<compile_context>
chip_gen: v6e
topology: v6e:2x2x1
jax: 0.10.0
libtpu: 0.0.40
codegen_flags: <defaults>
</compile_context>

<pallas_src>
import functools

import jax
import jax.numpy as jnp
from jax import lax
from jax.experimental import pallas as pl
from jax.experimental.pallas import tpu as pltpu

# Packed payload / accumulator row layout:
#   row 0: sum(w * v)      (surface stream)
#   row 1: sum(w)          (surface stream)
#   row 2: count           (surface stream -> "touched")
#   row 3: sum(w_empty)    (empty-space voting stream, fused)
#   row 4: count_empty
#   rows FEAT_ROW0 .. FEAT_ROW0+f4-1: sum(w * feat)
ROW_WV, ROW_W, ROW_CNT, ROW_WE, ROW_CNTE = 0, 1, 2, 3, 4
FEAT_ROW0 = 8  # 8-aligned so the feature slice is sublane-tile aligned


# --------------------------------------------------------------------------- #
# Fused scatter-accumulate + volume-update kernel (carry pattern, 1-D grid)
# --------------------------------------------------------------------------- #
def _integrate_kernel(tile_ref, win_ref,                 # scalar prefetch (SMEM)
                      local_ref, payload_ref,            # sorted/padded update stream
                      vold_ref, wold_ref, fold_ref,      # old volume tile (bf16)
                      vnew_ref, wnew_ref, fnew_ref,      # aliased outputs (bf16)
                      acc_ref,                           # (wins_per_tile, rows, window) f32
                      *, max_weight, trunc_value):
    c = pl.program_id(0)
    chunk = local_ref.shape[0]
    wins_per_tile, _, window = acc_ref.shape
    f4 = fold_ref.shape[0]

    tile = tile_ref[c]
    prev_tile = tile_ref[jnp.maximum(c - 1, 0)]
    next_tile = tile_ref[c + 1]                 # last entry is a -1 sentinel
    is_first = jnp.logical_or(c == 0, prev_tile != tile)
    is_last = next_tile != tile

    @pl.when(is_first)
    def _init():
        acc_ref[...] = jnp.zeros_like(acc_ref)

    # ---- scatter-accumulate this chunk into its window of the tile acc ------
    # Rows were sorted + padded in the wrapper so all rows of this chunk lie in
    # one `window`-wide voxel range; `local` is the in-window offset
    # (>= window for pad / out-of-bounds rows -> no one-hot match, payload 0).
    local = local_ref[...]                                        # (chunk, 1) int32
    onehot = (lax.broadcasted_iota(jnp.int32, (chunk, window), 1) == local)
    delta = lax.dot_general(
        payload_ref[...], onehot.astype(jnp.bfloat16),
        (((1,), (0,)), ((), ())),
        preferred_element_type=jnp.float32)                       # (rows, window)
    win = win_ref[c]
    acc_ref[win] = acc_ref[win] + delta

    # ---- fused dense volume update, once per touched tile --------------------
    @pl.when(is_last)
    def _finalize():
        for wi in range(wins_per_tile):                            # static unroll
            sl = slice(wi * window, (wi + 1) * window)
            a = acc_ref[wi]                                        # (rows, window)
            val_sum = a[ROW_WV:ROW_WV + 1, :]
            wgt_sum = a[ROW_W:ROW_W + 1, :]
            cnt = a[ROW_CNT:ROW_CNT + 1, :]
            wgt_e = a[ROW_WE:ROW_WE + 1, :]
            cnt_e = a[ROW_CNTE:ROW_CNTE + 1, :]
            feat_sum = a[FEAT_ROW0:FEAT_ROW0 + f4, :]

            v_old = vold_ref[:, sl].astype(jnp.float32)
            w_old = wold_ref[:, sl].astype(jnp.float32)
            f_old = fold_ref[:, sl].astype(jnp.float32)

            touched = cnt > 0.0
            denom = w_old + wgt_sum
            # NOTE: denom==0 with touched voxels yields NaN, same as the
            # PyTorch divide-by-zero behaviour.
            inv = pl.reciprocal(denom, approx=True)
            v_new = jnp.where(touched, (w_old * v_old + val_sum) * inv, v_old)
            w_new = jnp.where(touched, jnp.clip(denom, 0.0, max_weight), w_old)
            f_new = jnp.where(touched, (w_old * f_old + feat_sum) * inv, f_old)

            # Empty-space voting: overwrites the surface update but reads the
            # ORIGINAL old values, exactly like the PyTorch insert ordering.
            touched_e = cnt_e > 0.0
            denom_e = w_old + wgt_e
            inv_e = pl.reciprocal(denom_e, approx=True)
            v_new = jnp.where(touched_e,
                              (w_old * v_old + trunc_value * wgt_e) * inv_e, v_new)
            w_new = jnp.where(touched_e, jnp.clip(denom_e, 0.0, max_weight), w_new)

            vnew_ref[:, sl] = v_new.astype(vnew_ref.dtype)
            wnew_ref[:, sl] = w_new.astype(wnew_ref.dtype)
            fnew_ref[:, sl] = f_new.astype(fnew_ref.dtype)


# --------------------------------------------------------------------------- #
# Wrapper: stream packing / sorting / window padding (N-scale XLA) + pallas_call
# --------------------------------------------------------------------------- #
def fused_tsdf_integrate(indices, values, weights, feats,
                         indices_empty, weights_empty,
                         values_volume, weights_volume, features_volume,
                         *, max_weight, trunc_value,
                         v_tile=8192, window=512, chunk=256):
    xs, ys, zs = values_volume.shape
    f4 = features_volume.shape[-1]
    V = xs * ys * zs

    assert FEAT_ROW0 >= 5
    assert chunk % 128 == 0
    rows = max(16, ((FEAT_ROW0 + f4 + 15) // 16) * 16)   # bf16 sublane-tile aligned

    # Geometry: window | v_tile | vpad, all multiples of 128.
    window = 128 * max(1, window // 128)
    window = min(window, 128 * ((V + 127) // 128))
    wins_per_tile = max(1, min(v_tile // window, (V + window - 1) // window))
    v_tile = wins_per_tile * window
    n_vtiles = (V + v_tile - 1) // v_tile
    vpad = n_vtiles * v_tile
    n_windows = vpad // window

    def linear_index(idx):
        x, y, z = idx[:, 0], idx[:, 1], idx[:, 2]
        valid = (x >= 0) & (x < xs) & (y >= 0) & (y < ys) & (z >= 0) & (z < zs)
        lin = ys * zs * x + zs * y + z
        # invalid rows get sentinel `vpad` -> sort to the end, never match.
        return jnp.where(valid, lin, vpad).astype(jnp.int32), valid

    # ---- surface stream -> packed payload columns ----------------------------
    lin_m, valid_m = linear_index(indices)
    w = weights.reshape(-1, 1).astype(jnp.float32)
    v = values.reshape(-1, 1).astype(jnp.float32)
    f = feats.astype(jnp.float32)
    nm = lin_m.shape[0]
    ones_m = jnp.ones((nm, 1), jnp.float32)
    z1 = jnp.zeros((nm, 1), jnp.float32)
    cols_m = jnp.concatenate(
        [w * v, w, ones_m, z1, z1,
         jnp.zeros((nm, FEAT_ROW0 - 5), jnp.float32),
         w * f,
         jnp.zeros((nm, rows - FEAT_ROW0 - f4), jnp.float32)], axis=1)
    cols_m = jnp.where(valid_m[:, None], cols_m, 0.0)

    # ---- empty-space-voting stream fused into the same row stream ------------
    if indices_empty is not None:
        lin_e, valid_e = linear_index(indices_empty)
        we = weights_empty.reshape(-1, 1).astype(jnp.float32)
        ne = lin_e.shape[0]
        cols_e = jnp.concatenate(
            [jnp.zeros((ne, 3), jnp.float32), we, jnp.ones((ne, 1), jnp.float32),
             jnp.zeros((ne, rows - 5), jnp.float32)], axis=1)
        cols_e = jnp.where(valid_e[:, None], cols_e, 0.0)
        lin = jnp.concatenate([lin_m, lin_e], axis=0)
        cols = jnp.concatenate([cols_m, cols_e], axis=0)
    else:
        lin, cols = lin_m, cols_m

    ntot = lin.shape[0]

    # ---- sort rows by voxel and pad so each chunk stays inside one window ----
    order = jnp.argsort(lin)
    lin_s = lin[order]
    cols_s = cols[order]

    region = jnp.minimum(lin_s // window, n_windows).astype(jnp.int32)
    counts = jnp.zeros((n_windows + 1,), jnp.int32).at[region].add(1)
    padded = ((counts + chunk - 1) // chunk) * chunk
    region_start = jnp.concatenate(
        [jnp.zeros((1,), jnp.int32), jnp.cumsum(padded)[:-1].astype(jnp.int32)])
    first_row = jnp.concatenate(
        [jnp.zeros((1,), jnp.int32), jnp.cumsum(counts)[:-1].astype(jnp.int32)])
    dest = region_start[region] + (jnp.arange(ntot, dtype=jnp.int32) - first_row[region])

    # Static padded-stream length bound (shapes only, no data).
    max_regions = min(n_windows + 1, max(ntot, 1))
    L = ntot + max_regions * (chunk - 1)
    L = max(chunk, ((L + chunk - 1) // chunk) * chunk)
    n_chunks = L // chunk

    lin_pad = jnp.full((L,), vpad, jnp.int32).at[dest].set(lin_s)
    payload_pad = jnp.zeros((L, rows), jnp.float32).at[dest].set(cols_s)

    # ---- per-chunk metadata (scalar prefetch) ---------------------------------
    lin_first = lin_pad.reshape(n_chunks, chunk)[:, 0]
    region_c = jnp.minimum(lin_first // window, n_windows - 1).astype(jnp.int32)
    tile_of_chunk = (region_c // wins_per_tile).astype(jnp.int32)
    win_of_chunk = (region_c % wins_per_tile).astype(jnp.int32)
    tile_of_chunk = jnp.concatenate([tile_of_chunk, jnp.full((1,), -1, jnp.int32)])

    local = jnp.where(lin_pad < V, lin_pad % window, window).astype(jnp.int32)
    local2d = local.reshape(L, 1)
    # bf16 payload: ~3 significant digits on w, w*v, w*f (f32 accumulation in-kernel).
    payload_t = payload_pad.T.astype(jnp.bfloat16)

    # ---- dense volumes, lane-dense bf16 layout (1, vpad) / (f4, vpad) ---------
    # TODO(synk): production callers should keep the volumes resident in this
    # packed bf16 layout (and in fp16-compatible precision if required) across
    # calls; the reshape/cast/transpose below are per-call O(V) XLA passes the
    # kernel itself no longer pays.
    v_old = values_volume.reshape(1, V).astype(jnp.bfloat16)
    w_old = weights_volume.reshape(1, V).astype(jnp.bfloat16)
    f_old = features_volume.reshape(V, f4).T.astype(jnp.bfloat16)
    if vpad != V:
        v_old = jnp.pad(v_old, ((0, 0), (0, vpad - V)))
        w_old = jnp.pad(w_old, ((0, 0), (0, vpad - V)))
        f_old = jnp.pad(f_old, ((0, 0), (0, vpad - V)))

    kernel = functools.partial(_integrate_kernel,
                               max_weight=float(max_weight),
                               trunc_value=float(trunc_value))

    stream_map = lambda c, t, wn: (c, 0)
    stream_map_t = lambda c, t, wn: (0, c)
    tile_map = lambda c, t, wn: (0, t[c])        # data-dependent: touched tiles only

    out_shapes = (
        jax.ShapeDtypeStruct((1, vpad), jnp.bfloat16),
        jax.ShapeDtypeStruct((1, vpad), jnp.bfloat16),
        jax.ShapeDtypeStruct((f4, vpad), jnp.bfloat16),
    )

    v_new, w_new, f_new_t = pl.pallas_call(
        kernel,
        out_shape=out_shapes,
        grid_spec=pltpu.PrefetchScalarGridSpec(
            num_scalar_prefetch=2,
            grid=(n_chunks,),
            in_specs=[
                pl.BlockSpec((chunk, 1), stream_map),       # in-window one-hot indices
                pl.BlockSpec((rows, chunk), stream_map_t),  # packed bf16 payload
                pl.BlockSpec((1, v_tile), tile_map),        # values_volume (old)
                pl.BlockSpec((1, v_tile), tile_map),        # weights_volume (old)
                pl.BlockSpec((f4, v_tile), tile_map),       # features_volume (old, transposed)
            ],
            out_specs=[
                pl.BlockSpec((1, v_tile), tile_map),
                pl.BlockSpec((1, v_tile), tile_map),
                pl.BlockSpec((f4, v_tile), tile_map),
            ],
            scratch_shapes=[pltpu.VMEM((wins_per_tile, rows, window), jnp.float32)],
        ),
        # Outputs alias the old volumes: untouched tiles are never read,
        # computed on, or rewritten (arg indices count the prefetch operands).
        input_output_aliases={4: 0, 5: 1, 6: 2},
        compiler_params=pltpu.CompilerParams(
            dimension_semantics=("arbitrary",)),
    )(tile_of_chunk, win_of_chunk, local2d, payload_t, v_old, w_old, f_old)

    # Dense "touched" mask from the surface stream (wrapper-side; the kernel no
    # longer visits untouched voxels so it cannot produce it cheaply).
    touched = jnp.zeros((V,), jnp.int32).at[lin_m].set(1, mode="drop")

    v_out = v_new[:, :V].reshape(xs, ys, zs)
    w_out = w_new[:, :V].reshape(xs, ys, zs)
    f_out = f_new_t[:, :V].T.reshape(xs, ys, zs, f4)
    return v_out, f_out, w_out, touched.reshape(xs, ys, zs)


# --------------------------------------------------------------------------- #
# Module wrapper (strategy expansion / reshapes, no learned parameters)
# --------------------------------------------------------------------------- #
class IntegratorPallas:
    def __init__(self, config):
        self.max_weight = config.max_weight
        self.extraction_strategy = config.extraction_strategy
        self.n_empty_space_voting = config.n_empty_space_voting
        self.trunc_value = config.trunc_value

    def __call__(self, integrator_input, values_volume, features_volume, weights_volume):
        f4 = features_volume.shape[-1]

        values = integrator_input['update_values']
        features = integrator_input['update_features']
        indices = integrator_input['update_indices']
        weights = integrator_input['update_weights']

        features = features.reshape(-1, f4).astype(jnp.float32)
        values = values.reshape(-1, 1).astype(jnp.float32)

        rep = 8 if self.extraction_strategy == 'trilinear_interpolation' else 1
        # Faithful to the PyTorch code: features use .repeat(rep, 1) (tiling),
        # values use .repeat(1, rep).view(-1, 1) (interleaving).
        features = jnp.tile(features, (rep, 1))
        values = jnp.repeat(values, rep, axis=0)
        indices = indices.reshape(-1, 3).astype(jnp.int32)
        weights = weights.reshape(-1, 1).astype(jnp.float32)

        if self.n_empty_space_voting > 0:
            indices_e = integrator_input['update_indices_empty'].reshape(-1, 3).astype(jnp.int32)
            weights_e = integrator_input['update_weights_empty'].reshape(-1, 1).astype(jnp.float32)
        else:
            indices_e = None
            weights_e = None

        v_new, f_new, w_new, touched = fused_tsdf_integrate(
            indices, values, weights, features, indices_e, weights_e,
            values_volume, weights_volume, features_volume,
            max_weight=self.max_weight, trunc_value=self.trunc_value)

        # TODO(synk): PyTorch returns the variable-length unique index list
        # (indices_insert via unique_consecutive); dynamic shapes are not
        # expressible here, so a dense per-voxel "touched" mask is returned.
        return v_new, f_new, w_new, touched


# --------------------------------------------------------------------------- #
# Demo
# --------------------------------------------------------------------------- #
class _Cfg:
    pass


if __name__ == "__main__":
    key = jax.random.PRNGKey(0)
    ks = jax.random.split(key, 8)

    xs = ys = zs = 32           # volume 32^3 -> several V-tiles exercised
    f4 = 8                      # feature channels
    n1, n2, n3 = 2, 8, 8        # 128 surface samples, x8 trilinear corners
    m_e = 64                    # empty-space samples

    cfg = _Cfg()
    cfg.device = None
    cfg.max_weight = 255.0
    cfg.extraction_strategy = 'trilinear_interpolation'
    cfg.n_empty_space_voting = 1
    cfg.trunc_value = 0.1

    values_volume = jnp.zeros((xs, ys, zs), jnp.float16)
    weights_volume = jnp.zeros((xs, ys, zs), jnp.float16)
    features_volume = jnp.zeros((xs, ys, zs, f4), jnp.float16)

    corner = jnp.stack(jnp.meshgrid(jnp.arange(2), jnp.arange(2), jnp.arange(2),
                                    indexing='ij'), axis=-1).reshape(1, 1, 1, 8, 3)
    base = jax.random.randint(ks[0], (n1, n2, n3, 1, 3), -1, xs)   # includes OOB rows
    integrator_input = {
        'update_values': jax.random.normal(ks[1], (n1, n2, n3), jnp.float32),
        'update_features': jax.random.normal(ks[2], (n1, n2, n3, f4), jnp.float32),
        'update_indices': (base + corner).astype(jnp.int32),
        'update_weights': jax.random.uniform(ks[3], (n1, n2, n3, 8), jnp.float32),
        'update_indices_empty':
            (jax.random.randint(ks[4], (m_e, 1, 3), -1, xs) +
             corner.reshape(1, 8, 3)).astype(jnp.int32),
        'update_weights_empty': jax.random.uniform(ks[5], (m_e, 8), jnp.float32),
    }

    integrator = IntegratorPallas(cfg)
    run = jax.jit(lambda inp, vv, fv, wv: integrator(inp, vv, fv, wv))
    out = run(integrator_input, values_volume, features_volume, weights_volume)
    out = jax.block_until_ready(out)

    assert out[0].shape == (xs, ys, zs)
    assert out[1].shape == (xs, ys, zs, f4)
    assert out[2].shape == (xs, ys, zs)
    assert out[3].shape == (xs, ys, zs)
    print("KERNEL_OK")
</pallas_src>

<mosaic_0001>
module attributes {stable_mosaic.version = 11 : i64} {
  func.func private @main(%arg0: i32) attributes {dimension_semantics = [#tpu.dimension_semantics<core_parallel>], iteration_bounds = array<i64: 2>, tpu.core_type = #tpu.core_type<sc_scalar_subcore>, window_params = []} {
    return
  }
}

module attributes {stable_mosaic.version = 11 : i64} {
  func.func private @main(%arg0: i32) attributes {dimension_semantics = [#tpu.dimension_semantics<core_parallel>], iteration_bounds = array<i64: 2>, tpu.core_type = #tpu.core_type<sc_scalar_subcore>, window_params = []} {
    return
  }
}

module attributes {stable_mosaic.version = 11 : i64} {
  func.func @_integrate_kernel(%arg0: i32, %arg1: memref<72xi32, #tpu.memory_space<smem>>, %arg2: memref<71xi32, #tpu.memory_space<smem>>, %arg3: memref<256x1xi32, #tpu.memory_space<vmem>>, %arg4: memref<16x256xbf16, #tpu.memory_space<vmem>>, %arg5: memref<1x8192xbf16, #tpu.memory_space<vmem>>, %arg6: memref<1x8192xbf16, #tpu.memory_space<vmem>>, %arg7: memref<8x8192xbf16, #tpu.memory_space<vmem>>, %arg8: memref<1x8192xbf16, #tpu.memory_space<vmem>>, %arg9: memref<1x8192xbf16, #tpu.memory_space<vmem>>, %arg10: memref<8x8192xbf16, #tpu.memory_space<vmem>>, %arg11: memref<16x16x512xf32, #tpu.memory_space<vmem>>) attributes {dimension_semantics = [#tpu.dimension_semantics<arbitrary>], iteration_bounds = array<i64: 71>, scalar_prefetch = 2 : i64, scratch_operands = 1 : i64, tpu.core_type = #tpu.core_type<tc>, window_params = [{transform_indices = @transform_0, window_bounds = array<i64: 256, 1>}, {transform_indices = @transform_1, window_bounds = array<i64: 16, 256>}, {transform_indices = @transform_2, window_bounds = array<i64: 1, 8192>}, {transform_indices = @transform_3, window_bounds = array<i64: 1, 8192>}, {transform_indices = @transform_4, window_bounds = array<i64: 8, 8192>}, {transform_indices = @transform_5, window_bounds = array<i64: 1, 8192>}, {transform_indices = @transform_6, window_bounds = array<i64: 1, 8192>}, {transform_indices = @transform_7, window_bounds = array<i64: 8, 8192>}]} {
    %0 = arith.index_cast %arg0 : i32 to index
    %1 = memref.load %arg1[%0] : memref<72xi32, #tpu.memory_space<smem>>
    %c1_i32 = arith.constant 1 : i32
    %2 = arith.subi %arg0, %c1_i32 : i32
    %c0_i32 = arith.constant 0 : i32
    %3 = arith.maxsi %2, %c0_i32 : i32
    %4 = arith.index_cast %3 : i32 to index
    %5 = memref.load %arg1[%4] : memref<72xi32, #tpu.memory_space<smem>>
    %c1_i32_0 = arith.constant 1 : i32
    %6 = arith.addi %arg0, %c1_i32_0 : i32
    %7 = arith.index_cast %6 : i32 to index
    %8 = memref.load %arg1[%7] : memref<72xi32, #tpu.memory_space<smem>>
    %c0_i32_1 = arith.constant 0 : i32
    %9 = arith.cmpi eq, %arg0, %c0_i32_1 : i32
    %10 = arith.cmpi ne, %5, %1 : i32
    %11 = arith.ori %9, %10 : i1
    %12 = arith.cmpi ne, %8, %1 : i32
    %13 = arith.extui %11 : i1 to i32
    %c0_i32_2 = arith.constant 0 : i32
    %14 = arith.cmpi ne, %13, %c0_i32_2 : i32
    scf.if %14 {
      %cst_11 = arith.constant 0.000000e+00 : f32
      %36 = vector.broadcast %cst_11 : f32 to vector<16x16x512xf32>
      %c0_12 = arith.constant 0 : index
      %c0_13 = arith.constant 0 : index
      %c0_14 = arith.constant 0 : index
      %37 = vector.load %arg11[%c0_12, %c0_13, %c0_14] : memref<16x16x512xf32, #tpu.memory_space<vmem>>, vector<16x16x512xf32>
      tpu.vector_store %arg11[%c0_12, %c0_13, %c0_14], %36 {strides = array<i32>} : memref<16x16x512xf32, #tpu.memory_space<vmem>>, vector<16x16x512xf32>,
    } else {
    }
    %c0 = arith.constant 0 : index
    %c0_3 = arith.constant 0 : index
    %15 = vector.load %arg3[%c0, %c0_3] : memref<256x1xi32, #tpu.memory_space<vmem>>, vector<256x1xi32>
    %16 = tpu.iota {dimensions = array<i32: 1>} : vector<256x512xi32>
    %17 = vector.broadcast %15 : vector<256x1xi32> to vector<256x512xi32>
    %18 = arith.cmpi eq, %16, %17 : vector<256x512xi32>
    %c0_4 = arith.constant 0 : index
    %c0_5 = arith.constant 0 : index
    %19 = vector.load %arg4[%c0_4, %c0_5] : memref<16x256xbf16, #tpu.memory_space<vmem>>, vector<16x256xbf16>
    %20 = arith.extui %18 : vector<256x512xi1> to vector<256x512xi32>
    %21 = arith.sitofp %20 : vector<256x512xi32> to vector<256x512xf32>
    %22 = arith.truncf %21 : vector<256x512xf32> to vector<256x512xbf16>
    %cst = arith.constant dense<0.000000e+00> : vector<16x512xf32>
    %23 = tpu.matmul %19, %22, %cst {dimension_numbers = #tpu.dot_dimension_numbers<[1], [0], [0], [1], [0, 0, 1, 1], [], []>} : vector<16x256xbf16>, vector<256x512xbf16>, vector<16x512xf32> -> vector<16x512xf32>
    %24 = arith.index_cast %arg0 : i32 to index
    %25 = memref.load %arg2[%24] : memref<71xi32, #tpu.memory_space<smem>>
    %26 = arith.index_cast %25 : i32 to index
    %c0_6 = arith.constant 0 : index
    %c0_7 = arith.constant 0 : index
    %27 = vector.load %arg11[%26, %c0_6, %c0_7] : memref<16x16x512xf32, #tpu.memory_space<vmem>>, vector<1x16x512xf32>
    %28 = vector.shape_cast %27 : vector<1x16x512xf32> to vector<16x512xf32>
    %29 = arith.addf %28, %23 : vector<16x512xf32>
    %30 = arith.index_cast %25 : i32 to index
    %c0_8 = arith.constant 0 : index
    %c0_9 = arith.constant 0 : index
    %31 = vector.load %arg11[%30, %c0_8, %c0_9] : memref<16x16x512xf32, #tpu.memory_space<vmem>>, vector<1x16x512xf32>
    %32 = vector.shape_cast %31 : vector<1x16x512xf32> to vector<16x512xf32>
    %33 = vector.shape_cast %29 : vector<16x512xf32> to vector<1x16x512xf32>
    tpu.vector_store %arg11[%30, %c0_8, %c0_9], %33 {strides = array<i32>} : memref<16x16x512xf32, #tpu.memory_space<vmem>>, vector<1x16x512xf32>,
    %34 = arith.extui %12 : i1 to i32
    %c0_i32_10 = arith.constant 0 : i32
    %35 = arith.cmpi ne, %34, %c0_i32_10 : i32
    scf.if %35 {
      %c0_11 = arith.constant 0 : index
      %c0_12 = arith.constant 0 : index
      %c0_13 = arith.constant 0 : index
      %36 = vector.load %arg11[%c0_11, %c0_12, %c0_13] : memref<16x16x512xf32, #tpu.memory_space<vmem>>, vector<1x16x512xf32>
      %37 = vector.shape_cast %36 : vector<1x16x512xf32> to vector<16x512xf32>
      %38 = vector.extract_strided_slice %37 {offsets = [0, 0], sizes = [1, 512], strides = [1, 1]} : vector<16x512xf32> to vector<1x512xf32>
      %39 = vector.extract_strided_slice %37 {offsets = [1, 0], sizes = [1, 512], strides = [1, 1]} : vector<16x512xf32> to vector<1x512xf32>
      %40 = vector.extract_strided_slice %37 {offsets = [2, 0], sizes = [1, 512], strides = [1, 1]} : vector<16x512xf32> to vector<1x512xf32>
      %41 = vector.extract_strided_slice %37 {offsets = [3, 0], sizes = [1, 512], strides = [1, 1]} : vector<16x512xf32> to vector<1x512xf32>
      %42 = vector.extract_strided_slice %37 {offsets = [4, 0], sizes = [1, 512], strides = [1, 1]} : vector<16x512xf32> to vector<1x512xf32>
      %43 = vector.extract_strided_slice %37 {offsets = [8, 0], sizes = [8, 512], strides = [1, 1]} : vector<16x512xf32> to vector<8x512xf32>
      %c0_14 = arith.constant 0 : index
      %c0_15 = arith.constant 0 : index
      %44 = vector.load %arg5[%c0_14, %c0_15] : memref<1x8192xbf16, #tpu.memory_space<vmem>>, vector<1x512xbf16>
      %45 = arith.extf %44 : vector<1x512xbf16> to vector<1x512xf32>
      %c0_16 = arith.constant 0 : index
      %c0_17 = arith.constant 0 : index
      %46 = vector.load %arg6[%c0_16, %c0_17] : memref<1x8192xbf16, #tpu.memory_space<vmem>>, vector<1x512xbf16>
      %47 = arith.extf %46 : vector<1x512xbf16> to vector<1x512xf32>
      %c0_18 = arith.constant 0 : index
      %c0_19 = arith.constant 0 : index
      %48 = vector.load %arg7[%c0_18, %c0_19] : memref<8x8192xbf16, #tpu.memory_space<vmem>>, vector<8x512xbf16>
      %49 = arith.extf %48 : vector<8x512xbf16> to vector<8x512xf32>
      %cst_20 = arith.constant 0.000000e+00 : f32
      %50 = vector.broadcast %cst_20 : f32 to vector<1x512xf32>
      %51 = arith.cmpf ogt, %40, %50 : vector<1x512xf32>
      %52 = arith.addf %47, %39 : vector<1x512xf32>
      %53 = tpu.reciprocal %52 {approx = true} : vector<1x512xf32> -> vector<1x512xf32>
      %54 = arith.mulf %47, %45 : vector<1x512xf32>
      %55 = arith.addf %54, %38 : vector<1x512xf32>
      %56 = arith.mulf %55, %53 : vector<1x512xf32>
      %57 = arith.select %51, %56, %45 : vector<1x512xi1>, vector<1x512xf32>
      %cst_21 = arith.constant 0.000000e+00 : f32
      %cst_22 = arith.constant 2.550000e+02 : f32
      %58 = vector.broadcast %cst_21 : f32 to vector<1x512xf32>
      %59 = arith.maximumf %58, %52 : vector<1x512xf32>
      %60 = vector.broadcast %cst_22 : f32 to vector<1x512xf32>
      %61 = arith.minimumf %60, %59 : vector<1x512xf32>
      %62 = arith.select %51, %61, %47 : vector<1x512xi1>, vector<1x512xf32>
      %63 = vector.broadcast %47 : vector<1x512xf32> to vector<8x512xf32>
      %64 = arith.mulf %63, %49 : vector<8x512xf32>
      %65 = arith.addf %64, %43 : vector<8x512xf32>
      %66 = vector.broadcast %53 : vector<1x512xf32> to vector<8x512xf32>
      %67 = arith.mulf %65, %66 : vector<8x512xf32>
      %68 = vector.shape_cast %51 : vector<1x512xi1> to vector<1x512xi1>
      %69 = vector.broadcast %68 : vector<1x512xi1> to vector<8x512xi1>
      %70 = arith.select %69, %67, %49 : vector<8x512xi1>, vector<8x512xf32>
      %cst_23 = arith.constant 0.000000e+00 : f32
      %71 = vector.broadcast %cst_23 : f32 to vector<1x512xf32>
      %72 = arith.cmpf ogt, %42, %71 : vector<1x512xf32>
      %73 = arith.addf %47, %41 : vector<1x512xf32>
      %74 = tpu.reciprocal %73 {approx = true} : vector<1x512xf32> -> vector<1x512xf32>
      %75 = arith.mulf %47, %45 : vector<1x512xf32>
      %cst_24 = arith.constant 1.000000e-01 : f32
      %76 = vector.broadcast %cst_24 : f32 to vector<1x512xf32>
      %77 = arith.mulf %76, %41 : vector<1x512xf32>
      %78 = arith.addf %75, %77 : vector<1x512xf32>
      %79 = arith.mulf %78, %74 : vector<1x512xf32>
      %80 = arith.select %72, %79, %57 : vector<1x512xi1>, vector<1x512xf32>
      %cst_25 = arith.constant 0.000000e+00 : f32
      %cst_26 = arith.constant 2.550000e+02 : f32
      %81 = vector.broadcast %cst_25 : f32 to vector<1x512xf32>
      %82 = arith.maximumf %81, %73 : vector<1x512xf32>
      %83 = vector.broadcast %cst_26 : f32 to vector<1x512xf32>
      %84 = arith.minimumf %83, %82 : vector<1x512xf32>
      %85 = arith.select %72, %84, %62 : vector<1x512xi1>, vector<1x512xf32>
      %86 = arith.truncf %80 : vector<1x512xf32> to vector<1x512xbf16>
      %c0_27 = arith.constant 0 : index
      %c0_28 = arith.constant 0 : index
      %87 = vector.load %arg8[%c0_27, %c0_28] : memref<1x8192xbf16, #tpu.memory_space<vmem>>, vector<1x512xbf16>
      tpu.vector_store %arg8[%c0_27, %c0_28], %86 {strides = array<i32>} : memref<1x8192xbf16, #tpu.memory_space<vmem>>, vector<1x512xbf16>,
      %88 = arith.truncf %85 : vector<1x512xf32> to vector<1x512xbf16>
      %c0_29 = arith.constant 0 : index
      %c0_30 = arith.constant 0 : index
      %89 = vector.load %arg9[%c0_29, %c0_30] : memref<1x8192xbf16, #tpu.memory_space<vmem>>, vector<1x512xbf16>
      tpu.vector_store %arg9[%c0_29, %c0_30], %88 {strides = array<i32>} : memref<1x8192xbf16, #tpu.memory_space<vmem>>, vector<1x512xbf16>,
      %90 = arith.truncf %70 : vector<8x512xf32> to vector<8x512xbf16>
      %c0_31 = arith.constant 0 : index
      %c0_32 = arith.constant 0 : index
      %91 = vector.load %arg10[%c0_31, %c0_32] : memref<8x8192xbf16, #tpu.memory_space<vmem>>, vector<8x512xbf16>
      tpu.vector_store %arg10[%c0_31, %c0_32], %90 {strides = array<i32>} : memref<8x8192xbf16, #tpu.memory_space<vmem>>, vector<8x512xbf16>,
      %c1 = arith.constant 1 : index
      %c0_33 = arith.constant 0 : index
      %c0_34 = arith.constant 0 : index
      %92 = vector.load %arg11[%c1, %c0_33, %c0_34] : memref<16x16x512xf32, #tpu.memory_space<vmem>>, vector<1x16x512xf32>
      %93 = vector.shape_cast %92 : vector<1x16x512xf32> to vector<16x512xf32>
      %94 = vector.extract_strided_slice %93 {offsets = [0, 0], sizes = [1, 512], strides = [1, 1]} : vector<16x512xf32> to vector<1x512xf32>
      %95 = vector.extract_strided_slice %93 {offsets = [1, 0], sizes = [1, 512], strides = [1, 1]} : vector<16x512xf32> to vector<1x512xf32>
      %96 = vector.extract_strided_slice %93 {offsets = [2, 0], sizes = [1, 512], strides = [1, 1]} : vector<16x512xf32> to vector<1x512xf32>
      %97 = vector.extract_strided_slice %93 {offsets = [3, 0], sizes = [1, 512], strides = [1, 1]} : vector<16x512xf32> to vector<1x512xf32>
      %98 = vector.extract_strided_slice %93 {offsets = [4, 0], sizes = [1, 512], strides = [1, 1]} : vector<16x512xf32> to vector<1x512xf32>
      %99 = vector.extract_strided_slice %93 {offsets = [8, 0], sizes = [8, 512], strides = [1, 1]} : vector<16x512xf32> to vector<8x512xf32>
      %c0_35 = arith.constant 0 : index
      %c512 = arith.constant 512 : index
      %100 = vector.load %arg5[%c0_35, %c512] : memref<1x8192xbf16, #tpu.memory_space<vmem>>, vector<1x512xbf16>
      %101 = arith.extf %100 : vector<1x512xbf16> to vector<1x512xf32>
      %c0_36 = arith.constant 0 : index
      %c512_37 = arith.constant 512 : index
      %102 = vector.load %arg6[%c0_36, %c512_37] : memref<1x8192xbf16, #tpu.memory_space<vmem>>, vector<1x512xbf16>
      %103 = arith.extf %102 : vector<1x512xbf16> to vector<1x512xf32>
      %c0_38 = arith.constant 0 : index
      %c512_39 = arith.constant 512 : index
      %104 = vector.load %arg7[%c0_38, %c512_39] : memref<8x8192xbf16, #tpu.memory_space<vmem>>, vector<8x512xbf16>
      %105 = arith.extf %104 : vector<8x512xbf16> to vector<8x512xf32>
      %cst_40 = arith.constant 0.000000e+00 : f32
      %106 = vector.broadcast %cst_40 : f32 to vector<1x512xf32>
      %107 = arith.cmpf ogt, %96, %106 : vector<1x512xf32>
      %108 = arith.addf %103, %95 : vector<1x512xf32>
      %109 = tpu.reciprocal %108 {approx = true} : vector<1x512xf32> -> vector<1x512xf32>
      %110 = arith.mulf %103, %101 : vector<1x512xf32>
      %111 = arith.addf %110, %94 : vector<1x512xf32>
      %112 = arith.mulf %111, %109 : vector<1x512xf32>
      %113 = arith.select %107, %112, %101 : vector<1x512xi1>, vector<1x512xf32>
      %cst_41 = arith.constant 0.000000e+00 : f32
      %cst_42 = arith.constant 2.550000e+02 : f32
      %114 = vector.broadcast %cst_41 : f32 to vector<1x512xf32>
      %115 = arith.maximumf %114, %108 : vector<1x512xf32>
      %116 = vector.broadcast %cst_42 : f32 to vector<1x512xf32>
      %117 = arith.minimumf %116, %115 : vector<1x512xf32>
      %118 = arith.select %107, %117, %103 : vector<1x512xi1>, vector<1x512xf32>
      %119 = vector.broadcast %103 : vector<1x512xf32> to vector<8x512xf32>
      %120 = arith.mulf %119, %105 : vector<8x512xf32>
      %121 = arith.addf %120, %99 : vector<8x512xf32>
      %122 = vector.broadcast %109 : vector<1x512xf32> to vector<8x512xf32>
      %123 = arith.mulf %121, %122 : vector<8x512xf32>
      %124 = vector.shape_cast %107 : vector<1x512xi1> to vector<1x512xi1>
      %125 = vector.broadcast %124 : vector<1x512xi1> to vector<8x512xi1>
      %126 = arith.select %125, %123, %105 : vector<8x512xi1>, vector<8x512xf32>
      %cst_43 = arith.constant 0.000000e+00 : f32
      %127 = vector.broadcast %cst_43 : f32 to vector<1x512xf32>
      %128 = arith.cmpf ogt, %98, %127 : vector<1x512xf32>
      %129 = arith.addf %103, %97 : vector<1x512xf32>
      %130 = tpu.reciprocal %129 {approx = true} : vector<1x512xf32> -> vector<1x512xf32>
      %131 = arith.mulf %103, %101 : vector<1x512xf32>
      %cst_44 = arith.constant 1.000000e-01 : f32
      %132 = vector.broadcast %cst_44 : f32 to vector<1x512xf32>
      %133 = arith.mulf %132, %97 : vector<1x512xf32>
      %134 = arith.addf %131, %133 : vector<1x512xf32>
      %135 = arith.mulf %134, %130 : vector<1x512xf32>
      %136 = arith.select %128, %135, %113 : vector<1x512xi1>, vector<1x512xf32>
      %cst_45 = arith.constant 0.000000e+00 : f32
      %cst_46 = arith.constant 2.550000e+02 : f32
      %137 = vector.broadcast %cst_45 : f32 to vector<1x512xf32>
      %138 = arith.maximumf %137, %129 : vector<1x512xf32>
      %139 = vector.broadcast %cst_46 : f32 to vector<1x512xf32>
      %140 = arith.minimumf %139, %138 : vector<1x512xf32>
      %141 = arith.select %128, %140, %118 : vector<1x512xi1>, vector<1x512xf32>
      %142 = arith.truncf %136 : vector<1x512xf32> to vector<1x512xbf16>
      %c0_47 = arith.constant 0 : index
      %c512_48 = arith.constant 512 : index
      %143 = vector.load %arg8[%c0_47, %c512_48] : memref<1x8192xbf16, #tpu.memory_space<vmem>>, vector<1x512xbf16>
      tpu.vector_store %arg8[%c0_47, %c512_48], %142 {strides = array<i32>} : memref<1x8192xbf16, #tpu.memory_space<vmem>>, vector<1x512xbf16>,
      %144 = arith.truncf %141 : vector<1x512xf32> to vector<1x512xbf16>
      %c0_49 = arith.constant 0 : index
      %c512_50 = arith.constant 512 : index
      %145 = vector.load %arg9[%c0_49, %c512_50] : memref<1x8192xbf16, #tpu.memory_space<vmem>>, vector<1x512xbf16>
      tpu.vector_store %arg9[%c0_49, %c512_50], %144 {strides = array<i32>} : memref<1x8192xbf16, #tpu.memory_space<vmem>>, vector<1x512xbf16>,
      %146 = arith.truncf %126 : vector<8x512xf32> to vector<8x512xbf16>
      %c0_51 = arith.constant 0 : index
      %c512_52 = arith.constant 512 : index
      %147 = vector.load %arg10[%c0_51, %c512_52] : memref<8x8192xbf16, #tpu.memory_space<vmem>>, vector<8x512xbf16>
      tpu.vector_store %arg10[%c0_51, %c512_52], %146 {strides = array<i32>} : memref<8x8192xbf16, #tpu.memory_space<vmem>>, vector<8x512xbf16>,
      %c2 = arith.constant 2 : index
      %c0_53 = arith.constant 0 : index
      %c0_54 = arith.constant 0 : index
      %148 = vector.load %arg11[%c2, %c0_53, %c0_54] : memref<16x16x512xf32, #tpu.memory_space<vmem>>, vector<1x16x512xf32>
      %149 = vector.shape_cast %148 : vector<1x16x512xf32> to vector<16x512xf32>
      %150 = vector.extract_strided_slice %149 {offsets = [0, 0], sizes = [1, 512], strides = [1, 1]} : vector<16x512xf32> to vector<1x512xf32>
      %151 = vector.extract_strided_slice %149 {offsets = [1, 0], sizes = [1, 512], strides = [1, 1]} : vector<16x512xf32> to vector<1x512xf32>
      %152 = vector.extract_strided_slice %149 {offsets = [2, 0], sizes = [1, 512], strides = [1, 1]} : vector<16x512xf32> to vector<1x512xf32>
      %153 = vector.extract_strided_slice %149 {offsets = [3, 0], sizes = [1, 512], strides = [1, 1]} : vector<16x512xf32> to vector<1x512xf32>
      %154 = vector.extract_strided_slice %149 {offsets = [4, 0], sizes = [1, 512], strides = [1, 1]} : vector<16x512xf32> to vector<1x512xf32>
      %155 = vector.extract_strided_slice %149 {offsets = [8, 0], sizes = [8, 512], strides = [1, 1]} : vector<16x512xf32> to vector<8x512xf32>
      %c0_55 = arith.constant 0 : index
      %c1024 = arith.constant 1024 : index
      %156 = vector.load %arg5[%c0_55, %c1024] : memref<1x8192xbf16, #tpu.memory_space<vmem>>, vector<1x512xbf16>
      %157 = arith.extf %156 : vector<1x512xbf16> to vector<1x512xf32>
      %c0_56 = arith.constant 0 : index
      %c1024_57 = arith.constant 1024 : index
      %158 = vector.load %arg6[%c0_56, %c1024_57] : memref<1x8192xbf16, #tpu.memory_space<vmem>>, vector<1x512xbf16>
      %159 = arith.extf %158 : vector<1x512xbf16> to vector<1x512xf32>
      %c0_58 = arith.constant 0 : index
      %c1024_59 = arith.constant 1024 : index
      %160 = vector.load %arg7[%c0_58, %c1024_59] : memref<8x8192xbf16, #tpu.memory_space<vmem>>, vector<8x512xbf16>
      %161 = arith.extf %160 : vector<8x512xbf16> to vector<8x512xf32>
      %cst_60 = arith.constant 0.000000e+00 : f32
      %162 = vector.broadcast %cst_60 : f32 to vector<1x512xf32>
      %163 = arith.cmpf ogt, %152, %162 : vector<1x512xf32>
      %164 = arith.addf %159, %151 : vector<1x512xf32>
      %165 = tpu.reciprocal %164 {approx = true} : vector<1x512xf32> -> vector<1x512xf32>
      %166 = arith.mulf %159, %157 : vector<1x512xf32>
      %167 = arith.addf %166, %150 : vector<1x512xf32>
      %168 = arith.mulf %167, %165 : vector<1x512xf32>
      %169 = arith.select %163, %168, %157 : vector<1x512xi1>, vector<1x512xf32>
      %cst_61 = arith.constant 0.000000e+00 : f32
      %cst_62 = arith.constant 2.550000e+02 : f32
      %170 = vector.broadcast %cst_61 : f32 to vector<1x512xf32>
      %171 = arith.maximumf %170, %164 : vector<1x512xf32>
      %172 = vector.broadcast %cst_62 : f32 to vector<1x512xf32>
      %173 = arith.minimumf %172, %171 : vector<1x512xf32>
      %174 = arith.select %163, %173, %159 : vector<1x512xi1>, vector<1x512xf32>
      %175 = vector.broadcast %159 : vector<1x512xf32> to vector<8x512xf32>
      %176 = arith.mulf %175, %161 : vector<8x512xf32>
      %177 = arith.addf %176, %155 : vector<8x512xf32>
      %178 = vector.broadcast %165 : vector<1x512xf32> to vector<8x512xf32>
      %179 = arith.mulf %177, %178 : vector<8x512xf32>
      %180 = vector.shape_cast %163 : vector<1x512xi1> to vector<1x512xi1>
      %181 = vector.broadcast %180 : vector<1x512xi1> to vector<8x512xi1>
      %182 = arith.select %181, %179, %161 : vector<8x512xi1>, vector<8x512xf32>
      %cst_63 = arith.constant 0.000000e+00 : f32
      %183 = vector.broadcast %cst_63 : f32 to vector<1x512xf32>
      %184 = arith.cmpf ogt, %154, %183 : vector<1x512xf32>
      %185 = arith.addf %159, %153 : vector<1x512xf32>
      %186 = tpu.reciprocal %185 {approx = true} : vector<1x512xf32> -> vector<1x512xf32>
      %187 = arith.mulf %159, %157 : vector<1x512xf32>
      %cst_64 = arith.constant 1.000000e-01 : f32
      %188 = vector.broadcast %cst_64 : f32 to vector<1x512xf32>
      %189 = arith.mulf %188, %153 : vector<1x512xf32>
      %190 = arith.addf %187, %189 : vector<1x512xf32>
      %191 = arith.mulf %190, %186 : vector<1x512xf32>
      %192 = arith.select %184, %191, %169 : vector<1x512xi1>, vector<1x512xf32>
      %cst_65 = arith.constant 0.000000e+00 : f32
      %cst_66 = arith.constant 2.550000e+02 : f32
      %193 = vector.broadcast %cst_65 : f32 to vector<1x512xf32>
      %194 = arith.maximumf %193, %185 : vector<1x512xf32>
      %195 = vector.broadcast %cst_66 : f32 to vector<1x512xf32>
      %196 = arith.minimumf %195, %194 : vector<1x512xf32>
      %197 = arith.select %184, %196, %174 : vector<1x512xi1>, vector<1x512xf32>
      %198 = arith.truncf %192 : vector<1x512xf32> to vector<1x512xbf16>
      %c0_67 = arith.constant 0 : index
      %c1024_68 = arith.constant 1024 : index
      %199 = vector.load %arg8[%c0_67, %c1024_68] : memref<1x8192xbf16, #tpu.memory_space<vmem>>, vector<1x512xbf16>
      tpu.vector_store %arg8[%c0_67, %c1024_68], %198 {strides = array<i32>} : memref<1x8192xbf16, #tpu.memory_space<vmem>>, vector<1x512xbf16>,
      %200 = arith.truncf %197 : vector<1x512xf32> to vector<1x512xbf16>
      %c0_69 = arith.constant 0 : index
      %c1024_70 = arith.constant 1024 : index
      %201 = vector.load %arg9[%c0_69, %c1024_70] : memref<1x8192xbf16, #tpu.memory_space<vmem>>, vector<1x512xbf16>
      tpu.vector_store %arg9[%c0_69, %c1024_70], %200 {strides = array<i32>} : memref<1x8192xbf16, #tpu.memory_space<vmem>>, vector<1x512xbf16>,
      %202 = arith.truncf %182 : vector<8x512xf32> to vector<8x512xbf16>
      %c0_71 = arith.constant 0 : index
      %c1024_72 = arith.constant 1024 : index
      %203 = vector.load %arg10[%c0_71, %c1024_72] : memref<8x8192xbf16, #tpu.memory_space<vmem>>, vector<8x512xbf16>
      tpu.vector_store %arg10[%c0_71, %c1024_72], %202 {strides = array<i32>} : memref<8x8192xbf16, #tpu.memory_space<vmem>>, vector<8x512xbf16>,
      %c3 = arith.constant 3 : index
      %c0_73 = arith.constant 0 : index
      %c0_74 = arith.constant 0 : index
      %204 = vector.load %arg11[%c3, %c0_73, %c0_74] : memref<16x16x512xf32, #tpu.memory_space<vmem>>, vector<1x16x512xf32>
      %205 = vector.shape_cast %204 : vector<1x16x512xf32> to vector<16x512xf32>
      %206 = vector.extract_strided_slice %205 {offsets = [0, 0], sizes = [1, 512], strides = [1, 1]} : vector<16x512xf32> to vector<1x512xf32>
      %207 = vector.extract_strided_slice %205 {offsets = [1, 0], sizes = [1, 512], strides = [1, 1]} : vector<16x512xf32> to vector<1x512xf32>
      %208 = vector.extract_strided_slice %205 {offsets = [2, 0], sizes = [1, 512], strides = [1, 1]} : vector<16x512xf32> to vector<1x512xf32>
      %209 = vector.extract_strided_slice %205 {offsets = [3, 0], sizes = [1, 512], strides = [1, 1]} : vector<16x512xf32> to vector<1x512xf32>
      %210 = vector.extract_strided_slice %205 {offsets = [4, 0], sizes = [1, 512], strides = [1, 1]} : vector<16x512xf32> to vector<1x512xf32>
      %211 = vector.extract_strided_slice %205 {offsets = [8, 0], sizes = [8, 512], strides = [1, 1]} : vector<16x512xf32> to vector<8x512xf32>
      %c0_75 = arith.constant 0 : index
      %c1536 = arith.constant 1536 : index
      %212 = vector.load %arg5[%c0_75, %c1536] : memref<1x8192xbf16, #tpu.memory_space<vmem>>, vector<1x512xbf16>
      %213 = arith.extf %212 : vector<1x512xbf16> to vector<1x512xf32>
      %c0_76 = arith.constant 0 : index
      %c1536_77 = arith.constant 1536 : index
      %214 = vector.load %arg6[%c0_76, %c1536_77] : memref<1x8192xbf16, #tpu.memory_space<vmem>>, vector<1x512xbf16>
      %215 = arith.extf %214 : vector<1x512xbf16> to vector<1x512xf32>
      %c0_78 = arith.constant 0 : index
      %c1536_79 = arith.constant 1536 : index
      %216 = vector.load %arg7[%c0_78, %c1536_79] : memref<8x8192xbf16, #tpu.memory_space<vmem>>, vector<8x512xbf16>
      %217 = arith.extf %216 : vector<8x512xbf16> to vector<8x512xf32>
      %cst_80 = arith.constant 0.000000e+00 : f32
      %218 = vector.broadcast %cst_80 : f32 to vector<1x512xf32>
      %219 = arith.cmpf ogt, %208, %218 : vector<1x512xf32>
      %220 = arith.addf %215, %207 : vector<1x512xf32>
      %221 = tpu.reciprocal %220 {approx = true} : vector<1x512xf32> -> vector<1x512xf32>
      %222 = arith.mulf %215, %213 : vector<1x512xf32>
      %223 = arith.addf %222, %206 : vector<1x512xf32>
      %224 = arith.mulf %223, %221 : vector<1x512xf32>
      %225 = arith.select %219, %224, %213 : vector<1x512xi1>, vector<1x512xf32>
      %cst_81 = arith.constant 0.000000e+00 : f32
      %cst_82 = arith.constant 2.550000e+02 : f32
      %226 = vector.broadcast %cst_81 : f32 to vector<1x512xf32>
      %227 = arith.maximumf %226, %220 : vector<1x512xf32>
      %228 = vector.broadcast %cst_82 : f32 to vector<1x512xf32>
      %229 = arith.minimumf %228, %227 : vector<1x512xf32>
      %230 = arith.select %219, %229, %215 : vector<1x512xi1>, vector<1x512xf32>
      %231 = vector.broadcast %215 : vector<1x512xf32> to vector<8x512xf32>
      %232 = arith.mulf %231, %217 : vector<8x512xf32>
      %233 = arith.addf %232, %211 : vector<8x512xf32>
      %234 = vector.broadcast %221 : vector<1x512xf32> to vector<8x512xf32>
      %235 = arith.mulf %233, %234 : vector<8x512xf32>
      %236 = vector.shape_cast %219 : vector<1x512xi1> to vector<1x512xi1>
      %237 = vector.broadcast %236 : vector<1x512xi1> to vector<8x512xi1>
      %238 = arith.select %237, %235, %217 : vector<8x512xi1>, vector<8x512xf32>
      %cst_83 = arith.constant 0.000000e+00 : f32
      %239 = vector.broadcast %cst_83 : f32 to vector<1x512xf32>
      %240 = arith.cmpf ogt, %210, %239 : vector<1x512xf32>
      %241 = arith.addf %215, %209 : vector<1x512xf32>
      %242 = tpu.reciprocal %241 {approx = true} : vector<1x512xf32> -> vector<1x512xf32>
      %243 = arith.mulf %215, %213 : vector<1x512xf32>
      %cst_84 = arith.constant 1.000000e-01 : f32
      %244 = vector.broadcast %cst_84 : f32 to vector<1x512xf32>
      %245 = arith.mulf %244, %209 : vector<1x512xf32>
      %246 = arith.addf %243, %245 : vector<1x512xf32>
      %247 = arith.mulf %246, %242 : vector<1x512xf32>
      %248 = arith.select %240, %247, %225 : vector<1x512xi1>, vector<1x512xf32>
      %cst_85 = arith.constant 0.000000e+00 : f32
      %cst_86 = arith.constant 2.550000e+02 : f32
      %249 = vector.broadcast %cst_85 : f32 to vector<1x512xf32>
      %250 = arith.maximumf %249, %241 : vector<1x512xf32>
      %251 = vector.broadcast %cst_86 : f32 to vector<1x512xf32>
      %252 = arith.minimumf %251, %250 : vector<1x512xf32>
      %253 = arith.select %240, %252, %230 : vector<1x512xi1>, vector<1x512xf32>
      %254 = arith.truncf %248 : vector<1x512xf32> to vector<1x512xbf16>
      %c0_87 = arith.constant 0 : index
      %c1536_88 = arith.constant 1536 : index
      %255 = vector.load %arg8[%c0_87, %c1536_88] : memref<1x8192xbf16, #tpu.memory_space<vmem>>, vector<1x512xbf16>
      tpu.vector_store %arg8[%c0_87, %c1536_88], %254 {strides = array<i32>} : memref<1x8192xbf16, #tpu.memory_space<vmem>>, vector<1x512xbf16>,
      %256 = arith.truncf %253 : vector<1x512xf32> to vector<1x512xbf16>
      %c0_89 = arith.constant 0 : index
      %c1536_90 = arith.constant 1536 : index
      %257 = vector.load %arg9[%c0_89, %c1536_90] : memref<1x8192xbf16, #tpu.memory_space<vmem>>, vector<1x512xbf16>
      tpu.vector_store %arg9[%c0_89, %c1536_90], %256 {strides = array<i32>} : memref<1x8192xbf16, #tpu.memory_space<vmem>>, vector<1x512xbf16>,
      %258 = arith.truncf %238 : vector<8x512xf32> to vector<8x512xbf16>
      %c0_91 = arith.constant 0 : index
      %c1536_92 = arith.constant 1536 : index
      %259 = vector.load %arg10[%c0_91, %c1536_92] : memref<8x8192xbf16, #tpu.memory_space<vmem>>, vector<8x512xbf16>
      tpu.vector_store %arg10[%c0_91, %c1536_92], %258 {strides = array<i32>} : memref<8x8192xbf16, #tpu.memory_space<vmem>>, vector<8x512xbf16>,
      %c4 = arith.constant 4 : index
      %c0_93 = arith.constant 0 : index
      %c0_94 = arith.constant 0 : index
      %260 = vector.load %arg11[%c4, %c0_93, %c0_94] : memref<16x16x512xf32, #tpu.memory_space<vmem>>, vector<1x16x512xf32>
      %261 = vector.shape_cast %260 : vector<1x16x512xf32> to vector<16x512xf32>
      %262 = vector.extract_strided_slice %261 {offsets = [0, 0], sizes = [1, 512], strides = [1, 1]} : vector<16x512xf32> to vector<1x512xf32>
      %263 = vector.extract_strided_slice %261 {offsets = [1, 0], sizes = [1, 512], strides = [1, 1]} : vector<16x512xf32> to vector<1x512xf32>
      %264 = vector.extract_strided_slice %261 {offsets = [2, 0], sizes = [1, 512], strides = [1, 1]} : vector<16x512xf32> to vector<1x512xf32>
      %265 = vector.extract_strided_slice %261 {offsets = [3, 0], sizes = [1, 512], strides = [1, 1]} : vector<16x512xf32> to vector<1x512xf32>
      %266 = vector.extract_strided_slice %261 {offsets = [4, 0], sizes = [1, 512], strides = [1, 1]} : vector<16x512xf32> to vector<1x512xf32>
      %267 = vector.extract_strided_slice %261 {offsets = [8, 0], sizes = [8, 512], strides = [1, 1]} : vector<16x512xf32> to vector<8x512xf32>
      %c0_95 = arith.constant 0 : index
      %c2048 = arith.constant 2048 : index
      %268 = vector.load %arg5[%c0_95, %c2048] : memref<1x8192xbf16, #tpu.memory_space<vmem>>, vector<1x512xbf16>
      %269 = arith.extf %268 : vector<1x512xbf16> to vector<1x512xf32>
      %c0_96 = arith.constant 0 : index
      %c2048_97 = arith.constant 2048 : index
      %270 = vector.load %arg6[%c0_96, %c2048_97] : memref<1x8192xbf16, #tpu.memory_space<vmem>>, vector<1x512xbf16>
      %271 = arith.extf %270 : vector<1x512xbf16> to vector<1x512xf32>
      %c0_98 = arith.constant 0 : index
      %c2048_99 = arith.constant 2048 : index
      %272 = vector.load %arg7[%c0_98, %c2048_99] : memref<8x8192xbf16, #tpu.memory_space<vmem>>, vector<8x512xbf16>
      %273 = arith.extf %272 : vector<8x512xbf16> to vector<8x512xf32>
      %cst_100 = arith.constant 0.000000e+00 : f32
      %274 = vector.broadcast %cst_100 : f32 to vector<1x512xf32>
      %275 = arith.cmpf ogt, %264, %274 : vector<1x512xf32>
      %276 = arith.addf %271, %263 : vector<1x512xf32>
      %277 = tpu.reciprocal %276 {approx = true} : vector<1x512xf32> -> vector<1x512xf32>
      %278 = arith.mulf %271, %269 : vector<1x512xf32>
      %279 = arith.addf %278, %262 : vector<1x512xf32>
      %280 = arith.mulf %279, %277 : vector<1x512xf32>
      %281 = arith.select %275, %280, %269 : vector<1x512xi1>, vector<1x512xf32>
      %cst_101 = arith.constant 0.000000e+00 : f32
      %cst_102 = arith.constant 2.550000e+02 : f32
      %282 = vector.broadcast %cst_101 : f32 to vector<1x512xf32>
      %283 = arith.maximumf %282, %276 : vector<1x512xf32>
      %284 = vector.broadcast %cst_102 : f32 to vector<1x512xf32>
      %285 = arith.minimumf %284, %283 : vector<1x512xf32>
      %286 = arith.select %275, %285, %271 : vector<1x512xi1>, vector<1x512xf32>
      %287 = vector.broadcast %271 : vector<1x512xf32> to vector<8x512xf32>
      %288 = arith.mulf %287, %273 : vector<8x512xf32>
      %289 = arith.addf %288, %267 : vector<8x512xf32>
      %290 = vector.broadcast %277 : vector<1x512xf32> to vector<8x512xf32>
      %291 = arith.mulf %289, %290 : vector<8x512xf32>
      %292 = vector.shape_cast %275 : vector<1x512xi1> to vector<1x512xi1>
      %293 = vector.broadcast %292 : vector<1x512xi1> to vector<8x512xi1>
      %294 = arith.select %293, %291, %273 : vector<8x512xi1>, vector<8x512xf32>
      %cst_103 = arith.constant 0.000000e+00 : f32
      %295 = vector.broadcast %cst_103 : f32 to vector<1x512xf32>
      %296 = arith.cmpf ogt, %266, %295 : vector<1x512xf32>
      %297 = arith.addf %271, %265 : vector<1x512xf32>
      %298 = tpu.reciprocal %297 {approx = true} : vector<1x512xf32> -> vector<1x512xf32>
      %299 = arith.mulf %271, %269 : vector<1x512xf32>
      %cst_104 = arith.constant 1.000000e-01 : f32
      %300 = vector.broadcast %cst_104 : f32 to vector<1x512xf32>
      %301 = arith.mulf %300, %265 : vector<1x512xf32>
      %302 = arith.addf %299, %301 : vector<1x512xf32>
      %303 = arith.mulf %302, %298 : vector<1x512xf32>
      %304 = arith.select %296, %303, %281 : vector<1x512xi1>, vector<1x512xf32>
      %cst_105 = arith.constant 0.000000e+00 : f32
      %cst_106 = arith.constant 2.550000e+02 : f32
      %305 = vector.broadcast %cst_105 : f32 to vector<1x512xf32>
      %306 = arith.maximumf %305, %297 : vector<1x512xf32>
      %307 = vector.broadcast %cst_106 : f32 to vector<1x512xf32>
      %308 = arith.minimumf %307, %306 : vector<1x512xf32>
      %309 = arith.select %296, %308, %286 : vector<1x512xi1>, vector<1x512xf32>
      %310 = arith.truncf %304 : vector<1x512xf32> to vector<1x512xbf16>
      %c0_107 = arith.constant 0 : index
      %c2048_108 = arith.constant 2048 : index
      %311 = vector.load %arg8[%c0_107, %c2048_108] : memref<1x8192xbf16, #tpu.memory_space<vmem>>, vector<1x512xbf16>
      tpu.vector_store %arg8[%c0_107, %c2048_108], %310 {strides = array<i32>} : memref<1x8192xbf16, #tpu.memory_space<vmem>>, vector<1x512xbf16>,
      %312 = arith.truncf %309 : vector<1x512xf32> to vector<1x512xbf16>
      %c0_109 = arith.constant 0 : index
      %c2048_110 = arith.constant 2048 : index
      %313 = vector.load %arg9[%c0_109, %c2048_110] : memref<1x8192xbf16, #tpu.memory_space<vmem>>, vector<1x512xbf16>
      tpu.vector_store %arg9[%c0_109, %c2048_110], %312 {strides = array<i32>} : memref<1x8192xbf16, #tpu.memory_space<vmem>>, vector<1x512xbf16>,
      %314 = arith.truncf %294 : vector<8x512xf32> to vector<8x512xbf16>
      %c0_111 = arith.constant 0 : index
      %c2048_112 = arith.constant 2048 : index
      %315 = vector.load %arg10[%c0_111, %c2048_112] : memref<8x8192xbf16, #tpu.memory_space<vmem>>, vector<8x512xbf16>
      tpu.vector_store %arg10[%c0_111, %c2048_112], %314 {strides = array<i32>} : memref<8x8192xbf16, #tpu.memory_space<vmem>>, vector<8x512xbf16>,
      %c5 = arith.constant 5 : index
      %c0_113 = arith.constant 0 : index
      %c0_114 = arith.constant 0 : index
      %316 = vector.load %arg11[%c5, %c0_113, %c0_114] : memref<16x16x512xf32, #tpu.memory_space<vmem>>, vector<1x16x512xf32>
      %317 = vector.shape_cast %316 : vector<1x16x512xf32> to vector<16x512xf32>
      %318 = vector.extract_strided_slice %317 {offsets = [0, 0], sizes = [1, 512], strides = [1, 1]} : vector<16x512xf32> to vector<1x512xf32>
      %319 = vector.extract_strided_slice %317 {offsets = [1, 0], sizes = [1, 512], strides = [1, 1]} : vector<16x512xf32> to vector<1x512xf32>
      %320 = vector.extract_strided_slice %317 {offsets = [2, 0], sizes = [1, 512], strides = [1, 1]} : vector<16x512xf32> to vector<1x512xf32>
      %321 = vector.extract_strided_slice %317 {offsets = [3, 0], sizes = [1, 512], strides = [1, 1]} : vector<16x512xf32> to vector<1x512xf32>
      %322 = vector.extract_strided_slice %317 {offsets = [4, 0], sizes = [1, 512], strides = [1, 1]} : vector<16x512xf32> to vector<1x512xf32>
      %323 = vector.extract_strided_slice %317 {offsets = [8, 0], sizes = [8, 512], strides = [1, 1]} : vector<16x512xf32> to vector<8x512xf32>
      %c0_115 = arith.constant 0 : index
      %c2560 = arith.constant 2560 : index
      %324 = vector.load %arg5[%c0_115, %c2560] : memref<1x8192xbf16, #tpu.memory_space<vmem>>, vector<1x512xbf16>
      %325 = arith.extf %324 : vector<1x512xbf16> to vector<1x512xf32>
      %c0_116 = arith.constant 0 : index
      %c2560_117 = arith.constant 2560 : index
      %326 = vector.load %arg6[%c0_116, %c2560_117] : memref<1x8192xbf16, #tpu.memory_space<vmem>>, vector<1x512xbf16>
      %327 = arith.extf %326 : vector<1x512xbf16> to vector<1x512xf32>
      %c0_118 = arith.constant 0 : index
      %c2560_119 = arith.constant 2560 : index
      %328 = vector.load %arg7[%c0_118, %c2560_119] : memref<8x8192xbf16, #tpu.memory_space<vmem>>, vector<8x512xbf16>
      %329 = arith.extf %328 : vector<8x512xbf16> to vector<8x512xf32>
      %cst_120 = arith.constant 0.000000e+00 : f32
      %330 = vector.broadcast %cst_120 : f32 to vector<1x512xf32>
      %331 = arith.cmpf ogt, %320, %330 : vector<1x512xf32>
      %332 = arith.addf %327, %319 : vector<1x512xf32>
      %333 = tpu.reciprocal %332 {approx = true} : vector<1x512xf32> -> vector<1x512xf32>
      %334 = arith.mulf %327, %325 : vector<1x512xf32>
      %335 = arith.addf %334, %318 : vector<1x512xf32>
      %336 = arith.mulf %335, %333 : vector<1x512xf32>
      %337 = arith.select %331, %336, %325 : vector<1x512xi1>, vector<1x512xf32>
      %cst_121 = arith.constant 0.000000e+00 : f32
      %cst_122 = arith.constant 2.550000e+02 : f32
      %338 = vector.broadcast %cst_121 : f32 to vector<1x512xf32>
      %339 = arith.maximumf %338, %332 : vector<1x512xf32>
      %340 = vector.broadcast %cst_122 : f32 to vector<1x512xf32>
      %341 = arith.minimumf %340, %339 : vector<1x512xf32>
      %342 = arith.select %331, %341, %327 : vector<1x512xi1>, vector<1x512xf32>
      %343 = vector.broadcast %327 : vector<1x512xf32> to vector<8x512xf32>
      %344 = arith.mulf %343, %329 : vector<8x512xf32>
      %345 = arith.addf %344, %323 : vector<8x512xf32>
      %346 = vector.broadcast %333 : vector<1x512xf32> to vector<8x512xf32>
      %347 = arith.mulf %345, %346 : vector<8x512xf32>
      %348 = vector.shape_cast %331 : vector<1x512xi1> to vector<1x512xi1>
      %349 = vector.broadcast %348 : vector<1x512xi1> to vector<8x512xi1>
      %350 = arith.select %349, %347, %329 : vector<8x512xi1>, vector<8x512xf32>
      %cst_123 = arith.constant 0.000000e+00 : f32
      %351 = vector.broadcast %cst_123 : f32 to vector<1x512xf32>
      %352 = arith.cmpf ogt, %322, %351 : vector<1x512xf32>
      %353 = arith.addf %327, %321 : vector<1x512xf32>
      %354 = tpu.reciprocal %353 {approx = true} : vector<1x512xf32> -> vector<1x512xf32>
      %355 = arith.mulf %327, %325 : vector<1x512xf32>
      %cst_124 = arith.constant 1.000000e-01 : f32
      %356 = vector.broadcast %cst_124 : f32 to vector<1x512xf32>
      %357 = arith.mulf %356, %321 : vector<1x512xf32>
      %358 = arith.addf %355, %357 : vector<1x512xf32>
      %359 = arith.mulf %358, %354 : vector<1x512xf32>
      %360 = arith.select %352, %359, %337 : vector<1x512xi1>, vector<1x512xf32>
      %cst_125 = arith.constant 0.000000e+00 : f32
      %cst_126 = arith.constant 2.550000e+02 : f32
      %361 = vector.broadcast %cst_125 : f32 to vector<1x512xf32>
      %362 = arith.maximumf %361, %353 : vector<1x512xf32>
      %363 = vector.broadcast %cst_126 : f32 to vector<1x512xf32>
      %364 = arith.minimumf %363, %362 : vector<1x512xf32>
      %365 = arith.select %352, %364, %342 : vector<1x512xi1>, vector<1x512xf32>
      %366 = arith.truncf %360 : vector<1x512xf32> to vector<1x512xbf16>
      %c0_127 = arith.constant 0 : index
      %c2560_128 = arith.constant 2560 : index
      %367 = vector.load %arg8[%c0_127, %c2560_128] : memref<1x8192xbf16, #tpu.memory_space<vmem>>, vector<1x512xbf16>
      tpu.vector_store %arg8[%c0_127, %c2560_128], %366 {strides = array<i32>} : memref<1x8192xbf16, #tpu.memory_space<vmem>>, vector<1x512xbf16>,
      %368 = arith.truncf %365 : vector<1x512xf32> to vector<1x512xbf16>
      %c0_129 = arith.constant 0 : index
      %c2560_130 = arith.constant 2560 : index
      %369 = vector.load %arg9[%c0_129, %c2560_130] : memref<1x8192xbf16, #tpu.memory_space<vmem>>, vector<1x512xbf16>
      tpu.vector_store %arg9[%c0_129, %c2560_130], %368 {strides = array<i32>} : memref<1x8192xbf16, #tpu.memory_space<vmem>>, vector<1x512xbf16>,
      %370 = arith.truncf %350 : vector<8x512xf32> to vector<8x512xbf16>
      %c0_131 = arith.constant 0 : index
      %c2560_132 = arith.constant 2560 : index
      %371 = vector.load %arg10[%c0_131, %c2560_132] : memref<8x8192xbf16, #tpu.memory_space<vmem>>, vector<8x512xbf16>
      tpu.vector_store %arg10[%c0_131, %c2560_132], %370 {strides = array<i32>} : memref<8x8192xbf16, #tpu.memory_space<vmem>>, vector<8x512xbf16>,
      %c6 = arith.constant 6 : index
      %c0_133 = arith.constant 0 : index
      %c0_134 = arith.constant 0 : index
      %372 = vector.load %arg11[%c6, %c0_133, %c0_134] : memref<16x16x512xf32, #tpu.memory_space<vmem>>, vector<1x16x512xf32>
      %373 = vector.shape_cast %372 : vector<1x16x512xf32> to vector<16x512xf32>
      %374 = vector.extract_strided_slice %373 {offsets = [0, 0], sizes = [1, 512], strides = [1, 1]} : vector<16x512xf32> to vector<1x512xf32>
      %375 = vector.extract_strided_slice %373 {offsets = [1, 0], sizes = [1, 512], strides = [1, 1]} : vector<16x512xf32> to vector<1x512xf32>
      %376 = vector.extract_strided_slice %373 {offsets = [2, 0], sizes = [1, 512], strides = [1, 1]} : vector<16x512xf32> to vector<1x512xf32>
      %377 = vector.extract_strided_slice %373 {offsets = [3, 0], sizes = [1, 512], strides = [1, 1]} : vector<16x512xf32> to vector<1x512xf32>
      %378 = vector.extract_strided_slice %373 {offsets = [4, 0], sizes = [1, 512], strides = [1, 1]} : vector<16x512xf32> to vector<1x512xf32>
      %379 = vector.extract_strided_slice %373 {offsets = [8, 0], sizes = [8, 512], strides = [1, 1]} : vector<16x512xf32> to vector<8x512xf32>
      %c0_135 = arith.constant 0 : index
      %c3072 = arith.constant 3072 : index
      %380 = vector.load %arg5[%c0_135, %c3072] : memref<1x8192xbf16, #tpu.memory_space<vmem>>, vector<1x512xbf16>
      %381 = arith.extf %380 : vector<1x512xbf16> to vector<1x512xf32>
      %c0_136 = arith.constant 0 : index
      %c3072_137 = arith.constant 3072 : index
      %382 = vector.load %arg6[%c0_136, %c3072_137] : memref<1x8192xbf16, #tpu.memory_space<vmem>>, vector<1x512xbf16>
      %383 = arith.extf %382 : vector<1x512xbf16> to vector<1x512xf32>
      %c0_138 = arith.constant 0 : index
      %c3072_139 = arith.constant 3072 : index
      %384 = vector.load %arg7[%c0_138, %c3072_139] : memref<8x8192xbf16, #tpu.memory_space<vmem>>, vector<8x512xbf16>
      %385 = arith.extf %384 : vector<8x512xbf16> to vector<8x512xf32>
      %cst_140 = arith.constant 0.000000e+00 : f32
      %386 = vector.broadcast %cst_140 : f32 to vector<1x512xf32>
      %387 = arith.cmpf ogt, %376, %386 : vector<1x512xf32>
      %388 = arith.addf %383, %375 : vector<1x512xf32>
      %389 = tpu.reciprocal %388 {approx = true} : vector<1x512xf32> -> vector<1x512xf32>
      %390 = arith.mulf %383, %381 : vector<1x512xf32>
      %391 = arith.addf %390, %374 : vector<1x512xf32>
      %392 = arith.mulf %391, %389 : vector<1x512xf32>
      %393 = arith.select %387, %392, %381 : vector<1x512xi1>, vector<1x512xf32>
      %cst_141 = arith.constant 0.000000e+00 : f32
      %cst_142 = arith.constant 2.550000e+02 : f32
      %394 = vector.broadcast %cst_141 : f32 to vector<1x512xf32>
      %395 = arith.maximumf %394, %388 : vector<1x512xf32>
      %396 = vector.broadcast %cst_142 : f32 to vector<1x512xf32>
      %397 = arith.minimumf %396, %395 : vector<1x512xf32>
      %398 = arith.select %387, %397, %383 : vector<1x512xi1>, vector<1x512xf32>
      %399 = vector.broadcast %383 : vector<1x512xf32> to vector<8x512xf32>
      %400 = arith.mulf %399, %385 : vector<8x512xf32>
      %401 = arith.addf %400, %379 : vector<8x512xf32>
      %402 = vector.broadcast %389 : vector<1x512xf32> to vector<8x512xf32>
      %403 = arith.mulf %401, %402 : vector<8x512xf32>
      %404 = vector.shape_cast %387 : vector<1x512xi1> to vector<1x512xi1>
      %405 = vector.broadcast %404 : vector<1x512xi1> to vector<8x512xi1>
      %406 = arith.select %405, %403, %385 : vector<8x512xi1>, vector<8x512xf32>
      %cst_143 = arith.constant 0.000000e+00 : f32
      %407 = vector.broadcast %cst_143 : f32 to vector<1x512xf32>
      %408 = arith.cmpf ogt, %378, %407 : vector<1x512xf32>
      %409 = arith.addf %383, %377 : vector<1x512xf32>
      %410 = tpu.reciprocal %409 {approx = true} : vector<1x512xf32> -> vector<1x512xf32>
      %411 = arith.mulf %383, %381 : vector<1x512xf32>
      %cst_144 = arith.constant 1.000000e-01 : f32
      %412 = vector.broadcast %cst_144 : f32 to vector<1x512xf32>
      %413 = arith.mulf %412, %377 : vector<1x512xf32>
      %414 = arith.addf %411, %413 : vector<1x512xf32>
      %415 = arith.mulf %414, %410 : vector<1x512xf32>
      %416 = arith.select %408, %415, %393 : vector<1x512xi1>, vector<1x512xf32>
      %cst_145 = arith.constant 0.000000e+00 : f32
      %cst_146 = arith.constant 2.550000e+02 : f32
      %417 = vector.broadcast %cst_145 : f32 to vector<1x512xf32>
      %418 = arith.maximumf %417, %409 : vector<1x512xf32>
      %419 = vector.broadcast %cst_146 : f32 to vector<1x512xf32>
      %420 = arith.minimumf %419, %418 : vector<1x512xf32>
      %421 = arith.select %408, %420, %398 : vector<1x512xi1>, vector<1x512xf32>
      %422 = arith.truncf %416 : vector<1x512xf32> to vector<1x512xbf16>
      %c0_147 = arith.constant 0 : index
      %c3072_148 = arith.constant 3072 : index
      %423 = vector.load %arg8[%c0_147, %c3072_148] : memref<1x8192xbf16, #tpu.memory_space<vmem>>, vector<1x512xbf16>
      tpu.vector_store %arg8[%c0_147, %c3072_148], %422 {strides = array<i32>} : memref<1x8192xbf16, #tpu.memory_space<vmem>>, vector<1x512xbf16>,
      %424 = arith.truncf %421 : vector<1x512xf32> to vector<1x512xbf16>
      %c0_149 = arith.constant 0 : index
      %c3072_150 = arith.constant 3072 : index
      %425 = vector.load %arg9[%c0_149, %c3072_150] : memref<1x8192xbf16, #tpu.memory_space<vmem>>, vector<1x512xbf16>
      tpu.vector_store %arg9[%c0_149, %c3072_150], %424 {strides = array<i32>} : memref<1x8192xbf16, #tpu.memory_space<vmem>>, vector<1x512xbf16>,
      %426 = arith.truncf %406 : vector<8x512xf32> to vector<8x512xbf16>
      %c0_151 = arith.constant 0 : index
      %c3072_152 = arith.constant 3072 : index
      %427 = vector.load %arg10[%c0_151, %c3072_152] : memref<8x8192xbf16, #tpu.memory_space<vmem>>, vector<8x512xbf16>
      tpu.vector_store %arg10[%c0_151, %c3072_152], %426 {strides = array<i32>} : memref<8x8192xbf16, #tpu.memory_space<vmem>>, vector<8x512xbf16>,
      %c7 = arith.constant 7 : index
      %c0_153 = arith.constant 0 : index
      %c0_154 = arith.constant 0 : index
      %428 = vector.load %arg11[%c7, %c0_153, %c0_154] : memref<16x16x512xf32, #tpu.memory_space<vmem>>, vector<1x16x512xf32>
      %429 = vector.shape_cast %428 : vector<1x16x512xf32> to vector<16x512xf32>
      %430 = vector.extract_strided_slice %429 {offsets = [0, 0], sizes = [1, 512], strides = [1, 1]} : vector<16x512xf32> to vector<1x512xf32>
      %431 = vector.extract_strided_slice %429 {offsets = [1, 0], sizes = [1, 512], strides = [1, 1]} : vector<16x512xf32> to vector<1x512xf32>
      %432 = vector.extract_strided_slice %429 {offsets = [2, 0], sizes = [1, 512], strides = [1, 1]} : vector<16x512xf32> to vector<1x512xf32>
      %433 = vector.extract_strided_slice %429 {offsets = [3, 0], sizes = [1, 512], strides = [1, 1]} : vector<16x512xf32> to vector<1x512xf32>
      %434 = vector.extract_strided_slice %429 {offsets = [4, 0], sizes = [1, 512], strides = [1, 1]} : vector<16x512xf32> to vector<1x512xf32>
      %435 = vector.extract_strided_slice %429 {offsets = [8, 0], sizes = [8, 512], strides = [1, 1]} : vector<16x512xf32> to vector<8x512xf32>
      %c0_155 = arith.constant 0 : index
      %c3584 = arith.constant 3584 : index
      %436 = vector.load %arg5[%c0_155, %c3584] : memref<1x8192xbf16, #tpu.memory_space<vmem>>, vector<1x512xbf16>
      %437 = arith.extf %436 : vector<1x512xbf16> to vector<1x512xf32>
      %c0_156 = arith.constant 0 : index
      %c3584_157 = arith.constant 3584 : index
      %438 = vector.load %arg6[%c0_156, %c3584_157] : memref<1x8192xbf16, #tpu.memory_space<vmem>>, vector<1x512xbf16>
      %439 = arith.extf %438 : vector<1x512xbf16> to vector<1x512xf32>
      %c0_158 = arith.constant 0 : index
      %c3584_159 = arith.constant 3584 : index
      %440 = vector.load %arg7[%c0_158, %c3584_159] : memref<8x8192xbf16, #tpu.memory_space<vmem>>, vector<8x512xbf16>
      %441 = arith.extf %440 : vector<8x512xbf16> to vector<8x512xf32>
      %cst_160 = arith.constant 0.000000e+00 : f32
      %442 = vector.broadcast %cst_160 : f32 to vector<1x512xf32>
      %443 = arith.cmpf ogt, %432, %442 : vector<1x512xf32>
      %444 = arith.addf %439, %431 : vector<1x512xf32>
      %445 = tpu.reciprocal %444 {approx = true} : vector<1x512xf32> -> vector<1x512xf32>
      %446 = arith.mulf %439, %437 : vector<1x512xf32>
      %447 = arith.addf %446, %430 : vector<1x512xf32>
      %448 = arith.mulf %447, %445 : vector<1x512xf32>
      %449 = arith.select %443, %448, %437 : vector<1x512xi1>, vector<1x512xf32>
      %cst_161 = arith.constant 0.000000e+00 : f32
      %cst_162 = arith.constant 2.550000e+02 : f32
      %450 = vector.broadcast %cst_161 : f32 to vector<1x512xf32>
      %451 = arith.maximumf %450, %444 : vector<1x512xf32>
      %452 = vector.broadcast %cst_162 : f32 to vector<1x512xf32>
      %453 = arith.minimumf %452, %451 : vector<1x512xf32>
      %454 = arith.select %443, %453, %439 : vector<1x512xi1>, vector<1x512xf32>
      %455 = vector.broadcast %439 : vector<1x512xf32> to vector<8x512xf32>
      %456 = arith.mulf %455, %441 : vector<8x512xf32>
      %457 = arith.addf %456, %435 : vector<8x512xf32>
      %458 = vector.broadcast %445 : vector<1x512xf32> to vector<8x512xf32>
      %459 = arith.mulf %457, %458 : vector<8x512xf32>
      %460 = vector.shape_cast %443 : vector<1x512xi1> to vector<1x512xi1>
      %461 = vector.broadcast %460 : vector<1x512xi1> to vector<8x512xi1>
      %462 = arith.select %461, %459, %441 : vector<8x512xi1>, vector<8x512xf32>
      %cst_163 = arith.constant 0.000000e+00 : f32
      %463 = vector.broadcast %cst_163 : f32 to vector<1x512xf32>
      %464 = arith.cmpf ogt, %434, %463 : vector<1x512xf32>
      %465 = arith.addf %439, %433 : vector<1x512xf32>
      %466 = tpu.reciprocal %465 {approx = true} : vector<1x512xf32> -> vector<1x512xf32>
      %467 = arith.mulf %439, %437 : vector<1x512xf32>
      %cst_164 = arith.constant 1.000000e-01 : f32
      %468 = vector.broadcast %cst_164 : f32 to vector<1x512xf32>
      %469 = arith.mulf %468, %433 : vector<1x512xf32>
      %470 = arith.addf %467, %469 : vector<1x512xf32>
      %471 = arith.mulf %470, %466 : vector<1x512xf32>
      %472 = arith.select %464, %471, %449 : vector<1x512xi1>, vector<1x512xf32>
      %cst_165 = arith.constant 0.000000e+00 : f32
      %cst_166 = arith.constant 2.550000e+02 : f32
      %473 = vector.broadcast %cst_165 : f32 to vector<1x512xf32>
      %474 = arith.maximumf %473, %465 : vector<1x512xf32>
      %475 = vector.broadcast %cst_166 : f32 to vector<1x512xf32>
      %476 = arith.minimumf %475, %474 : vector<1x512xf32>
      %477 = arith.select %464, %476, %454 : vector<1x512xi1>, vector<1x512xf32>
      %478 = arith.truncf %472 : vector<1x512xf32> to vector<1x512xbf16>
      %c0_167 = arith.constant 0 : index
      %c3584_168 = arith.constant 3584 : index
      %479 = vector.load %arg8[%c0_167, %c3584_168] : memref<1x8192xbf16, #tpu.memory_space<vmem>>, vector<1x512xbf16>
      tpu.vector_store %arg8[%c0_167, %c3584_168], %478 {strides = array<i32>} : memref<1x8192xbf16, #tpu.memory_space<vmem>>, vector<1x512xbf16>,
      %480 = arith.truncf %477 : vector<1x512xf32> to vector<1x512xbf16>
      %c0_169 = arith.constant 0 : index
      %c3584_170 = arith.constant 3584 : index
      %481 = vector.load %arg9[%c0_169, %c3584_170] : memref<1x8192xbf16, #tpu.memory_space<vmem>>, vector<1x512xbf16>
      tpu.vector_store %arg9[%c0_169, %c3584_170], %480 {strides = array<i32>} : memref<1x8192xbf16, #tpu.memory_space<vmem>>, vector<1x512xbf16>,
      %482 = arith.truncf %462 : vector<8x512xf32> to vector<8x512xbf16>
      %c0_171 = arith.constant 0 : index
      %c3584_172 = arith.constant 3584 : index
      %483 = vector.load %arg10[%c0_171, %c3584_172] : memref<8x8192xbf16, #tpu.memory_space<vmem>>, vector<8x512xbf16>
      tpu.vector_store %arg10[%c0_171, %c3584_172], %482 {strides = array<i32>} : memref<8x8192xbf16, #tpu.memory_space<vmem>>, vector<8x512xbf16>,
      %c8 = arith.constant 8 : index
      %c0_173 = arith.constant 0 : index
      %c0_174 = arith.constant 0 : index
      %484 = vector.load %arg11[%c8, %c0_173, %c0_174] : memref<16x16x512xf32, #tpu.memory_space<vmem>>, vector<1x16x512xf32>
      %485 = vector.shape_cast %484 : vector<1x16x512xf32> to vector<16x512xf32>
      %486 = vector.extract_strided_slice %485 {offsets = [0, 0], sizes = [1, 512], strides = [1, 1]} : vector<16x512xf32> to vector<1x512xf32>
      %487 = vector.extract_strided_slice %485 {offsets = [1, 0], sizes = [1, 512], strides = [1, 1]} : vector<16x512xf32> to vector<1x512xf32>
      %488 = vector.extract_strided_slice %485 {offsets = [2, 0], sizes = [1, 512], strides = [1, 1]} : vector<16x512xf32> to vector<1x512xf32>
      %489 = vector.extract_strided_slice %485 {offsets = [3, 0], sizes = [1, 512], strides = [1, 1]} : vector<16x512xf32> to vector<1x512xf32>
      %490 = vector.extract_strided_slice %485 {offsets = [4, 0], sizes = [1, 512], strides = [1, 1]} : vector<16x512xf32> to vector<1x512xf32>
      %491 = vector.extract_strided_slice %485 {offsets = [8, 0], sizes = [8, 512], strides = [1, 1]} : vector<16x512xf32> to vector<8x512xf32>
      %c0_175 = arith.constant 0 : index
      %c4096 = arith.constant 4096 : index
      %492 = vector.load %arg5[%c0_175, %c4096] : memref<1x8192xbf16, #tpu.memory_space<vmem>>, vector<1x512xbf16>
      %493 = arith.extf %492 : vector<1x512xbf16> to vector<1x512xf32>
      %c0_176 = arith.constant 0 : index
      %c4096_177 = arith.constant 4096 : index
      %494 = vector.load %arg6[%c0_176, %c4096_177] : memref<1x8192xbf16, #tpu.memory_space<vmem>>, vector<1x512xbf16>
      %495 = arith.extf %494 : vector<1x512xbf16> to vector<1x512xf32>
      %c0_178 = arith.constant 0 : index
      %c4096_179 = arith.constant 4096 : index
      %496 = vector.load %arg7[%c0_178, %c4096_179] : memref<8x8192xbf16, #tpu.memory_space<vmem>>, vector<8x512xbf16>
      %497 = arith.extf %496 : vector<8x512xbf16> to vector<8x512xf32>
      %cst_180 = arith.constant 0.000000e+00 : f32
      %498 = vector.broadcast %cst_180 : f32 to vector<1x512xf32>
      %499 = arith.cmpf ogt, %488, %498 : vector<1x512xf32>
      %500 = arith.addf %495, %487 : vector<1x512xf32>
      %501 = tpu.reciprocal %500 {approx = true} : vector<1x512xf32> -> vector<1x512xf32>
      %502 = arith.mulf %495, %493 : vector<1x512xf32>
      %503 = arith.addf %502, %486 : vector<1x512xf32>
      %504 = arith.mulf %503, %501 : vector<1x512xf32>
      %505 = arith.select %499, %504, %493 : vector<1x512xi1>, vector<1x512xf32>
      %cst_181 = arith.constant 0.000000e+00 : f32
      %cst_182 = arith.constant 2.550000e+02 : f32
      %506 = vector.broadcast %cst_181 : f32 to vector<1x512xf32>
      %507 = arith.maximumf %506, %500 : vector<1x512xf32>
      %508 = vector.broadcast %cst_182 : f32 to vector<1x512xf32>
      %509 = arith.minimumf %508, %507 : vector<1x512xf32>
      %510 = arith.select %499, %509, %495 : vector<1x512xi1>, vector<1x512xf32>
      %511 = vector.broadcast %495 : vector<1x512xf32> to vector<8x512xf32>
      %512 = arith.mulf %511, %497 : vector<8x512xf32>
      %513 = arith.addf %512, %491 : vector<8x512xf32>
      %514 = vector.broadcast %501 : vector<1x512xf32> to vector<8x512xf32>
      %515 = arith.mulf %513, %514 : vector<8x512xf32>
      %516 = vector.shape_cast %499 : vector<1x512xi1> to vector<1x512xi1>
      %517 = vector.broadcast %516 : vector<1x512xi1> to vector<8x512xi1>
      %518 = arith.select %517, %515, %497 : vector<8x512xi1>, vector<8x512xf32>
      %cst_183 = arith.constant 0.000000e+00 : f32
      %519 = vector.broadcast %cst_183 : f32 to vector<1x512xf32>
      %520 = arith.cmpf ogt, %490, %519 : vector<1x512xf32>
      %521 = arith.addf %495, %489 : vector<1x512xf32>
      %522 = tpu.reciprocal %521 {approx = true} : vector<1x512xf32> -> vector<1x512xf32>
      %523 = arith.mulf %495, %493 : vector<1x512xf32>
      %cst_184 = arith.constant 1.000000e-01 : f32
      %524 = vector.broadcast %cst_184 : f32 to vector<1x512xf32>
      %525 = arith.mulf %524, %489 : vector<1x512xf32>
      %526 = arith.addf %523, %525 : vector<1x512xf32>
      %527 = arith.mulf %526, %522 : vector<1x512xf32>
      %528 = arith.select %520, %527, %505 : vector<1x512xi1>, vector<1x512xf32>
      %cst_185 = arith.constant 0.000000e+00 : f32
      %cst_186 = arith.constant 2.550000e+02 : f32
      %529 = vector.broadcast %cst_185 : f32 to vector<1x512xf32>
      %530 = arith.maximumf %529, %521 : vector<1x512xf32>
      %531 = vector.broadcast %cst_186 : f32 to vector<1x512xf32>
      %532 = arith.minimumf %531, %530 : vector<1x512xf32>
      %533 = arith.select %520, %532, %510 : vector<1x512xi1>, vector<1x512xf32>
      %534 = arith.truncf %528 : vector<1x512xf32> to vector<1x512xbf16>
      %c0_187 = arith.constant 0 : index
      %c4096_188 = arith.constant 4096 : index
      %535 = vector.load %arg8[%c0_187, %c4096_188] : memref<1x8192xbf16, #tpu.memory_space<vmem>>, vector<1x512xbf16>
      tpu.vector_store %arg8[%c0_187, %c4096_188], %534 {strides = array<i32>} : memref<1x8192xbf16, #tpu.memory_space<vmem>>, vector<1x512xbf16>,
      %536 = arith.truncf %533 : vector<1x512xf32> to vector<1x512xbf16>
      %c0_189 = arith.constant 0 : index
      %c4096_190 = arith.constant 4096 : index
      %537 = vector.load %arg9[%c0_189, %c4096_190] : memref<1x8192xbf16, #tpu.memory_space<vmem>>, vector<1x512xbf16>
      tpu.vector_store %arg9[%c0_189, %c4096_190], %536 {strides = array<i32>} : memref<1x8192xbf16, #tpu.memory_space<vmem>>, vector<1x512xbf16>,
      %538 = arith.truncf %518 : vector<8x512xf32> to vector<8x512xbf16>
      %c0_191 = arith.constant 0 : index
      %c4096_192 = arith.constant 4096 : index
      %539 = vector.load %arg10[%c0_191, %c4096_192] : memref<8x8192xbf16, #tpu.memory_space<vmem>>, vector<8x512xbf16>
      tpu.vector_store %arg10[%c0_191, %c4096_192], %538 {strides = array<i32>} : memref<8x8192xbf16, #tpu.memory_space<vmem>>, vector<8x512xbf16>,
      %c9 = arith.constant 9 : index
      %c0_193 = arith.constant 0 : index
      %c0_194 = arith.constant 0 : index
      %540 = vector.load %arg11[%c9, %c0_193, %c0_194] : memref<16x16x512xf32, #tpu.memory_space<vmem>>, vector<1x16x512xf32>
      %541 = vector.shape_cast %540 : vector<1x16x512xf32> to vector<16x512xf32>
      %542 = vector.extract_strided_slice %541 {offsets = [0, 0], sizes = [1, 512], strides = [1, 1]} : vector<16x512xf32> to vector<1x512xf32>
      %543 = vector.extract_strided_slice %541 {offsets = [1, 0], sizes = [1, 512], strides = [1, 1]} : vector<16x512xf32> to vector<1x512xf32>
      %544 = vector.extract_strided_slice %541 {offsets = [2, 0], sizes = [1, 512], strides = [1, 1]} : vector<16x512xf32> to vector<1x512xf32>
      %545 = vector.extract_strided_slice %541 {offsets = [3, 0], sizes = [1, 512], strides = [1, 1]} : vector<16x512xf32> to vector<1x512xf32>
      %546 = vector.extract_strided_slice %541 {offsets = [4, 0], sizes = [1, 512], strides = [1, 1]} : vector<16x512xf32> to vector<1x512xf32>
      %547 = vector.extract_strided_slice %541 {offsets = [8, 0], sizes = [8, 512], strides = [1, 1]} : vector<16x512xf32> to vector<8x512xf32>
      %c0_195 = arith.constant 0 : index
      %c4608 = arith.constant 4608 : index
      %548 = vector.load %arg5[%c0_195, %c4608] : memref<1x8192xbf16, #tpu.memory_space<vmem>>, vector<1x512xbf16>
      %549 = arith.extf %548 : vector<1x512xbf16> to vector<1x512xf32>
      %c0_196 = arith.constant 0 : index
      %c4608_197 = arith.constant 4608 : index
      %550 = vector.load %arg6[%c0_196, %c4608_197] : memref<1x8192xbf16, #tpu.memory_space<vmem>>, vector<1x512xbf16>
      %551 = arith.extf %550 : vector<1x512xbf16> to vector<1x512xf32>
      %c0_198 = arith.constant 0 : index
      %c4608_199 = arith.constant 4608 : index
      %552 = vector.load %arg7[%c0_198, %c4608_199] : memref<8x8192xbf16, #tpu.memory_space<vmem>>, vector<8x512xbf16>
      %553 = arith.extf %552 : vector<8x512xbf16> to vector<8x512xf32>
      %cst_200 = arith.constant 0.000000e+00 : f32
      %554 = vector.broadcast %cst_200 : f32 to vector<1x512xf32>
      %555 = arith.cmpf ogt, %544, %554 : vector<1x512xf32>
      %556 = arith.addf %551, %543 : vector<1x512xf32>
      %557 = tpu.reciprocal %556 {approx = true} : vector<1x512xf32> -> vector<1x512xf32>
      %558 = arith.mulf %551, %549 : vector<1x512xf32>
      %559 = arith.addf %558, %542 : vector<1x512xf32>
      %560 = arith.mulf %559, %557 : vector<1x512xf32>
      %561 = arith.select %555, %560, %549 : vector<1x512xi1>, vector<1x512xf32>
      %cst_201 = arith.constant 0.000000e+00 : f32
      %cst_202 = arith.constant 2.550000e+02 : f32
      %562 = vector.broadcast %cst_201 : f32 to vector<1x512xf32>
      %563 = arith.maximumf %562, %556 : vector<1x512xf32>
      %564 = vector.broadcast %cst_202 : f32 to vector<1x512xf32>
      %565 = arith.minimumf %564, %563 : vector<1x512xf32>
      %566 = arith.select %555, %565, %551 : vector<1x512xi1>, vector<1x512xf32>
      %567 = vector.broadcast %551 : vector<1x512xf32> to vector<8x512xf32>
      %568 = arith.mulf %567, %553 : vector<8x512xf32>
      %569 = arith.addf %568, %547 : vector<8x512xf32>
      %570 = vector.broadcast %557 : vector<1x512xf32> to vector<8x512xf32>
      %571 = arith.mulf %569, %570 : vector<8x512xf32>
      %572 = vector.shape_cast %555 : vector<1x512xi1> to vector<1x512xi1>
      %573 = vector.broadcast %572 : vector<1x512xi1> to vector<8x512xi1>
      %574 = arith.select %573, %571, %553 : vector<8x512xi1>, vector<8x512xf32>
      %cst_203 = arith.constant 0.000000e+00 : f32
      %575 = vector.broadcast %cst_203 : f32 to vector<1x512xf32>
      %576 = arith.cmpf ogt, %546, %575 : vector<1x512xf32>
      %577 = arith.addf %551, %545 : vector<1x512xf32>
      %578 = tpu.reciprocal %577 {approx = true} : vector<1x512xf32> -> vector<1x512xf32>
      %579 = arith.mulf %551, %549 : vector<1x512xf32>
      %cst_204 = arith.constant 1.000000e-01 : f32
      %580 = vector.broadcast %cst_204 : f32 to vector<1x512xf32>
      %581 = arith.mulf %580, %545 : vector<1x512xf32>
      %582 = arith.addf %579, %581 : vector<1x512xf32>
      %583 = arith.mulf %582, %578 : vector<1x512xf32>
      %584 = arith.select %576, %583, %561 : vector<1x512xi1>, vector<1x512xf32>
      %cst_205 = arith.constant 0.000000e+00 : f32
      %cst_206 = arith.constant 2.550000e+02 : f32
      %585 = vector.broadcast %cst_205 : f32 to vector<1x512xf32>
      %586 = arith.maximumf %585, %577 : vector<1x512xf32>
      %587 = vector.broadcast %cst_206 : f32 to vector<1x512xf32>
      %588 = arith.minimumf %587, %586 : vector<1x512xf32>
      %589 = arith.select %576, %588, %566 : vector<1x512xi1>, vector<1x512xf32>
      %590 = arith.truncf %584 : vector<1x512xf32> to vector<1x512xbf16>
      %c0_207 = arith.constant 0 : index
      %c4608_208 = arith.constant 4608 : index
      %591 = vector.load %arg8[%c0_207, %c4608_208] : memref<1x8192xbf16, #tpu.memory_space<vmem>>, vector<1x512xbf16>
      tpu.vector_store %arg8[%c0_207, %c4608_208], %590 {strides = array<i32>} : memref<1x8192xbf16, #tpu.memory_space<vmem>>, vector<1x512xbf16>,
      %592 = arith.truncf %589 : vector<1x512xf32> to vector<1x512xbf16>
      %c0_209 = arith.constant 0 : index
      %c4608_210 = arith.constant 4608 : index
      %593 = vector.load %arg9[%c0_209, %c4608_210] : memref<1x8192xbf16, #tpu.memory_space<vmem>>, vector<1x512xbf16>
      tpu.vector_store %arg9[%c0_209, %c4608_210], %592 {strides = array<i32>} : memref<1x8192xbf16, #tpu.memory_space<vmem>>, vector<1x512xbf16>,
      %594 = arith.truncf %574 : vector<8x512xf32> to vector<8x512xbf16>
      %c0_211 = arith.constant 0 : index
      %c4608_212 = arith.constant 4608 : index
      %595 = vector.load %arg10[%c0_211, %c4608_212] : memref<8x8192xbf16, #tpu.memory_space<vmem>>, vector<8x512xbf16>
      tpu.vector_store %arg10[%c0_211, %c4608_212], %594 {strides = array<i32>} : memref<8x8192xbf16, #tpu.memory_space<vmem>>, vector<8x512xbf16>,
      %c10 = arith.constant 10 : index
      %c0_213 = arith.constant 0 : index
      %c0_214 = arith.constant 0 : index
      %596 = vector.load %arg11[%c10, %c0_213, %c0_214] : memref<16x16x512xf32, #tpu.memory_space<vmem>>, vector<1x16x512xf32>
      %597 = vector.shape_cast %596 : vector<1x16x512xf32> to vector<16x512xf32>
      %598 = vector.extract_strided_slice %597 {offsets = [0, 0], sizes = [1, 512], strides = [1, 1]} : vector<16x512xf32> to vector<1x512xf32>
      %599 = vector.extract_strided_slice %597 {offsets = [1, 0], sizes = [1, 512], strides = [1, 1]} : vector<16x512xf32> to vector<1x512xf32>
      %600 = vector.extract_strided_slice %597 {offsets = [2, 0], sizes = [1, 512], strides = [1, 1]} : vector<16x512xf32> to vector<1x512xf32>
      %601 = vector.extract_strided_slice %597 {offsets = [3, 0], sizes = [1, 512], strides = [1, 1]} : vector<16x512xf32> to vector<1x512xf32>
      %602 = vector.extract_strided_slice %597 {offsets = [4, 0], sizes = [1, 512], strides = [1, 1]} : vector<16x512xf32> to vector<1x512xf32>
      %603 = vector.extract_strided_slice %597 {offsets = [8, 0], sizes = [8, 512], strides = [1, 1]} : vector<16x512xf32> to vector<8x512xf32>
      %c0_215 = arith.constant 0 : index
      %c5120 = arith.constant 5120 : index
      %604 = vector.load %arg5[%c0_215, %c5120] : memref<1x8192xbf16, #tpu.memory_space<vmem>>, vector<1x512xbf16>
      %605 = arith.extf %604 : vector<1x512xbf16> to vector<1x512xf32>
      %c0_216 = arith.constant 0 : index
      %c5120_217 = arith.constant 5120 : index
      %606 = vector.load %arg6[%c0_216, %c5120_217] : memref<1x8192xbf16, #tpu.memory_space<vmem>>, vector<1x512xbf16>
      %607 = arith.extf %606 : vector<1x512xbf16> to vector<1x512xf32>
      %c0_218 = arith.constant 0 : index
      %c5120_219 = arith.constant 5120 : index
      %608 = vector.load %arg7[%c0_218, %c5120_219] : memref<8x8192xbf16, #tpu.memory_space<vmem>>, vector<8x512xbf16>
      %609 = arith.extf %608 : vector<8x512xbf16> to vector<8x512xf32>
      %cst_220 = arith.constant 0.000000e+00 : f32
      %610 = vector.broadcast %cst_220 : f32 to vector<1x512xf32>
      %611 = arith.cmpf ogt, %600, %610 : vector<1x512xf32>
      %612 = arith.addf %607, %599 : vector<1x512xf32>
      %613 = tpu.reciprocal %612 {approx = true} : vector<1x512xf32> -> vector<1x512xf32>
      %614 = arith.mulf %607, %605 : vector<1x512xf32>
      %615 = arith.addf %614, %598 : vector<1x512xf32>
      %616 = arith.mulf %615, %613 : vector<1x512xf32>
      %617 = arith.select %611, %616, %605 : vector<1x512xi1>, vector<1x512xf32>
      %cst_221 = arith.constant 0.000000e+00 : f32
      %cst_222 = arith.constant 2.550000e+02 : f32
      %618 = vector.broadcast %cst_221 : f32 to vector<1x512xf32>
      %619 = arith.maximumf %618, %612 : vector<1x512xf32>
      %620 = vector.broadcast %cst_222 : f32 to vector<1x512xf32>
      %621 = arith.minimumf %620, %619 : vector<1x512xf32>
      %622 = arith.select %611, %621, %607 : vector<1x512xi1>, vector<1x512xf32>
      %623 = vector.broadcast %607 : vector<1x512xf32> to vector<8x512xf32>
      %624 = arith.mulf %623, %609 : vector<8x512xf32>
      %625 = arith.addf %624, %603 : vector<8x512xf32>
      %626 = vector.broadcast %613 : vector<1x512xf32> to vector<8x512xf32>
      %627 = arith.mulf %625, %626 : vector<8x512xf32>
      %628 = vector.shape_cast %611 : vector<1x512xi1> to vector<1x512xi1>
      %629 = vector.broadcast %628 : vector<1x512xi1> to vector<8x512xi1>
      %630 = arith.select %629, %627, %609 : vector<8x512xi1>, vector<8x512xf32>
      %cst_223 = arith.constant 0.000000e+00 : f32
      %631 = vector.broadcast %cst_223 : f32 to vector<1x512xf32>
      %632 = arith.cmpf ogt, %602, %631 : vector<1x512xf32>
      %633 = arith.addf %607, %601 : vector<1x512xf32>
      %634 = tpu.reciprocal %633 {approx = true} : vector<1x512xf32> -> vector<1x512xf32>
      %635 = arith.mulf %607, %605 : vector<1x512xf32>
      %cst_224 = arith.constant 1.000000e-01 : f32
      %636 = vector.broadcast %cst_224 : f32 to vector<1x512xf32>
      %637 = arith.mulf %636, %601 : vector<1x512xf32>
      %638 = arith.addf %635, %637 : vector<1x512xf32>
      %639 = arith.mulf %638, %634 : vector<1x512xf32>
      %640 = arith.select %632, %639, %617 : vector<1x512xi1>, vector<1x512xf32>
      %cst_225 = arith.constant 0.000000e+00 : f32
      %cst_226 = arith.constant 2.550000e+02 : f32
      %641 = vector.broadcast %cst_225 : f32 to vector<1x512xf32>
      %642 = arith.maximumf %641, %633 : vector<1x512xf32>
      %643 = vector.broadcast %cst_226 : f32 to vector<1x512xf32>
      %644 = arith.minimumf %643, %642 : vector<1x512xf32>
      %645 = arith.select %632, %644, %622 : vector<1x512xi1>, vector<1x512xf32>
      %646 = arith.truncf %640 : vector<1x512xf32> to vector<1x512xbf16>
      %c0_227 = arith.constant 0 : index
      %c5120_228 = arith.constant 5120 : index
      %647 = vector.load %arg8[%c0_227, %c5120_228] : memref<1x8192xbf16, #tpu.memory_space<vmem>>, vector<1x512xbf16>
      tpu.vector_store %arg8[%c0_227, %c5120_228], %646 {strides = array<i32>} : memref<1x8192xbf16, #tpu.memory_space<vmem>>, vector<1x512xbf16>,
      %648 = arith.truncf %645 : vector<1x512xf32> to vector<1x512xbf16>
      %c0_229 = arith.constant 0 : index
      %c5120_230 = arith.constant 5120 : index
      %649 = vector.load %arg9[%c0_229, %c5120_230] : memref<1x8192xbf16, #tpu.memory_space<vmem>>, vector<1x512xbf16>
      tpu.vector_store %arg9[%c0_229, %c5120_230], %648 {strides = array<i32>} : memref<1x8192xbf16, #tpu.memory_space<vmem>>, vector<1x512xbf16>,
      %650 = arith.truncf %630 : vector<8x512xf32> to vector<8x512xbf16>
      %c0_231 = arith.constant 0 : index
      %c5120_232 = arith.constant 5120 : index
      %651 = vector.load %arg10[%c0_231, %c5120_232] : memref<8x8192xbf16, #tpu.memory_space<vmem>>, vector<8x512xbf16>
      tpu.vector_store %arg10[%c0_231, %c5120_232], %650 {strides = array<i32>} : memref<8x8192xbf16, #tpu.memory_space<vmem>>, vector<8x512xbf16>,
      %c11 = arith.constant 11 : index
      %c0_233 = arith.constant 0 : index
      %c0_234 = arith.constant 0 : index
      %652 = vector.load %arg11[%c11, %c0_233, %c0_234] : memref<16x16x512xf32, #tpu.memory_space<vmem>>, vector<1x16x512xf32>
      %653 = vector.shape_cast %652 : vector<1x16x512xf32> to vector<16x512xf32>
      %654 = vector.extract_strided_slice %653 {offsets = [0, 0], sizes = [1, 512], strides = [1, 1]} : vector<16x512xf32> to vector<1x512xf32>
      %655 = vector.extract_strided_slice %653 {offsets = [1, 0], sizes = [1, 512], strides = [1, 1]} : vector<16x512xf32> to vector<1x512xf32>
      %656 = vector.extract_strided_slice %653 {offsets = [2, 0], sizes = [1, 512], strides = [1, 1]} : vector<16x512xf32> to vector<1x512xf32>
      %657 = vector.extract_strided_slice %653 {offsets = [3, 0], sizes = [1, 512], strides = [1, 1]} : vector<16x512xf32> to vector<1x512xf32>
      %658 = vector.extract_strided_slice %653 {offsets = [4, 0], sizes = [1, 512], strides = [1, 1]} : vector<16x512xf32> to vector<1x512xf32>
      %659 = vector.extract_strided_slice %653 {offsets = [8, 0], sizes = [8, 512], strides = [1, 1]} : vector<16x512xf32> to vector<8x512xf32>
      %c0_235 = arith.constant 0 : index
      %c5632 = arith.constant 5632 : index
      %660 = vector.load %arg5[%c0_235, %c5632] : memref<1x8192xbf16, #tpu.memory_space<vmem>>, vector<1x512xbf16>
      %661 = arith.extf %660 : vector<1x512xbf16> to vector<1x512xf32>
      %c0_236 = arith.constant 0 : index
      %c5632_237 = arith.constant 5632 : index
      %662 = vector.load %arg6[%c0_236, %c5632_237] : memref<1x8192xbf16, #tpu.memory_space<vmem>>, vector<1x512xbf16>
      %663 = arith.extf %662 : vector<1x512xbf16> to vector<1x512xf32>
      %c0_238 = arith.constant 0 : index
      %c5632_239 = arith.constant 5632 : index
      %664 = vector.load %arg7[%c0_238, %c5632_239] : memref<8x8192xbf16, #tpu.memory_space<vmem>>, vector<8x512xbf16>
      %665 = arith.extf %664 : vector<8x512xbf16> to vector<8x512xf32>
      %cst_240 = arith.constant 0.000000e+00 : f32
      %666 = vector.broadcast %cst_240 : f32 to vector<1x512xf32>
      %667 = arith.cmpf ogt, %656, %666 : vector<1x512xf32>
      %668 = arith.addf %663, %655 : vector<1x512xf32>
      %669 = tpu.reciprocal %668 {approx = true} : vector<1x512xf32> -> vector<1x512xf32>
      %670 = arith.mulf %663, %661 : vector<1x512xf32>
      %671 = arith.addf %670, %654 : vector<1x512xf32>
      %672 = arith.mulf %671, %669 : vector<1x512xf32>
      %673 = arith.select %667, %672, %661 : vector<1x512xi1>, vector<1x512xf32>
      %cst_241 = arith.constant 0.000000e+00 : f32
      %cst_242 = arith.constant 2.550000e+02 : f32
      %674 = vector.broadcast %cst_241 : f32 to vector<1x512xf32>
      %675 = arith.maximumf %674, %668 : vector<1x512xf32>
      %676 = vector.broadcast %cst_242 : f32 to vector<1x512xf32>
      %677 = arith.minimumf %676, %675 : vector<1x512xf32>
      %678 = arith.select %667, %677, %663 : vector<1x512xi1>, vector<1x512xf32>
      %679 = vector.broadcast %663 : vector<1x512xf32> to vector<8x512xf32>
      %680 = arith.mulf %679, %665 : vector<8x512xf32>
      %681 = arith.addf %680, %659 : vector<8x512xf32>
      %682 = vector.broadcast %669 : vector<1x512xf32> to vector<8x512xf32>
      %683 = arith.mulf %681, %682 : vector<8x512xf32>
      %684 = vector.shape_cast %667 : vector<1x512xi1> to vector<1x512xi1>
      %685 = vector.broadcast %684 : vector<1x512xi1> to vector<8x512xi1>
      %686 = arith.select %685, %683, %665 : vector<8x512xi1>, vector<8x512xf32>
      %cst_243 = arith.constant 0.000000e+00 : f32
      %687 = vector.broadcast %cst_243 : f32 to vector<1x512xf32>
      %688 = arith.cmpf ogt, %658, %687 : vector<1x512xf32>
      %689 = arith.addf %663, %657 : vector<1x512xf32>
      %690 = tpu.reciprocal %689 {approx = true} : vector<1x512xf32> -> vector<1x512xf32>
      %691 = arith.mulf %663, %661 : vector<1x512xf32>
      %cst_244 = arith.constant 1.000000e-01 : f32
      %692 = vector.broadcast %cst_244 : f32 to vector<1x512xf32>
      %693 = arith.mulf %692, %657 : vector<1x512xf32>
      %694 = arith.addf %691, %693 : vector<1x512xf32>
      %695 = arith.mulf %694, %690 : vector<1x512xf32>
      %696 = arith.select %688, %695, %673 : vector<1x512xi1>, vector<1x512xf32>
      %cst_245 = arith.constant 0.000000e+00 : f32
      %cst_246 = arith.constant 2.550000e+02 : f32
      %697 = vector.broadcast %cst_245 : f32 to vector<1x512xf32>
      %698 = arith.maximumf %697, %689 : vector<1x512xf32>
      %699 = vector.broadcast %cst_246 : f32 to vector<1x512xf32>
      %700 = arith.minimumf %699, %698 : vector<1x512xf32>
      %701 = arith.select %688, %700, %678 : vector<1x512xi1>, vector<1x512xf32>
      %702 = arith.truncf %696 : vector<1x512xf32> to vector<1x512xbf16>
      %c0_247 = arith.constant 0 : index
      %c5632_248 = arith.constant 5632 : index
      %703 = vector.load %arg8[%c0_247, %c5632_248] : memref<1x8192xbf16, #tpu.memory_space<vmem>>, vector<1x512xbf16>
      tpu.vector_store %arg8[%c0_247, %c5632_248], %702 {strides = array<i32>} : memref<1x8192xbf16, #tpu.memory_space<vmem>>, vector<1x512xbf16>,
      %704 = arith.truncf %701 : vector<1x512xf32> to vector<1x512xbf16>
      %c0_249 = arith.constant 0 : index
      %c5632_250 = arith.constant 5632 : index
      %705 = vector.load %arg9[%c0_249, %c5632_250] : memref<1x8192xbf16, #tpu.memory_space<vmem>>, vector<1x512xbf16>
      tpu.vector_store %arg9[%c0_249, %c5632_250], %704 {strides = array<i32>} : memref<1x8192xbf16, #tpu.memory_space<vmem>>, vector<1x512xbf16>,
      %706 = arith.truncf %686 : vector<8x512xf32> to vector<8x512xbf16>
      %c0_251 = arith.constant 0 : index
      %c5632_252 = arith.constant 5632 : index
      %707 = vector.load %arg10[%c0_251, %c5632_252] : memref<8x8192xbf16, #tpu.memory_space<vmem>>, vector<8x512xbf16>
      tpu.vector_store %arg10[%c0_251, %c5632_252], %706 {strides = array<i32>} : memref<8x8192xbf16, #tpu.memory_space<vmem>>, vector<8x512xbf16>,
      %c12 = arith.constant 12 : index
      %c0_253 = arith.constant 0 : index
      %c0_254 = arith.constant 0 : index
      %708 = vector.load %arg11[%c12, %c0_253, %c0_254] : memref<16x16x512xf32, #tpu.memory_space<vmem>>, vector<1x16x512xf32>
      %709 = vector.shape_cast %708 : vector<1x16x512xf32> to vector<16x512xf32>
      %710 = vector.extract_strided_slice %709 {offsets = [0, 0], sizes = [1, 512], strides = [1, 1]} : vector<16x512xf32> to vector<1x512xf32>
      %711 = vector.extract_strided_slice %709 {offsets = [1, 0], sizes = [1, 512], strides = [1, 1]} : vector<16x512xf32> to vector<1x512xf32>
      %712 = vector.extract_strided_slice %709 {offsets = [2, 0], sizes = [1, 512], strides = [1, 1]} : vector<16x512xf32> to vector<1x512xf32>
      %713 = vector.extract_strided_slice %709 {offsets = [3, 0], sizes = [1, 512], strides = [1, 1]} : vector<16x512xf32> to vector<1x512xf32>
      %714 = vector.extract_strided_slice %709 {offsets = [4, 0], sizes = [1, 512], strides = [1, 1]} : vector<16x512xf32> to vector<1x512xf32>
      %715 = vector.extract_strided_slice %709 {offsets = [8, 0], sizes = [8, 512], strides = [1, 1]} : vector<16x512xf32> to vector<8x512xf32>
      %c0_255 = arith.constant 0 : index
      %c6144 = arith.constant 6144 : index
      %716 = vector.load %arg5[%c0_255, %c6144] : memref<1x8192xbf16, #tpu.memory_space<vmem>>, vector<1x512xbf16>
      %717 = arith.extf %716 : vector<1x512xbf16> to vector<1x512xf32>
      %c0_256 = arith.constant 0 : index
      %c6144_257 = arith.constant 6144 : index
      %718 = vector.load %arg6[%c0_256, %c6144_257] : memref<1x8192xbf16, #tpu.memory_space<vmem>>, vector<1x512xbf16>
      %719 = arith.extf %718 : vector<1x512xbf16> to vector<1x512xf32>
      %c0_258 = arith.constant 0 : index
      %c6144_259 = arith.constant 6144 : index
      %720 = vector.load %arg7[%c0_258, %c6144_259] : memref<8x8192xbf16, #tpu.memory_space<vmem>>, vector<8x512xbf16>
      %721 = arith.extf %720 : vector<8x512xbf16> to vector<8x512xf32>
      %cst_260 = arith.constant 0.000000e+00 : f32
      %722 = vector.broadcast %cst_260 : f32 to vector<1x512xf32>
      %723 = arith.cmpf ogt, %712, %722 : vector<1x512xf32>
      %724 = arith.addf %719, %711 : vector<1x512xf32>
      %725 = tpu.reciprocal %724 {approx = true} : vector<1x512xf32> -> vector<1x512xf32>
      %726 = arith.mulf %719, %717 : vector<1x512xf32>
      %727 = arith.addf %726, %710 : vector<1x512xf32>
      %728 = arith.mulf %727, %725 : vector<1x512xf32>
      %729 = arith.select %723, %728, %717 : vector<1x512xi1>, vector<1x512xf32>
      %cst_261 = arith.constant 0.000000e+00 : f32
      %cst_262 = arith.constant 2.550000e+02 : f32
      %730 = vector.broadcast %cst_261 : f32 to vector<1x512xf32>
      %731 = arith.maximumf %730, %724 : vector<1x512xf32>
      %732 = vector.broadcast %cst_262 : f32 to vector<1x512xf32>
      %733 = arith.minimumf %732, %731 : vector<1x512xf32>
      %734 = arith.select %723, %733, %719 : vector<1x512xi1>, vector<1x512xf32>
      %735 = vector.broadcast %719 : vector<1x512xf32> to vector<8x512xf32>
      %736 = arith.mulf %735, %721 : vector<8x512xf32>
      %737 = arith.addf %736, %715 : vector<8x512xf32>
      %738 = vector.broadcast %725 : vector<1x512xf32> to vector<8x512xf32>
      %739 = arith.mulf %737, %738 : vector<8x512xf32>
      %740 = vector.shape_cast %723 : vector<1x512xi1> to vector<1x512xi1>
      %741 = vector.broadcast %740 : vector<1x512xi1> to vector<8x512xi1>
      %742 = arith.select %741, %739, %721 : vector<8x512xi1>, vector<8x512xf32>
      %cst_263 = arith.constant 0.000000e+00 : f32
      %743 = vector.broadcast %cst_263 : f32 to vector<1x512xf32>
      %744 = arith.cmpf ogt, %714, %743 : vector<1x512xf32>
      %745 = arith.addf %719, %713 : vector<1x512xf32>
      %746 = tpu.reciprocal %745 {approx = true} : vector<1x512xf32> -> vector<1x512xf32>
      %747 = arith.mulf %719, %717 : vector<1x512xf32>
      %cst_264 = arith.constant 1.000000e-01 : f32
      %748 = vector.broadcast %cst_264 : f32 to vector<1x512xf32>
      %749 = arith.mulf %748, %713 : vector<1x512xf32>
      %750 = arith.addf %747, %749 : vector<1x512xf32>
      %751 = arith.mulf %750, %746 : vector<1x512xf32>
      %752 = arith.select %744, %751, %729 : vector<1x512xi1>, vector<1x512xf32>
      %cst_265 = arith.constant 0.000000e+00 : f32
      %cst_266 = arith.constant 2.550000e+02 : f32
      %753 = vector.broadcast %cst_265 : f32 to vector<1x512xf32>
      %754 = arith.maximumf %753, %745 : vector<1x512xf32>
      %755 = vector.broadcast %cst_266 : f32 to vector<1x512xf32>
      %756 = arith.minimumf %755, %754 : vector<1x512xf32>
      %757 = arith.select %744, %756, %734 : vector<1x512xi1>, vector<1x512xf32>
      %758 = arith.truncf %752 : vector<1x512xf32> to vector<1x512xbf16>
      %c0_267 = arith.constant 0 : index
      %c6144_268 = arith.constant 6144 : index
      %759 = vector.load %arg8[%c0_267, %c6144_268] : memref<1x8192xbf16, #tpu.memory_space<vmem>>, vector<1x512xbf16>
      tpu.vector_store %arg8[%c0_267, %c6144_268], %758 {strides = array<i32>} : memref<1x8192xbf16, #tpu.memory_space<vmem>>, vector<1x512xbf16>,
      %760 = arith.truncf %757 : vector<1x512xf32> to vector<1x512xbf16>
      %c0_269 = arith.constant 0 : index
      %c6144_270 = arith.constant 6144 : index
      %761 = vector.load %arg9[%c0_269, %c6144_270] : memref<1x8192xbf16, #tpu.memory_space<vmem>>, vector<1x512xbf16>
      tpu.vector_store %arg9[%c0_269, %c6144_270], %760 {strides = array<i32>} : memref<1x8192xbf16, #tpu.memory_space<vmem>>, vector<1x512xbf16>,
      %762 = arith.truncf %742 : vector<8x512xf32> to vector<8x512xbf16>
      %c0_271 = arith.constant 0 : index
      %c6144_272 = arith.constant 6144 : index
      %763 = vector.load %arg10[%c0_271, %c6144_272] : memref<8x8192xbf16, #tpu.memory_space<vmem>>, vector<8x512xbf16>
      tpu.vector_store %arg10[%c0_271, %c6144_272], %762 {strides = array<i32>} : memref<8x8192xbf16, #tpu.memory_space<vmem>>, vector<8x512xbf16>,
      %c13 = arith.constant 13 : index
      %c0_273 = arith.constant 0 : index
      %c0_274 = arith.constant 0 : index
      %764 = vector.load %arg11[%c13, %c0_273, %c0_274] : memref<16x16x512xf32, #tpu.memory_space<vmem>>, vector<1x16x512xf32>
      %765 = vector.shape_cast %764 : vector<1x16x512xf32> to vector<16x512xf32>
      %766 = vector.extract_strided_slice %765 {offsets = [0, 0], sizes = [1, 512], strides = [1, 1]} : vector<16x512xf32> to vector<1x512xf32>
      %767 = vector.extract_strided_slice %765 {offsets = [1, 0], sizes = [1, 512], strides = [1, 1]} : vector<16x512xf32> to vector<1x512xf32>
      %768 = vector.extract_strided_slice %765 {offsets = [2, 0], sizes = [1, 512], strides = [1, 1]} : vector<16x512xf32> to vector<1x512xf32>
      %769 = vector.extract_strided_slice %765 {offsets = [3, 0], sizes = [1, 512], strides = [1, 1]} : vector<16x512xf32> to vector<1x512xf32>
      %770 = vector.extract_strided_slice %765 {offsets = [4, 0], sizes = [1, 512], strides = [1, 1]} : vector<16x512xf32> to vector<1x512xf32>
      %771 = vector.extract_strided_slice %765 {offsets = [8, 0], sizes = [8, 512], strides = [1, 1]} : vector<16x512xf32> to vector<8x512xf32>
      %c0_275 = arith.constant 0 : index
      %c6656 = arith.constant 6656 : index
      %772 = vector.load %arg5[%c0_275, %c6656] : memref<1x8192xbf16, #tpu.memory_space<vmem>>, vector<1x512xbf16>
      %773 = arith.extf %772 : vector<1x512xbf16> to vector<1x512xf32>
      %c0_276 = arith.constant 0 : index
      %c6656_277 = arith.constant 6656 : index
      %774 = vector.load %arg6[%c0_276, %c6656_277] : memref<1x8192xbf16, #tpu.memory_space<vmem>>, vector<1x512xbf16>
      %775 = arith.extf %774 : vector<1x512xbf16> to vector<1x512xf32>
      %c0_278 = arith.constant 0 : index
      %c6656_279 = arith.constant 6656 : index
      %776 = vector.load %arg7[%c0_278, %c6656_279] : memref<8x8192xbf16, #tpu.memory_space<vmem>>, vector<8x512xbf16>
      %777 = arith.extf %776 : vector<8x512xbf16> to vector<8x512xf32>
      %cst_280 = arith.constant 0.000000e+00 : f32
      %778 = vector.broadcast %cst_280 : f32 to vector<1x512xf32>
      %779 = arith.cmpf ogt, %768, %778 : vector<1x512xf32>
      %780 = arith.addf %775, %767 : vector<1x512xf32>
      %781 = tpu.reciprocal %780 {approx = true} : vector<1x512xf32> -> vector<1x512xf32>
      %782 = arith.mulf %775, %773 : vector<1x512xf32>
      %783 = arith.addf %782, %766 : vector<1x512xf32>
      %784 = arith.mulf %783, %781 : vector<1x512xf32>
      %785 = arith.select %779, %784, %773 : vector<1x512xi1>, vector<1x512xf32>
      %cst_281 = arith.constant 0.000000e+00 : f32
      %cst_282 = arith.constant 2.550000e+02 : f32
      %786 = vector.broadcast %cst_281 : f32 to vector<1x512xf32>
      %787 = arith.maximumf %786, %780 : vector<1x512xf32>
      %788 = vector.broadcast %cst_282 : f32 to vector<1x512xf32>
      %789 = arith.minimumf %788, %787 : vector<1x512xf32>
      %790 = arith.select %779, %789, %775 : vector<1x512xi1>, vector<1x512xf32>
      %791 = vector.broadcast %775 : vector<1x512xf32> to vector<8x512xf32>
      %792 = arith.mulf %791, %777 : vector<8x512xf32>
      %793 = arith.addf %792, %771 : vector<8x512xf32>
      %794 = vector.broadcast %781 : vector<1x512xf32> to vector<8x512xf32>
      %795 = arith.mulf %793, %794 : vector<8x512xf32>
      %796 = vector.shape_cast %779 : vector<1x512xi1> to vector<1x512xi1>
      %797 = vector.broadcast %796 : vector<1x512xi1> to vector<8x512xi1>
      %798 = arith.select %797, %795, %777 : vector<8x512xi1>, vector<8x512xf32>
      %cst_283 = arith.constant 0.000000e+00 : f32
      %799 = vector.broadcast %cst_283 : f32 to vector<1x512xf32>
      %800 = arith.cmpf ogt, %770, %799 : vector<1x512xf32>
      %801 = arith.addf %775, %769 : vector<1x512xf32>
      %802 = tpu.reciprocal %801 {approx = true} : vector<1x512xf32> -> vector<1x512xf32>
      %803 = arith.mulf %775, %773 : vector<1x512xf32>
      %cst_284 = arith.constant 1.000000e-01 : f32
      %804 = vector.broadcast %cst_284 : f32 to vector<1x512xf32>
      %805 = arith.mulf %804, %769 : vector<1x512xf32>
      %806 = arith.addf %803, %805 : vector<1x512xf32>
      %807 = arith.mulf %806, %802 : vector<1x512xf32>
      %808 = arith.select %800, %807, %785 : vector<1x512xi1>, vector<1x512xf32>
      %cst_285 = arith.constant 0.000000e+00 : f32
      %cst_286 = arith.constant 2.550000e+02 : f32
      %809 = vector.broadcast %cst_285 : f32 to vector<1x512xf32>
      %810 = arith.maximumf %809, %801 : vector<1x512xf32>
      %811 = vector.broadcast %cst_286 : f32 to vector<1x512xf32>
      %812 = arith.minimumf %811, %810 : vector<1x512xf32>
      %813 = arith.select %800, %812, %790 : vector<1x512xi1>, vector<1x512xf32>
      %814 = arith.truncf %808 : vector<1x512xf32> to vector<1x512xbf16>
      %c0_287 = arith.constant 0 : index
      %c6656_288 = arith.constant 6656 : index
      %815 = vector.load %arg8[%c0_287, %c6656_288] : memref<1x8192xbf16, #tpu.memory_space<vmem>>, vector<1x512xbf16>
      tpu.vector_store %arg8[%c0_287, %c6656_288], %814 {strides = array<i32>} : memref<1x8192xbf16, #tpu.memory_space<vmem>>, vector<1x512xbf16>,
      %816 = arith.truncf %813 : vector<1x512xf32> to vector<1x512xbf16>
      %c0_289 = arith.constant 0 : index
      %c6656_290 = arith.constant 6656 : index
      %817 = vector.load %arg9[%c0_289, %c6656_290] : memref<1x8192xbf16, #tpu.memory_space<vmem>>, vector<1x512xbf16>
      tpu.vector_store %arg9[%c0_289, %c6656_290], %816 {strides = array<i32>} : memref<1x8192xbf16, #tpu.memory_space<vmem>>, vector<1x512xbf16>,
      %818 = arith.truncf %798 : vector<8x512xf32> to vector<8x512xbf16>
      %c0_291 = arith.constant 0 : index
      %c6656_292 = arith.constant 6656 : index
      %819 = vector.load %arg10[%c0_291, %c6656_292] : memref<8x8192xbf16, #tpu.memory_space<vmem>>, vector<8x512xbf16>
      tpu.vector_store %arg10[%c0_291, %c6656_292], %818 {strides = array<i32>} : memref<8x8192xbf16, #tpu.memory_space<vmem>>, vector<8x512xbf16>,
      %c14 = arith.constant 14 : index
      %c0_293 = arith.constant 0 : index
      %c0_294 = arith.constant 0 : index
      %820 = vector.load %arg11[%c14, %c0_293, %c0_294] : memref<16x16x512xf32, #tpu.memory_space<vmem>>, vector<1x16x512xf32>
      %821 = vector.shape_cast %820 : vector<1x16x512xf32> to vector<16x512xf32>
      %822 = vector.extract_strided_slice %821 {offsets = [0, 0], sizes = [1, 512], strides = [1, 1]} : vector<16x512xf32> to vector<1x512xf32>
      %823 = vector.extract_strided_slice %821 {offsets = [1, 0], sizes = [1, 512], strides = [1, 1]} : vector<16x512xf32> to vector<1x512xf32>
      %824 = vector.extract_strided_slice %821 {offsets = [2, 0], sizes = [1, 512], strides = [1, 1]} : vector<16x512xf32> to vector<1x512xf32>
      %825 = vector.extract_strided_slice %821 {offsets = [3, 0], sizes = [1, 512], strides = [1, 1]} : vector<16x512xf32> to vector<1x512xf32>
      %826 = vector.extract_strided_slice %821 {offsets = [4, 0], sizes = [1, 512], strides = [1, 1]} : vector<16x512xf32> to vector<1x512xf32>
      %827 = vector.extract_strided_slice %821 {offsets = [8, 0], sizes = [8, 512], strides = [1, 1]} : vector<16x512xf32> to vector<8x512xf32>
      %c0_295 = arith.constant 0 : index
      %c7168 = arith.constant 7168 : index
      %828 = vector.load %arg5[%c0_295, %c7168] : memref<1x8192xbf16, #tpu.memory_space<vmem>>, vector<1x512xbf16>
      %829 = arith.extf %828 : vector<1x512xbf16> to vector<1x512xf32>
      %c0_296 = arith.constant 0 : index
      %c7168_297 = arith.constant 7168 : index
      %830 = vector.load %arg6[%c0_296, %c7168_297] : memref<1x8192xbf16, #tpu.memory_space<vmem>>, vector<1x512xbf16>
      %831 = arith.extf %830 : vector<1x512xbf16> to vector<1x512xf32>
      %c0_298 = arith.constant 0 : index
      %c7168_299 = arith.constant 7168 : index
      %832 = vector.load %arg7[%c0_298, %c7168_299] : memref<8x8192xbf16, #tpu.memory_space<vmem>>, vector<8x512xbf16>
      %833 = arith.extf %832 : vector<8x512xbf16> to vector<8x512xf32>
      %cst_300 = arith.constant 0.000000e+00 : f32
      %834 = vector.broadcast %cst_300 : f32 to vector<1x512xf32>
      %835 = arith.cmpf ogt, %824, %834 : vector<1x512xf32>
      %836 = arith.addf %831, %823 : vector<1x512xf32>
      %837 = tpu.reciprocal %836 {approx = true} : vector<1x512xf32> -> vector<1x512xf32>
      %838 = arith.mulf %831, %829 : vector<1x512xf32>
      %839 = arith.addf %838, %822 : vector<1x512xf32>
      %840 = arith.mulf %839, %837 : vector<1x512xf32>
      %841 = arith.select %835, %840, %829 : vector<1x512xi1>, vector<1x512xf32>
      %cst_301 = arith.constant 0.000000e+00 : f32
      %cst_302 = arith.constant 2.550000e+02 : f32
      %842 = vector.broadcast %cst_301 : f32 to vector<1x512xf32>
      %843 = arith.maximumf %842, %836 : vector<1x512xf32>
      %844 = vector.broadcast %cst_302 : f32 to vector<1x512xf32>
      %845 = arith.minimumf %844, %843 : vector<1x512xf32>
      %846 = arith.select %835, %845, %831 : vector<1x512xi1>, vector<1x512xf32>
      %847 = vector.broadcast %831 : vector<1x512xf32> to vector<8x512xf32>
      %848 = arith.mulf %847, %833 : vector<8x512xf32>
      %849 = arith.addf %848, %827 : vector<8x512xf32>
      %850 = vector.broadcast %837 : vector<1x512xf32> to vector<8x512xf32>
      %851 = arith.mulf %849, %850 : vector<8x512xf32>
      %852 = vector.shape_cast %835 : vector<1x512xi1> to vector<1x512xi1>
      %853 = vector.broadcast %852 : vector<1x512xi1> to vector<8x512xi1>
      %854 = arith.select %853, %851, %833 : vector<8x512xi1>, vector<8x512xf32>
      %cst_303 = arith.constant 0.000000e+00 : f32
      %855 = vector.broadcast %cst_303 : f32 to vector<1x512xf32>
      %856 = arith.cmpf ogt, %826, %855 : vector<1x512xf32>
      %857 = arith.addf %831, %825 : vector<1x512xf32>
      %858 = tpu.reciprocal %857 {approx = true} : vector<1x512xf32> -> vector<1x512xf32>
      %859 = arith.mulf %831, %829 : vector<1x512xf32>
      %cst_304 = arith.constant 1.000000e-01 : f32
      %860 = vector.broadcast %cst_304 : f32 to vector<1x512xf32>
      %861 = arith.mulf %860, %825 : vector<1x512xf32>
      %862 = arith.addf %859, %861 : vector<1x512xf32>
      %863 = arith.mulf %862, %858 : vector<1x512xf32>
      %864 = arith.select %856, %863, %841 : vector<1x512xi1>, vector<1x512xf32>
      %cst_305 = arith.constant 0.000000e+00 : f32
      %cst_306 = arith.constant 2.550000e+02 : f32
      %865 = vector.broadcast %cst_305 : f32 to vector<1x512xf32>
      %866 = arith.maximumf %865, %857 : vector<1x512xf32>
      %867 = vector.broadcast %cst_306 : f32 to vector<1x512xf32>
      %868 = arith.minimumf %867, %866 : vector<1x512xf32>
      %869 = arith.select %856, %868, %846 : vector<1x512xi1>, vector<1x512xf32>
      %870 = arith.truncf %864 : vector<1x512xf32> to vector<1x512xbf16>
      %c0_307 = arith.constant 0 : index
      %c7168_308 = arith.constant 7168 : index
      %871 = vector.load %arg8[%c0_307, %c7168_308] : memref<1x8192xbf16, #tpu.memory_space<vmem>>, vector<1x512xbf16>
      tpu.vector_store %arg8[%c0_307, %c7168_308], %870 {strides = array<i32>} : memref<1x8192xbf16, #tpu.memory_space<vmem>>, vector<1x512xbf16>,
      %872 = arith.truncf %869 : vector<1x512xf32> to vector<1x512xbf16>
      %c0_309 = arith.constant 0 : index
      %c7168_310 = arith.constant 7168 : index
      %873 = vector.load %arg9[%c0_309, %c7168_310] : memref<1x8192xbf16, #tpu.memory_space<vmem>>, vector<1x512xbf16>
      tpu.vector_store %arg9[%c0_309, %c7168_310], %872 {strides = array<i32>} : memref<1x8192xbf16, #tpu.memory_space<vmem>>, vector<1x512xbf16>,
      %874 = arith.truncf %854 : vector<8x512xf32> to vector<8x512xbf16>
      %c0_311 = arith.constant 0 : index
      %c7168_312 = arith.constant 7168 : index
      %875 = vector.load %arg10[%c0_311, %c7168_312] : memref<8x8192xbf16, #tpu.memory_space<vmem>>, vector<8x512xbf16>
      tpu.vector_store %arg10[%c0_311, %c7168_312], %874 {strides = array<i32>} : memref<8x8192xbf16, #tpu.memory_space<vmem>>, vector<8x512xbf16>,
      %c15 = arith.constant 15 : index
      %c0_313 = arith.constant 0 : index
      %c0_314 = arith.constant 0 : index
      %876 = vector.load %arg11[%c15, %c0_313, %c0_314] : memref<16x16x512xf32, #tpu.memory_space<vmem>>, vector<1x16x512xf32>
      %877 = vector.shape_cast %876 : vector<1x16x512xf32> to vector<16x512xf32>
      %878 = vector.extract_strided_slice %877 {offsets = [0, 0], sizes = [1, 512], strides = [1, 1]} : vector<16x512xf32> to vector<1x512xf32>
      %879 = vector.extract_strided_slice %877 {offsets = [1, 0], sizes = [1, 512], strides = [1, 1]} : vector<16x512xf32> to vector<1x512xf32>
      %880 = vector.extract_strided_slice %877 {offsets = [2, 0], sizes = [1, 512], strides = [1, 1]} : vector<16x512xf32> to vector<1x512xf32>
      %881 = vector.extract_strided_slice %877 {offsets = [3, 0], sizes = [1, 512], strides = [1, 1]} : vector<16x512xf32> to vector<1x512xf32>
      %882 = vector.extract_strided_slice %877 {offsets = [4, 0], sizes = [1, 512], strides = [1, 1]} : vector<16x512xf32> to vector<1x512xf32>
      %883 = vector.extract_strided_slice %877 {offsets = [8, 0], sizes = [8, 512], strides = [1, 1]} : vector<16x512xf32> to vector<8x512xf32>
      %c0_315 = arith.constant 0 : index
      %c7680 = arith.constant 7680 : index
      %884 = vector.load %arg5[%c0_315, %c7680] : memref<1x8192xbf16, #tpu.memory_space<vmem>>, vector<1x512xbf16>
      %885 = arith.extf %884 : vector<1x512xbf16> to vector<1x512xf32>
      %c0_316 = arith.constant 0 : index
      %c7680_317 = arith.constant 7680 : index
      %886 = vector.load %arg6[%c0_316, %c7680_317] : memref<1x8192xbf16, #tpu.memory_space<vmem>>, vector<1x512xbf16>
      %887 = arith.extf %886 : vector<1x512xbf16> to vector<1x512xf32>
      %c0_318 = arith.constant 0 : index
      %c7680_319 = arith.constant 7680 : index
      %888 = vector.load %arg7[%c0_318, %c7680_319] : memref<8x8192xbf16, #tpu.memory_space<vmem>>, vector<8x512xbf16>
      %889 = arith.extf %888 : vector<8x512xbf16> to vector<8x512xf32>
      %cst_320 = arith.constant 0.000000e+00 : f32
      %890 = vector.broadcast %cst_320 : f32 to vector<1x512xf32>
      %891 = arith.cmpf ogt, %880, %890 : vector<1x512xf32>
      %892 = arith.addf %887, %879 : vector<1x512xf32>
      %893 = tpu.reciprocal %892 {approx = true} : vector<1x512xf32> -> vector<1x512xf32>
      %894 = arith.mulf %887, %885 : vector<1x512xf32>
      %895 = arith.addf %894, %878 : vector<1x512xf32>
      %896 = arith.mulf %895, %893 : vector<1x512xf32>
      %897 = arith.select %891, %896, %885 : vector<1x512xi1>, vector<1x512xf32>
      %cst_321 = arith.constant 0.000000e+00 : f32
      %cst_322 = arith.constant 2.550000e+02 : f32
      %898 = vector.broadcast %cst_321 : f32 to vector<1x512xf32>
      %899 = arith.maximumf %898, %892 : vector<1x512xf32>
      %900 = vector.broadcast %cst_322 : f32 to vector<1x512xf32>
      %901 = arith.minimumf %900, %899 : vector<1x512xf32>
      %902 = arith.select %891, %901, %887 : vector<1x512xi1>, vector<1x512xf32>
      %903 = vector.broadcast %887 : vector<1x512xf32> to vector<8x512xf32>
      %904 = arith.mulf %903, %889 : vector<8x512xf32>
      %905 = arith.addf %904, %883 : vector<8x512xf32>
      %906 = vector.broadcast %893 : vector<1x512xf32> to vector<8x512xf32>
      %907 = arith.mulf %905, %906 : vector<8x512xf32>
      %908 = vector.shape_cast %891 : vector<1x512xi1> to vector<1x512xi1>
      %909 = vector.broadcast %908 : vector<1x512xi1> to vector<8x512xi1>
      %910 = arith.select %909, %907, %889 : vector<8x512xi1>, vector<8x512xf32>
      %cst_323 = arith.constant 0.000000e+00 : f32
      %911 = vector.broadcast %cst_323 : f32 to vector<1x512xf32>
      %912 = arith.cmpf ogt, %882, %911 : vector<1x512xf32>
      %913 = arith.addf %887, %881 : vector<1x512xf32>
      %914 = tpu.reciprocal %913 {approx = true} : vector<1x512xf32> -> vector<1x512xf32>
      %915 = arith.mulf %887, %885 : vector<1x512xf32>
      %cst_324 = arith.constant 1.000000e-01 : f32
      %916 = vector.broadcast %cst_324 : f32 to vector<1x512xf32>
      %917 = arith.mulf %916, %881 : vector<1x512xf32>
      %918 = arith.addf %915, %917 : vector<1x512xf32>
      %919 = arith.mulf %918, %914 : vector<1x512xf32>
      %920 = arith.select %912, %919, %897 : vector<1x512xi1>, vector<1x512xf32>
      %cst_325 = arith.constant 0.000000e+00 : f32
      %cst_326 = arith.constant 2.550000e+02 : f32
      %921 = vector.broadcast %cst_325 : f32 to vector<1x512xf32>
      %922 = arith.maximumf %921, %913 : vector<1x512xf32>
      %923 = vector.broadcast %cst_326 : f32 to vector<1x512xf32>
      %924 = arith.minimumf %923, %922 : vector<1x512xf32>
      %925 = arith.select %912, %924, %902 : vector<1x512xi1>, vector<1x512xf32>
      %926 = arith.truncf %920 : vector<1x512xf32> to vector<1x512xbf16>
      %c0_327 = arith.constant 0 : index
      %c7680_328 = arith.constant 7680 : index
      %927 = vector.load %arg8[%c0_327, %c7680_328] : memref<1x8192xbf16, #tpu.memory_space<vmem>>, vector<1x512xbf16>
      tpu.vector_store %arg8[%c0_327, %c7680_328], %926 {strides = array<i32>} : memref<1x8192xbf16, #tpu.memory_space<vmem>>, vector<1x512xbf16>,
      %928 = arith.truncf %925 : vector<1x512xf32> to vector<1x512xbf16>
      %c0_329 = arith.constant 0 : index
      %c7680_330 = arith.constant 7680 : index
      %929 = vector.load %arg9[%c0_329, %c7680_330] : memref<1x8192xbf16, #tpu.memory_space<vmem>>, vector<1x512xbf16>
      tpu.vector_store %arg9[%c0_329, %c7680_330], %928 {strides = array<i32>} : memref<1x8192xbf16, #tpu.memory_space<vmem>>, vector<1x512xbf16>,
      %930 = arith.truncf %910 : vector<8x512xf32> to vector<8x512xbf16>
      %c0_331 = arith.constant 0 : index
      %c7680_332 = arith.constant 7680 : index
      %931 = vector.load %arg10[%c0_331, %c7680_332] : memref<8x8192xbf16, #tpu.memory_space<vmem>>, vector<8x512xbf16>
      tpu.vector_store %arg10[%c0_331, %c7680_332], %930 {strides = array<i32>} : memref<8x8192xbf16, #tpu.memory_space<vmem>>, vector<8x512xbf16>,
    } else {
    }
    return
  }
  func.func @transform_0(%arg0: i32, %arg1: memref<72xi32, #tpu.memory_space<smem>>, %arg2: memref<71xi32, #tpu.memory_space<smem>>) -> (i32, i32) {
    %c0_i32 = arith.constant 0 : i32
    %c0_i32_0 = arith.constant 0 : i32
    return %arg0, %c0_i32 : i32, i32
  }
  func.func @transform_1(%arg0: i32, %arg1: memref<72xi32, #tpu.memory_space<smem>>, %arg2: memref<71xi32, #tpu.memory_space<smem>>) -> (i32, i32) {
    %c0_i32 = arith.constant 0 : i32
    %c0_i32_0 = arith.constant 0 : i32
    return %c0_i32, %arg0 : i32, i32
  }
  func.func @transform_2(%arg0: i32, %arg1: memref<72xi32, #tpu.memory_space<smem>>, %arg2: memref<71xi32, #tpu.memory_space<smem>>) -> (i32, i32) {
    %0 = arith.index_cast %arg0 : i32 to index
    %1 = memref.load %arg1[%0] : memref<72xi32, #tpu.memory_space<smem>>
    %c0_i32 = arith.constant 0 : i32
    %c0_i32_0 = arith.constant 0 : i32
    return %c0_i32, %1 : i32, i32
  }
  func.func @transform_3(%arg0: i32, %arg1: memref<72xi32, #tpu.memory_space<smem>>, %arg2: memref<71xi32, #tpu.memory_space<smem>>) -> (i32, i32) {
    %0 = arith.index_cast %arg0 : i32 to index
    %1 = memref.load %arg1[%0] : memref<72xi32, #tpu.memory_space<smem>>
    %c0_i32 = arith.constant 0 : i32
    %c0_i32_0 = arith.constant 0 : i32
    return %c0_i32, %1 : i32, i32
  }
  func.func @transform_4(%arg0: i32, %arg1: memref<72xi32, #tpu.memory_space<smem>>, %arg2: memref<71xi32, #tpu.memory_space<smem>>) -> (i32, i32) {
    %0 = arith.index_cast %arg0 : i32 to index
    %1 = memref.load %arg1[%0] : memref<72xi32, #tpu.memory_space<smem>>
    %c0_i32 = arith.constant 0 : i32
    %c0_i32_0 = arith.constant 0 : i32
    return %c0_i32, %1 : i32, i32
  }
  func.func @transform_5(%arg0: i32, %arg1: memref<72xi32, #tpu.memory_space<smem>>, %arg2: memref<71xi32, #tpu.memory_space<smem>>) -> (i32, i32) {
    %0 = arith.index_cast %arg0 : i32 to index
    %1 = memref.load %arg1[%0] : memref<72xi32, #tpu.memory_space<smem>>
    %c0_i32 = arith.constant 0 : i32
    %c0_i32_0 = arith.constant 0 : i32
    return %c0_i32, %1 : i32, i32
  }
  func.func @transform_6(%arg0: i32, %arg1: memref<72xi32, #tpu.memory_space<smem>>, %arg2: memref<71xi32, #tpu.memory_space<smem>>) -> (i32, i32) {
    %0 = arith.index_cast %arg0 : i32 to index
    %1 = memref.load %arg1[%0] : memref<72xi32, #tpu.memory_space<smem>>
    %c0_i32 = arith.constant 0 : i32
    %c0_i32_0 = arith.constant 0 : i32
    return %c0_i32, %1 : i32, i32
  }
  func.func @transform_7(%arg0: i32, %arg1: memref<72xi32, #tpu.memory_space<smem>>, %arg2: memref<71xi32, #tpu.memory_space<smem>>) -> (i32, i32) {
    %0 = arith.index_cast %arg0 : i32 to index
    %1 = memref.load %arg1[%0] : memref<72xi32, #tpu.memory_space<smem>>
    %c0_i32 = arith.constant 0 : i32
    %c0_i32_0 = arith.constant 0 : i32
    return %c0_i32, %1 : i32, i32
  }
}

</mosaic_0001>

<llo_original>
// kernel: mul.18
$region0: #{mul.18}
  %s0 = inlined_call_operand.hbm [shape: f32[2,8,8,8], index: 0, kind: input, shape index: {}]
  %s1 = inlined_call_operand.vmem [shape: f32[1024], index: 1, kind: output, shape index: {}]
  $region1: #{mul.18} parent=0
    #allocation0 [shape = 'u8[65536]{0}', space=vmem, size = 0x10000, scoped, tag = 'operand span for operand 0']
    #allocation1 [shape = 's32[1]{0}', space=sflag, size = 0x4, scoped, tag = 'scoped memory for mul.18']
    %2 = vsyncpa [#allocation1], 0
    %s4 = ssub.s32 2048, 2048
    %5 = vsyncadd [#allocation1], %s4
    %s7 = sshll.u32 [#allocation0], 4
    %s8 = int_to_ptr.vmem [resolvable:$true] %s7
    %10 = dma.hbm_to_vmem [thread:$0]  %s0, 2048, %s8, [#allocation1]
    %11 = dma.done [#allocation1], 2048
    %s12 = smov 3
    %v13 = vld [vmem:[#allocation0] ss:$16 sm:%s12]
    %s14 = smov 12
    %v15 = vld [vmem:[#allocation0] ss:$16 sm:%s14]
    %vm16 = vcmask 1043458
    %v17 = vsel %vm16, %v15, %v13
    %s18 = smov 48
    %v19 = vld [vmem:[#allocation0] ss:$16 sm:%s18]
    %vm20 = vcmask 1045508
    %v21 = vsel %vm20, %v19, %v17
    %s22 = smov 192
    %v23 = vld [vmem:[#allocation0] ss:$16 sm:%s22]
    %vm24 = vcmask 1047558
    %v25 = vsel %vm24, %v23, %v21
    %vm26 = vcmask 64512
    %27 = vst.msk [vmem:[%s1] sm:$0xff] %vm26, %v25
    %s28 = scalar_lea.vmem [#allocation0], 15
    %s29 = smov 3
    %v30 = vld [vmem:[%s28] ss:$16 sm:%s29]
    %s31 = scalar_lea.vmem [#allocation0], 15
    %s32 = smov 12
    %v33 = vld [vmem:[%s31] ss:$16 sm:%s32]
    %vm34 = vcmask 1043458
    %v35 = vsel %vm34, %v33, %v30
    %s36 = scalar_lea.vmem [#allocation0], 15
    %s37 = smov 48
    %v38 = vld [vmem:[%s36] ss:$16 sm:%s37]
    %vm39 = vcmask 1045508
    %v40 = vsel %vm39, %v38, %v35
    %s41 = scalar_lea.vmem [#allocation0], 15
    %s42 = smov 192
    %v43 = vld [vmem:[%s41] ss:$16 sm:%s42]
    %vm44 = vcmask 1047558
    %v45 = vsel %vm44, %v43, %v40
    %46 = vrot.lane.b32.xlu0 %v45, 120
    %v47 = vpop.permute.xlu0 %46
    %vm48 = vcmask 1048512
    %49 = vst.msk [vmem:[%s1] sm:$0xff] %vm48, %v47
    %s50 = scalar_lea.vmem [#allocation0], 14
    %s51 = smov 3
    %v52 = vld [vmem:[%s50] ss:$16 sm:%s51]
    %s53 = scalar_lea.vmem [#allocation0], 14
    %s54 = smov 12
    %v55 = vld [vmem:[%s53] ss:$16 sm:%s54]
    %vm56 = vcmask 1043458
    %v57 = vsel %vm56, %v55, %v52
    %s58 = scalar_lea.vmem [#allocation0], 14
    %s59 = smov 48
    %v60 = vld [vmem:[%s58] ss:$16 sm:%s59]
    %vm61 = vcmask 1045508
    %v62 = vsel %vm61, %v60, %v57
    %s63 = scalar_lea.vmem [#allocation0], 14
    %s64 = smov 192
    %v65 = vld [vmem:[%s63] ss:$16 sm:%s64]
    %vm66 = vcmask 1047558
    %v67 = vsel %vm66, %v65, %v62
    %68 = vrot.lane.b32.xlu0 %v67, 112
    %v69 = vpop.permute.xlu0 %68
    %vm70 = vcmask 982912
    %71 = vst.msk [vmem:[%s1] sm:$0xff] %vm70, %v69
    %s72 = scalar_lea.vmem [#allocation0], 13
    %s73 = smov 3
    %v74 = vld [vmem:[%s72] ss:$16 sm:%s73]
    %s75 = scalar_lea.vmem [#allocation0], 13
    %s76 = smov 12
    %v77 = vld [vmem:[%s75] ss:$16 sm:%s76]
    %vm78 = vcmask 1043458
    %v79 = vsel %vm78, %v77, %v74
    %s80 = scalar_lea.vmem [#allocation0], 13
    %s81 = smov 48
    %v82 = vld [vmem:[%s80] ss:$16 sm:%s81]
    %vm83 = vcmask 1045508
    %v84 = vsel %vm83, %v82, %v79
    %s85 = scalar_lea.vmem [#allocation0], 13
    %s86 = smov 192
    %v87 = vld [vmem:[%s85] ss:$16 sm:%s86]
    %vm88 = vcmask 1047558
    %v89 = vsel %vm88, %v87, %v84
    %90 = vrot.lane.b32.xlu0 %v89, 104
    %v91 = vpop.permute.xlu0 %90
    %vm92 = vcmask 917312
    %93 = vst.msk [vmem:[%s1] sm:$0xff] %vm92, %v91
    %s94 = scalar_lea.vmem [#allocation0], 12
    %s95 = smov 3
    %v96 = vld [vmem:[%s94] ss:$16 sm:%s95]
    %s97 = scalar_lea.vmem [#allocation0], 12
    %s98 = smov 12
    %v99 = vld [vmem:[%s97] ss:$16 sm:%s98]
    %vm100 = vcmask 1043458
    %v101 = vsel %vm100, %v99, %v96
    %s102 = scalar_lea.vmem [#allocation0], 12
    %s103 = smov 48
    %v104 = vld [vmem:[%s102] ss:$16 sm:%s103]
    %vm105 = vcmask 1045508
    %v106 = vsel %vm105, %v104, %v101
    %s107 = scalar_lea.vmem [#allocation0], 12
    %s108 = smov 192
    %v109 = vld [vmem:[%s107] ss:$16 sm:%s108]
    %vm110 = vcmask 1047558
    %v111 = vsel %vm110, %v109, %v106
    %112 = vrot.lane.b32.xlu0 %v111, 96
    %v113 = vpop.permute.xlu0 %112
    %vm114 = vcmask 851712
    %115 = vst.msk [vmem:[%s1] sm:$0xff] %vm114, %v113
    %s116 = scalar_lea.vmem [#allocation0], 11
    %s117 = smov 3
    %v118 = vld [vmem:[%s116] ss:$16 sm:%s117]
    %s119 = scalar_lea.vmem [#allocation0], 11
    %s120 = smov 12
    %v121 = vld [vmem:[%s119] ss:$16 sm:%s120]
    %vm122 = vcmask 1043458
    %v123 = vsel %vm122, %v121, %v118
    %s124 = scalar_lea.vmem [#allocation0], 11
    %s125 = smov 48
    %v126 = vld [vmem:[%s124] ss:$16 sm:%s125]
    %vm127 = vcmask 1045508
    %v128 = vsel %vm127, %v126, %v123
    %s129 = scalar_lea.vmem [#allocation0], 11
    %s130 = smov 192
    %v131 = vld [vmem:[%s129] ss:$16 sm:%s130]
    %vm132 = vcmask 1047558
    %v133 = vsel %vm132, %v131, %v128
    %134 = vrot.lane.b32.xlu0 %v133, 88
    %v135 = vpop.permute.xlu0 %134
    %vm136 = vcmask 786112
    %137 = vst.msk [vmem:[%s1] sm:$0xff] %vm136, %v135
    %s138 = scalar_lea.vmem [#allocation0], 10
    %s139 = smov 3
    %v140 = vld [vmem:[%s138] ss:$16 sm:%s139]
    %s141 = scalar_lea.vmem [#allocation0], 10
    %s142 = smov 12
    %v143 = vld [vmem:[%s141] ss:$16 sm:%s142]
    %vm144 = vcmask 1043458
    %v145 = vsel %vm144, %v143, %v140
    %s146 = scalar_lea.vmem [#allocation0], 10
    %s147 = smov 48
    %v148 = vld [vmem:[%s146] ss:$16 sm:%s147]
    %vm149 = vcmask 1045508
    %v150 = vsel %vm149, %v148, %v145
    %s151 = scalar_lea.vmem [#allocation0], 10
    %s152 = smov 192
    %v153 = vld [vmem:[%s151] ss:$16 sm:%s152]
    %vm154 = vcmask 1047558
    %v155 = vsel %vm154, %v153, %v150
    %156 = vrot.lane.b32.xlu0 %v155, 80
    %v157 = vpop.permute.xlu0 %156
    %vm158 = vcmask 720512
    %159 = vst.msk [vmem:[%s1] sm:$0xff] %vm158, %v157
    %s160 = scalar_lea.vmem [#allocation0], 9
    %s161 = smov 3
    %v162 = vld [vmem:[%s160] ss:$16 sm:%s161]
    %s163 = scalar_lea.vmem [#allocation0], 9
    %s164 = smov 12
    %v165 = vld [vmem:[%s163] ss:$16 sm:%s164]
    %vm166 = vcmask 1043458
    %v167 = vsel %vm166, %v165, %v162
    %s168 = scalar_lea.vmem [#allocation0], 9
    %s169 = smov 48
    %v170 = vld [vmem:[%s168] ss:$16 sm:%s169]
    %vm171 = vcmask 1045508
    %v172 = vsel %vm171, %v170, %v167
    %s173 = scalar_lea.vmem [#allocation0], 9
    %s174 = smov 192
    %v175 = vld [vmem:[%s173] ss:$16 sm:%s174]
    %vm176 = vcmask 1047558
    %v177 = vsel %vm176, %v175, %v172
    %178 = vrot.lane.b32.xlu0 %v177, 72
    %v179 = vpop.permute.xlu0 %178
    %vm180 = vcmask 654912
    %181 = vst.msk [vmem:[%s1] sm:$0xff] %vm180, %v179
    %s182 = scalar_lea.vmem [#allocation0], 8
    %s183 = smov 3
    %v184 = vld [vmem:[%s182] ss:$16 sm:%s183]
    %s185 = scalar_lea.vmem [#allocation0], 8
    %s186 = smov 12
    %v187 = vld [vmem:[%s185] ss:$16 sm:%s186]
    %vm188 = vcmask 1043458
    %v189 = vsel %vm188, %v187, %v184
    %s190 = scalar_lea.vmem [#allocation0], 8
    %s191 = smov 48
    %v192 = vld [vmem:[%s190] ss:$16 sm:%s191]
    %vm193 = vcmask 1045508
    %v194 = vsel %vm193, %v192, %v189
    %s195 = scalar_lea.vmem [#allocation0], 8
    %s196 = smov 192
    %v197 = vld [vmem:[%s195] ss:$16 sm:%s196]
    %vm198 = vcmask 1047558
    %v199 = vsel %vm198, %v197, %v194
    %200 = vrot.lane.b32.xlu0 %v199, 64
    %v201 = vpop.permute.xlu0 %200
    %vm202 = vcmask 589312
    %203 = vst.msk [vmem:[%s1] sm:$0xff] %vm202, %v201
    %s204 = scalar_lea.vmem [#allocation0], 7
    %s205 = smov 3
    %v206 = vld [vmem:[%s204] ss:$16 sm:%s205]
    %s207 = scalar_lea.vmem [#allocation0], 7
    %s208 = smov 12
    %v209 = vld [vmem:[%s207] ss:$16 sm:%s208]
    %vm210 = vcmask 1043458
    %v211 = vsel %vm210, %v209, %v206
    %s212 = scalar_lea.vmem [#allocation0], 7
    %s213 = smov 48
    %v214 = vld [vmem:[%s212] ss:$16 sm:%s213]
    %vm215 = vcmask 1045508
    %v216 = vsel %vm215, %v214, %v211
    %s217 = scalar_lea.vmem [#allocation0], 7
    %s218 = smov 192
    %v219 = vld [vmem:[%s217] ss:$16 sm:%s218]
    %vm220 = vcmask 1047558
    %v221 = vsel %vm220, %v219, %v216
    %222 = vrot.lane.b32.xlu0 %v221, 56
    %v223 = vpop.permute.xlu0 %222
    %vm224 = vcmask 523712
    %225 = vst.msk [vmem:[%s1] sm:$0xff] %vm224, %v223
    %s226 = scalar_lea.vmem [#allocation0], 6
    %s227 = smov 3
    %v228 = vld [vmem:[%s226] ss:$16 sm:%s227]
    %s229 = scalar_lea.vmem [#allocation0], 6
    %s230 = smov 12
    %v231 = vld [vmem:[%s229] ss:$16 sm:%s230]
    %vm232 = vcmask 1043458
    %v233 = vsel %vm232, %v231, %v228
    %s234 = scalar_lea.vmem [#allocation0], 6
    %s235 = smov 48
    %v236 = vld [vmem:[%s234] ss:$16 sm:%s235]
    %vm237 = vcmask 1045508
    %v238 = vsel %vm237, %v236, %v233
    %s239 = scalar_lea.vmem [#allocation0], 6
    %s240 = smov 192
    %v241 = vld [vmem:[%s239] ss:$16 sm:%s240]
    %vm242 = vcmask 1047558
    %v243 = vsel %vm242, %v241, %v238
    %244 = vrot.lane.b32.xlu0 %v243, 48
    %v245 = vpop.permute.xlu0 %244
    %vm246 = vcmask 458112
    %247 = vst.msk [vmem:[%s1] sm:$0xff] %vm246, %v245
    %s248 = scalar_lea.vmem [#allocation0], 5
    %s249 = smov 3
    %v250 = vld [vmem:[%s248] ss:$16 sm:%s249]
    %s251 = scalar_lea.vmem [#allocation0], 5
    %s252 = smov 12
    %v253 = vld [vmem:[%s251] ss:$16 sm:%s252]
    %vm254 = vcmask 1043458
    %v255 = vsel %vm254, %v253, %v250
    %s256 = scalar_lea.vmem [#allocation0], 5
    %s257 = smov 48
    %v258 = vld [vmem:[%s256] ss:$16 sm:%s257]
    %vm259 = vcmask 1045508
    %v260 = vsel %vm259, %v258, %v255
    %s261 = scalar_lea.vmem [#allocation0], 5
    %s262 = smov 192
    %v263 = vld [vmem:[%s261] ss:$16 sm:%s262]
    %vm264 = vcmask 1047558
    %v265 = vsel %vm264, %v263, %v260
    %266 = vrot.lane.b32.xlu0 %v265, 40
    %v267 = vpop.permute.xlu0 %266
    %vm268 = vcmask 392512
    %269 = vst.msk [vmem:[%s1] sm:$0xff] %vm268, %v267
    %s270 = scalar_lea.vmem [#allocation0], 4
    %s271 = smov 3
    %v272 = vld [vmem:[%s270] ss:$16 sm:%s271]
    %s273 = scalar_lea.vmem [#allocation0], 4
    %s274 = smov 12
    %v275 = vld [vmem:[%s273] ss:$16 sm:%s274]
    %vm276 = vcmask 1043458
    %v277 = vsel %vm276, %v275, %v272
    %s278 = scalar_lea.vmem [#allocation0], 4
    %s279 = smov 48
    %v280 = vld [vmem:[%s278] ss:$16 sm:%s279]
    %vm281 = vcmask 1045508
    %v282 = vsel %vm281, %v280, %v277
    %s283 = scalar_lea.vmem [#allocation0], 4
    %s284 = smov 192
    %v285 = vld [vmem:[%s283] ss:$16 sm:%s284]
    %vm286 = vcmask 1047558
    %v287 = vsel %vm286, %v285, %v282
    %288 = vrot.lane.b32.xlu0 %v287, 32
    %v289 = vpop.permute.xlu0 %288
    %vm290 = vcmask 326912
    %291 = vst.msk [vmem:[%s1] sm:$0xff] %vm290, %v289
    %s292 = scalar_lea.vmem [#allocation0], 3
    %s293 = smov 3
    %v294 = vld [vmem:[%s292] ss:$16 sm:%s293]
    %s295 = scalar_lea.vmem [#allocation0], 3
    %s296 = smov 12
    %v297 = vld [vmem:[%s295] ss:$16 sm:%s296]
    %vm298 = vcmask 1043458
    %v299 = vsel %vm298, %v297, %v294
    %s300 = scalar_lea.vmem [#allocation0], 3
    %s301 = smov 48
    %v302 = vld [vmem:[%s300] ss:$16 sm:%s301]
    %vm303 = vcmask 1045508
    %v304 = vsel %vm303, %v302, %v299
    %s305 = scalar_lea.vmem [#allocation0], 3
    %s306 = smov 192
    %v307 = vld [vmem:[%s305] ss:$16 sm:%s306]
    %vm308 = vcmask 1047558
    %v309 = vsel %vm308, %v307, %v304
    %310 = vrot.lane.b32.xlu0 %v309, 24
    %v311 = vpop.permute.xlu0 %310
    %vm312 = vcmask 261312
    %313 = vst.msk [vmem:[%s1] sm:$0xff] %vm312, %v311
    %s314 = scalar_lea.vmem [#allocation0], 2
    %s315 = smov 3
    %v316 = vld [vmem:[%s314] ss:$16 sm:%s315]
    %s317 = scalar_lea.vmem [#allocation0], 2
    %s318 = smov 12
    %v319 = vld [vmem:[%s317] ss:$16 sm:%s318]
    %vm320 = vcmask 1043458
    %v321 = vsel %vm320, %v319, %v316
    %s322 = scalar_lea.vmem [#allocation0], 2
    %s323 = smov 48
    %v324 = vld [vmem:[%s322] ss:$16 sm:%s323]
    %vm325 = vcmask 1045508
    %v326 = vsel %vm325, %v324, %v321
    %s327 = scalar_lea.vmem [#allocation0], 2
    %s328 = smov 192
    %v329 = vld [vmem:[%s327] ss:$16 sm:%s328]
    %vm330 = vcmask 1047558
    %v331 = vsel %vm330, %v329, %v326
    %332 = vrot.lane.b32.xlu0 %v331, 16
    %v333 = vpop.permute.xlu0 %332
    %vm334 = vcmask 195712
    %335 = vst.msk [vmem:[%s1] sm:$0xff] %vm334, %v333
    %s336 = scalar_lea.vmem [#allocation0], 1
    %s337 = smov 3
    %v338 = vld [vmem:[%s336] ss:$16 sm:%s337]
    %s339 = scalar_lea.vmem [#allocation0], 1
    %s340 = smov 12
    %v341 = vld [vmem:[%s339] ss:$16 sm:%s340]
    %vm342 = vcmask 1043458
    %v343 = vsel %vm342, %v341, %v338
    %s344 = scalar_lea.vmem [#allocation0], 1
    %s345 = smov 48
    %v346 = vld [vmem:[%s344] ss:$16 sm:%s345]
    %vm347 = vcmask 1045508
    %v348 = vsel %vm347, %v346, %v343
    %s349 = scalar_lea.vmem [#allocation0], 1
    %s350 = smov 192
    %v351 = vld [vmem:[%s349] ss:$16 sm:%s350]
    %vm352 = vcmask 1047558
    %v353 = vsel %vm352, %v351, %v348
    %354 = vrot.lane.b32.xlu0 %v353, 8
    %v355 = vpop.permute.xlu0 %354
    %vm356 = vcmask 130112
    %357 = vst.msk [vmem:[%s1] sm:$0xff] %vm356, %v355
    %358 = vsyncpa [#allocation1], 1

// kernel: mul.9
$region0: #{mul.9}
  #allocation0 [shape = 's32[1]{0}', space=sflag, size = 0x4, scoped, tag = 'scoped memory for mul.9']
  %s0 = inlined_call_operand.vmem [shape: f32[1024,1], index: 0, kind: input, shape index: {}]
  %s1 = inlined_call_operand.vmem [shape: f32[1024,1], index: 1, kind: input, shape index: {}]
  %s2 = inlined_call_operand.vmem [shape: f32[1024,1], index: 2, kind: output, shape index: {}]
  %v3 = vld [vmem:[%s0] sm:$0x1]
  %v4 = vld [vmem:[%s1] sm:$0x1]
  %5 = xla_tuple %v3, %v4
  %6 = xla_tuple %5
  %v7 = vmul.f32 %v3, %v4
  %8 = xla_tuple %v7
  %9 = vst [vmem:[%s2] sm:$0x1] %v7
  %s10 = scalar_lea.vmem %s0, 1
  %v11 = vld [vmem:[%s10] sm:$0x1]
  %s12 = scalar_lea.vmem %s1, 1
  %v13 = vld [vmem:[%s12] sm:$0x1]
  %14 = xla_tuple %v11, %v13
  %15 = xla_tuple %14
  %v16 = vmul.f32 %v11, %v13
  %17 = xla_tuple %v16
  %s18 = scalar_lea.vmem %s2, 1
  %19 = vst [vmem:[%s18] sm:$0x1] %v16
  %s20 = scalar_lea.vmem %s0, 2
  %v21 = vld [vmem:[%s20] sm:$0x1]
  %s22 = scalar_lea.vmem %s1, 2
  %v23 = vld [vmem:[%s22] sm:$0x1]
  %24 = xla_tuple %v21, %v23
  %25 = xla_tuple %24
  %v26 = vmul.f32 %v21, %v23
  %27 = xla_tuple %v26
  %s28 = scalar_lea.vmem %s2, 2
  %29 = vst [vmem:[%s28] sm:$0x1] %v26
  %s30 = scalar_lea.vmem %s0, 3
  %v31 = vld [vmem:[%s30] sm:$0x1]
  %s32 = scalar_lea.vmem %s1, 3
  %v33 = vld [vmem:[%s32] sm:$0x1]
  %34 = xla_tuple %v31, %v33
  %35 = xla_tuple %34
  %v36 = vmul.f32 %v31, %v33
  %37 = xla_tuple %v36
  %s38 = scalar_lea.vmem %s2, 3
  %39 = vst [vmem:[%s38] sm:$0x1] %v36
  %s40 = scalar_lea.vmem %s0, 4
  %v41 = vld [vmem:[%s40] sm:$0x1]
  %s42 = scalar_lea.vmem %s1, 4
  %v43 = vld [vmem:[%s42] sm:$0x1]
  %44 = xla_tuple %v41, %v43
  %45 = xla_tuple %44
  %v46 = vmul.f32 %v41, %v43
  %47 = xla_tuple %v46
  %s48 = scalar_lea.vmem %s2, 4
  %49 = vst [vmem:[%s48] sm:$0x1] %v46
  %s50 = scalar_lea.vmem %s0, 5
  %v51 = vld [vmem:[%s50] sm:$0x1]
  %s52 = scalar_lea.vmem %s1, 5
  %v53 = vld [vmem:[%s52] sm:$0x1]
  %54 = xla_tuple %v51, %v53
  %55 = xla_tuple %54
  %v56 = vmul.f32 %v51, %v53
  %57 = xla_tuple %v56
  %s58 = scalar_lea.vmem %s2, 5
  %59 = vst [vmem:[%s58] sm:$0x1] %v56
  %s60 = scalar_lea.vmem %s0, 6
  %v61 = vld [vmem:[%s60] sm:$0x1]
  %s62 = scalar_lea.vmem %s1, 6
  %v63 = vld [vmem:[%s62] sm:$0x1]
  %64 = xla_tuple %v61, %v63
  %65 = xla_tuple %64
  %v66 = vmul.f32 %v61, %v63
  %67 = xla_tuple %v66
  %s68 = scalar_lea.vmem %s2, 6
  %69 = vst [vmem:[%s68] sm:$0x1] %v66
  %s70 = scalar_lea.vmem %s0, 7
  %v71 = vld [vmem:[%s70] sm:$0x1]
  %s72 = scalar_lea.vmem %s1, 7
  %v73 = vld [vmem:[%s72] sm:$0x1]
  %74 = xla_tuple %v71, %v73
  %75 = xla_tuple %74
  %v76 = vmul.f32 %v71, %v73
  %77 = xla_tuple %v76
  %s78 = scalar_lea.vmem %s2, 7
  %79 = vst [vmem:[%s78] sm:$0x1] %v76

// kernel: _lambda_.1
$region0: #{_lambda_.1}
  #allocation0 [shape = 'u32[]', space=smem, size = 0x4, offset = 0x4, fixed_abs, tag = 'smem constant byte address 0x4 - core index']
  #allocation1 [shape = 'u32[144,128]{1,0:T(1,128)}', space=vmem, size = 0x12000, scoped, tag = 'internal scratch']
  #allocation2 [shape = 'f32[16,16,512]{2,1,0:T(8,128)}', space=vmem, size = 0x80000, scoped, tag = 'scratch operand']
  #allocation3 [shape = 's32[1]{0}', space=sflag, size = 0x4, scoped, tag = 'scoped memory for _lambda_.1']
  #allocation4 [shape = 'u8[512]{0}', space=smem, size = 0x200, scoped, tag = 'prefetched SMEM operand 0']
  #allocation5 [shape = 'u8[512]{0}', space=smem, size = 0x200, scoped, tag = 'prefetched SMEM operand 1']
  %s0 = inlined_call_operand.vmem [shape: s32[72], index: 0, kind: input, shape index: {}]
  %s1 = inlined_call_operand.vmem [shape: s32[71], index: 1, kind: input, shape index: {}]
  %s2 = inlined_call_operand.vmem [shape: s32[18176,1], index: 2, kind: input, shape index: {}]
  %s3 = inlined_call_operand.vmem [shape: bf16[16,18176], index: 3, kind: input, shape index: {}]
  %s4 = inlined_call_operand.vmem [shape: bf16[1,32768], index: 4, kind: input, shape index: {}, may-alias: {4,7}]
  %s5 = inlined_call_operand.vmem [shape: bf16[1,32768], index: 5, kind: input, shape index: {}, may-alias: {5,8}]
  %s6 = inlined_call_operand.vmem [shape: bf16[8,32768], index: 6, kind: input, shape index: {}, may-alias: {6,9}]
  %s7 = inlined_call_operand.vmem [shape: bf16[1,32768], index: 7, kind: output, shape index: {0}, may-alias: {4,7}]
  %s8 = inlined_call_operand.vmem [shape: bf16[1,32768], index: 8, kind: output, shape index: {1}, may-alias: {5,8}]
  %s9 = inlined_call_operand.vmem [shape: bf16[8,32768], index: 9, kind: output, shape index: {2}, may-alias: {6,9}]
  %10 = xla_tuple %s7, %s8, %s9
  %s11 = sld [smem:[#allocation0]]
  $region115: #{_lambda_.1} parent=0
    _
  %s13 = ssub.s32 1, %s11
  %s14 = scalar_select 0, %s13, %s11
  %s15 = sshll.u32 %s0, 4
  %s16 = int_to_ptr.vmem [resolvable:$true] %s15
  %18 = dma.vmem_to_smem %s16, 16, [#allocation4], [#allocation3]
  %s19 = sshll.u32 %s1, 4
  %s20 = int_to_ptr.vmem [resolvable:$true] %s19
  %22 = dma.vmem_to_smem %s20, 16, [#allocation5], [#allocation3]
  %23 = dma.done [#allocation3], 32
  %24 = sfence
  $region1: #{_lambda_.1} parent=0
    #allocation6 [shape = 'u8[16384]{0}', space=vmem, size = 0x4000, scoped, tag = 'input window, operand 3']
    loop: start=0, step=1, limit=73
    $region2: #{_lambda_.1} parent=1 // loop_pre_header
      _
    $region3: #{_lambda_.1} parent=1 // loop_header
      %s26 = sphi 0, %s30
      %p27 = scmp.ge.s32.totalorder %s26, 73
      %s36 = sphi 0, %s38
      %s39 = sphi 0, %s36
      %s40 = sphi 0, %s39
      %s56 = sphi 0, %s40
      %s62 = sphi 0, %s64
      %s65 = sphi 0, %s62
      %s66 = sphi 0, %s65
      %s82 = sphi 0, %s66
      %s90 = sphi 0, %s92
      %s93 = sphi 0, %s90
      %s94 = sphi 0, %s93
      %s110 = sphi 0, %s94
      %s118 = sphi 0, %s120
      %s121 = sphi 0, %s118
      %s122 = sphi 0, %s121
      %s138 = sphi 0, %s122
      %s146 = sphi 0, %s148
      %s149 = sphi 0, %s146
      %s150 = sphi 0, %s149
      %s166 = sphi 0, %s150
      %s174 = sphi 0, %s176
      %s177 = sphi 0, %s174
      %s178 = sphi 0, %s177
      %s194 = sphi 0, %s178
      %s202 = sphi 0, %s204
      %s205 = sphi 0, %s202
      %s206 = sphi 0, %s205
      %s222 = sphi 0, %s206
      %s230 = sphi 0, %s232
      %s233 = sphi 0, %s230
      %s234 = sphi 0, %s233
      %s250 = sphi 0, %s234
    $region4: #{_lambda_.1} parent=1 // loop_header_branch
      %29 = sbr.rel (%p27) target = $region8
    $region5: #{_lambda_.1} parent=1 // loop_body
      %s31 = ssub.s32 %s26, 1
      %s32 = ssub.s32 %s26, 2
      %s33 = sadd.s32 %s26, 1
      %s34 = ssub.s32 %s26, %s33
      %p35 = scmp.eq.s32.totalorder %s34, 0
      %s37 = sadd.s32 %s36, 1
      %s38 = scalar_select %p35, %s36, %s37
      %p41 = pneg %p35
      %p42 = scmp.eq.s32.totalorder %s26, 70
      %p43 = por %p41, %p42
      %p44 = scmp.ne.s32.totalorder %s36, %s39
      %p45 = scmp.eq.s32.totalorder %s26, 0
      %p46 = por %p44, %p45
      %p47 = scmp.ne.s32.totalorder %s36, %s39
      %p48 = scmp.eq.s32.totalorder %s31, 70
      %p49 = por %p47, %p48
      %p50 = scmp.ne.s32.totalorder %s39, %s40
      %p51 = scmp.eq.s32.totalorder %s31, 0
      %p52 = por %p50, %p51
      %p53 = scmp.ne.s32.totalorder %s39, %s40
      %p54 = scmp.eq.s32.totalorder %s32, 70
      %p55 = por %p53, %p54
      %p57 = scmp.ne.s32.totalorder %s40, %s56
      %p58 = scmp.eq.s32.totalorder %s32, 0
      %p59 = por %p57, %p58
      %s60 = ssub.s32 %s26, %s33
      %p61 = scmp.eq.s32.totalorder %s60, 0
      %s63 = sadd.s32 %s62, 1
      %s64 = scalar_select %p61, %s62, %s63
      %p67 = pneg %p61
      %p68 = scmp.eq.s32.totalorder %s26, 70
      %p69 = por %p67, %p68
      %p70 = scmp.ne.s32.totalorder %s62, %s65
      %p71 = scmp.eq.s32.totalorder %s26, 0
      %p72 = por %p70, %p71
      %p73 = scmp.ne.s32.totalorder %s62, %s65
      %p74 = scmp.eq.s32.totalorder %s31, 70
      %p75 = por %p73, %p74
      %p76 = scmp.ne.s32.totalorder %s65, %s66
      %p77 = scmp.eq.s32.totalorder %s31, 0
      %p78 = por %p76, %p77
      %p79 = scmp.ne.s32.totalorder %s65, %s66
      %p80 = scmp.eq.s32.totalorder %s32, 70
      %p81 = por %p79, %p80
      %p83 = scmp.ne.s32.totalorder %s66, %s82
      %p84 = scmp.eq.s32.totalorder %s32, 0
      %p85 = por %p83, %p84
      %s86 = sld [smem:[#allocation4 + %s26]]
      %s87 = sld [smem:[#allocation4 + %s33]]
      %s88 = ssub.s32 %s86, %s87
      %p89 = scmp.eq.s32.totalorder %s88, 0
      %s91 = sadd.s32 %s90, 1
      %s92 = scalar_select %p89, %s90, %s91
      %p95 = pneg %p89
      %p96 = scmp.eq.s32.totalorder %s26, 70
      %p97 = por %p95, %p96
      %p98 = scmp.ne.s32.totalorder %s90, %s93
      %p99 = scmp.eq.s32.totalorder %s26, 0
      %p100 = por %p98, %p99
      %p101 = scmp.ne.s32.totalorder %s90, %s93
      %p102 = scmp.eq.s32.totalorder %s31, 70
      %p103 = por %p101, %p102
      %p104 = scmp.ne.s32.totalorder %s93, %s94
      %p105 = scmp.eq.s32.totalorder %s31, 0
      %p106 = por %p104, %p105
      %p107 = scmp.ne.s32.totalorder %s93, %s94
      %p108 = scmp.eq.s32.totalorder %s32, 70
      %p109 = por %p107, %p108
      %p111 = scmp.ne.s32.totalorder %s94, %s110
      %p112 = scmp.eq.s32.totalorder %s32, 0
      %p113 = por %p111, %p112
      %s114 = sld [smem:[#allocation4 + %s26]]
      %s115 = sld [smem:[#allocation4 + %s33]]
      %s116 = ssub.s32 %s114, %s115
      %p117 = scmp.eq.s32.totalorder %s116, 0
      %s119 = sadd.s32 %s118, 1
      %s120 = scalar_select %p117, %s118, %s119
      %p123 = pneg %p117
      %p124 = scmp.eq.s32.totalorder %s26, 70
      %p125 = por %p123, %p124
      %p126 = scmp.ne.s32.totalorder %s118, %s121
      %p127 = scmp.eq.s32.totalorder %s26, 0
      %p128 = por %p126, %p127
      %p129 = scmp.ne.s32.totalorder %s118, %s121
      %p130 = scmp.eq.s32.totalorder %s31, 70
      %p131 = por %p129, %p130
      %p132 = scmp.ne.s32.totalorder %s121, %s122
      %p133 = scmp.eq.s32.totalorder %s31, 0
      %p134 = por %p132, %p133
      %p135 = scmp.ne.s32.totalorder %s121, %s122
      %p136 = scmp.eq.s32.totalorder %s32, 70
      %p137 = por %p135, %p136
      %p139 = scmp.ne.s32.totalorder %s122, %s138
      %p140 = scmp.eq.s32.totalorder %s32, 0
      %p141 = por %p139, %p140
      %s142 = sld [smem:[#allocation4 + %s26]]
      %s143 = sld [smem:[#allocation4 + %s33]]
      %s144 = ssub.s32 %s142, %s143
      %p145 = scmp.eq.s32.totalorder %s144, 0
      %s147 = sadd.s32 %s146, 1
      %s148 = scalar_select %p145, %s146, %s147
      %p151 = pneg %p145
      %p152 = scmp.eq.s32.totalorder %s26, 70
      %p153 = por %p151, %p152
      %p154 = scmp.ne.s32.totalorder %s146, %s149
      %p155 = scmp.eq.s32.totalorder %s26, 0
      %p156 = por %p154, %p155
      %p157 = scmp.ne.s32.totalorder %s146, %s149
      %p158 = scmp.eq.s32.totalorder %s31, 70
      %p159 = por %p157, %p158
      %p160 = scmp.ne.s32.totalorder %s149, %s150
      %p161 = scmp.eq.s32.totalorder %s31, 0
      %p162 = por %p160, %p161
      %p163 = scmp.ne.s32.totalorder %s149, %s150
      %p164 = scmp.eq.s32.totalorder %s32, 70
      %p165 = por %p163, %p164
      %p167 = scmp.ne.s32.totalorder %s150, %s166
      %p168 = scmp.eq.s32.totalorder %s32, 0
      %p169 = por %p167, %p168
      %s170 = sld [smem:[#allocation4 + %s26]]
      %s171 = sld [smem:[#allocation4 + %s33]]
      %s172 = ssub.s32 %s170, %s171
      %p173 = scmp.eq.s32.totalorder %s172, 0
      %s175 = sadd.s32 %s174, 1
      %s176 = scalar_select %p173, %s174, %s175
      %p179 = pneg %p173
      %p180 = scmp.eq.s32.totalorder %s26, 70
      %p181 = por %p179, %p180
      %p182 = scmp.ne.s32.totalorder %s174, %s177
      %p183 = scmp.eq.s32.totalorder %s26, 0
      %p184 = por %p182, %p183
      %p185 = scmp.ne.s32.totalorder %s174, %s177
      %p186 = scmp.eq.s32.totalorder %s31, 70
      %p187 = por %p185, %p186
      %p188 = scmp.ne.s32.totalorder %s177, %s178
      %p189 = scmp.eq.s32.totalorder %s31, 0
      %p190 = por %p188, %p189
      %p191 = scmp.ne.s32.totalorder %s177, %s178
      %p192 = scmp.eq.s32.totalorder %s32, 70
      %p193 = por %p191, %p192
      %p195 = scmp.ne.s32.totalorder %s178, %s194
      %p196 = scmp.eq.s32.totalorder %s32, 0
      %p197 = por %p195, %p196
      %s198 = sld [smem:[#allocation4 + %s26]]
      %s199 = sld [smem:[#allocation4 + %s33]]
      %s200 = ssub.s32 %s198, %s199
      %p201 = scmp.eq.s32.totalorder %s200, 0
      %s203 = sadd.s32 %s202, 1
      %s204 = scalar_select %p201, %s202, %s203
      %p207 = pneg %p201
      %p208 = scmp.eq.s32.totalorder %s26, 70
      %p209 = por %p207, %p208
      %p210 = scmp.ne.s32.totalorder %s202, %s205
      %p211 = scmp.eq.s32.totalorder %s26, 0
      %p212 = por %p210, %p211
      %p213 = scmp.ne.s32.totalorder %s202, %s205
      %p214 = scmp.eq.s32.totalorder %s31, 70
      %p215 = por %p213, %p214
      %p216 = scmp.ne.s32.totalorder %s205, %s206
      %p217 = scmp.eq.s32.totalorder %s31, 0
      %p218 = por %p216, %p217
      %p219 = scmp.ne.s32.totalorder %s205, %s206
      %p220 = scmp.eq.s32.totalorder %s32, 70
      %p221 = por %p219, %p220
      %p223 = scmp.ne.s32.totalorder %s206, %s222
      %p224 = scmp.eq.s32.totalorder %s32, 0
      %p225 = por %p223, %p224
      %s226 = sld [smem:[#allocation4 + %s26]]
      %s227 = sld [smem:[#allocation4 + %s33]]
      %s228 = ssub.s32 %s226, %s227
      %p229 = scmp.eq.s32.totalorder %s228, 0
      %s231 = sadd.s32 %s230, 1
      %s232 = scalar_select %p229, %s230, %s231
      %p235 = pneg %p229
      %p236 = scmp.eq.s32.totalorder %s26, 70
      %p237 = por %p235, %p236
      %p238 = scmp.ne.s32.totalorder %s230, %s233
      %p239 = scmp.eq.s32.totalorder %s26, 0
      %p240 = por %p238, %p239
      %p241 = scmp.ne.s32.totalorder %s230, %s233
      %p242 = scmp.eq.s32.totalorder %s31, 70
      %p243 = por %p241, %p242
      %p244 = scmp.ne.s32.totalorder %s233, %s234
      %p245 = scmp.eq.s32.totalorder %s31, 0
      %p246 = por %p244, %p245
      %p247 = scmp.ne.s32.totalorder %s233, %s234
      %p248 = scmp.eq.s32.totalorder %s32, 70
      %p249 = por %p247, %p248
      %p251 = scmp.ne.s32.totalorder %s234, %s250
      %p252 = scmp.eq.s32.totalorder %s32, 0
      %p253 = por %p251, %p252
      %p254 = scmp.le.s32.totalorder 1, %s26
      %p255 = scmp.lt.s32.totalorder %s26, 72
      %p256 = pnand %p254, %p255
      %p257 = pneg %p256
      // Predicated region
      $region9: #{_lambda_.1} parent=5 // pred_check
        _
      $region10: #{_lambda_.1} parent=5 // pred_check_branch
        %259 = sbr.rel (%p256) target = $region12
      $region11: #{_lambda_.1} parent=5 // pred_region
        %s260 = ssub.s32 %s26, 1
      $region12: #{_lambda_.1} parent=5 // pred_fallthru
        _
      %p261 = scmp.lt.s32.totalorder %s26, 71
      // Predicated region
      $region13: #{_lambda_.1} parent=5 // pred_check
        %p262 = pneg %p261
      $region14: #{_lambda_.1} parent=5 // pred_check_branch
        %264 = sbr.rel (%p262) target = $region16
      $region15: #{_lambda_.1} parent=5 // pred_region
        // Predicated region
        $region17: #{_lambda_.1} parent=15 // pred_check
          %p265 = pneg %p46
        $region18: #{_lambda_.1} parent=15 // pred_check_branch
          %267 = sbr.rel (%p265) target = $region20
        $region19: #{_lambda_.1} parent=15 // pred_region
          %s268 = smul.u32 32, %s26
          %p269 = scmp.lt.s32.totalorder %s268, 2271
          %s270 = scalar_select %p269, %s268, 2271
          %s271 = smul.addr %s270, 8
          %s272 = scalar_lea.vmem %s2, %s271
          %s273 = smul.u32 32, %s26
        $region20: #{_lambda_.1} parent=15 // pred_fallthru
          _
        // Predicated region
        $region21: #{_lambda_.1} parent=15 // pred_check
          %p274 = pneg %p72
        $region22: #{_lambda_.1} parent=15 // pred_check_branch
          %276 = sbr.rel (%p274) target = $region24
        $region23: #{_lambda_.1} parent=15 // pred_region
          %s277 = sand.u32 %s62, 1
          %s278 = sand.u32 %s62, 1
          %s279 = smul.addr %s278, 16
          %s280 = scalar_lea.vmem [#allocation6], %s279
          %s281 = smul.u32 2, %s26
          %s282 = smul.addr %s281, 4
          %s283 = scalar_lea.vmem %s3, %s282
          // Predicated region
          $region25: #{_lambda_.1} parent=23 // pred_check
            _
          $region26: #{_lambda_.1} parent=23 // pred_check_branch
            %285 = sbr.rel (0) target = $region28
          $region27: #{_lambda_.1} parent=23 // pred_region
            // Predicated region
            $region29: #{_lambda_.1} parent=27 // pred_check
              _
            $region30: #{_lambda_.1} parent=27 // pred_check_branch
              %287 = sbr.rel (0) target = $region32
            $region31: #{_lambda_.1} parent=27 // pred_region
              // Predicated region
              $region44: #{_lambda_.1} parent=31 // pred_check
                _
              $region45: #{_lambda_.1} parent=31 // pred_check_branch
                %305 = sbr.rel (0) target = $region47
              $region46: #{_lambda_.1} parent=31 // pred_region
                loop: start=0, step=1, limit=1
                $region48: #{_lambda_.1} parent=46 // loop_pre_header
                  _
                $region49: #{_lambda_.1} parent=46 // loop_header
                  %s307 = sphi 0, %s311
                  %p308 = scmp.ge.s32.totalorder %s307, 1
                  %s312 = sphi %s283, %s283
                  %s313 = sphi %s280, %s280
                $region50: #{_lambda_.1} parent=46 // loop_header_branch
                  %310 = sbr.rel (%p308) target = $region54
                $region51: #{_lambda_.1} parent=46 // loop_body
                  %v314 = vld [vmem:[%s312] sm:$0xff]
                  %315 = vst [vmem:[%s313] sm:$0xff] %v314
                  %v316 = vld [vmem:[%s312 + $0x238] sm:$0xff]
                  %317 = vst [vmem:[%s313 + $0x8] sm:$0xff] %v316
                $region52: #{_lambda_.1} parent=46 // loop_footer
                  %s311 = sadd.s32 1, %s307
                $region53: #{_lambda_.1} parent=46 // loop_footer_branch
                  %306 = sbr.rel target = $region49
                $region54: #{_lambda_.1} parent=46 // loop_exit
                  _
              $region47: #{_lambda_.1} parent=31 // pred_fallthru
                _
              // Predicated region
              $region55: #{_lambda_.1} parent=31 // pred_check
                _
              $region56: #{_lambda_.1} parent=31 // pred_check_branch
                %319 = sbr.rel target = $region58
              $region57: #{_lambda_.1} parent=31 // pred_region
                _
              $region58: #{_lambda_.1} parent=31 // pred_fallthru
                _
            $region32: #{_lambda_.1} parent=27 // pred_fallthru
              _
            // Predicated region
            $region33: #{_lambda_.1} parent=27 // pred_check
              _
            $region34: #{_lambda_.1} parent=27 // pred_check_branch
              %289 = sbr.rel target = $region36
            $region35: #{_lambda_.1} parent=27 // pred_region
              %s291 = ssub.s32 256, 1
              loop: start=0, step=1, limit=1
              $region37: #{_lambda_.1} parent=35 // loop_pre_header
                _
              $region38: #{_lambda_.1} parent=35 // loop_header
                %s293 = sphi 0, %s297
                %p294 = scmp.ge.s32.totalorder %s293, 1
                %s298 = sphi %s283, %s283
                %s299 = sphi %s280, %s280
              $region39: #{_lambda_.1} parent=35 // loop_header_branch
                %296 = sbr.rel (%p294) target = $region43
              $region40: #{_lambda_.1} parent=35 // loop_body
                %v300 = vld [vmem:[%s298] sm:%s291]
                %301 = vst [vmem:[%s299] sm:%s291] %v300
                %v302 = vld [vmem:[%s298 + $0x238] sm:%s291]
                %303 = vst [vmem:[%s299 + $0x8] sm:%s291] %v302
              $region41: #{_lambda_.1} parent=35 // loop_footer
                %s297 = sadd.s32 1, %s293
              $region42: #{_lambda_.1} parent=35 // loop_footer_branch
                %292 = sbr.rel target = $region38
              $region43: #{_lambda_.1} parent=35 // loop_exit
                _
            $region36: #{_lambda_.1} parent=27 // pred_fallthru
              _
          $region28: #{_lambda_.1} parent=23 // pred_fallthru
            _
          %320 = vnop
        $region24: #{_lambda_.1} parent=15 // pred_fallthru
          _
        // Predicated region
        $region59: #{_lambda_.1} parent=15 // pred_check
          %p321 = pneg %p100
        $region60: #{_lambda_.1} parent=15 // pred_check_branch
          %323 = sbr.rel (%p321) target = $region62
        $region61: #{_lambda_.1} parent=15 // pred_region
          %s324 = sld [smem:[#allocation4 + %s26]]
          %s325 = smul.u32 64, %s324
          %p326 = scmp.lt.s32.totalorder %s325, 255
          %s327 = scalar_select %p326, %s325, 255
          %s328 = scalar_lea.vmem %s4, %s327
          %s329 = sld [smem:[#allocation4 + %s26]]
          %s330 = smul.u32 64, %s329
        $region62: #{_lambda_.1} parent=15 // pred_fallthru
          _
        // Predicated region
        $region63: #{_lambda_.1} parent=15 // pred_check
          %p331 = pneg %p128
        $region64: #{_lambda_.1} parent=15 // pred_check_branch
          %333 = sbr.rel (%p331) target = $region66
        $region65: #{_lambda_.1} parent=15 // pred_region
          %s334 = sld [smem:[#allocation4 + %s26]]
          %s335 = smul.u32 64, %s334
          %p336 = scmp.lt.s32.totalorder %s335, 255
          %s337 = scalar_select %p336, %s335, 255
          %s338 = scalar_lea.vmem %s5, %s337
          %s339 = sld [smem:[#allocation4 + %s26]]
          %s340 = smul.u32 64, %s339
        $region66: #{_lambda_.1} parent=15 // pred_fallthru
          _
        // Predicated region
        $region67: #{_lambda_.1} parent=15 // pred_check
          %p341 = pneg %p156
        $region68: #{_lambda_.1} parent=15 // pred_check_branch
          %343 = sbr.rel (%p341) target = $region70
        $region69: #{_lambda_.1} parent=15 // pred_region
          %s344 = sld [smem:[#allocation4 + %s26]]
          %s345 = smul.u32 64, %s344
          %p346 = scmp.lt.s32.totalorder %s345, 255
          %s347 = scalar_select %p346, %s345, 255
          %s348 = smul.addr %s347, 4
          %s349 = scalar_lea.vmem %s6, %s348
          %s350 = sld [smem:[#allocation4 + %s26]]
          %s351 = smul.u32 64, %s350
        $region70: #{_lambda_.1} parent=15 // pred_fallthru
          _
      $region16: #{_lambda_.1} parent=5 // pred_fallthru
        _
      %p352 = scmp.le.s32.totalorder 1, %s26
      %p353 = scmp.lt.s32.totalorder %s26, 72
      %p354 = pnand %p352, %p353
      %p355 = pneg %p354
      // Predicated region
      $region71: #{_lambda_.1} parent=5 // pred_check
        _
      $region72: #{_lambda_.1} parent=5 // pred_check_branch
        %357 = sbr.rel (%p354) target = $region74
      $region73: #{_lambda_.1} parent=5 // pred_region
        %s358 = ssub.s32 %s26, 1
        %s359 = sand.u32 %s65, 1
        %s360 = sand.u32 %s65, 1
        %s361 = smul.addr %s360, 16
        %s362 = scalar_lea.vmem [#allocation6], %s361
        // Predicated region
        $region75: #{_lambda_.1} parent=73 // pred_check
          %p363 = pneg %p78
        $region76: #{_lambda_.1} parent=73 // pred_check_branch
          %365 = sbr.rel (%p363) target = $region78
        $region77: #{_lambda_.1} parent=73 // pred_region
          _
        $region78: #{_lambda_.1} parent=73 // pred_fallthru
          _
        %s366 = smul.u32 32, %s31
        %p367 = scmp.lt.s32.totalorder %s366, 2271
        %s368 = scalar_select %p367, %s366, 2271
        %s369 = smul.addr %s368, 8
        %s370 = scalar_lea.vmem %s2, %s369
        %p371 = pneg %p52
        %p372 = pneg %p49
        %s373 = sand.u32 %s65, 1
        %s374 = sand.u32 %s65, 1
        %s375 = smul.addr %s374, 16
        %s376 = scalar_lea.vmem [#allocation6], %s375
        %p377 = pneg %p78
        %p378 = pneg %p75
        %s379 = sld [smem:[#allocation4 + %s31]]
        %s380 = smul.u32 64, %s379
        %p381 = scmp.lt.s32.totalorder %s380, 255
        %s382 = scalar_select %p381, %s380, 255
        %s383 = scalar_lea.vmem %s4, %s382
        %p384 = pneg %p106
        %p385 = pneg %p103
        %s386 = sld [smem:[#allocation4 + %s31]]
        %s387 = smul.u32 64, %s386
        %p388 = scmp.lt.s32.totalorder %s387, 255
        %s389 = scalar_select %p388, %s387, 255
        %s390 = scalar_lea.vmem %s5, %s389
        %p391 = pneg %p134
        %p392 = pneg %p131
        %s393 = sld [smem:[#allocation4 + %s31]]
        %s394 = smul.u32 64, %s393
        %p395 = scmp.lt.s32.totalorder %s394, 255
        %s396 = scalar_select %p395, %s394, 255
        %s397 = smul.addr %s396, 4
        %s398 = scalar_lea.vmem %s6, %s397
        %p399 = pneg %p162
        %p400 = pneg %p159
        %p401 = pneg %p190
        %p402 = pneg %p187
        %s403 = sld [smem:[#allocation4 + %s31]]
        %s404 = smul.u32 64, %s403
        %p405 = scmp.lt.s32.totalorder %s404, 255
        %s406 = scalar_select %p405, %s404, 255
        %s407 = scalar_lea.vmem %s7, %s406
        %p408 = pneg %p218
        %p409 = pneg %p215
        %s410 = sld [smem:[#allocation4 + %s31]]
        %s411 = smul.u32 64, %s410
        %p412 = scmp.lt.s32.totalorder %s411, 255
        %s413 = scalar_select %p412, %s411, 255
        %s414 = scalar_lea.vmem %s8, %s413
        %p415 = pneg %p246
        %p416 = pneg %p243
        %s417 = sld [smem:[#allocation4 + %s31]]
        %s418 = smul.u32 64, %s417
        %p419 = scmp.lt.s32.totalorder %s418, 255
        %s420 = scalar_select %p419, %s418, 255
        %s421 = smul.addr %s420, 4
        %s422 = scalar_lea.vmem %s9, %s421
        %s423 = smul.u32 32, %s31
        %p424 = scmp.lt.s32.totalorder %s423, 2271
        %s425 = scalar_select %p424, %s423, 2271
        %s426 = smul.addr %s425, 8
        %s427 = scalar_lea.vmem %s2, %s426
        %s428 = smul.u32 32, %s31
        %s429 = smul.u32 2, %s31
        %s430 = sld [smem:[#allocation4 + %s31]]
        %s431 = smul.u32 64, %s430
        %p432 = scmp.lt.s32.totalorder %s431, 255
        %s433 = scalar_select %p432, %s431, 255
        %s434 = scalar_lea.vmem %s4, %s433
        %s435 = sld [smem:[#allocation4 + %s31]]
        %s436 = smul.u32 64, %s435
        %s437 = sld [smem:[#allocation4 + %s31]]
        %s438 = smul.u32 64, %s437
        %p439 = scmp.lt.s32.totalorder %s438, 255
        %s440 = scalar_select %p439, %s438, 255
        %s441 = scalar_lea.vmem %s5, %s440
        %s442 = sld [smem:[#allocation4 + %s31]]
        %s443 = smul.u32 64, %s442
        %s444 = sld [smem:[#allocation4 + %s31]]
        %s445 = smul.u32 64, %s444
        %p446 = scmp.lt.s32.totalorder %s445, 255
        %s447 = scalar_select %p446, %s445, 255
        %s448 = smul.addr %s447, 4
        %s449 = scalar_lea.vmem %s6, %s448
        %s450 = sld [smem:[#allocation4 + %s31]]
        %s451 = smul.u32 64, %s450
        %s452 = sld [smem:[#allocation4 + %s31]]
        %s453 = smul.u32 64, %s452
        %p454 = scmp.lt.s32.totalorder %s453, 255
        %s455 = scalar_select %p454, %s453, 255
        %s456 = scalar_lea.vmem %s7, %s455
        %s457 = sld [smem:[#allocation4 + %s31]]
        %s458 = smul.u32 64, %s457
        %s459 = sld [smem:[#allocation4 + %s31]]
        %s460 = smul.u32 64, %s459
        %p461 = scmp.lt.s32.totalorder %s460, 255
        %s462 = scalar_select %p461, %s460, 255
        %s463 = scalar_lea.vmem %s8, %s462
        %s464 = sld [smem:[#allocation4 + %s31]]
        %s465 = smul.u32 64, %s464
        %s466 = sld [smem:[#allocation4 + %s31]]
        %s467 = smul.u32 64, %s466
        %p468 = scmp.lt.s32.totalorder %s467, 255
        %s469 = scalar_select %p468, %s467, 255
        %s470 = smul.addr %s469, 4
        %s471 = scalar_lea.vmem %s9, %s470
        %s472 = sld [smem:[#allocation4 + %s31]]
        %s473 = smul.u32 64, %s472
        %s474 = sld [smem:[#allocation4 + %s31]]
        %s475 = ssub.s32 %s31, 1
        %p476 = scmp.gt.s32.totalorder %s475, 0
        %s477 = scalar_select %p476, %s475, 0
        %s478 = sld [smem:[#allocation4 + %s477]]
        %s479 = sadd.s32 %s31, 1
        %s480 = sld [smem:[#allocation4 + %s479]]
        %p481 = scmp.eq.s32.totalorder %s31, 0
        %p482 = scmp.ne.s32.totalorder %s478, %s474
        %p483 = por %p481, %p482
        %p484 = scmp.ne.s32.totalorder %s480, %s474
        // Predicated region
        $region79: #{_lambda_.1} parent=73 // pred_check
          %p485 = pneg %p483
        $region80: #{_lambda_.1} parent=73 // pred_check_branch
          %487 = sbr.rel (%p485) target = $region82
        $region81: #{_lambda_.1} parent=73 // pred_region
          %488 = vst [vmem:[#allocation2] sm:$0xff] 0.0
          %489 = vst [vmem:[#allocation2 + $0x8] sm:$0xff] 0.0
          %490 = vst [vmem:[#allocation2 + $0x10] sm:$0xff] 0.0
          %491 = vst [vmem:[#allocation2 + $0x18] sm:$0xff] 0.0
          %492 = vst [vmem:[#allocation2 + $0x20] sm:$0xff] 0.0
          %493 = vst [vmem:[#allocation2 + $0x28] sm:$0xff] 0.0
          %494 = vst [vmem:[#allocation2 + $0x30] sm:$0xff] 0.0
          %495 = vst [vmem:[#allocation2 + $0x38] sm:$0xff] 0.0
          %496 = vst [vmem:[#allocation2 + $0x40] sm:$0xff] 0.0
          %497 = vst [vmem:[#allocation2 + $0x48] sm:$0xff] 0.0
          %498 = vst [vmem:[#allocation2 + $0x50] sm:$0xff] 0.0
          %499 = vst [vmem:[#allocation2 + $0x58] sm:$0xff] 0.0
          %500 = vst [vmem:[#allocation2 + $0x60] sm:$0xff] 0.0
          %501 = vst [vmem:[#allocation2 + $0x68] sm:$0xff] 0.0
          %502 = vst [vmem:[#allocation2 + $0x70] sm:$0xff] 0.0
          %503 = vst [vmem:[#allocation2 + $0x78] sm:$0xff] 0.0
          %504 = vst [vmem:[#allocation2 + $0x80] sm:$0xff] 0.0
          %505 = vst [vmem:[#allocation2 + $0x88] sm:$0xff] 0.0
          %506 = vst [vmem:[#allocation2 + $0x90] sm:$0xff] 0.0
          %507 = vst [vmem:[#allocation2 + $0x98] sm:$0xff] 0.0
          %508 = vst [vmem:[#allocation2 + $0xa0] sm:$0xff] 0.0
          %509 = vst [vmem:[#allocation2 + $0xa8] sm:$0xff] 0.0
          %510 = vst [vmem:[#allocation2 + $0xb0] sm:$0xff] 0.0
          %511 = vst [vmem:[#allocation2 + $0xb8] sm:$0xff] 0.0
          %512 = vst [vmem:[#allocation2 + $0xc0] sm:$0xff] 0.0
          %513 = vst [vmem:[#allocation2 + $0xc8] sm:$0xff] 0.0
          %514 = vst [vmem:[#allocation2 + $0xd0] sm:$0xff] 0.0
          %515 = vst [vmem:[#allocation2 + $0xd8] sm:$0xff] 0.0
          %516 = vst [vmem:[#allocation2 + $0xe0] sm:$0xff] 0.0
          %517 = vst [vmem:[#allocation2 + $0xe8] sm:$0xff] 0.0
          %518 = vst [vmem:[#allocation2 + $0xf0] sm:$0xff] 0.0
          %519 = vst [vmem:[#allocation2 + $0xf8] sm:$0xff] 0.0
          %520 = vst [vmem:[#allocation2 + $0x100] sm:$0xff] 0.0
          %521 = vst [vmem:[#allocation2 + $0x108] sm:$0xff] 0.0
          %522 = vst [vmem:[#allocation2 + $0x110] sm:$0xff] 0.0
          %523 = vst [vmem:[#allocation2 + $0x118] sm:$0xff] 0.0
          %524 = vst [vmem:[#allocation2 + $0x120] sm:$0xff] 0.0
          %525 = vst [vmem:[#allocation2 + $0x128] sm:$0xff] 0.0
          %526 = vst [vmem:[#allocation2 + $0x130] sm:$0xff] 0.0
          %527 = vst [vmem:[#allocation2 + $0x138] sm:$0xff] 0.0
          %528 = vst [vmem:[#allocation2 + $0x140] sm:$0xff] 0.0
          %529 = vst [vmem:[#allocation2 + $0x148] sm:$0xff] 0.0
          %530 = vst [vmem:[#allocation2 + $0x150] sm:$0xff] 0.0
          %531 = vst [vmem:[#allocation2 + $0x158] sm:$0xff] 0.0
          %532 = vst [vmem:[#allocation2 + $0x160] sm:$0xff] 0.0
          %533 = vst [vmem:[#allocation2 + $0x168] sm:$0xff] 0.0
          %534 = vst [vmem:[#allocation2 + $0x170] sm:$0xff] 0.0
          %535 = vst [vmem:[#allocation2 + $0x178] sm:$0xff] 0.0
          %536 = vst [vmem:[#allocation2 + $0x180] sm:$0xff] 0.0
          %537 = vst [vmem:[#allocation2 + $0x188] sm:$0xff] 0.0
          %538 = vst [vmem:[#allocation2 + $0x190] sm:$0xff] 0.0
          %539 = vst [vmem:[#allocation2 + $0x198] sm:$0xff] 0.0
          %540 = vst [vmem:[#allocation2 + $0x1a0] sm:$0xff] 0.0
          %541 = vst [vmem:[#allocation2 + $0x1a8] sm:$0xff] 0.0
          %542 = vst [vmem:[#allocation2 + $0x1b0] sm:$0xff] 0.0
          %543 = vst [vmem:[#allocation2 + $0x1b8] sm:$0xff] 0.0
          %544 = vst [vmem:[#allocation2 + $0x1c0] sm:$0xff] 0.0
          %545 = vst [vmem:[#allocation2 + $0x1c8] sm:$0xff] 0.0
          %546 = vst [vmem:[#allocation2 + $0x1d0] sm:$0xff] 0.0
          %547 = vst [vmem:[#allocation2 + $0x1d8] sm:$0xff] 0.0
          %548 = vst [vmem:[#allocation2 + $0x1e0] sm:$0xff] 0.0
          %549 = vst [vmem:[#allocation2 + $0x1e8] sm:$0xff] 0.0
          %550 = vst [vmem:[#allocation2 + $0x1f0] sm:$0xff] 0.0
          %551 = vst [vmem:[#allocation2 + $0x1f8] sm:$0xff] 0.0
          %552 = vst [vmem:[#allocation2 + $0x200] sm:$0xff] 0.0
          %553 = vst [vmem:[#allocation2 + $0x208] sm:$0xff] 0.0
          %554 = vst [vmem:[#allocation2 + $0x210] sm:$0xff] 0.0
          %555 = vst [vmem:[#allocation2 + $0x218] sm:$0xff] 0.0
          %556 = vst [vmem:[#allocation2 + $0x220] sm:$0xff] 0.0
          %557 = vst [vmem:[#allocation2 + $0x228] sm:$0xff] 0.0
          %558 = vst [vmem:[#allocation2 + $0x230] sm:$0xff] 0.0
          %559 = vst [vmem:[#allocation2 + $0x238] sm:$0xff] 0.0
          %560 = vst [vmem:[#allocation2 + $0x240] sm:$0xff] 0.0
          %561 = vst [vmem:[#allocation2 + $0x248] sm:$0xff] 0.0
          %562 = vst [vmem:[#allocation2 + $0x250] sm:$0xff] 0.0
          %563 = vst [vmem:[#allocation2 + $0x258] sm:$0xff] 0.0
          %564 = vst [vmem:[#allocation2 + $0x260] sm:$0xff] 0.0
          %565 = vst [vmem:[#allocation2 + $0x268] sm:$0xff] 0.0
          %566 = vst [vmem:[#allocation2 + $0x270] sm:$0xff] 0.0
          %567 = vst [vmem:[#allocation2 + $0x278] sm:$0xff] 0.0
          %568 = vst [vmem:[#allocation2 + $0x280] sm:$0xff] 0.0
          %569 = vst [vmem:[#allocation2 + $0x288] sm:$0xff] 0.0
          %570 = vst [vmem:[#allocation2 + $0x290] sm:$0xff] 0.0
          %571 = vst [vmem:[#allocation2 + $0x298] sm:$0xff] 0.0
          %572 = vst [vmem:[#allocation2 + $0x2a0] sm:$0xff] 0.0
          %573 = vst [vmem:[#allocation2 + $0x2a8] sm:$0xff] 0.0
          %574 = vst [vmem:[#allocation2 + $0x2b0] sm:$0xff] 0.0
          %575 = vst [vmem:[#allocation2 + $0x2b8] sm:$0xff] 0.0
          %576 = vst [vmem:[#allocation2 + $0x2c0] sm:$0xff] 0.0
          %577 = vst [vmem:[#allocation2 + $0x2c8] sm:$0xff] 0.0
          %578 = vst [vmem:[#allocation2 + $0x2d0] sm:$0xff] 0.0
          %579 = vst [vmem:[#allocation2 + $0x2d8] sm:$0xff] 0.0
          %580 = vst [vmem:[#allocation2 + $0x2e0] sm:$0xff] 0.0
          %581 = vst [vmem:[#allocation2 + $0x2e8] sm:$0xff] 0.0
          %582 = vst [vmem:[#allocation2 + $0x2f0] sm:$0xff] 0.0
          %583 = vst [vmem:[#allocation2 + $0x2f8] sm:$0xff] 0.0
          %584 = vst [vmem:[#allocation2 + $0x300] sm:$0xff] 0.0
          %585 = vst [vmem:[#allocation2 + $0x308] sm:$0xff] 0.0
          %586 = vst [vmem:[#allocation2 + $0x310] sm:$0xff] 0.0
          %587 = vst [vmem:[#allocation2 + $0x318] sm:$0xff] 0.0
          %588 = vst [vmem:[#allocation2 + $0x320] sm:$0xff] 0.0
          %589 = vst [vmem:[#allocation2 + $0x328] sm:$0xff] 0.0
          %590 = vst [vmem:[#allocation2 + $0x330] sm:$0xff] 0.0
          %591 = vst [vmem:[#allocation2 + $0x338] sm:$0xff] 0.0
          %592 = vst [vmem:[#allocation2 + $0x340] sm:$0xff] 0.0
          %593 = vst [vmem:[#allocation2 + $0x348] sm:$0xff] 0.0
          %594 = vst [vmem:[#allocation2 + $0x350] sm:$0xff] 0.0
          %595 = vst [vmem:[#allocation2 + $0x358] sm:$0xff] 0.0
          %596 = vst [vmem:[#allocation2 + $0x360] sm:$0xff] 0.0
          %597 = vst [vmem:[#allocation2 + $0x368] sm:$0xff] 0.0
          %598 = vst [vmem:[#allocation2 + $0x370] sm:$0xff] 0.0
          %599 = vst [vmem:[#allocation2 + $0x378] sm:$0xff] 0.0
          %600 = vst [vmem:[#allocation2 + $0x380] sm:$0xff] 0.0
          %601 = vst [vmem:[#allocation2 + $0x388] sm:$0xff] 0.0
          %602 = vst [vmem:[#allocation2 + $0x390] sm:$0xff] 0.0
          %603 = vst [vmem:[#allocation2 + $0x398] sm:$0xff] 0.0
          %604 = vst [vmem:[#allocation2 + $0x3a0] sm:$0xff] 0.0
          %605 = vst [vmem:[#allocation2 + $0x3a8] sm:$0xff] 0.0
          %606 = vst [vmem:[#allocation2 + $0x3b0] sm:$0xff] 0.0
          %607 = vst [vmem:[#allocation2 + $0x3b8] sm:$0xff] 0.0
          %608 = vst [vmem:[#allocation2 + $0x3c0] sm:$0xff] 0.0
          %609 = vst [vmem:[#allocation2 + $0x3c8] sm:$0xff] 0.0
          %610 = vst [vmem:[#allocation2 + $0x3d0] sm:$0xff] 0.0
          %611 = vst [vmem:[#allocation2 + $0x3d8] sm:$0xff] 0.0
          %612 = vst [vmem:[#allocation2 + $0x3e0] sm:$0xff] 0.0
          %613 = vst [vmem:[#allocation2 + $0x3e8] sm:$0xff] 0.0
          %614 = vst [vmem:[#allocation2 + $0x3f0] sm:$0xff] 0.0
          %615 = vst [vmem:[#allocation2 + $0x3f8] sm:$0xff] 0.0
        $region82: #{_lambda_.1} parent=73 // pred_fallthru
          _
        %v616 = vld [vmem:[%s427] sm:$0xff]
        %v617 = vld [vmem:[%s427 + $0x8] sm:$0xff]
        %v618 = vld [vmem:[%s427 + $0x10] sm:$0xff]
        %v619 = vld [vmem:[%s427 + $0x18] sm:$0xff]
        %v620 = vld [vmem:[%s427 + $0x20] sm:$0xff]
        %v621 = vld [vmem:[%s427 + $0x28] sm:$0xff]
        %v622 = vld [vmem:[%s427 + $0x30] sm:$0xff]
        %v623 = vld [vmem:[%s427 + $0x38] sm:$0xff]
        %v624 = vld [vmem:[%s427 + $0x40] sm:$0xff]
        %v625 = vld [vmem:[%s427 + $0x48] sm:$0xff]
        %v626 = vld [vmem:[%s427 + $0x50] sm:$0xff]
        %v627 = vld [vmem:[%s427 + $0x58] sm:$0xff]
        %v628 = vld [vmem:[%s427 + $0x60] sm:$0xff]
        %v629 = vld [vmem:[%s427 + $0x68] sm:$0xff]
        %v630 = vld [vmem:[%s427 + $0x70] sm:$0xff]
        %v631 = vld [vmem:[%s427 + $0x78] sm:$0xff]
        %v632 = vld [vmem:[%s427 + $0x80] sm:$0xff]
        %v633 = vld [vmem:[%s427 + $0x88] sm:$0xff]
        %v634 = vld [vmem:[%s427 + $0x90] sm:$0xff]
        %v635 = vld [vmem:[%s427 + $0x98] sm:$0xff]
        %v636 = vld [vmem:[%s427 + $0xa0] sm:$0xff]
        %v637 = vld [vmem:[%s427 + $0xa8] sm:$0xff]
        %v638 = vld [vmem:[%s427 + $0xb0] sm:$0xff]
        %v639 = vld [vmem:[%s427 + $0xb8] sm:$0xff]
        %v640 = vld [vmem:[%s427 + $0xc0] sm:$0xff]
        %v641 = vld [vmem:[%s427 + $0xc8] sm:$0xff]
        %v642 = vld [vmem:[%s427 + $0xd0] sm:$0xff]
        %v643 = vld [vmem:[%s427 + $0xd8] sm:$0xff]
        %v644 = vld [vmem:[%s427 + $0xe0] sm:$0xff]
        %v645 = vld [vmem:[%s427 + $0xe8] sm:$0xff]
        %v646 = vld [vmem:[%s427 + $0xf0] sm:$0xff]
        %v647 = vld [vmem:[%s427 + $0xf8] sm:$0xff]
        %v648 = vlaneseq
        %v649 = vand.u32 %v648, 127
        %v650 = vadd.s32 %v649, 128
        %v651 = vadd.s32 %v649, 256
        %v652 = vadd.s32 %v649, 384
        %653 = vset.pattern.permute.xlu0 0
        %654 = vperm.xlu0 %653, %v616
        %v655 = vpop.permute.xlu0 %654
        %656 = vset.pattern.permute.xlu0 0
        %657 = vperm.xlu0 %656, %v617
        %v658 = vpop.permute.xlu0 %657
        %659 = vset.pattern.permute.xlu0 0
        %660 = vperm.xlu0 %659, %v618
        %v661 = vpop.permute.xlu0 %660
        %662 = vset.pattern.permute.xlu0 0
        %663 = vperm.xlu0 %662, %v619
        %v664 = vpop.permute.xlu0 %663
        %665 = vset.pattern.permute.xlu0 0
        %666 = vperm.xlu0 %665, %v620
        %v667 = vpop.permute.xlu0 %666
        %668 = vset.pattern.permute.xlu0 0
        %669 = vperm.xlu0 %668, %v621
        %v670 = vpop.permute.xlu0 %669
        %671 = vset.pattern.permute.xlu0 0
        %672 = vperm.xlu0 %671, %v622
        %v673 = vpop.permute.xlu0 %672
        %674 = vset.pattern.permute.xlu0 0
        %675 = vperm.xlu0 %674, %v623
        %v676 = vpop.permute.xlu0 %675
        %677 = vset.pattern.permute.xlu0 0
        %678 = vperm.xlu0 %677, %v624
        %v679 = vpop.permute.xlu0 %678
        %680 = vset.pattern.permute.xlu0 0
        %681 = vperm.xlu0 %680, %v625
        %v682 = vpop.permute.xlu0 %681
        %683 = vset.pattern.permute.xlu0 0
        %684 = vperm.xlu0 %683, %v626
        %v685 = vpop.permute.xlu0 %684
        %686 = vset.pattern.permute.xlu0 0
        %687 = vperm.xlu0 %686, %v627
        %v688 = vpop.permute.xlu0 %687
        %689 = vset.pattern.permute.xlu0 0
        %690 = vperm.xlu0 %689, %v628
        %v691 = vpop.permute.xlu0 %690
        %692 = vset.pattern.permute.xlu0 0
        %693 = vperm.xlu0 %692, %v629
        %v694 = vpop.permute.xlu0 %693
        %695 = vset.pattern.permute.xlu0 0
        %696 = vperm.xlu0 %695, %v630
        %v697 = vpop.permute.xlu0 %696
        %698 = vset.pattern.permute.xlu0 0
        %699 = vperm.xlu0 %698, %v631
        %v700 = vpop.permute.xlu0 %699
        %701 = vset.pattern.permute.xlu0 0
        %702 = vperm.xlu0 %701, %v632
        %v703 = vpop.permute.xlu0 %702
        %704 = vset.pattern.permute.xlu0 0
        %705 = vperm.xlu0 %704, %v633
        %v706 = vpop.permute.xlu0 %705
        %707 = vset.pattern.permute.xlu0 0
        %708 = vperm.xlu0 %707, %v634
        %v709 = vpop.permute.xlu0 %708
        %710 = vset.pattern.permute.xlu0 0
        %711 = vperm.xlu0 %710, %v635
        %v712 = vpop.permute.xlu0 %711
        %713 = vset.pattern.permute.xlu0 0
        %714 = vperm.xlu0 %713, %v636
        %v715 = vpop.permute.xlu0 %714
        %716 = vset.pattern.permute.xlu0 0
        %717 = vperm.xlu0 %716, %v637
        %v718 = vpop.permute.xlu0 %717
        %719 = vset.pattern.permute.xlu0 0
        %720 = vperm.xlu0 %719, %v638
        %v721 = vpop.permute.xlu0 %720
        %722 = vset.pattern.permute.xlu0 0
        %723 = vperm.xlu0 %722, %v639
        %v724 = vpop.permute.xlu0 %723
        %725 = vset.pattern.permute.xlu0 0
        %726 = vperm.xlu0 %725, %v640
        %v727 = vpop.permute.xlu0 %726
        %728 = vset.pattern.permute.xlu0 0
        %729 = vperm.xlu0 %728, %v641
        %v730 = vpop.permute.xlu0 %729
        %731 = vset.pattern.permute.xlu0 0
        %732 = vperm.xlu0 %731, %v642
        %v733 = vpop.permute.xlu0 %732
        %734 = vset.pattern.permute.xlu0 0
        %735 = vperm.xlu0 %734, %v643
        %v736 = vpop.permute.xlu0 %735
        %737 = vset.pattern.permute.xlu0 0
        %738 = vperm.xlu0 %737, %v644
        %v739 = vpop.permute.xlu0 %738
        %740 = vset.pattern.permute.xlu0 0
        %741 = vperm.xlu0 %740, %v645
        %v742 = vpop.permute.xlu0 %741
        %743 = vset.pattern.permute.xlu0 0
        %744 = vperm.xlu0 %743, %v646
        %v745 = vpop.permute.xlu0 %744
        %746 = vset.pattern.permute.xlu0 0
        %747 = vperm.xlu0 %746, %v647
        %v748 = vpop.permute.xlu0 %747
        %vm749 = vcmp.eq.s32.totalorder %v649, %v655
        %vm750 = vcmp.eq.s32.totalorder %v650, %v655
        %vm751 = vcmp.eq.s32.totalorder %v651, %v655
        %vm752 = vcmp.eq.s32.totalorder %v652, %v655
        %vm753 = vcmp.eq.s32.totalorder %v649, %v658
        %vm754 = vcmp.eq.s32.totalorder %v650, %v658
        %vm755 = vcmp.eq.s32.totalorder %v651, %v658
        %vm756 = vcmp.eq.s32.totalorder %v652, %v658
        %vm757 = vcmp.eq.s32.totalorder %v649, %v661
        %vm758 = vcmp.eq.s32.totalorder %v650, %v661
        %vm759 = vcmp.eq.s32.totalorder %v651, %v661
        %vm760 = vcmp.eq.s32.totalorder %v652, %v661
        %vm761 = vcmp.eq.s32.totalorder %v649, %v664
        %vm762 = vcmp.eq.s32.totalorder %v650, %v664
        %vm763 = vcmp.eq.s32.totalorder %v651, %v664
        %vm764 = vcmp.eq.s32.totalorder %v652, %v664
        %vm765 = vcmp.eq.s32.totalorder %v649, %v667
        %vm766 = vcmp.eq.s32.totalorder %v650, %v667
        %vm767 = vcmp.eq.s32.totalorder %v651, %v667
        %vm768 = vcmp.eq.s32.totalorder %v652, %v667
        %vm769 = vcmp.eq.s32.totalorder %v649, %v670
        %vm770 = vcmp.eq.s32.totalorder %v650, %v670
        %vm771 = vcmp.eq.s32.totalorder %v651, %v670
        %vm772 = vcmp.eq.s32.totalorder %v652, %v670
        %vm773 = vcmp.eq.s32.totalorder %v649, %v673
        %vm774 = vcmp.eq.s32.totalorder %v650, %v673
        %vm775 = vcmp.eq.s32.totalorder %v651, %v673
        %vm776 = vcmp.eq.s32.totalorder %v652, %v673
        %vm777 = vcmp.eq.s32.totalorder %v649, %v676
        %vm778 = vcmp.eq.s32.totalorder %v650, %v676
        %vm779 = vcmp.eq.s32.totalorder %v651, %v676
        %vm780 = vcmp.eq.s32.totalorder %v652, %v676
        %vm781 = vcmp.eq.s32.totalorder %v649, %v679
        %vm782 = vcmp.eq.s32.totalorder %v650, %v679
        %vm783 = vcmp.eq.s32.totalorder %v651, %v679
        %vm784 = vcmp.eq.s32.totalorder %v652, %v679
        %vm785 = vcmp.eq.s32.totalorder %v649, %v682
        %vm786 = vcmp.eq.s32.totalorder %v650, %v682
        %vm787 = vcmp.eq.s32.totalorder %v651, %v682
        %vm788 = vcmp.eq.s32.totalorder %v652, %v682
        %vm789 = vcmp.eq.s32.totalorder %v649, %v685
        %vm790 = vcmp.eq.s32.totalorder %v650, %v685
        %vm791 = vcmp.eq.s32.totalorder %v651, %v685
        %vm792 = vcmp.eq.s32.totalorder %v652, %v685
        %vm793 = vcmp.eq.s32.totalorder %v649, %v688
        %vm794 = vcmp.eq.s32.totalorder %v650, %v688
        %vm795 = vcmp.eq.s32.totalorder %v651, %v688
        %vm796 = vcmp.eq.s32.totalorder %v652, %v688
        %vm797 = vcmp.eq.s32.totalorder %v649, %v691
        %vm798 = vcmp.eq.s32.totalorder %v650, %v691
        %vm799 = vcmp.eq.s32.totalorder %v651, %v691
        %vm800 = vcmp.eq.s32.totalorder %v652, %v691
        %vm801 = vcmp.eq.s32.totalorder %v649, %v694
        %vm802 = vcmp.eq.s32.totalorder %v650, %v694
        %vm803 = vcmp.eq.s32.totalorder %v651, %v694
        %vm804 = vcmp.eq.s32.totalorder %v652, %v694
        %vm805 = vcmp.eq.s32.totalorder %v649, %v697
        %vm806 = vcmp.eq.s32.totalorder %v650, %v697
        %vm807 = vcmp.eq.s32.totalorder %v651, %v697
        %vm808 = vcmp.eq.s32.totalorder %v652, %v697
        %vm809 = vcmp.eq.s32.totalorder %v649, %v700
        %vm810 = vcmp.eq.s32.totalorder %v650, %v700
        %vm811 = vcmp.eq.s32.totalorder %v651, %v700
        %vm812 = vcmp.eq.s32.totalorder %v652, %v700
        %vm813 = vcmp.eq.s32.totalorder %v649, %v703
        %vm814 = vcmp.eq.s32.totalorder %v650, %v703
        %vm815 = vcmp.eq.s32.totalorder %v651, %v703
        %vm816 = vcmp.eq.s32.totalorder %v652, %v703
        %vm817 = vcmp.eq.s32.totalorder %v649, %v706
        %vm818 = vcmp.eq.s32.totalorder %v650, %v706
        %vm819 = vcmp.eq.s32.totalorder %v651, %v706
        %vm820 = vcmp.eq.s32.totalorder %v652, %v706
        %vm821 = vcmp.eq.s32.totalorder %v649, %v709
        %vm822 = vcmp.eq.s32.totalorder %v650, %v709
        %vm823 = vcmp.eq.s32.totalorder %v651, %v709
        %vm824 = vcmp.eq.s32.totalorder %v652, %v709
        %vm825 = vcmp.eq.s32.totalorder %v649, %v712
        %vm826 = vcmp.eq.s32.totalorder %v650, %v712
        %vm827 = vcmp.eq.s32.totalorder %v651, %v712
        %vm828 = vcmp.eq.s32.totalorder %v652, %v712
        %vm829 = vcmp.eq.s32.totalorder %v649, %v715
        %vm830 = vcmp.eq.s32.totalorder %v650, %v715
        %vm831 = vcmp.eq.s32.totalorder %v651, %v715
        %vm832 = vcmp.eq.s32.totalorder %v652, %v715
        %vm833 = vcmp.eq.s32.totalorder %v649, %v718
        %vm834 = vcmp.eq.s32.totalorder %v650, %v718
        %vm835 = vcmp.eq.s32.totalorder %v651, %v718
        %vm836 = vcmp.eq.s32.totalorder %v652, %v718
        %vm837 = vcmp.eq.s32.totalorder %v649, %v721
        %vm838 = vcmp.eq.s32.totalorder %v650, %v721
        %vm839 = vcmp.eq.s32.totalorder %v651, %v721
        %vm840 = vcmp.eq.s32.totalorder %v652, %v721
        %vm841 = vcmp.eq.s32.totalorder %v649, %v724
        %vm842 = vcmp.eq.s32.totalorder %v650, %v724
        %vm843 = vcmp.eq.s32.totalorder %v651, %v724
        %vm844 = vcmp.eq.s32.totalorder %v652, %v724
        %vm845 = vcmp.eq.s32.totalorder %v649, %v727
        %vm846 = vcmp.eq.s32.totalorder %v650, %v727
        %vm847 = vcmp.eq.s32.totalorder %v651, %v727
        %vm848 = vcmp.eq.s32.totalorder %v652, %v727
        %vm849 = vcmp.eq.s32.totalorder %v649, %v730
        %vm850 = vcmp.eq.s32.totalorder %v650, %v730
        %vm851 = vcmp.eq.s32.totalorder %v651, %v730
        %vm852 = vcmp.eq.s32.totalorder %v652, %v730
        %vm853 = vcmp.eq.s32.totalorder %v649, %v733
        %vm854 = vcmp.eq.s32.totalorder %v650, %v733
        %vm855 = vcmp.eq.s32.totalorder %v651, %v733
        %vm856 = vcmp.eq.s32.totalorder %v652, %v733
        %vm857 = vcmp.eq.s32.totalorder %v649, %v736
        %vm858 = vcmp.eq.s32.totalorder %v650, %v736
        %vm859 = vcmp.eq.s32.totalorder %v651, %v736
        %vm860 = vcmp.eq.s32.totalorder %v652, %v736
        %vm861 = vcmp.eq.s32.totalorder %v649, %v739
        %vm862 = vcmp.eq.s32.totalorder %v650, %v739
        %vm863 = vcmp.eq.s32.totalorder %v651, %v739
        %vm864 = vcmp.eq.s32.totalorder %v652, %v739
        %vm865 = vcmp.eq.s32.totalorder %v649, %v742
        %vm866 = vcmp.eq.s32.totalorder %v650, %v742
        %vm867 = vcmp.eq.s32.totalorder %v651, %v742
        %vm868 = vcmp.eq.s32.totalorder %v652, %v742
        %vm869 = vcmp.eq.s32.totalorder %v649, %v745
        %vm870 = vcmp.eq.s32.totalorder %v650, %v745
        %vm871 = vcmp.eq.s32.totalorder %v651, %v745
        %vm872 = vcmp.eq.s32.totalorder %v652, %v745
        %vm873 = vcmp.eq.s32.totalorder %v649, %v748
        %vm874 = vcmp.eq.s32.totalorder %v650, %v748
        %vm875 = vcmp.eq.s32.totalorder %v651, %v748
        %vm876 = vcmp.eq.s32.totalorder %v652, %v748
        %v877 = vld [vmem:[%s362] sm:$0xff]
        %v878 = vld [vmem:[%s362 + $0x8] sm:$0xff]
        %v879 = vsel %vm749, 1, 0
        %v880 = vsel %vm750, 1, 0
        %v881 = vsel %vm751, 1, 0
        %v882 = vsel %vm752, 1, 0
        %v883 = vsel %vm753, 1, 0
        %v884 = vsel %vm754, 1, 0
        %v885 = vsel %vm755, 1, 0
        %v886 = vsel %vm756, 1, 0
        %v887 = vsel %vm757, 1, 0
        %v888 = vsel %vm758, 1, 0
        %v889 = vsel %vm759, 1, 0
        %v890 = vsel %vm760, 1, 0
        %v891 = vsel %vm761, 1, 0
        %v892 = vsel %vm762, 1, 0
        %v893 = vsel %vm763, 1, 0
        %v894 = vsel %vm764, 1, 0
        %v895 = vsel %vm765, 1, 0
        %v896 = vsel %vm766, 1, 0
        %v897 = vsel %vm767, 1, 0
        %v898 = vsel %vm768, 1, 0
        %v899 = vsel %vm769, 1, 0
        %v900 = vsel %vm770, 1, 0
        %v901 = vsel %vm771, 1, 0
        %v902 = vsel %vm772, 1, 0
        %v903 = vsel %vm773, 1, 0
        %v904 = vsel %vm774, 1, 0
        %v905 = vsel %vm775, 1, 0
        %v906 = vsel %vm776, 1, 0
        %v907 = vsel %vm777, 1, 0
        %v908 = vsel %vm778, 1, 0
        %v909 = vsel %vm779, 1, 0
        %v910 = vsel %vm780, 1, 0
        %v911 = vsel %vm781, 1, 0
        %v912 = vsel %vm782, 1, 0
        %v913 = vsel %vm783, 1, 0
        %v914 = vsel %vm784, 1, 0
        %v915 = vsel %vm785, 1, 0
        %v916 = vsel %vm786, 1, 0
        %v917 = vsel %vm787, 1, 0
        %v918 = vsel %vm788, 1, 0
        %v919 = vsel %vm789, 1, 0
        %v920 = vsel %vm790, 1, 0
        %v921 = vsel %vm791, 1, 0
        %v922 = vsel %vm792, 1, 0
        %v923 = vsel %vm793, 1, 0
        %v924 = vsel %vm794, 1, 0
        %v925 = vsel %vm795, 1, 0
        %v926 = vsel %vm796, 1, 0
        %v927 = vsel %vm797, 1, 0
        %v928 = vsel %vm798, 1, 0
        %v929 = vsel %vm799, 1, 0
        %v930 = vsel %vm800, 1, 0
        %v931 = vsel %vm801, 1, 0
        %v932 = vsel %vm802, 1, 0
        %v933 = vsel %vm803, 1, 0
        %v934 = vsel %vm804, 1, 0
        %v935 = vsel %vm805, 1, 0
        %v936 = vsel %vm806, 1, 0
        %v937 = vsel %vm807, 1, 0
        %v938 = vsel %vm808, 1, 0
        %v939 = vsel %vm809, 1, 0
        %v940 = vsel %vm810, 1, 0
        %v941 = vsel %vm811, 1, 0
        %v942 = vsel %vm812, 1, 0
        %v943 = vsel %vm813, 1, 0
        %v944 = vsel %vm814, 1, 0
        %v945 = vsel %vm815, 1, 0
        %v946 = vsel %vm816, 1, 0
        %v947 = vsel %vm817, 1, 0
        %v948 = vsel %vm818, 1, 0
        %v949 = vsel %vm819, 1, 0
        %v950 = vsel %vm820, 1, 0
        %v951 = vsel %vm821, 1, 0
        %v952 = vsel %vm822, 1, 0
        %v953 = vsel %vm823, 1, 0
        %v954 = vsel %vm824, 1, 0
        %v955 = vsel %vm825, 1, 0
        %v956 = vsel %vm826, 1, 0
        %v957 = vsel %vm827, 1, 0
        %v958 = vsel %vm828, 1, 0
        %v959 = vsel %vm829, 1, 0
        %v960 = vsel %vm830, 1, 0
        %v961 = vsel %vm831, 1, 0
        %v962 = vsel %vm832, 1, 0
        %v963 = vsel %vm833, 1, 0
        %v964 = vsel %vm834, 1, 0
        %v965 = vsel %vm835, 1, 0
        %v966 = vsel %vm836, 1, 0
        %v967 = vsel %vm837, 1, 0
        %v968 = vsel %vm838, 1, 0
        %v969 = vsel %vm839, 1, 0
        %v970 = vsel %vm840, 1, 0
        %v971 = vsel %vm841, 1, 0
        %v972 = vsel %vm842, 1, 0
        %v973 = vsel %vm843, 1, 0
        %v974 = vsel %vm844, 1, 0
        %v975 = vsel %vm845, 1, 0
        %v976 = vsel %vm846, 1, 0
        %v977 = vsel %vm847, 1, 0
        %v978 = vsel %vm848, 1, 0
        %v979 = vsel %vm849, 1, 0
        %v980 = vsel %vm850, 1, 0
        %v981 = vsel %vm851, 1, 0
        %v982 = vsel %vm852, 1, 0
        %v983 = vsel %vm853, 1, 0
        %v984 = vsel %vm854, 1, 0
        %v985 = vsel %vm855, 1, 0
        %v986 = vsel %vm856, 1, 0
        %v987 = vsel %vm857, 1, 0
        %v988 = vsel %vm858, 1, 0
        %v989 = vsel %vm859, 1, 0
        %v990 = vsel %vm860, 1, 0
        %v991 = vsel %vm861, 1, 0
        %v992 = vsel %vm862, 1, 0
        %v993 = vsel %vm863, 1, 0
        %v994 = vsel %vm864, 1, 0
        %v995 = vsel %vm865, 1, 0
        %v996 = vsel %vm866, 1, 0
        %v997 = vsel %vm867, 1, 0
        %v998 = vsel %vm868, 1, 0
        %v999 = vsel %vm869, 1, 0
        %v1000 = vsel %vm870, 1, 0
        %v1001 = vsel %vm871, 1, 0
        %v1002 = vsel %vm872, 1, 0
        %v1003 = vsel %vm873, 1, 0
        %v1004 = vsel %vm874, 1, 0
        %v1005 = vsel %vm875, 1, 0
        %v1006 = vsel %vm876, 1, 0
        %v1007 = vcvt.s32.f32 %v879
        %v1008 = vcvt.s32.f32 %v880
        %v1009 = vcvt.s32.f32 %v881
        %v1010 = vcvt.s32.f32 %v882
        %v1011 = vcvt.s32.f32 %v883
        %v1012 = vcvt.s32.f32 %v884
        %v1013 = vcvt.s32.f32 %v885
        %v1014 = vcvt.s32.f32 %v886
        %v1015 = vcvt.s32.f32 %v887
        %v1016 = vcvt.s32.f32 %v888
        %v1017 = vcvt.s32.f32 %v889
        %v1018 = vcvt.s32.f32 %v890
        %v1019 = vcvt.s32.f32 %v891
        %v1020 = vcvt.s32.f32 %v892
        %v1021 = vcvt.s32.f32 %v893
        %v1022 = vcvt.s32.f32 %v894
        %v1023 = vcvt.s32.f32 %v895
        %v1024 = vcvt.s32.f32 %v896
        %v1025 = vcvt.s32.f32 %v897
        %v1026 = vcvt.s32.f32 %v898
        %v1027 = vcvt.s32.f32 %v899
        %v1028 = vcvt.s32.f32 %v900
        %v1029 = vcvt.s32.f32 %v901
        %v1030 = vcvt.s32.f32 %v902
        %v1031 = vcvt.s32.f32 %v903
        %v1032 = vcvt.s32.f32 %v904
        %v1033 = vcvt.s32.f32 %v905
        %v1034 = vcvt.s32.f32 %v906
        %v1035 = vcvt.s32.f32 %v907
        %v1036 = vcvt.s32.f32 %v908
        %v1037 = vcvt.s32.f32 %v909
        %v1038 = vcvt.s32.f32 %v910
        %v1039 = vcvt.s32.f32 %v911
        %v1040 = vcvt.s32.f32 %v912
        %v1041 = vcvt.s32.f32 %v913
        %v1042 = vcvt.s32.f32 %v914
        %v1043 = vcvt.s32.f32 %v915
        %v1044 = vcvt.s32.f32 %v916
        %v1045 = vcvt.s32.f32 %v917
        %v1046 = vcvt.s32.f32 %v918
        %v1047 = vcvt.s32.f32 %v919
        %v1048 = vcvt.s32.f32 %v920
        %v1049 = vcvt.s32.f32 %v921
        %v1050 = vcvt.s32.f32 %v922
        %v1051 = vcvt.s32.f32 %v923
        %v1052 = vcvt.s32.f32 %v924
        %v1053 = vcvt.s32.f32 %v925
        %v1054 = vcvt.s32.f32 %v926
        %v1055 = vcvt.s32.f32 %v927
        %v1056 = vcvt.s32.f32 %v928
        %v1057 = vcvt.s32.f32 %v929
        %v1058 = vcvt.s32.f32 %v930
        %v1059 = vcvt.s32.f32 %v931
        %v1060 = vcvt.s32.f32 %v932
        %v1061 = vcvt.s32.f32 %v933
        %v1062 = vcvt.s32.f32 %v934
        %v1063 = vcvt.s32.f32 %v935
        %v1064 = vcvt.s32.f32 %v936
        %v1065 = vcvt.s32.f32 %v937
        %v1066 = vcvt.s32.f32 %v938
        %v1067 = vcvt.s32.f32 %v939
        %v1068 = vcvt.s32.f32 %v940
        %v1069 = vcvt.s32.f32 %v941
        %v1070 = vcvt.s32.f32 %v942
        %v1071 = vcvt.s32.f32 %v943
        %v1072 = vcvt.s32.f32 %v944
        %v1073 = vcvt.s32.f32 %v945
        %v1074 = vcvt.s32.f32 %v946
        %v1075 = vcvt.s32.f32 %v947
        %v1076 = vcvt.s32.f32 %v948
        %v1077 = vcvt.s32.f32 %v949
        %v1078 = vcvt.s32.f32 %v950
        %v1079 = vcvt.s32.f32 %v951
        %v1080 = vcvt.s32.f32 %v952
        %v1081 = vcvt.s32.f32 %v953
        %v1082 = vcvt.s32.f32 %v954
        %v1083 = vcvt.s32.f32 %v955
        %v1084 = vcvt.s32.f32 %v956
        %v1085 = vcvt.s32.f32 %v957
        %v1086 = vcvt.s32.f32 %v958
        %v1087 = vcvt.s32.f32 %v959
        %v1088 = vcvt.s32.f32 %v960
        %v1089 = vcvt.s32.f32 %v961
        %v1090 = vcvt.s32.f32 %v962
        %v1091 = vcvt.s32.f32 %v963
        %v1092 = vcvt.s32.f32 %v964
        %v1093 = vcvt.s32.f32 %v965
        %v1094 = vcvt.s32.f32 %v966
        %v1095 = vcvt.s32.f32 %v967
        %v1096 = vcvt.s32.f32 %v968
        %v1097 = vcvt.s32.f32 %v969
        %v1098 = vcvt.s32.f32 %v970
        %v1099 = vcvt.s32.f32 %v971
        %v1100 = vcvt.s32.f32 %v972
        %v1101 = vcvt.s32.f32 %v973
        %v1102 = vcvt.s32.f32 %v974
        %v1103 = vcvt.s32.f32 %v975
        %v1104 = vcvt.s32.f32 %v976
        %v1105 = vcvt.s32.f32 %v977
        %v1106 = vcvt.s32.f32 %v978
        %v1107 = vcvt.s32.f32 %v979
        %v1108 = vcvt.s32.f32 %v980
        %v1109 = vcvt.s32.f32 %v981
        %v1110 = vcvt.s32.f32 %v982
        %v1111 = vcvt.s32.f32 %v983
        %v1112 = vcvt.s32.f32 %v984
        %v1113 = vcvt.s32.f32 %v985
        %v1114 = vcvt.s32.f32 %v986
        %v1115 = vcvt.s32.f32 %v987
        %v1116 = vcvt.s32.f32 %v988
        %v1117 = vcvt.s32.f32 %v989
        %v1118 = vcvt.s32.f32 %v990
        %v1119 = vcvt.s32.f32 %v991
        %v1120 = vcvt.s32.f32 %v992
        %v1121 = vcvt.s32.f32 %v993
        %v1122 = vcvt.s32.f32 %v994
        %v1123 = vcvt.s32.f32 %v995
        %v1124 = vcvt.s32.f32 %v996
        %v1125 = vcvt.s32.f32 %v997
        %v1126 = vcvt.s32.f32 %v998
        %v1127 = vcvt.s32.f32 %v999
        %v1128 = vcvt.s32.f32 %v1000
        %v1129 = vcvt.s32.f32 %v1001
        %v1130 = vcvt.s32.f32 %v1002
        %v1131 = vcvt.s32.f32 %v1003
        %v1132 = vcvt.s32.f32 %v1004
        %v1133 = vcvt.s32.f32 %v1005
        %v1134 = vcvt.s32.f32 %v1006
        %v1135 = vpack.c.bf16 %v1011, %v1007
        %v1136 = vpack.c.bf16 %v1012, %v1008
        %v1137 = vpack.c.bf16 %v1013, %v1009
        %v1138 = vpack.c.bf16 %v1014, %v1010
        %v1139 = vpack.c.bf16 %v1019, %v1015
        %v1140 = vpack.c.bf16 %v1020, %v1016
        %v1141 = vpack.c.bf16 %v1021, %v1017
        %v1142 = vpack.c.bf16 %v1022, %v1018
        %v1143 = vpack.c.bf16 %v1027, %v1023
        %v1144 = vpack.c.bf16 %v1028, %v1024
        %v1145 = vpack.c.bf16 %v1029, %v1025
        %v1146 = vpack.c.bf16 %v1030, %v1026
        %v1147 = vpack.c.bf16 %v1035, %v1031
        %v1148 = vpack.c.bf16 %v1036, %v1032
        %v1149 = vpack.c.bf16 %v1037, %v1033
        %v1150 = vpack.c.bf16 %v1038, %v1034
        %v1151 = vpack.c.bf16 %v1043, %v1039
        %v1152 = vpack.c.bf16 %v1044, %v1040
        %v1153 = vpack.c.bf16 %v1045, %v1041
        %v1154 = vpack.c.bf16 %v1046, %v1042
        %v1155 = vpack.c.bf16 %v1051, %v1047
        %v1156 = vpack.c.bf16 %v1052, %v1048
        %v1157 = vpack.c.bf16 %v1053, %v1049
        %v1158 = vpack.c.bf16 %v1054, %v1050
        %v1159 = vpack.c.bf16 %v1059, %v1055
        %v1160 = vpack.c.bf16 %v1060, %v1056
        %v1161 = vpack.c.bf16 %v1061, %v1057
        %v1162 = vpack.c.bf16 %v1062, %v1058
        %v1163 = vpack.c.bf16 %v1067, %v1063
        %v1164 = vpack.c.bf16 %v1068, %v1064
        %v1165 = vpack.c.bf16 %v1069, %v1065
        %v1166 = vpack.c.bf16 %v1070, %v1066
        %v1167 = vpack.c.bf16 %v1075, %v1071
        %v1168 = vpack.c.bf16 %v1076, %v1072
        %v1169 = vpack.c.bf16 %v1077, %v1073
        %v1170 = vpack.c.bf16 %v1078, %v1074
        %v1171 = vpack.c.bf16 %v1083, %v1079
        %v1172 = vpack.c.bf16 %v1084, %v1080
        %v1173 = vpack.c.bf16 %v1085, %v1081
        %v1174 = vpack.c.bf16 %v1086, %v1082
        %v1175 = vpack.c.bf16 %v1091, %v1087
        %v1176 = vpack.c.bf16 %v1092, %v1088
        %v1177 = vpack.c.bf16 %v1093, %v1089
        %v1178 = vpack.c.bf16 %v1094, %v1090
        %v1179 = vpack.c.bf16 %v1099, %v1095
        %v1180 = vpack.c.bf16 %v1100, %v1096
        %v1181 = vpack.c.bf16 %v1101, %v1097
        %v1182 = vpack.c.bf16 %v1102, %v1098
        %v1183 = vpack.c.bf16 %v1107, %v1103
        %v1184 = vpack.c.bf16 %v1108, %v1104
        %v1185 = vpack.c.bf16 %v1109, %v1105
        %v1186 = vpack.c.bf16 %v1110, %v1106
        %v1187 = vpack.c.bf16 %v1115, %v1111
        %v1188 = vpack.c.bf16 %v1116, %v1112
        %v1189 = vpack.c.bf16 %v1117, %v1113
        %v1190 = vpack.c.bf16 %v1118, %v1114
        %v1191 = vpack.c.bf16 %v1123, %v1119
        %v1192 = vpack.c.bf16 %v1124, %v1120
        %v1193 = vpack.c.bf16 %v1125, %v1121
        %v1194 = vpack.c.bf16 %v1126, %v1122
        %v1195 = vpack.c.bf16 %v1131, %v1127
        %v1196 = vpack.c.bf16 %v1132, %v1128
        %v1197 = vpack.c.bf16 %v1133, %v1129
        %v1198 = vpack.c.bf16 %v1134, %v1130
        %v1201 = vunpack.c.l.b16 %v877
        %v1202 = vunpack.c.h.b16 %v877
        %v1203 = vunpack.c.l.b16 %v878
        %v1204 = vunpack.c.h.b16 %v878
        %v1205 = vpack.c.b16 %v1203, %v1201
        %v1206 = vpack.c.b16 %v1204, %v1202
        %1209 = vmatprep.subr.bf16.mxu0 %v1164
        %1210 = vmatpush1.bf16.msra.mxu0 %v1163
        %1211 = vmatprep.subr.bf16.mxu0 %v1160
        %1212 = vmatpush1.bf16.msra.mxu0 %v1159
        %1213 = vmatprep.subr.bf16.mxu0 %v1156
        %1214 = vmatpush1.bf16.msra.mxu0 %v1155
        %1215 = vmatprep.subr.bf16.mxu0 %v1152
        %1216 = vmatpush1.bf16.msra.mxu0 %v1151
        %1217 = vmatprep.subr.bf16.mxu0 %v1148
        %1218 = vmatpush1.bf16.msra.mxu0 %v1147
        %1219 = vmatprep.subr.bf16.mxu0 %v1144
        %1220 = vmatpush1.bf16.msra.mxu0 %v1143
        %1221 = vmatprep.subr.bf16.mxu0 %v1140
        %1222 = vmatpush1.bf16.msra.mxu0 %v1139
        %1223 = vmatprep.subr.bf16.mxu0 %v1136
        %1224 = vmatpush1.bf16.msra.mxu0 %v1135
        %1225 = vmatprep.subr.bf16.mxu0 %v1196
        %1226 = vmatpush2.bf16.msra.mxu0 %v1195
        %1227 = vmatprep.subr.bf16.mxu0 %v1192
        %1228 = vmatpush2.bf16.msra.mxu0 %v1191
        %1229 = vmatprep.subr.bf16.mxu0 %v1188
        %1230 = vmatpush2.bf16.msra.mxu0 %v1187
        %1231 = vmatprep.subr.bf16.mxu0 %v1184
        %1232 = vmatpush2.bf16.msra.mxu0 %v1183
        %1233 = vmatprep.subr.bf16.mxu0 %v1180
        %1234 = vmatpush2.bf16.msra.mxu0 %v1179
        %1235 = vmatprep.subr.bf16.mxu0 %v1176
        %1236 = vmatpush2.bf16.msra.mxu0 %v1175
        %1237 = vmatprep.subr.bf16.mxu0 %v1172
        %1238 = vmatpush2.bf16.msra.mxu0 %v1171
        %1239 = vmatprep.subr.bf16.mxu0 %v1168
        %1240 = vmatpush2.bf16.msra.mxu0 %v1167
        %1241 = vmatprep.mubr.bf16.mxu0 %v1206
        %1242 = vmatmul.mubr.bf16.gmra.mxu0 %v1205
        %v1243 = vpop.f32.mrf.mxu0
        %v1244 = vadd.f32 0.0, %v1243
        %v1245 = vpop.f32.mrf.mxu0
        %v1246 = vadd.f32 0.0, %v1245
        %v1247 = vpop.f32.mrf.mxu0
        %v1248 = vadd.f32 0.0, %v1247
        %v1249 = vpop.f32.mrf.mxu0
        %v1250 = vadd.f32 0.0, %v1249
        %1251 = vdwg.mxu0
        %1252 = vmatprep.subr.bf16.mxu0 %v1166
        %1253 = vmatpush1.bf16.msra.mxu0 %v1165
        %1254 = vmatprep.subr.bf16.mxu0 %v1162
        %1255 = vmatpush1.bf16.msra.mxu0 %v1161
        %1256 = vmatprep.subr.bf16.mxu0 %v1158
        %1257 = vmatpush1.bf16.msra.mxu0 %v1157
        %1258 = vmatprep.subr.bf16.mxu0 %v1154
        %1259 = vmatpush1.bf16.msra.mxu0 %v1153
        %1260 = vmatprep.subr.bf16.mxu0 %v1150
        %1261 = vmatpush1.bf16.msra.mxu0 %v1149
        %1262 = vmatprep.subr.bf16.mxu0 %v1146
        %1263 = vmatpush1.bf16.msra.mxu0 %v1145
        %1264 = vmatprep.subr.bf16.mxu0 %v1142
        %1265 = vmatpush1.bf16.msra.mxu0 %v1141
        %1266 = vmatprep.subr.bf16.mxu0 %v1138
        %1267 = vmatpush1.bf16.msra.mxu0 %v1137
        %1268 = vmatprep.subr.bf16.mxu0 %v1198
        %1269 = vmatpush2.bf16.msra.mxu0 %v1197
        %1270 = vmatprep.subr.bf16.mxu0 %v1194
        %1271 = vmatpush2.bf16.msra.mxu0 %v1193
        %1272 = vmatprep.subr.bf16.mxu0 %v1190
        %1273 = vmatpush2.bf16.msra.mxu0 %v1189
        %1274 = vmatprep.subr.bf16.mxu0 %v1186
        %1275 = vmatpush2.bf16.msra.mxu0 %v1185
        %1276 = vmatprep.subr.bf16.mxu0 %v1182
        %1277 = vmatpush2.bf16.msra.mxu0 %v1181
        %1278 = vmatprep.subr.bf16.mxu0 %v1178
        %1279 = vmatpush2.bf16.msra.mxu0 %v1177
        %1280 = vmatprep.subr.bf16.mxu0 %v1174
        %1281 = vmatpush2.bf16.msra.mxu0 %v1173
        %1282 = vmatprep.subr.bf16.mxu0 %v1170
        %1283 = vmatpush2.bf16.msra.mxu0 %v1169
        %1284 = vmatprep.mubr.bf16.mxu0 %v1206
        %1285 = vmatmul.mubr.bf16.gmra.mxu0 %v1205
        %v1286 = vpop.f32.mrf.mxu0
        %v1287 = vadd.f32 0.0, %v1286
        %v1288 = vpop.f32.mrf.mxu0
        %v1289 = vadd.f32 0.0, %v1288
        %v1290 = vpop.f32.mrf.mxu0
        %v1291 = vadd.f32 0.0, %v1290
        %v1292 = vpop.f32.mrf.mxu0
        %v1293 = vadd.f32 0.0, %v1292
        %1294 = vdwg.mxu0
        %s1295 = sld [smem:[#allocation5 + %s31]]
        %s1296 = smul.u32 %s1295, 8
        %s1297 = smul.addr %s1296, 8
        %s1298 = scalar_lea.vmem [#allocation2], %s1297
        %v1299 = vld [vmem:[%s1298] sm:$0xff]
        %v1300 = vld [vmem:[%s1298 + $0x8] sm:$0xff]
        %v1301 = vld [vmem:[%s1298 + $0x10] sm:$0xff]
        %v1302 = vld [vmem:[%s1298 + $0x18] sm:$0xff]
        %v1303 = vld [vmem:[%s1298 + $0x20] sm:$0xff]
        %v1304 = vld [vmem:[%s1298 + $0x28] sm:$0xff]
        %v1305 = vld [vmem:[%s1298 + $0x30] sm:$0xff]
        %v1306 = vld [vmem:[%s1298 + $0x38] sm:$0xff]
        %v1307 = vadd.f32 %v1299, %v1244
        %v1308 = vadd.f32 %v1300, %v1246
        %v1309 = vadd.f32 %v1301, %v1287
        %v1310 = vadd.f32 %v1302, %v1289
        %v1311 = vadd.f32 %v1303, %v1248
        %v1312 = vadd.f32 %v1304, %v1250
        %v1313 = vadd.f32 %v1305, %v1291
        %v1314 = vadd.f32 %v1306, %v1293
        %1315 = vst [vmem:[%s1298] sm:$0xff] %v1307
        %1316 = vst [vmem:[%s1298 + $0x8] sm:$0xff] %v1308
        %1317 = vst [vmem:[%s1298 + $0x10] sm:$0xff] %v1309
        %1318 = vst [vmem:[%s1298 + $0x18] sm:$0xff] %v1310
        %1319 = vst [vmem:[%s1298 + $0x20] sm:$0xff] %v1311
        %1320 = vst [vmem:[%s1298 + $0x28] sm:$0xff] %v1312
        %1321 = vst [vmem:[%s1298 + $0x30] sm:$0xff] %v1313
        %1322 = vst [vmem:[%s1298 + $0x38] sm:$0xff] %v1314
        // Predicated region
        $region83: #{_lambda_.1} parent=73 // pred_check
          %p1323 = pneg %p484
        $region84: #{_lambda_.1} parent=73 // pred_check_branch
          %1325 = sbr.rel (%p1323) target = $region86
        $region85: #{_lambda_.1} parent=73 // pred_region
          %v1326 = vld [vmem:[#allocation2] sm:$0xff]
          %v1327 = vld [vmem:[#allocation2 + $0x8] sm:$0xff]
          %v1328 = vld [vmem:[#allocation2 + $0x10] sm:$0xff]
          %v1329 = vld [vmem:[#allocation2 + $0x18] sm:$0xff]
          %v1330 = vld [vmem:[#allocation2 + $0x20] sm:$0xff]
          %v1331 = vld [vmem:[#allocation2 + $0x28] sm:$0xff]
          %v1332 = vld [vmem:[#allocation2 + $0x30] sm:$0xff]
          %v1333 = vld [vmem:[#allocation2 + $0x38] sm:$0xff]
          %v1334 = vld [vmem:[%s434] sm:$0xf]
          %v1335 = vunpack.c.l.bf16 %v1334
          %v1336 = vld [vmem:[%s441] sm:$0xf]
          %v1337 = vunpack.c.l.bf16 %v1336
          %v1338 = vld [vmem:[%s449] sm:$0xff]
          %v1339 = vld [vmem:[%s449 + $0x8] sm:$0xff]
          %v1340 = vunpack.c.l.bf16 %v1338
          %v1341 = vunpack.c.h.bf16 %v1338
          %v1342 = vunpack.c.l.bf16 %v1339
          %v1343 = vunpack.c.h.bf16 %v1339
          %vm1344 = vcmp.gt.f32.partialorder %v1326, 0.0
          %vm1345 = vcmp.gt.f32.partialorder %v1327, 0.0
          %vm1346 = vcmp.gt.f32.partialorder %v1328, 0.0
          %vm1347 = vcmp.gt.f32.partialorder %v1329, 0.0
          %v1352 = vcombine.low %v1326, %v1327
          %v1353 = vcombine.low %v1328, %v1329
          %v1355 = vunpack.c.l.s4 1983009808
          %v1356 = vunpack.c.0.s8 %v1355
          %v1357 = vlaneseq
          %v1358 = vshrl.u32 %v1357, 7
          %v1359 = vsub.s32 %v1356, %v1358
          %v1360 = vrot.slane %v1352, %v1359
          %v1362 = vunpack.c.l.s4 1983009808
          %v1363 = vunpack.c.0.s8 %v1362
          %v1364 = vlaneseq
          %v1365 = vshrl.u32 %v1364, 7
          %v1366 = vsub.s32 %v1363, %v1365
          %v1367 = vrot.slane %v1353, %v1366
          %v1368 = vcombine.low %v1360, %v1367
          %v1369 = vrot.slane %v1368, 7
          %v1370 = vrot.slane %v1369, 2
          %v1372 = vadd.f32 %v1337, %v1370
          %v1373 = vrcp.pop %v1372
          %v1374 = vmul.f32 %v1337, %v1335
          %v1376 = vadd.f32 %v1374, %v1368
          %v1377 = vmul.f32 %v1376, %v1373
          %v1379 = vlaneseq
          %v1380 = vshrl.u32 %v1379, 7
          %v1381 = vsub.s32 0, %v1380
          %v1382 = vrot.slane %v1377, %v1381
          %v1383 = vlaneseq
          %v1384 = vshrl.u32 %v1383, 7
          %v1385 = vsub.s32 2, %v1384
          %v1386 = vrot.slane %v1377, %v1385
          %v1387 = vlaneseq
          %v1388 = vshrl.u32 %v1387, 7
          %v1389 = vsub.s32 4, %v1388
          %v1390 = vrot.slane %v1377, %v1389
          %v1391 = vlaneseq
          %v1392 = vshrl.u32 %v1391, 7
          %v1393 = vsub.s32 6, %v1392
          %v1394 = vrot.slane %v1377, %v1393
          %v1400 = vlaneseq
          %v1401 = vshrl.u32 %v1400, 7
          %v1402 = vsub.s32 0, %v1401
          %v1403 = vrot.slane %v1335, %v1402
          %v1404 = vlaneseq
          %v1405 = vshrl.u32 %v1404, 7
          %v1406 = vsub.s32 2, %v1405
          %v1407 = vrot.slane %v1335, %v1406
          %v1408 = vlaneseq
          %v1409 = vshrl.u32 %v1408, 7
          %v1410 = vsub.s32 4, %v1409
          %v1411 = vrot.slane %v1335, %v1410
          %v1412 = vlaneseq
          %v1413 = vshrl.u32 %v1412, 7
          %v1414 = vsub.s32 6, %v1413
          %v1415 = vrot.slane %v1335, %v1414
          %v1420 = vsel %vm1344, %v1382, %v1403
          %v1421 = vsel %vm1345, %v1386, %v1407
          %v1422 = vsel %vm1346, %v1390, %v1411
          %v1423 = vsel %vm1347, %v1394, %v1415
          %v1424 = vmax.f32 %v1372, 0.0
          %v1425 = vmin.f32 %v1424, 255.0
          %v1427 = vlaneseq
          %v1428 = vshrl.u32 %v1427, 7
          %v1429 = vsub.s32 0, %v1428
          %v1430 = vrot.slane %v1425, %v1429
          %v1431 = vlaneseq
          %v1432 = vshrl.u32 %v1431, 7
          %v1433 = vsub.s32 2, %v1432
          %v1434 = vrot.slane %v1425, %v1433
          %v1435 = vlaneseq
          %v1436 = vshrl.u32 %v1435, 7
          %v1437 = vsub.s32 4, %v1436
          %v1438 = vrot.slane %v1425, %v1437
          %v1439 = vlaneseq
          %v1440 = vshrl.u32 %v1439, 7
          %v1441 = vsub.s32 6, %v1440
          %v1442 = vrot.slane %v1425, %v1441
          %v1448 = vlaneseq
          %v1449 = vshrl.u32 %v1448, 7
          %v1450 = vsub.s32 0, %v1449
          %v1451 = vrot.slane %v1337, %v1450
          %v1452 = vlaneseq
          %v1453 = vshrl.u32 %v1452, 7
          %v1454 = vsub.s32 2, %v1453
          %v1455 = vrot.slane %v1337, %v1454
          %v1456 = vlaneseq
          %v1457 = vshrl.u32 %v1456, 7
          %v1458 = vsub.s32 4, %v1457
          %v1459 = vrot.slane %v1337, %v1458
          %v1460 = vlaneseq
          %v1461 = vshrl.u32 %v1460, 7
          %v1462 = vsub.s32 6, %v1461
          %v1463 = vrot.slane %v1337, %v1462
          %v1468 = vsel %vm1344, %v1430, %v1451
          %v1469 = vsel %vm1345, %v1434, %v1455
          %v1470 = vsel %vm1346, %v1438, %v1459
          %v1471 = vsel %vm1347, %v1442, %v1463
          %v1472 = vlaneseq
          %v1473 = vshrl.u32 %v1472, 7
          %v1474 = vsub.s32 0, %v1473
          %v1475 = vrot.slane %v1451, %v1474
          %v1476 = vlaneseq
          %v1477 = vshrl.u32 %v1476, 7
          %v1478 = vsub.s32 0, %v1477
          %v1479 = vrot.slane %v1455, %v1478
          %v1480 = vlaneseq
          %v1481 = vshrl.u32 %v1480, 7
          %v1482 = vsub.s32 0, %v1481
          %v1483 = vrot.slane %v1459, %v1482
          %v1484 = vlaneseq
          %v1485 = vshrl.u32 %v1484, 7
          %v1486 = vsub.s32 0, %v1485
          %v1487 = vrot.slane %v1463, %v1486
          %v1488 = vmul.f32 %v1475, %v1340
          %v1489 = vmul.f32 %v1479, %v1341
          %v1490 = vmul.f32 %v1483, %v1342
          %v1491 = vmul.f32 %v1487, %v1343
          %v1492 = vadd.f32 %v1488, %v1330
          %v1493 = vadd.f32 %v1489, %v1331
          %v1494 = vadd.f32 %v1490, %v1332
          %v1495 = vadd.f32 %v1491, %v1333
          %v1497 = vlaneseq
          %v1498 = vshrl.u32 %v1497, 7
          %v1499 = vsub.s32 0, %v1498
          %v1500 = vrot.slane %v1373, %v1499
          %v1501 = vlaneseq
          %v1502 = vshrl.u32 %v1501, 7
          %v1503 = vsub.s32 2, %v1502
          %v1504 = vrot.slane %v1373, %v1503
          %v1505 = vlaneseq
          %v1506 = vshrl.u32 %v1505, 7
          %v1507 = vsub.s32 4, %v1506
          %v1508 = vrot.slane %v1373, %v1507
          %v1509 = vlaneseq
          %v1510 = vshrl.u32 %v1509, 7
          %v1511 = vsub.s32 6, %v1510
          %v1512 = vrot.slane %v1373, %v1511
          %v1517 = vlaneseq
          %v1518 = vshrl.u32 %v1517, 7
          %v1519 = vsub.s32 0, %v1518
          %v1520 = vrot.slane %v1500, %v1519
          %v1521 = vlaneseq
          %v1522 = vshrl.u32 %v1521, 7
          %v1523 = vsub.s32 0, %v1522
          %v1524 = vrot.slane %v1504, %v1523
          %v1525 = vlaneseq
          %v1526 = vshrl.u32 %v1525, 7
          %v1527 = vsub.s32 0, %v1526
          %v1528 = vrot.slane %v1508, %v1527
          %v1529 = vlaneseq
          %v1530 = vshrl.u32 %v1529, 7
          %v1531 = vsub.s32 0, %v1530
          %v1532 = vrot.slane %v1512, %v1531
          %v1533 = vmul.f32 %v1492, %v1520
          %v1534 = vmul.f32 %v1493, %v1524
          %v1535 = vmul.f32 %v1494, %v1528
          %v1536 = vmul.f32 %v1495, %v1532
          %v1537 = vsel %vm1344, 1, 0
          %v1538 = vsel %vm1345, 1, 0
          %v1539 = vsel %vm1346, 1, 0
          %v1540 = vsel %vm1347, 1, 0
          %v1541 = vlaneseq
          %v1542 = vshrl.u32 %v1541, 7
          %v1543 = vsub.s32 2, %v1542
          %v1544 = vrot.slane %v1537, %v1543
          %v1545 = vlaneseq
          %v1546 = vshrl.u32 %v1545, 7
          %v1547 = vsub.s32 2, %v1546
          %v1548 = vrot.slane %v1538, %v1547
          %v1549 = vlaneseq
          %v1550 = vshrl.u32 %v1549, 7
          %v1551 = vsub.s32 2, %v1550
          %v1552 = vrot.slane %v1539, %v1551
          %v1553 = vlaneseq
          %v1554 = vshrl.u32 %v1553, 7
          %v1555 = vsub.s32 2, %v1554
          %v1556 = vrot.slane %v1540, %v1555
          %vm1557 = vcmp.eq.s32.totalorder %v1544, 1
          %vm1558 = vcmp.eq.s32.totalorder %v1548, 1
          %vm1559 = vcmp.eq.s32.totalorder %v1552, 1
          %vm1560 = vcmp.eq.s32.totalorder %v1556, 1
          %v1561 = vsel %vm1557, %v1533, %v1340
          %v1562 = vsel %vm1558, %v1534, %v1341
          %v1563 = vsel %vm1559, %v1535, %v1342
          %v1564 = vsel %vm1560, %v1536, %v1343
          %v1565 = vcombine.high %v1360, %v1367
          %v1566 = vrot.slane %v1565, 7
          %v1567 = vrot.slane %v1566, 2
          %v1569 = vadd.f32 %v1337, %v1567
          %v1570 = vrcp.pop %v1569
          %v1571 = vmul.f32 %v1326, 0.1
          %v1572 = vmul.f32 %v1327, 0.1
          %v1573 = vmul.f32 %v1328, 0.1
          %v1574 = vmul.f32 %v1329, 0.1
          %v1579 = vcombine.low %v1571, %v1572
          %v1580 = vcombine.low %v1573, %v1574
          %v1582 = vunpack.c.l.s4 1983009808
          %v1583 = vunpack.c.0.s8 %v1582
          %v1584 = vlaneseq
          %v1585 = vshrl.u32 %v1584, 7
          %v1586 = vsub.s32 %v1583, %v1585
          %v1587 = vrot.slane %v1579, %v1586
          %v1589 = vunpack.c.l.s4 1983009808
          %v1590 = vunpack.c.0.s8 %v1589
          %v1591 = vlaneseq
          %v1592 = vshrl.u32 %v1591, 7
          %v1593 = vsub.s32 %v1590, %v1592
          %v1594 = vrot.slane %v1580, %v1593
          %v1595 = vcombine.high %v1587, %v1594
          %v1596 = vrot.slane %v1595, 7
          %v1597 = vrot.slane %v1596, 2
          %v1599 = vadd.f32 %v1374, %v1597
          %v1600 = vmul.f32 %v1599, %v1570
          %v1602 = vlaneseq
          %v1603 = vshrl.u32 %v1602, 7
          %v1604 = vsub.s32 0, %v1603
          %v1605 = vrot.slane %v1600, %v1604
          %v1606 = vlaneseq
          %v1607 = vshrl.u32 %v1606, 7
          %v1608 = vsub.s32 2, %v1607
          %v1609 = vrot.slane %v1600, %v1608
          %v1610 = vlaneseq
          %v1611 = vshrl.u32 %v1610, 7
          %v1612 = vsub.s32 4, %v1611
          %v1613 = vrot.slane %v1600, %v1612
          %v1614 = vlaneseq
          %v1615 = vshrl.u32 %v1614, 7
          %v1616 = vsub.s32 6, %v1615
          %v1617 = vrot.slane %v1600, %v1616
          %v1626 = vrot.slane %v1420, 6
          %v1627 = vrot.slane %v1421, 6
          %v1628 = vrot.slane %v1422, 6
          %v1629 = vrot.slane %v1423, 6
          %v1634 = vsel %vm1344, %v1605, %v1626
          %v1635 = vsel %vm1345, %v1609, %v1627
          %v1636 = vsel %vm1346, %v1613, %v1628
          %v1637 = vsel %vm1347, %v1617, %v1629
          %v1638 = vmax.f32 %v1569, 0.0
          %v1639 = vmin.f32 %v1638, 255.0
          %v1641 = vlaneseq
          %v1642 = vshrl.u32 %v1641, 7
          %v1643 = vsub.s32 0, %v1642
          %v1644 = vrot.slane %v1639, %v1643
          %v1645 = vlaneseq
          %v1646 = vshrl.u32 %v1645, 7
          %v1647 = vsub.s32 2, %v1646
          %v1648 = vrot.slane %v1639, %v1647
          %v1649 = vlaneseq
          %v1650 = vshrl.u32 %v1649, 7
          %v1651 = vsub.s32 4, %v1650
          %v1652 = vrot.slane %v1639, %v1651
          %v1653 = vlaneseq
          %v1654 = vshrl.u32 %v1653, 7
          %v1655 = vsub.s32 6, %v1654
          %v1656 = vrot.slane %v1639, %v1655
          %v1665 = vrot.slane %v1468, 6
          %v1666 = vrot.slane %v1469, 6
          %v1667 = vrot.slane %v1470, 6
          %v1668 = vrot.slane %v1471, 6
          %v1673 = vsel %vm1344, %v1644, %v1665
          %v1674 = vsel %vm1345, %v1648, %v1666
          %v1675 = vsel %vm1346, %v1652, %v1667
          %v1676 = vsel %vm1347, %v1656, %v1668
          %v1677 = vpack.c.bf16 %v1634, %v1634
          %v1678 = vpack.c.bf16 %v1635, %v1635
          %v1679 = vpack.c.bf16 %v1636, %v1636
          %v1680 = vpack.c.bf16 %v1637, %v1637
          %v1685 = vcombine.low %v1677, %v1678
          %v1686 = vcombine.low %v1679, %v1680
          %v1688 = vunpack.c.l.s4 1966171168
          %v1689 = vunpack.c.0.s8 %v1688
          %v1690 = vlaneseq
          %v1691 = vshrl.u32 %v1690, 7
          %v1692 = vsub.s32 %v1689, %v1691
          %v1693 = vrot.slane %v1685, %v1692
          %v1695 = vunpack.c.l.s4 1966171168
          %v1696 = vunpack.c.0.s8 %v1695
          %v1697 = vlaneseq
          %v1698 = vshrl.u32 %v1697, 7
          %v1699 = vsub.s32 %v1696, %v1698
          %v1700 = vrot.slane %v1686, %v1699
          %v1701 = vcombine.low %v1693, %v1700
          %v1703 = vunpack.c.l.s4 1966171168
          %v1704 = vunpack.c.0.s8 %v1703
          %v1705 = vlaneseq
          %v1706 = vshrl.u32 %v1705, 7
          %v1707 = vsub.s32 %v1704, %v1706
          %v1708 = vrot.slane %v1701, %v1707
          %v1709 = vcombine.high %v1708, %v1708
          %vm1711 = vcmask 1040384
          %vm1712 = vsmask.f32 256
          %vm1713 = vmand %vm1711, %vm1712
          %vm1714 = vcmask 1041409
          %vm1715 = vsmask.f32 1280
          %vm1716 = vmand %vm1714, %vm1715
          %vm1717 = vmor %vm1716, %vm1713
          %vm1718 = vcmask 1042434
          %vm1719 = vsmask.f32 2304
          %vm1720 = vmand %vm1718, %vm1719
          %vm1721 = vmor %vm1720, %vm1717
          %vm1722 = vcmask 1043459
          %vm1723 = vsmask.f32 3328
          %vm1724 = vmand %vm1722, %vm1723
          %vm1725 = vmor %vm1724, %vm1721
          %v1726 = vld [vmem:[%s456] sm:$0xf]
          %v1727 = vsel %vm1725, %v1709, %v1726
          %1728 = vst [vmem:[%s456] sm:$0xf] %v1727
          %v1729 = vpack.c.bf16 %v1673, %v1673
          %v1730 = vpack.c.bf16 %v1674, %v1674
          %v1731 = vpack.c.bf16 %v1675, %v1675
          %v1732 = vpack.c.bf16 %v1676, %v1676
          %v1737 = vcombine.low %v1729, %v1730
          %v1738 = vcombine.low %v1731, %v1732
          %v1740 = vunpack.c.l.s4 1966171168
          %v1741 = vunpack.c.0.s8 %v1740
          %v1742 = vlaneseq
          %v1743 = vshrl.u32 %v1742, 7
          %v1744 = vsub.s32 %v1741, %v1743
          %v1745 = vrot.slane %v1737, %v1744
          %v1747 = vunpack.c.l.s4 1966171168
          %v1748 = vunpack.c.0.s8 %v1747
          %v1749 = vlaneseq
          %v1750 = vshrl.u32 %v1749, 7
          %v1751 = vsub.s32 %v1748, %v1750
          %v1752 = vrot.slane %v1738, %v1751
          %v1753 = vcombine.low %v1745, %v1752
          %v1755 = vunpack.c.l.s4 1966171168
          %v1756 = vunpack.c.0.s8 %v1755
          %v1757 = vlaneseq
          %v1758 = vshrl.u32 %v1757, 7
          %v1759 = vsub.s32 %v1756, %v1758
          %v1760 = vrot.slane %v1753, %v1759
          %v1761 = vcombine.high %v1760, %v1760
          %v1763 = vld [vmem:[%s463] sm:$0xf]
          %v1764 = vsel %vm1725, %v1761, %v1763
          %1765 = vst [vmem:[%s463] sm:$0xf] %v1764
          %v1766 = vpack.c.bf16 %v1561, %v1561
          %v1767 = vpack.c.bf16 %v1562, %v1562
          %v1768 = vpack.c.bf16 %v1563, %v1563
          %v1769 = vpack.c.bf16 %v1564, %v1564
          %v1774 = vunpack.c.l.b16 %v1766
          %v1775 = vunpack.c.l.b16 %v1767
          %v1776 = vunpack.c.l.b16 %v1768
          %v1777 = vunpack.c.l.b16 %v1769
          %v1778 = vpack.c.b16 %v1775, %v1774
          %v1779 = vpack.c.b16 %v1777, %v1776
          %1782 = vst [vmem:[%s471] sm:$0xff] %v1778
          %1783 = vst [vmem:[%s471 + $0x8] sm:$0xff] %v1779
          %s1784 = scalar_lea.vmem [#allocation2], 64
          %v1785 = vld [vmem:[%s1784] sm:$0xff]
          %v1786 = vld [vmem:[%s1784 + $0x8] sm:$0xff]
          %v1787 = vld [vmem:[%s1784 + $0x10] sm:$0xff]
          %v1788 = vld [vmem:[%s1784 + $0x18] sm:$0xff]
          %v1789 = vld [vmem:[%s1784 + $0x20] sm:$0xff]
          %v1790 = vld [vmem:[%s1784 + $0x28] sm:$0xff]
          %v1791 = vld [vmem:[%s1784 + $0x30] sm:$0xff]
          %v1792 = vld [vmem:[%s1784 + $0x38] sm:$0xff]
          %v1793 = vld [vmem:[%s434 + $0x4] sm:$0xf]
          %v1794 = vunpack.c.l.bf16 %v1793
          %v1795 = vld [vmem:[%s441 + $0x4] sm:$0xf]
          %v1796 = vunpack.c.l.bf16 %v1795
          %v1797 = vld [vmem:[%s449 + $0x10] sm:$0xff]
          %v1798 = vld [vmem:[%s449 + $0x18] sm:$0xff]
          %v1799 = vunpack.c.l.bf16 %v1797
          %v1800 = vunpack.c.h.bf16 %v1797
          %v1801 = vunpack.c.l.bf16 %v1798
          %v1802 = vunpack.c.h.bf16 %v1798
          %vm1803 = vcmp.gt.f32.partialorder %v1785, 0.0
          %vm1804 = vcmp.gt.f32.partialorder %v1786, 0.0
          %vm1805 = vcmp.gt.f32.partialorder %v1787, 0.0
          %vm1806 = vcmp.gt.f32.partialorder %v1788, 0.0
          %v1811 = vcombine.low %v1785, %v1786
          %v1812 = vcombine.low %v1787, %v1788
          %v1814 = vunpack.c.l.s4 1983009808
          %v1815 = vunpack.c.0.s8 %v1814
          %v1816 = vlaneseq
          %v1817 = vshrl.u32 %v1816, 7
          %v1818 = vsub.s32 %v1815, %v1817
          %v1819 = vrot.slane %v1811, %v1818
          %v1821 = vunpack.c.l.s4 1983009808
          %v1822 = vunpack.c.0.s8 %v1821
          %v1823 = vlaneseq
          %v1824 = vshrl.u32 %v1823, 7
          %v1825 = vsub.s32 %v1822, %v1824
          %v1826 = vrot.slane %v1812, %v1825
          %v1827 = vcombine.low %v1819, %v1826
          %v1828 = vrot.slane %v1827, 7
          %v1829 = vrot.slane %v1828, 2
          %v1831 = vadd.f32 %v1796, %v1829
          %v1832 = vrcp.pop %v1831
          %v1833 = vmul.f32 %v1796, %v1794
          %v1835 = vadd.f32 %v1833, %v1827
          %v1836 = vmul.f32 %v1835, %v1832
          %v1838 = vlaneseq
          %v1839 = vshrl.u32 %v1838, 7
          %v1840 = vsub.s32 0, %v1839
          %v1841 = vrot.slane %v1836, %v1840
          %v1842 = vlaneseq
          %v1843 = vshrl.u32 %v1842, 7
          %v1844 = vsub.s32 2, %v1843
          %v1845 = vrot.slane %v1836, %v1844
          %v1846 = vlaneseq
          %v1847 = vshrl.u32 %v1846, 7
          %v1848 = vsub.s32 4, %v1847
          %v1849 = vrot.slane %v1836, %v1848
          %v1850 = vlaneseq
          %v1851 = vshrl.u32 %v1850, 7
          %v1852 = vsub.s32 6, %v1851
          %v1853 = vrot.slane %v1836, %v1852
          %v1859 = vlaneseq
          %v1860 = vshrl.u32 %v1859, 7
          %v1861 = vsub.s32 0, %v1860
          %v1862 = vrot.slane %v1794, %v1861
          %v1863 = vlaneseq
          %v1864 = vshrl.u32 %v1863, 7
          %v1865 = vsub.s32 2, %v1864
          %v1866 = vrot.slane %v1794, %v1865
          %v1867 = vlaneseq
          %v1868 = vshrl.u32 %v1867, 7
          %v1869 = vsub.s32 4, %v1868
          %v1870 = vrot.slane %v1794, %v1869
          %v1871 = vlaneseq
          %v1872 = vshrl.u32 %v1871, 7
          %v1873 = vsub.s32 6, %v1872
          %v1874 = vrot.slane %v1794, %v1873
          %v1879 = vsel %vm1803, %v1841, %v1862
          %v1880 = vsel %vm1804, %v1845, %v1866
          %v1881 = vsel %vm1805, %v1849, %v1870
          %v1882 = vsel %vm1806, %v1853, %v1874
          %v1883 = vmax.f32 %v1831, 0.0
          %v1884 = vmin.f32 %v1883, 255.0
          %v1886 = vlaneseq
          %v1887 = vshrl.u32 %v1886, 7
          %v1888 = vsub.s32 0, %v1887
          %v1889 = vrot.slane %v1884, %v1888
          %v1890 = vlaneseq
          %v1891 = vshrl.u32 %v1890, 7
          %v1892 = vsub.s32 2, %v1891
          %v1893 = vrot.slane %v1884, %v1892
          %v1894 = vlaneseq
          %v1895 = vshrl.u32 %v1894, 7
          %v1896 = vsub.s32 4, %v1895
          %v1897 = vrot.slane %v1884, %v1896
          %v1898 = vlaneseq
          %v1899 = vshrl.u32 %v1898, 7
          %v1900 = vsub.s32 6, %v1899
          %v1901 = vrot.slane %v1884, %v1900
          %v1907 = vlaneseq
          %v1908 = vshrl.u32 %v1907, 7
          %v1909 = vsub.s32 0, %v1908
          %v1910 = vrot.slane %v1796, %v1909
          %v1911 = vlaneseq
          %v1912 = vshrl.u32 %v1911, 7
          %v1913 = vsub.s32 2, %v1912
          %v1914 = vrot.slane %v1796, %v1913
          %v1915 = vlaneseq
          %v1916 = vshrl.u32 %v1915, 7
          %v1917 = vsub.s32 4, %v1916
          %v1918 = vrot.slane %v1796, %v1917
          %v1919 = vlaneseq
          %v1920 = vshrl.u32 %v1919, 7
          %v1921 = vsub.s32 6, %v1920
          %v1922 = vrot.slane %v1796, %v1921
          %v1927 = vsel %vm1803, %v1889, %v1910
          %v1928 = vsel %vm1804, %v1893, %v1914
          %v1929 = vsel %vm1805, %v1897, %v1918
          %v1930 = vsel %vm1806, %v1901, %v1922
          %v1931 = vlaneseq
          %v1932 = vshrl.u32 %v1931, 7
          %v1933 = vsub.s32 0, %v1932
          %v1934 = vrot.slane %v1910, %v1933
          %v1935 = vlaneseq
          %v1936 = vshrl.u32 %v1935, 7
          %v1937 = vsub.s32 0, %v1936
          %v1938 = vrot.slane %v1914, %v1937
          %v1939 = vlaneseq
          %v1940 = vshrl.u32 %v1939, 7
          %v1941 = vsub.s32 0, %v1940
          %v1942 = vrot.slane %v1918, %v1941
          %v1943 = vlaneseq
          %v1944 = vshrl.u32 %v1943, 7
          %v1945 = vsub.s32 0, %v1944
          %v1946 = vrot.slane %v1922, %v1945
          %v1947 = vmul.f32 %v1934, %v1799
          %v1948 = vmul.f32 %v1938, %v1800
          %v1949 = vmul.f32 %v1942, %v1801
          %v1950 = vmul.f32 %v1946, %v1802
          %v1951 = vadd.f32 %v1947, %v1789
          %v1952 = vadd.f32 %v1948, %v1790
          %v1953 = vadd.f32 %v1949, %v1791
          %v1954 = vadd.f32 %v1950, %v1792
          %v1956 = vlaneseq
          %v1957 = vshrl.u32 %v1956, 7
          %v1958 = vsub.s32 0, %v1957
          %v1959 = vrot.slane %v1832, %v1958
          %v1960 = vlaneseq
          %v1961 = vshrl.u32 %v1960, 7
          %v1962 = vsub.s32 2, %v1961
          %v1963 = vrot.slane %v1832, %v1962
          %v1964 = vlaneseq
          %v1965 = vshrl.u32 %v1964, 7
          %v1966 = vsub.s32 4, %v1965
          %v1967 = vrot.slane %v1832, %v1966
          %v1968 = vlaneseq
          %v1969 = vshrl.u32 %v1968, 7
          %v1970 = vsub.s32 6, %v1969
          %v1971 = vrot.slane %v1832, %v1970
          %v1976 = vlaneseq
          %v1977 = vshrl.u32 %v1976, 7
          %v1978 = vsub.s32 0, %v1977
          %v1979 = vrot.slane %v1959, %v1978
          %v1980 = vlaneseq
          %v1981 = vshrl.u32 %v1980, 7
          %v1982 = vsub.s32 0, %v1981
          %v1983 = vrot.slane %v1963, %v1982
          %v1984 = vlaneseq
          %v1985 = vshrl.u32 %v1984, 7
          %v1986 = vsub.s32 0, %v1985
          %v1987 = vrot.slane %v1967, %v1986
          %v1988 = vlaneseq
          %v1989 = vshrl.u32 %v1988, 7
          %v1990 = vsub.s32 0, %v1989
          %v1991 = vrot.slane %v1971, %v1990
          %v1992 = vmul.f32 %v1951, %v1979
          %v1993 = vmul.f32 %v1952, %v1983
          %v1994 = vmul.f32 %v1953, %v1987
          %v1995 = vmul.f32 %v1954, %v1991
          %v1996 = vsel %vm1803, 1, 0
          %v1997 = vsel %vm1804, 1, 0
          %v1998 = vsel %vm1805, 1, 0
          %v1999 = vsel %vm1806, 1, 0
          %v2000 = vlaneseq
          %v2001 = vshrl.u32 %v2000, 7
          %v2002 = vsub.s32 2, %v2001
          %v2003 = vrot.slane %v1996, %v2002
          %v2004 = vlaneseq
          %v2005 = vshrl.u32 %v2004, 7
          %v2006 = vsub.s32 2, %v2005
          %v2007 = vrot.slane %v1997, %v2006
          %v2008 = vlaneseq
          %v2009 = vshrl.u32 %v2008, 7
          %v2010 = vsub.s32 2, %v2009
          %v2011 = vrot.slane %v1998, %v2010
          %v2012 = vlaneseq
          %v2013 = vshrl.u32 %v2012, 7
          %v2014 = vsub.s32 2, %v2013
          %v2015 = vrot.slane %v1999, %v2014
          %vm2016 = vcmp.eq.s32.totalorder %v2003, 1
          %vm2017 = vcmp.eq.s32.totalorder %v2007, 1
          %vm2018 = vcmp.eq.s32.totalorder %v2011, 1
          %vm2019 = vcmp.eq.s32.totalorder %v2015, 1
          %v2020 = vsel %vm2016, %v1992, %v1799
          %v2021 = vsel %vm2017, %v1993, %v1800
          %v2022 = vsel %vm2018, %v1994, %v1801
          %v2023 = vsel %vm2019, %v1995, %v1802
          %v2024 = vcombine.high %v1819, %v1826
          %v2025 = vrot.slane %v2024, 7
          %v2026 = vrot.slane %v2025, 2
          %v2028 = vadd.f32 %v1796, %v2026
          %v2029 = vrcp.pop %v2028
          %v2030 = vmul.f32 %v1785, 0.1
          %v2031 = vmul.f32 %v1786, 0.1
          %v2032 = vmul.f32 %v1787, 0.1
          %v2033 = vmul.f32 %v1788, 0.1
          %v2038 = vcombine.low %v2030, %v2031
          %v2039 = vcombine.low %v2032, %v2033
          %v2041 = vunpack.c.l.s4 1983009808
          %v2042 = vunpack.c.0.s8 %v2041
          %v2043 = vlaneseq
          %v2044 = vshrl.u32 %v2043, 7
          %v2045 = vsub.s32 %v2042, %v2044
          %v2046 = vrot.slane %v2038, %v2045
          %v2048 = vunpack.c.l.s4 1983009808
          %v2049 = vunpack.c.0.s8 %v2048
          %v2050 = vlaneseq
          %v2051 = vshrl.u32 %v2050, 7
          %v2052 = vsub.s32 %v2049, %v2051
          %v2053 = vrot.slane %v2039, %v2052
          %v2054 = vcombine.high %v2046, %v2053
          %v2055 = vrot.slane %v2054, 7
          %v2056 = vrot.slane %v2055, 2
          %v2058 = vadd.f32 %v1833, %v2056
          %v2059 = vmul.f32 %v2058, %v2029
          %v2061 = vlaneseq
          %v2062 = vshrl.u32 %v2061, 7
          %v2063 = vsub.s32 0, %v2062
          %v2064 = vrot.slane %v2059, %v2063
          %v2065 = vlaneseq
          %v2066 = vshrl.u32 %v2065, 7
          %v2067 = vsub.s32 2, %v2066
          %v2068 = vrot.slane %v2059, %v2067
          %v2069 = vlaneseq
          %v2070 = vshrl.u32 %v2069, 7
          %v2071 = vsub.s32 4, %v2070
          %v2072 = vrot.slane %v2059, %v2071
          %v2073 = vlaneseq
          %v2074 = vshrl.u32 %v2073, 7
          %v2075 = vsub.s32 6, %v2074
          %v2076 = vrot.slane %v2059, %v2075
          %v2085 = vrot.slane %v1879, 6
          %v2086 = vrot.slane %v1880, 6
          %v2087 = vrot.slane %v1881, 6
          %v2088 = vrot.slane %v1882, 6
          %v2093 = vsel %vm1803, %v2064, %v2085
          %v2094 = vsel %vm1804, %v2068, %v2086
          %v2095 = vsel %vm1805, %v2072, %v2087
          %v2096 = vsel %vm1806, %v2076, %v2088
          %v2097 = vmax.f32 %v2028, 0.0
          %v2098 = vmin.f32 %v2097, 255.0
          %v2100 = vlaneseq
          %v2101 = vshrl.u32 %v2100, 7
          %v2102 = vsub.s32 0, %v2101
          %v2103 = vrot.slane %v2098, %v2102
          %v2104 = vlaneseq
          %v2105 = vshrl.u32 %v2104, 7
          %v2106 = vsub.s32 2, %v2105
          %v2107 = vrot.slane %v2098, %v2106
          %v2108 = vlaneseq
          %v2109 = vshrl.u32 %v2108, 7
          %v2110 = vsub.s32 4, %v2109
          %v2111 = vrot.slane %v2098, %v2110
          %v2112 = vlaneseq
          %v2113 = vshrl.u32 %v2112, 7
          %v2114 = vsub.s32 6, %v2113
          %v2115 = vrot.slane %v2098, %v2114
          %v2124 = vrot.slane %v1927, 6
          %v2125 = vrot.slane %v1928, 6
          %v2126 = vrot.slane %v1929, 6
          %v2127 = vrot.slane %v1930, 6
          %v2132 = vsel %vm1803, %v2103, %v2124
          %v2133 = vsel %vm1804, %v2107, %v2125
          %v2134 = vsel %vm1805, %v2111, %v2126
          %v2135 = vsel %vm1806, %v2115, %v2127
          %v2136 = vpack.c.bf16 %v2093, %v2093
          %v2137 = vpack.c.bf16 %v2094, %v2094
          %v2138 = vpack.c.bf16 %v2095, %v2095
          %v2139 = vpack.c.bf16 %v2096, %v2096
          %v2144 = vcombine.low %v2136, %v2137
          %v2145 = vcombine.low %v2138, %v2139
          %v2147 = vunpack.c.l.s4 1966171168
          %v2148 = vunpack.c.0.s8 %v2147
          %v2149 = vlaneseq
          %v2150 = vshrl.u32 %v2149, 7
          %v2151 = vsub.s32 %v2148, %v2150
          %v2152 = vrot.slane %v2144, %v2151
          %v2154 = vunpack.c.l.s4 1966171168
          %v2155 = vunpack.c.0.s8 %v2154
          %v2156 = vlaneseq
          %v2157 = vshrl.u32 %v2156, 7
          %v2158 = vsub.s32 %v2155, %v2157
          %v2159 = vrot.slane %v2145, %v2158
          %v2160 = vcombine.low %v2152, %v2159
          %v2162 = vunpack.c.l.s4 1966171168
          %v2163 = vunpack.c.0.s8 %v2162
          %v2164 = vlaneseq
          %v2165 = vshrl.u32 %v2164, 7
          %v2166 = vsub.s32 %v2163, %v2165
          %v2167 = vrot.slane %v2160, %v2166
          %v2168 = vcombine.high %v2167, %v2167
          %v2170 = vld [vmem:[%s456 + $0x4] sm:$0xf]
          %v2171 = vsel %vm1725, %v2168, %v2170
          %2172 = vst [vmem:[%s456 + $0x4] sm:$0xf] %v2171
          %v2173 = vpack.c.bf16 %v2132, %v2132
          %v2174 = vpack.c.bf16 %v2133, %v2133
          %v2175 = vpack.c.bf16 %v2134, %v2134
          %v2176 = vpack.c.bf16 %v2135, %v2135
          %v2181 = vcombine.low %v2173, %v2174
          %v2182 = vcombine.low %v2175, %v2176
          %v2184 = vunpack.c.l.s4 1966171168
          %v2185 = vunpack.c.0.s8 %v2184
          %v2186 = vlaneseq
          %v2187 = vshrl.u32 %v2186, 7
          %v2188 = vsub.s32 %v2185, %v2187
          %v2189 = vrot.slane %v2181, %v2188
          %v2191 = vunpack.c.l.s4 1966171168
          %v2192 = vunpack.c.0.s8 %v2191
          %v2193 = vlaneseq
          %v2194 = vshrl.u32 %v2193, 7
          %v2195 = vsub.s32 %v2192, %v2194
          %v2196 = vrot.slane %v2182, %v2195
          %v2197 = vcombine.low %v2189, %v2196
          %v2199 = vunpack.c.l.s4 1966171168
          %v2200 = vunpack.c.0.s8 %v2199
          %v2201 = vlaneseq
          %v2202 = vshrl.u32 %v2201, 7
          %v2203 = vsub.s32 %v2200, %v2202
          %v2204 = vrot.slane %v2197, %v2203
          %v2205 = vcombine.high %v2204, %v2204
          %v2207 = vld [vmem:[%s463 + $0x4] sm:$0xf]
          %v2208 = vsel %vm1725, %v2205, %v2207
          %2209 = vst [vmem:[%s463 + $0x4] sm:$0xf] %v2208
          %v2210 = vpack.c.bf16 %v2020, %v2020
          %v2211 = vpack.c.bf16 %v2021, %v2021
          %v2212 = vpack.c.bf16 %v2022, %v2022
          %v2213 = vpack.c.bf16 %v2023, %v2023
          %v2218 = vunpack.c.l.b16 %v2210
          %v2219 = vunpack.c.l.b16 %v2211
          %v2220 = vunpack.c.l.b16 %v2212
          %v2221 = vunpack.c.l.b16 %v2213
          %v2222 = vpack.c.b16 %v2219, %v2218
          %v2223 = vpack.c.b16 %v2221, %v2220
          %2226 = vst [vmem:[%s471 + $0x10] sm:$0xff] %v2222
          %2227 = vst [vmem:[%s471 + $0x18] sm:$0xff] %v2223
          %s2228 = scalar_lea.vmem [#allocation2], 128
          %v2229 = vld [vmem:[%s2228] sm:$0xff]
          %v2230 = vld [vmem:[%s2228 + $0x8] sm:$0xff]
          %v2231 = vld [vmem:[%s2228 + $0x10] sm:$0xff]
          %v2232 = vld [vmem:[%s2228 + $0x18] sm:$0xff]
          %v2233 = vld [vmem:[%s2228 + $0x20] sm:$0xff]
          %v2234 = vld [vmem:[%s2228 + $0x28] sm:$0xff]
          %v2235 = vld [vmem:[%s2228 + $0x30] sm:$0xff]
          %v2236 = vld [vmem:[%s2228 + $0x38] sm:$0xff]
          %v2237 = vld [vmem:[%s434 + $0x8] sm:$0xf]
          %v2238 = vunpack.c.l.bf16 %v2237
          %v2239 = vld [vmem:[%s441 + $0x8] sm:$0xf]
          %v2240 = vunpack.c.l.bf16 %v2239
          %v2241 = vld [vmem:[%s449 + $0x20] sm:$0xff]
          %v2242 = vld [vmem:[%s449 + $0x28] sm:$0xff]
          %v2243 = vunpack.c.l.bf16 %v2241
          %v2244 = vunpack.c.h.bf16 %v2241
          %v2245 = vunpack.c.l.bf16 %v2242
          %v2246 = vunpack.c.h.bf16 %v2242
          %vm2247 = vcmp.gt.f32.partialorder %v2229, 0.0
          %vm2248 = vcmp.gt.f32.partialorder %v2230, 0.0
          %vm2249 = vcmp.gt.f32.partialorder %v2231, 0.0
          %vm2250 = vcmp.gt.f32.partialorder %v2232, 0.0
          %v2255 = vcombine.low %v2229, %v2230
          %v2256 = vcombine.low %v2231, %v2232
          %v2258 = vunpack.c.l.s4 1983009808
          %v2259 = vunpack.c.0.s8 %v2258
          %v2260 = vlaneseq
          %v2261 = vshrl.u32 %v2260, 7
          %v2262 = vsub.s32 %v2259, %v2261
          %v2263 = vrot.slane %v2255, %v2262
          %v2265 = vunpack.c.l.s4 1983009808
          %v2266 = vunpack.c.0.s8 %v2265
          %v2267 = vlaneseq
          %v2268 = vshrl.u32 %v2267, 7
          %v2269 = vsub.s32 %v2266, %v2268
          %v2270 = vrot.slane %v2256, %v2269
          %v2271 = vcombine.low %v2263, %v2270
          %v2272 = vrot.slane %v2271, 7
          %v2273 = vrot.slane %v2272, 2
          %v2275 = vadd.f32 %v2240, %v2273
          %v2276 = vrcp.pop %v2275
          %v2277 = vmul.f32 %v2240, %v2238
          %v2279 = vadd.f32 %v2277, %v2271
          %v2280 = vmul.f32 %v2279, %v2276
          %v2282 = vlaneseq
          %v2283 = vshrl.u32 %v2282, 7
          %v2284 = vsub.s32 0, %v2283
          %v2285 = vrot.slane %v2280, %v2284
          %v2286 = vlaneseq
          %v2287 = vshrl.u32 %v2286, 7
          %v2288 = vsub.s32 2, %v2287
          %v2289 = vrot.slane %v2280, %v2288
          %v2290 = vlaneseq
          %v2291 = vshrl.u32 %v2290, 7
          %v2292 = vsub.s32 4, %v2291
          %v2293 = vrot.slane %v2280, %v2292
          %v2294 = vlaneseq
          %v2295 = vshrl.u32 %v2294, 7
          %v2296 = vsub.s32 6, %v2295
          %v2297 = vrot.slane %v2280, %v2296
          %v2303 = vlaneseq
          %v2304 = vshrl.u32 %v2303, 7
          %v2305 = vsub.s32 0, %v2304
          %v2306 = vrot.slane %v2238, %v2305
          %v2307 = vlaneseq
          %v2308 = vshrl.u32 %v2307, 7
          %v2309 = vsub.s32 2, %v2308
          %v2310 = vrot.slane %v2238, %v2309
          %v2311 = vlaneseq
          %v2312 = vshrl.u32 %v2311, 7
          %v2313 = vsub.s32 4, %v2312
          %v2314 = vrot.slane %v2238, %v2313
          %v2315 = vlaneseq
          %v2316 = vshrl.u32 %v2315, 7
          %v2317 = vsub.s32 6, %v2316
          %v2318 = vrot.slane %v2238, %v2317
          %v2323 = vsel %vm2247, %v2285, %v2306
          %v2324 = vsel %vm2248, %v2289, %v2310
          %v2325 = vsel %vm2249, %v2293, %v2314
          %v2326 = vsel %vm2250, %v2297, %v2318
          %v2327 = vmax.f32 %v2275, 0.0
          %v2328 = vmin.f32 %v2327, 255.0
          %v2330 = vlaneseq
          %v2331 = vshrl.u32 %v2330, 7
          %v2332 = vsub.s32 0, %v2331
          %v2333 = vrot.slane %v2328, %v2332
          %v2334 = vlaneseq
          %v2335 = vshrl.u32 %v2334, 7
          %v2336 = vsub.s32 2, %v2335
          %v2337 = vrot.slane %v2328, %v2336
          %v2338 = vlaneseq
          %v2339 = vshrl.u32 %v2338, 7
          %v2340 = vsub.s32 4, %v2339
          %v2341 = vrot.slane %v2328, %v2340
          %v2342 = vlaneseq
          %v2343 = vshrl.u32 %v2342, 7
          %v2344 = vsub.s32 6, %v2343
          %v2345 = vrot.slane %v2328, %v2344
          %v2351 = vlaneseq
          %v2352 = vshrl.u32 %v2351, 7
          %v2353 = vsub.s32 0, %v2352
          %v2354 = vrot.slane %v2240, %v2353
          %v2355 = vlaneseq
          %v2356 = vshrl.u32 %v2355, 7
          %v2357 = vsub.s32 2, %v2356
          %v2358 = vrot.slane %v2240, %v2357
          %v2359 = vlaneseq
          %v2360 = vshrl.u32 %v2359, 7
          %v2361 = vsub.s32 4, %v2360
          %v2362 = vrot.slane %v2240, %v2361
          %v2363 = vlaneseq
          %v2364 = vshrl.u32 %v2363, 7
          %v2365 = vsub.s32 6, %v2364
          %v2366 = vrot.slane %v2240, %v2365
          %v2371 = vsel %vm2247, %v2333, %v2354
          %v2372 = vsel %vm2248, %v2337, %v2358
          %v2373 = vsel %vm2249, %v2341, %v2362
          %v2374 = vsel %vm2250, %v2345, %v2366
          %v2375 = vlaneseq
          %v2376 = vshrl.u32 %v2375, 7
          %v2377 = vsub.s32 0, %v2376
          %v2378 = vrot.slane %v2354, %v2377
          %v2379 = vlaneseq
          %v2380 = vshrl.u32 %v2379, 7
          %v2381 = vsub.s32 0, %v2380
          %v2382 = vrot.slane %v2358, %v2381
          %v2383 = vlaneseq
          %v2384 = vshrl.u32 %v2383, 7
          %v2385 = vsub.s32 0, %v2384
          %v2386 = vrot.slane %v2362, %v2385
          %v2387 = vlaneseq
          %v2388 = vshrl.u32 %v2387, 7
          %v2389 = vsub.s32 0, %v2388
          %v2390 = vrot.slane %v2366, %v2389
          %v2391 = vmul.f32 %v2378, %v2243
          %v2392 = vmul.f32 %v2382, %v2244
          %v2393 = vmul.f32 %v2386, %v2245
          %v2394 = vmul.f32 %v2390, %v2246
          %v2395 = vadd.f32 %v2391, %v2233
          %v2396 = vadd.f32 %v2392, %v2234
          %v2397 = vadd.f32 %v2393, %v2235
          %v2398 = vadd.f32 %v2394, %v2236
          %v2400 = vlaneseq
          %v2401 = vshrl.u32 %v2400, 7
          %v2402 = vsub.s32 0, %v2401
          %v2403 = vrot.slane %v2276, %v2402
          %v2404 = vlaneseq
          %v2405 = vshrl.u32 %v2404, 7
          %v2406 = vsub.s32 2, %v2405
          %v2407 = vrot.slane %v2276, %v2406
          %v2408 = vlaneseq
          %v2409 = vshrl.u32 %v2408, 7
          %v2410 = vsub.s32 4, %v2409
          %v2411 = vrot.slane %v2276, %v2410
          %v2412 = vlaneseq
          %v2413 = vshrl.u32 %v2412, 7
          %v2414 = vsub.s32 6, %v2413
          %v2415 = vrot.slane %v2276, %v2414
          %v2420 = vlaneseq
          %v2421 = vshrl.u32 %v2420, 7
          %v2422 = vsub.s32 0, %v2421
          %v2423 = vrot.slane %v2403, %v2422
          %v2424 = vlaneseq
          %v2425 = vshrl.u32 %v2424, 7
          %v2426 = vsub.s32 0, %v2425
          %v2427 = vrot.slane %v2407, %v2426
          %v2428 = vlaneseq
          %v2429 = vshrl.u32 %v2428, 7
          %v2430 = vsub.s32 0, %v2429
          %v2431 = vrot.slane %v2411, %v2430
          %v2432 = vlaneseq
          %v2433 = vshrl.u32 %v2432, 7
          %v2434 = vsub.s32 0, %v2433
          %v2435 = vrot.slane %v2415, %v2434
          %v2436 = vmul.f32 %v2395, %v2423
          %v2437 = vmul.f32 %v2396, %v2427
          %v2438 = vmul.f32 %v2397, %v2431
          %v2439 = vmul.f32 %v2398, %v2435
          %v2440 = vsel %vm2247, 1, 0
          %v2441 = vsel %vm2248, 1, 0
          %v2442 = vsel %vm2249, 1, 0
          %v2443 = vsel %vm2250, 1, 0
          %v2444 = vlaneseq
          %v2445 = vshrl.u32 %v2444, 7
          %v2446 = vsub.s32 2, %v2445
          %v2447 = vrot.slane %v2440, %v2446
          %v2448 = vlaneseq
          %v2449 = vshrl.u32 %v2448, 7
          %v2450 = vsub.s32 2, %v2449
          %v2451 = vrot.slane %v2441, %v2450
          %v2452 = vlaneseq
          %v2453 = vshrl.u32 %v2452, 7
          %v2454 = vsub.s32 2, %v2453
          %v2455 = vrot.slane %v2442, %v2454
          %v2456 = vlaneseq
          %v2457 = vshrl.u32 %v2456, 7
          %v2458 = vsub.s32 2, %v2457
          %v2459 = vrot.slane %v2443, %v2458
          %vm2460 = vcmp.eq.s32.totalorder %v2447, 1
          %vm2461 = vcmp.eq.s32.totalorder %v2451, 1
          %vm2462 = vcmp.eq.s32.totalorder %v2455, 1
          %vm2463 = vcmp.eq.s32.totalorder %v2459, 1
          %v2464 = vsel %vm2460, %v2436, %v2243
          %v2465 = vsel %vm2461, %v2437, %v2244
          %v2466 = vsel %vm2462, %v2438, %v2245
          %v2467 = vsel %vm2463, %v2439, %v2246
          %v2468 = vcombine.high %v2263, %v2270
          %v2469 = vrot.slane %v2468, 7
          %v2470 = vrot.slane %v2469, 2
          %v2472 = vadd.f32 %v2240, %v2470
          %v2473 = vrcp.pop %v2472
          %v2474 = vmul.f32 %v2229, 0.1
          %v2475 = vmul.f32 %v2230, 0.1
          %v2476 = vmul.f32 %v2231, 0.1
          %v2477 = vmul.f32 %v2232, 0.1
          %v2482 = vcombine.low %v2474, %v2475
          %v2483 = vcombine.low %v2476, %v2477
          %v2485 = vunpack.c.l.s4 1983009808
          %v2486 = vunpack.c.0.s8 %v2485
          %v2487 = vlaneseq
          %v2488 = vshrl.u32 %v2487, 7
          %v2489 = vsub.s32 %v2486, %v2488
          %v2490 = vrot.slane %v2482, %v2489
          %v2492 = vunpack.c.l.s4 1983009808
          %v2493 = vunpack.c.0.s8 %v2492
          %v2494 = vlaneseq
          %v2495 = vshrl.u32 %v2494, 7
          %v2496 = vsub.s32 %v2493, %v2495
          %v2497 = vrot.slane %v2483, %v2496
          %v2498 = vcombine.high %v2490, %v2497
          %v2499 = vrot.slane %v2498, 7
          %v2500 = vrot.slane %v2499, 2
          %v2502 = vadd.f32 %v2277, %v2500
          %v2503 = vmul.f32 %v2502, %v2473
          %v2505 = vlaneseq
          %v2506 = vshrl.u32 %v2505, 7
          %v2507 = vsub.s32 0, %v2506
          %v2508 = vrot.slane %v2503, %v2507
          %v2509 = vlaneseq
          %v2510 = vshrl.u32 %v2509, 7
          %v2511 = vsub.s32 2, %v2510
          %v2512 = vrot.slane %v2503, %v2511
          %v2513 = vlaneseq
          %v2514 = vshrl.u32 %v2513, 7
          %v2515 = vsub.s32 4, %v2514
          %v2516 = vrot.slane %v2503, %v2515
          %v2517 = vlaneseq
          %v2518 = vshrl.u32 %v2517, 7
          %v2519 = vsub.s32 6, %v2518
          %v2520 = vrot.slane %v2503, %v2519
          %v2529 = vrot.slane %v2323, 6
          %v2530 = vrot.slane %v2324, 6
          %v2531 = vrot.slane %v2325, 6
          %v2532 = vrot.slane %v2326, 6
          %v2537 = vsel %vm2247, %v2508, %v2529
          %v2538 = vsel %vm2248, %v2512, %v2530
          %v2539 = vsel %vm2249, %v2516, %v2531
          %v2540 = vsel %vm2250, %v2520, %v2532
          %v2541 = vmax.f32 %v2472, 0.0
          %v2542 = vmin.f32 %v2541, 255.0
          %v2544 = vlaneseq
          %v2545 = vshrl.u32 %v2544, 7
          %v2546 = vsub.s32 0, %v2545
          %v2547 = vrot.slane %v2542, %v2546
          %v2548 = vlaneseq
          %v2549 = vshrl.u32 %v2548, 7
          %v2550 = vsub.s32 2, %v2549
          %v2551 = vrot.slane %v2542, %v2550
          %v2552 = vlaneseq
          %v2553 = vshrl.u32 %v2552, 7
          %v2554 = vsub.s32 4, %v2553
          %v2555 = vrot.slane %v2542, %v2554
          %v2556 = vlaneseq
          %v2557 = vshrl.u32 %v2556, 7
          %v2558 = vsub.s32 6, %v2557
          %v2559 = vrot.slane %v2542, %v2558
          %v2568 = vrot.slane %v2371, 6
          %v2569 = vrot.slane %v2372, 6
          %v2570 = vrot.slane %v2373, 6
          %v2571 = vrot.slane %v2374, 6
          %v2576 = vsel %vm2247, %v2547, %v2568
          %v2577 = vsel %vm2248, %v2551, %v2569
          %v2578 = vsel %vm2249, %v2555, %v2570
          %v2579 = vsel %vm2250, %v2559, %v2571
          %v2580 = vpack.c.bf16 %v2537, %v2537
          %v2581 = vpack.c.bf16 %v2538, %v2538
          %v2582 = vpack.c.bf16 %v2539, %v2539
          %v2583 = vpack.c.bf16 %v2540, %v2540
          %v2588 = vcombine.low %v2580, %v2581
          %v2589 = vcombine.low %v2582, %v2583
          %v2591 = vunpack.c.l.s4 1966171168
          %v2592 = vunpack.c.0.s8 %v2591
          %v2593 = vlaneseq
          %v2594 = vshrl.u32 %v2593, 7
          %v2595 = vsub.s32 %v2592, %v2594
          %v2596 = vrot.slane %v2588, %v2595
          %v2598 = vunpack.c.l.s4 1966171168
          %v2599 = vunpack.c.0.s8 %v2598
          %v2600 = vlaneseq
          %v2601 = vshrl.u32 %v2600, 7
          %v2602 = vsub.s32 %v2599, %v2601
          %v2603 = vrot.slane %v2589, %v2602
          %v2604 = vcombine.low %v2596, %v2603
          %v2606 = vunpack.c.l.s4 1966171168
          %v2607 = vunpack.c.0.s8 %v2606
          %v2608 = vlaneseq
          %v2609 = vshrl.u32 %v2608, 7
          %v2610 = vsub.s32 %v2607, %v2609
          %v2611 = vrot.slane %v2604, %v2610
          %v2612 = vcombine.high %v2611, %v2611
          %v2614 = vld [vmem:[%s456 + $0x8] sm:$0xf]
          %v2615 = vsel %vm1725, %v2612, %v2614
          %2616 = vst [vmem:[%s456 + $0x8] sm:$0xf] %v2615
          %v2617 = vpack.c.bf16 %v2576, %v2576
          %v2618 = vpack.c.bf16 %v2577, %v2577
          %v2619 = vpack.c.bf16 %v2578, %v2578
          %v2620 = vpack.c.bf16 %v2579, %v2579
          %v2625 = vcombine.low %v2617, %v2618
          %v2626 = vcombine.low %v2619, %v2620
          %v2628 = vunpack.c.l.s4 1966171168
          %v2629 = vunpack.c.0.s8 %v2628
          %v2630 = vlaneseq
          %v2631 = vshrl.u32 %v2630, 7
          %v2632 = vsub.s32 %v2629, %v2631
          %v2633 = vrot.slane %v2625, %v2632
          %v2635 = vunpack.c.l.s4 1966171168
          %v2636 = vunpack.c.0.s8 %v2635
          %v2637 = vlaneseq
          %v2638 = vshrl.u32 %v2637, 7
          %v2639 = vsub.s32 %v2636, %v2638
          %v2640 = vrot.slane %v2626, %v2639
          %v2641 = vcombine.low %v2633, %v2640
          %v2643 = vunpack.c.l.s4 1966171168
          %v2644 = vunpack.c.0.s8 %v2643
          %v2645 = vlaneseq
          %v2646 = vshrl.u32 %v2645, 7
          %v2647 = vsub.s32 %v2644, %v2646
          %v2648 = vrot.slane %v2641, %v2647
          %v2649 = vcombine.high %v2648, %v2648
          %v2651 = vld [vmem:[%s463 + $0x8] sm:$0xf]
          %v2652 = vsel %vm1725, %v2649, %v2651
          %2653 = vst [vmem:[%s463 + $0x8] sm:$0xf] %v2652
          %v2654 = vpack.c.bf16 %v2464, %v2464
          %v2655 = vpack.c.bf16 %v2465, %v2465
          %v2656 = vpack.c.bf16 %v2466, %v2466
          %v2657 = vpack.c.bf16 %v2467, %v2467
          %v2662 = vunpack.c.l.b16 %v2654
          %v2663 = vunpack.c.l.b16 %v2655
          %v2664 = vunpack.c.l.b16 %v2656
          %v2665 = vunpack.c.l.b16 %v2657
          %v2666 = vpack.c.b16 %v2663, %v2662
          %v2667 = vpack.c.b16 %v2665, %v2664
          %2670 = vst [vmem:[%s471 + $0x20] sm:$0xff] %v2666
          %2671 = vst [vmem:[%s471 + $0x28] sm:$0xff] %v2667
          %s2672 = scalar_lea.vmem [#allocation2], 192
          %v2673 = vld [vmem:[%s2672] sm:$0xff]
          %v2674 = vld [vmem:[%s2672 + $0x8] sm:$0xff]
          %v2675 = vld [vmem:[%s2672 + $0x10] sm:$0xff]
          %v2676 = vld [vmem:[%s2672 + $0x18] sm:$0xff]
          %v2677 = vld [vmem:[%s2672 + $0x20] sm:$0xff]
          %v2678 = vld [vmem:[%s2672 + $0x28] sm:$0xff]
          %v2679 = vld [vmem:[%s2672 + $0x30] sm:$0xff]
          %v2680 = vld [vmem:[%s2672 + $0x38] sm:$0xff]
          %v2681 = vld [vmem:[%s434 + $0xc] sm:$0xf]
          %v2682 = vunpack.c.l.bf16 %v2681
          %v2683 = vld [vmem:[%s441 + $0xc] sm:$0xf]
          %v2684 = vunpack.c.l.bf16 %v2683
          %v2685 = vld [vmem:[%s449 + $0x30] sm:$0xff]
          %v2686 = vld [vmem:[%s449 + $0x38] sm:$0xff]
          %v2687 = vunpack.c.l.bf16 %v2685
          %v2688 = vunpack.c.h.bf16 %v2685
          %v2689 = vunpack.c.l.bf16 %v2686
          %v2690 = vunpack.c.h.bf16 %v2686
          %vm2691 = vcmp.gt.f32.partialorder %v2673, 0.0
          %vm2692 = vcmp.gt.f32.partialorder %v2674, 0.0
          %vm2693 = vcmp.gt.f32.partialorder %v2675, 0.0
          %vm2694 = vcmp.gt.f32.partialorder %v2676, 0.0
          %v2699 = vcombine.low %v2673, %v2674
          %v2700 = vcombine.low %v2675, %v2676
          %v2702 = vunpack.c.l.s4 1983009808
          %v2703 = vunpack.c.0.s8 %v2702
          %v2704 = vlaneseq
          %v2705 = vshrl.u32 %v2704, 7
          %v2706 = vsub.s32 %v2703, %v2705
          %v2707 = vrot.slane %v2699, %v2706
          %v2709 = vunpack.c.l.s4 1983009808
          %v2710 = vunpack.c.0.s8 %v2709
          %v2711 = vlaneseq
          %v2712 = vshrl.u32 %v2711, 7
          %v2713 = vsub.s32 %v2710, %v2712
          %v2714 = vrot.slane %v2700, %v2713
          %v2715 = vcombine.low %v2707, %v2714
          %v2716 = vrot.slane %v2715, 7
          %v2717 = vrot.slane %v2716, 2
          %v2719 = vadd.f32 %v2684, %v2717
          %v2720 = vrcp.pop %v2719
          %v2721 = vmul.f32 %v2684, %v2682
          %v2723 = vadd.f32 %v2721, %v2715
          %v2724 = vmul.f32 %v2723, %v2720
          %v2726 = vlaneseq
          %v2727 = vshrl.u32 %v2726, 7
          %v2728 = vsub.s32 0, %v2727
          %v2729 = vrot.slane %v2724, %v2728
          %v2730 = vlaneseq
          %v2731 = vshrl.u32 %v2730, 7
          %v2732 = vsub.s32 2, %v2731
          %v2733 = vrot.slane %v2724, %v2732
          %v2734 = vlaneseq
          %v2735 = vshrl.u32 %v2734, 7
          %v2736 = vsub.s32 4, %v2735
          %v2737 = vrot.slane %v2724, %v2736
          %v2738 = vlaneseq
          %v2739 = vshrl.u32 %v2738, 7
          %v2740 = vsub.s32 6, %v2739
          %v2741 = vrot.slane %v2724, %v2740
          %v2747 = vlaneseq
          %v2748 = vshrl.u32 %v2747, 7
          %v2749 = vsub.s32 0, %v2748
          %v2750 = vrot.slane %v2682, %v2749
          %v2751 = vlaneseq
          %v2752 = vshrl.u32 %v2751, 7
          %v2753 = vsub.s32 2, %v2752
          %v2754 = vrot.slane %v2682, %v2753
          %v2755 = vlaneseq
          %v2756 = vshrl.u32 %v2755, 7
          %v2757 = vsub.s32 4, %v2756
          %v2758 = vrot.slane %v2682, %v2757
          %v2759 = vlaneseq
          %v2760 = vshrl.u32 %v2759, 7
          %v2761 = vsub.s32 6, %v2760
          %v2762 = vrot.slane %v2682, %v2761
          %v2767 = vsel %vm2691, %v2729, %v2750
          %v2768 = vsel %vm2692, %v2733, %v2754
          %v2769 = vsel %vm2693, %v2737, %v2758
          %v2770 = vsel %vm2694, %v2741, %v2762
          %v2771 = vmax.f32 %v2719, 0.0
          %v2772 = vmin.f32 %v2771, 255.0
          %v2774 = vlaneseq
          %v2775 = vshrl.u32 %v2774, 7
          %v2776 = vsub.s32 0, %v2775
          %v2777 = vrot.slane %v2772, %v2776
          %v2778 = vlaneseq
          %v2779 = vshrl.u32 %v2778, 7
          %v2780 = vsub.s32 2, %v2779
          %v2781 = vrot.slane %v2772, %v2780
          %v2782 = vlaneseq
          %v2783 = vshrl.u32 %v2782, 7
          %v2784 = vsub.s32 4, %v2783
          %v2785 = vrot.slane %v2772, %v2784
          %v2786 = vlaneseq
          %v2787 = vshrl.u32 %v2786, 7
          %v2788 = vsub.s32 6, %v2787
          %v2789 = vrot.slane %v2772, %v2788
          %v2795 = vlaneseq
          %v2796 = vshrl.u32 %v2795, 7
          %v2797 = vsub.s32 0, %v2796
          %v2798 = vrot.slane %v2684, %v2797
          %v2799 = vlaneseq
          %v2800 = vshrl.u32 %v2799, 7
          %v2801 = vsub.s32 2, %v2800
          %v2802 = vrot.slane %v2684, %v2801
          %v2803 = vlaneseq
          %v2804 = vshrl.u32 %v2803, 7
          %v2805 = vsub.s32 4, %v2804
          %v2806 = vrot.slane %v2684, %v2805
          %v2807 = vlaneseq
          %v2808 = vshrl.u32 %v2807, 7
          %v2809 = vsub.s32 6, %v2808
          %v2810 = vrot.slane %v2684, %v2809
          %v2815 = vsel %vm2691, %v2777, %v2798
          %v2816 = vsel %vm2692, %v2781, %v2802
          %v2817 = vsel %vm2693, %v2785, %v2806
          %v2818 = vsel %vm2694, %v2789, %v2810
          %v2819 = vlaneseq
          %v2820 = vshrl.u32 %v2819, 7
          %v2821 = vsub.s32 0, %v2820
          %v2822 = vrot.slane %v2798, %v2821
          %v2823 = vlaneseq
          %v2824 = vshrl.u32 %v2823, 7
          %v2825 = vsub.s32 0, %v2824
          %v2826 = vrot.slane %v2802, %v2825
          %v2827 = vlaneseq
          %v2828 = vshrl.u32 %v2827, 7
          %v2829 = vsub.s32 0, %v2828
          %v2830 = vrot.slane %v2806, %v2829
          %v2831 = vlaneseq
          %v2832 = vshrl.u32 %v2831, 7
          %v2833 = vsub.s32 0, %v2832
          %v2834 = vrot.slane %v2810, %v2833
          %v2835 = vmul.f32 %v2822, %v2687
          %v2836 = vmul.f32 %v2826, %v2688
          %v2837 = vmul.f32 %v2830, %v2689
          %v2838 = vmul.f32 %v2834, %v2690
          %v2839 = vadd.f32 %v2835, %v2677
          %v2840 = vadd.f32 %v2836, %v2678
          %v2841 = vadd.f32 %v2837, %v2679
          %v2842 = vadd.f32 %v2838, %v2680
          %v2844 = vlaneseq
          %v2845 = vshrl.u32 %v2844, 7
          %v2846 = vsub.s32 0, %v2845
          %v2847 = vrot.slane %v2720, %v2846
          %v2848 = vlaneseq
          %v2849 = vshrl.u32 %v2848, 7
          %v2850 = vsub.s32 2, %v2849
          %v2851 = vrot.slane %v2720, %v2850
          %v2852 = vlaneseq
          %v2853 = vshrl.u32 %v2852, 7
          %v2854 = vsub.s32 4, %v2853
          %v2855 = vrot.slane %v2720, %v2854
          %v2856 = vlaneseq
          %v2857 = vshrl.u32 %v2856, 7
          %v2858 = vsub.s32 6, %v2857
          %v2859 = vrot.slane %v2720, %v2858
          %v2864 = vlaneseq
          %v2865 = vshrl.u32 %v2864, 7
          %v2866 = vsub.s32 0, %v2865
          %v2867 = vrot.slane %v2847, %v2866
          %v2868 = vlaneseq
          %v2869 = vshrl.u32 %v2868, 7
          %v2870 = vsub.s32 0, %v2869
          %v2871 = vrot.slane %v2851, %v2870
          %v2872 = vlaneseq
          %v2873 = vshrl.u32 %v2872, 7
          %v2874 = vsub.s32 0, %v2873
          %v2875 = vrot.slane %v2855, %v2874
          %v2876 = vlaneseq
          %v2877 = vshrl.u32 %v2876, 7
          %v2878 = vsub.s32 0, %v2877
          %v2879 = vrot.slane %v2859, %v2878
          %v2880 = vmul.f32 %v2839, %v2867
          %v2881 = vmul.f32 %v2840, %v2871
          %v2882 = vmul.f32 %v2841, %v2875
          %v2883 = vmul.f32 %v2842, %v2879
          %v2884 = vsel %vm2691, 1, 0
          %v2885 = vsel %vm2692, 1, 0
          %v2886 = vsel %vm2693, 1, 0
          %v2887 = vsel %vm2694, 1, 0
          %v2888 = vlaneseq
          %v2889 = vshrl.u32 %v2888, 7
          %v2890 = vsub.s32 2, %v2889
          %v2891 = vrot.slane %v2884, %v2890
          %v2892 = vlaneseq
          %v2893 = vshrl.u32 %v2892, 7
          %v2894 = vsub.s32 2, %v2893
          %v2895 = vrot.slane %v2885, %v2894
          %v2896 = vlaneseq
          %v2897 = vshrl.u32 %v2896, 7
          %v2898 = vsub.s32 2, %v2897
          %v2899 = vrot.slane %v2886, %v2898
          %v2900 = vlaneseq
          %v2901 = vshrl.u32 %v2900, 7
          %v2902 = vsub.s32 2, %v2901
          %v2903 = vrot.slane %v2887, %v2902
          %vm2904 = vcmp.eq.s32.totalorder %v2891, 1
          %vm2905 = vcmp.eq.s32.totalorder %v2895, 1
          %vm2906 = vcmp.eq.s32.totalorder %v2899, 1
          %vm2907 = vcmp.eq.s32.totalorder %v2903, 1
          %v2908 = vsel %vm2904, %v2880, %v2687
          %v2909 = vsel %vm2905, %v2881, %v2688
          %v2910 = vsel %vm2906, %v2882, %v2689
          %v2911 = vsel %vm2907, %v2883, %v2690
          %v2912 = vcombine.high %v2707, %v2714
          %v2913 = vrot.slane %v2912, 7
          %v2914 = vrot.slane %v2913, 2
          %v2916 = vadd.f32 %v2684, %v2914
          %v2917 = vrcp.pop %v2916
          %v2918 = vmul.f32 %v2673, 0.1
          %v2919 = vmul.f32 %v2674, 0.1
          %v2920 = vmul.f32 %v2675, 0.1
          %v2921 = vmul.f32 %v2676, 0.1
          %v2926 = vcombine.low %v2918, %v2919
          %v2927 = vcombine.low %v2920, %v2921
          %v2929 = vunpack.c.l.s4 1983009808
          %v2930 = vunpack.c.0.s8 %v2929
          %v2931 = vlaneseq
          %v2932 = vshrl.u32 %v2931, 7
          %v2933 = vsub.s32 %v2930, %v2932
          %v2934 = vrot.slane %v2926, %v2933
          %v2936 = vunpack.c.l.s4 1983009808
          %v2937 = vunpack.c.0.s8 %v2936
          %v2938 = vlaneseq
          %v2939 = vshrl.u32 %v2938, 7
          %v2940 = vsub.s32 %v2937, %v2939
          %v2941 = vrot.slane %v2927, %v2940
          %v2942 = vcombine.high %v2934, %v2941
          %v2943 = vrot.slane %v2942, 7
          %v2944 = vrot.slane %v2943, 2
          %v2946 = vadd.f32 %v2721, %v2944
          %v2947 = vmul.f32 %v2946, %v2917
          %v2949 = vlaneseq
          %v2950 = vshrl.u32 %v2949, 7
          %v2951 = vsub.s32 0, %v2950
          %v2952 = vrot.slane %v2947, %v2951
          %v2953 = vlaneseq
          %v2954 = vshrl.u32 %v2953, 7
          %v2955 = vsub.s32 2, %v2954
          %v2956 = vrot.slane %v2947, %v2955
          %v2957 = vlaneseq
          %v2958 = vshrl.u32 %v2957, 7
          %v2959 = vsub.s32 4, %v2958
          %v2960 = vrot.slane %v2947, %v2959
          %v2961 = vlaneseq
          %v2962 = vshrl.u32 %v2961, 7
          %v2963 = vsub.s32 6, %v2962
          %v2964 = vrot.slane %v2947, %v2963
          %v2973 = vrot.slane %v2767, 6
          %v2974 = vrot.slane %v2768, 6
          %v2975 = vrot.slane %v2769, 6
          %v2976 = vrot.slane %v2770, 6
          %v2981 = vsel %vm2691, %v2952, %v2973
          %v2982 = vsel %vm2692, %v2956, %v2974
          %v2983 = vsel %vm2693, %v2960, %v2975
          %v2984 = vsel %vm2694, %v2964, %v2976
          %v2985 = vmax.f32 %v2916, 0.0
          %v2986 = vmin.f32 %v2985, 255.0
          %v2988 = vlaneseq
          %v2989 = vshrl.u32 %v2988, 7
          %v2990 = vsub.s32 0, %v2989
          %v2991 = vrot.slane %v2986, %v2990
          %v2992 = vlaneseq
          %v2993 = vshrl.u32 %v2992, 7
          %v2994 = vsub.s32 2, %v2993
          %v2995 = vrot.slane %v2986, %v2994
          %v2996 = vlaneseq
          %v2997 = vshrl.u32 %v2996, 7
          %v2998 = vsub.s32 4, %v2997
          %v2999 = vrot.slane %v2986, %v2998
          %v3000 = vlaneseq
          %v3001 = vshrl.u32 %v3000, 7
          %v3002 = vsub.s32 6, %v3001
          %v3003 = vrot.slane %v2986, %v3002
          %v3012 = vrot.slane %v2815, 6
          %v3013 = vrot.slane %v2816, 6
          %v3014 = vrot.slane %v2817, 6
          %v3015 = vrot.slane %v2818, 6
          %v3020 = vsel %vm2691, %v2991, %v3012
          %v3021 = vsel %vm2692, %v2995, %v3013
          %v3022 = vsel %vm2693, %v2999, %v3014
          %v3023 = vsel %vm2694, %v3003, %v3015
          %v3024 = vpack.c.bf16 %v2981, %v2981
          %v3025 = vpack.c.bf16 %v2982, %v2982
          %v3026 = vpack.c.bf16 %v2983, %v2983
          %v3027 = vpack.c.bf16 %v2984, %v2984
          %v3032 = vcombine.low %v3024, %v3025
          %v3033 = vcombine.low %v3026, %v3027
          %v3035 = vunpack.c.l.s4 1966171168
          %v3036 = vunpack.c.0.s8 %v3035
          %v3037 = vlaneseq
          %v3038 = vshrl.u32 %v3037, 7
          %v3039 = vsub.s32 %v3036, %v3038
          %v3040 = vrot.slane %v3032, %v3039
          %v3042 = vunpack.c.l.s4 1966171168
          %v3043 = vunpack.c.0.s8 %v3042
          %v3044 = vlaneseq
          %v3045 = vshrl.u32 %v3044, 7
          %v3046 = vsub.s32 %v3043, %v3045
          %v3047 = vrot.slane %v3033, %v3046
          %v3048 = vcombine.low %v3040, %v3047
          %v3050 = vunpack.c.l.s4 1966171168
          %v3051 = vunpack.c.0.s8 %v3050
          %v3052 = vlaneseq
          %v3053 = vshrl.u32 %v3052, 7
          %v3054 = vsub.s32 %v3051, %v3053
          %v3055 = vrot.slane %v3048, %v3054
          %v3056 = vcombine.high %v3055, %v3055
          %v3058 = vld [vmem:[%s456 + $0xc] sm:$0xf]
          %v3059 = vsel %vm1725, %v3056, %v3058
          %3060 = vst [vmem:[%s456 + $0xc] sm:$0xf] %v3059
          %v3061 = vpack.c.bf16 %v3020, %v3020
          %v3062 = vpack.c.bf16 %v3021, %v3021
          %v3063 = vpack.c.bf16 %v3022, %v3022
          %v3064 = vpack.c.bf16 %v3023, %v3023
          %v3069 = vcombine.low %v3061, %v3062
          %v3070 = vcombine.low %v3063, %v3064
          %v3072 = vunpack.c.l.s4 1966171168
          %v3073 = vunpack.c.0.s8 %v3072
          %v3074 = vlaneseq
          %v3075 = vshrl.u32 %v3074, 7
          %v3076 = vsub.s32 %v3073, %v3075
          %v3077 = vrot.slane %v3069, %v3076
          %v3079 = vunpack.c.l.s4 1966171168
          %v3080 = vunpack.c.0.s8 %v3079
          %v3081 = vlaneseq
          %v3082 = vshrl.u32 %v3081, 7
          %v3083 = vsub.s32 %v3080, %v3082
          %v3084 = vrot.slane %v3070, %v3083
          %v3085 = vcombine.low %v3077, %v3084
          %v3087 = vunpack.c.l.s4 1966171168
          %v3088 = vunpack.c.0.s8 %v3087
          %v3089 = vlaneseq
          %v3090 = vshrl.u32 %v3089, 7
          %v3091 = vsub.s32 %v3088, %v3090
          %v3092 = vrot.slane %v3085, %v3091
          %v3093 = vcombine.high %v3092, %v3092
          %v3095 = vld [vmem:[%s463 + $0xc] sm:$0xf]
          %v3096 = vsel %vm1725, %v3093, %v3095
          %3097 = vst [vmem:[%s463 + $0xc] sm:$0xf] %v3096
          %v3098 = vpack.c.bf16 %v2908, %v2908
          %v3099 = vpack.c.bf16 %v2909, %v2909
          %v3100 = vpack.c.bf16 %v2910, %v2910
          %v3101 = vpack.c.bf16 %v2911, %v2911
          %v3106 = vunpack.c.l.b16 %v3098
          %v3107 = vunpack.c.l.b16 %v3099
          %v3108 = vunpack.c.l.b16 %v3100
          %v3109 = vunpack.c.l.b16 %v3101
          %v3110 = vpack.c.b16 %v3107, %v3106
          %v3111 = vpack.c.b16 %v3109, %v3108
          %3114 = vst [vmem:[%s471 + $0x30] sm:$0xff] %v3110
          %3115 = vst [vmem:[%s471 + $0x38] sm:$0xff] %v3111
          %s3116 = scalar_lea.vmem [#allocation2], 256
          %v3117 = vld [vmem:[%s3116] sm:$0xff]
          %v3118 = vld [vmem:[%s3116 + $0x8] sm:$0xff]
          %v3119 = vld [vmem:[%s3116 + $0x10] sm:$0xff]
          %v3120 = vld [vmem:[%s3116 + $0x18] sm:$0xff]
          %v3121 = vld [vmem:[%s3116 + $0x20] sm:$0xff]
          %v3122 = vld [vmem:[%s3116 + $0x28] sm:$0xff]
          %v3123 = vld [vmem:[%s3116 + $0x30] sm:$0xff]
          %v3124 = vld [vmem:[%s3116 + $0x38] sm:$0xff]
          %v3125 = vld [vmem:[%s434 + $0x10] sm:$0xf]
          %v3126 = vunpack.c.l.bf16 %v3125
          %v3127 = vld [vmem:[%s441 + $0x10] sm:$0xf]
          %v3128 = vunpack.c.l.bf16 %v3127
          %v3129 = vld [vmem:[%s449 + $0x40] sm:$0xff]
          %v3130 = vld [vmem:[%s449 + $0x48] sm:$0xff]
          %v3131 = vunpack.c.l.bf16 %v3129
          %v3132 = vunpack.c.h.bf16 %v3129
          %v3133 = vunpack.c.l.bf16 %v3130
          %v3134 = vunpack.c.h.bf16 %v3130
          %vm3135 = vcmp.gt.f32.partialorder %v3117, 0.0
          %vm3136 = vcmp.gt.f32.partialorder %v3118, 0.0
          %vm3137 = vcmp.gt.f32.partialorder %v3119, 0.0
          %vm3138 = vcmp.gt.f32.partialorder %v3120, 0.0
          %v3143 = vcombine.low %v3117, %v3118
          %v3144 = vcombine.low %v3119, %v3120
          %v3146 = vunpack.c.l.s4 1983009808
          %v3147 = vunpack.c.0.s8 %v3146
          %v3148 = vlaneseq
          %v3149 = vshrl.u32 %v3148, 7
          %v3150 = vsub.s32 %v3147, %v3149
          %v3151 = vrot.slane %v3143, %v3150
          %v3153 = vunpack.c.l.s4 1983009808
          %v3154 = vunpack.c.0.s8 %v3153
          %v3155 = vlaneseq
          %v3156 = vshrl.u32 %v3155, 7
          %v3157 = vsub.s32 %v3154, %v3156
          %v3158 = vrot.slane %v3144, %v3157
          %v3159 = vcombine.low %v3151, %v3158
          %v3160 = vrot.slane %v3159, 7
          %v3161 = vrot.slane %v3160, 2
          %v3163 = vadd.f32 %v3128, %v3161
          %v3164 = vrcp.pop %v3163
          %v3165 = vmul.f32 %v3128, %v3126
          %v3167 = vadd.f32 %v3165, %v3159
          %v3168 = vmul.f32 %v3167, %v3164
          %v3170 = vlaneseq
          %v3171 = vshrl.u32 %v3170, 7
          %v3172 = vsub.s32 0, %v3171
          %v3173 = vrot.slane %v3168, %v3172
          %v3174 = vlaneseq
          %v3175 = vshrl.u32 %v3174, 7
          %v3176 = vsub.s32 2, %v3175
          %v3177 = vrot.slane %v3168, %v3176
          %v3178 = vlaneseq
          %v3179 = vshrl.u32 %v3178, 7
          %v3180 = vsub.s32 4, %v3179
          %v3181 = vrot.slane %v3168, %v3180
          %v3182 = vlaneseq
          %v3183 = vshrl.u32 %v3182, 7
          %v3184 = vsub.s32 6, %v3183
          %v3185 = vrot.slane %v3168, %v3184
          %v3191 = vlaneseq
          %v3192 = vshrl.u32 %v3191, 7
          %v3193 = vsub.s32 0, %v3192
          %v3194 = vrot.slane %v3126, %v3193
          %v3195 = vlaneseq
          %v3196 = vshrl.u32 %v3195, 7
          %v3197 = vsub.s32 2, %v3196
          %v3198 = vrot.slane %v3126, %v3197
          %v3199 = vlaneseq
          %v3200 = vshrl.u32 %v3199, 7
          %v3201 = vsub.s32 4, %v3200
          %v3202 = vrot.slane %v3126, %v3201
          %v3203 = vlaneseq
          %v3204 = vshrl.u32 %v3203, 7
          %v3205 = vsub.s32 6, %v3204
          %v3206 = vrot.slane %v3126, %v3205
          %v3211 = vsel %vm3135, %v3173, %v3194
          %v3212 = vsel %vm3136, %v3177, %v3198
          %v3213 = vsel %vm3137, %v3181, %v3202
          %v3214 = vsel %vm3138, %v3185, %v3206
          %v3215 = vmax.f32 %v3163, 0.0
          %v3216 = vmin.f32 %v3215, 255.0
          %v3218 = vlaneseq
          %v3219 = vshrl.u32 %v3218, 7
          %v3220 = vsub.s32 0, %v3219
          %v3221 = vrot.slane %v3216, %v3220
          %v3222 = vlaneseq
          %v3223 = vshrl.u32 %v3222, 7
          %v3224 = vsub.s32 2, %v3223
          %v3225 = vrot.slane %v3216, %v3224
          %v3226 = vlaneseq
          %v3227 = vshrl.u32 %v3226, 7
          %v3228 = vsub.s32 4, %v3227
          %v3229 = vrot.slane %v3216, %v3228
          %v3230 = vlaneseq
          %v3231 = vshrl.u32 %v3230, 7
          %v3232 = vsub.s32 6, %v3231
          %v3233 = vrot.slane %v3216, %v3232
          %v3239 = vlaneseq
          %v3240 = vshrl.u32 %v3239, 7
          %v3241 = vsub.s32 0, %v3240
          %v3242 = vrot.slane %v3128, %v3241
          %v3243 = vlaneseq
          %v3244 = vshrl.u32 %v3243, 7
          %v3245 = vsub.s32 2, %v3244
          %v3246 = vrot.slane %v3128, %v3245
          %v3247 = vlaneseq
          %v3248 = vshrl.u32 %v3247, 7
          %v3249 = vsub.s32 4, %v3248
          %v3250 = vrot.slane %v3128, %v3249
          %v3251 = vlaneseq
          %v3252 = vshrl.u32 %v3251, 7
          %v3253 = vsub.s32 6, %v3252
          %v3254 = vrot.slane %v3128, %v3253
          %v3259 = vsel %vm3135, %v3221, %v3242
          %v3260 = vsel %vm3136, %v3225, %v3246
          %v3261 = vsel %vm3137, %v3229, %v3250
          %v3262 = vsel %vm3138, %v3233, %v3254
          %v3263 = vlaneseq
          %v3264 = vshrl.u32 %v3263, 7
          %v3265 = vsub.s32 0, %v3264
          %v3266 = vrot.slane %v3242, %v3265
          %v3267 = vlaneseq
          %v3268 = vshrl.u32 %v3267, 7
          %v3269 = vsub.s32 0, %v3268
          %v3270 = vrot.slane %v3246, %v3269
          %v3271 = vlaneseq
          %v3272 = vshrl.u32 %v3271, 7
          %v3273 = vsub.s32 0, %v3272
          %v3274 = vrot.slane %v3250, %v3273
          %v3275 = vlaneseq
          %v3276 = vshrl.u32 %v3275, 7
          %v3277 = vsub.s32 0, %v3276
          %v3278 = vrot.slane %v3254, %v3277
          %v3279 = vmul.f32 %v3266, %v3131
          %v3280 = vmul.f32 %v3270, %v3132
          %v3281 = vmul.f32 %v3274, %v3133
          %v3282 = vmul.f32 %v3278, %v3134
          %v3283 = vadd.f32 %v3279, %v3121
          %v3284 = vadd.f32 %v3280, %v3122
          %v3285 = vadd.f32 %v3281, %v3123
          %v3286 = vadd.f32 %v3282, %v3124
          %v3288 = vlaneseq
          %v3289 = vshrl.u32 %v3288, 7
          %v3290 = vsub.s32 0, %v3289
          %v3291 = vrot.slane %v3164, %v3290
          %v3292 = vlaneseq
          %v3293 = vshrl.u32 %v3292, 7
          %v3294 = vsub.s32 2, %v3293
          %v3295 = vrot.slane %v3164, %v3294
          %v3296 = vlaneseq
          %v3297 = vshrl.u32 %v3296, 7
          %v3298 = vsub.s32 4, %v3297
          %v3299 = vrot.slane %v3164, %v3298
          %v3300 = vlaneseq
          %v3301 = vshrl.u32 %v3300, 7
          %v3302 = vsub.s32 6, %v3301
          %v3303 = vrot.slane %v3164, %v3302
          %v3308 = vlaneseq
          %v3309 = vshrl.u32 %v3308, 7
          %v3310 = vsub.s32 0, %v3309
          %v3311 = vrot.slane %v3291, %v3310
          %v3312 = vlaneseq
          %v3313 = vshrl.u32 %v3312, 7
          %v3314 = vsub.s32 0, %v3313
          %v3315 = vrot.slane %v3295, %v3314
          %v3316 = vlaneseq
          %v3317 = vshrl.u32 %v3316, 7
          %v3318 = vsub.s32 0, %v3317
          %v3319 = vrot.slane %v3299, %v3318
          %v3320 = vlaneseq
          %v3321 = vshrl.u32 %v3320, 7
          %v3322 = vsub.s32 0, %v3321
          %v3323 = vrot.slane %v3303, %v3322
          %v3324 = vmul.f32 %v3283, %v3311
          %v3325 = vmul.f32 %v3284, %v3315
          %v3326 = vmul.f32 %v3285, %v3319
          %v3327 = vmul.f32 %v3286, %v3323
          %v3328 = vsel %vm3135, 1, 0
          %v3329 = vsel %vm3136, 1, 0
          %v3330 = vsel %vm3137, 1, 0
          %v3331 = vsel %vm3138, 1, 0
          %v3332 = vlaneseq
          %v3333 = vshrl.u32 %v3332, 7
          %v3334 = vsub.s32 2, %v3333
          %v3335 = vrot.slane %v3328, %v3334
          %v3336 = vlaneseq
          %v3337 = vshrl.u32 %v3336, 7
          %v3338 = vsub.s32 2, %v3337
          %v3339 = vrot.slane %v3329, %v3338
          %v3340 = vlaneseq
          %v3341 = vshrl.u32 %v3340, 7
          %v3342 = vsub.s32 2, %v3341
          %v3343 = vrot.slane %v3330, %v3342
          %v3344 = vlaneseq
          %v3345 = vshrl.u32 %v3344, 7
          %v3346 = vsub.s32 2, %v3345
          %v3347 = vrot.slane %v3331, %v3346
          %vm3348 = vcmp.eq.s32.totalorder %v3335, 1
          %vm3349 = vcmp.eq.s32.totalorder %v3339, 1
          %vm3350 = vcmp.eq.s32.totalorder %v3343, 1
          %vm3351 = vcmp.eq.s32.totalorder %v3347, 1
          %v3352 = vsel %vm3348, %v3324, %v3131
          %v3353 = vsel %vm3349, %v3325, %v3132
          %v3354 = vsel %vm3350, %v3326, %v3133
          %v3355 = vsel %vm3351, %v3327, %v3134
          %v3356 = vcombine.high %v3151, %v3158
          %v3357 = vrot.slane %v3356, 7
          %v3358 = vrot.slane %v3357, 2
          %v3360 = vadd.f32 %v3128, %v3358
          %v3361 = vrcp.pop %v3360
          %v3362 = vmul.f32 %v3117, 0.1
          %v3363 = vmul.f32 %v3118, 0.1
          %v3364 = vmul.f32 %v3119, 0.1
          %v3365 = vmul.f32 %v3120, 0.1
          %v3370 = vcombine.low %v3362, %v3363
          %v3371 = vcombine.low %v3364, %v3365
          %v3373 = vunpack.c.l.s4 1983009808
          %v3374 = vunpack.c.0.s8 %v3373
          %v3375 = vlaneseq
          %v3376 = vshrl.u32 %v3375, 7
          %v3377 = vsub.s32 %v3374, %v3376
          %v3378 = vrot.slane %v3370, %v3377
          %v3380 = vunpack.c.l.s4 1983009808
          %v3381 = vunpack.c.0.s8 %v3380
          %v3382 = vlaneseq
          %v3383 = vshrl.u32 %v3382, 7
          %v3384 = vsub.s32 %v3381, %v3383
          %v3385 = vrot.slane %v3371, %v3384
          %v3386 = vcombine.high %v3378, %v3385
          %v3387 = vrot.slane %v3386, 7
          %v3388 = vrot.slane %v3387, 2
          %v3390 = vadd.f32 %v3165, %v3388
          %v3391 = vmul.f32 %v3390, %v3361
          %v3393 = vlaneseq
          %v3394 = vshrl.u32 %v3393, 7
          %v3395 = vsub.s32 0, %v3394
          %v3396 = vrot.slane %v3391, %v3395
          %v3397 = vlaneseq
          %v3398 = vshrl.u32 %v3397, 7
          %v3399 = vsub.s32 2, %v3398
          %v3400 = vrot.slane %v3391, %v3399
          %v3401 = vlaneseq
          %v3402 = vshrl.u32 %v3401, 7
          %v3403 = vsub.s32 4, %v3402
          %v3404 = vrot.slane %v3391, %v3403
          %v3405 = vlaneseq
          %v3406 = vshrl.u32 %v3405, 7
          %v3407 = vsub.s32 6, %v3406
          %v3408 = vrot.slane %v3391, %v3407
          %v3417 = vrot.slane %v3211, 6
          %v3418 = vrot.slane %v3212, 6
          %v3419 = vrot.slane %v3213, 6
          %v3420 = vrot.slane %v3214, 6
          %v3425 = vsel %vm3135, %v3396, %v3417
          %v3426 = vsel %vm3136, %v3400, %v3418
          %v3427 = vsel %vm3137, %v3404, %v3419
          %v3428 = vsel %vm3138, %v3408, %v3420
          %v3429 = vmax.f32 %v3360, 0.0
          %v3430 = vmin.f32 %v3429, 255.0
          %v3432 = vlaneseq
          %v3433 = vshrl.u32 %v3432, 7
          %v3434 = vsub.s32 0, %v3433
          %v3435 = vrot.slane %v3430, %v3434
          %v3436 = vlaneseq
          %v3437 = vshrl.u32 %v3436, 7
          %v3438 = vsub.s32 2, %v3437
          %v3439 = vrot.slane %v3430, %v3438
          %v3440 = vlaneseq
          %v3441 = vshrl.u32 %v3440, 7
          %v3442 = vsub.s32 4, %v3441
          %v3443 = vrot.slane %v3430, %v3442
          %v3444 = vlaneseq
          %v3445 = vshrl.u32 %v3444, 7
          %v3446 = vsub.s32 6, %v3445
          %v3447 = vrot.slane %v3430, %v3446
          %v3456 = vrot.slane %v3259, 6
          %v3457 = vrot.slane %v3260, 6
          %v3458 = vrot.slane %v3261, 6
          %v3459 = vrot.slane %v3262, 6
          %v3464 = vsel %vm3135, %v3435, %v3456
          %v3465 = vsel %vm3136, %v3439, %v3457
          %v3466 = vsel %vm3137, %v3443, %v3458
          %v3467 = vsel %vm3138, %v3447, %v3459
          %v3468 = vpack.c.bf16 %v3425, %v3425
          %v3469 = vpack.c.bf16 %v3426, %v3426
          %v3470 = vpack.c.bf16 %v3427, %v3427
          %v3471 = vpack.c.bf16 %v3428, %v3428
          %v3476 = vcombine.low %v3468, %v3469
          %v3477 = vcombine.low %v3470, %v3471
          %v3479 = vunpack.c.l.s4 1966171168
          %v3480 = vunpack.c.0.s8 %v3479
          %v3481 = vlaneseq
          %v3482 = vshrl.u32 %v3481, 7
          %v3483 = vsub.s32 %v3480, %v3482
          %v3484 = vrot.slane %v3476, %v3483
          %v3486 = vunpack.c.l.s4 1966171168
          %v3487 = vunpack.c.0.s8 %v3486
          %v3488 = vlaneseq
          %v3489 = vshrl.u32 %v3488, 7
          %v3490 = vsub.s32 %v3487, %v3489
          %v3491 = vrot.slane %v3477, %v3490
          %v3492 = vcombine.low %v3484, %v3491
          %v3494 = vunpack.c.l.s4 1966171168
          %v3495 = vunpack.c.0.s8 %v3494
          %v3496 = vlaneseq
          %v3497 = vshrl.u32 %v3496, 7
          %v3498 = vsub.s32 %v3495, %v3497
          %v3499 = vrot.slane %v3492, %v3498
          %v3500 = vcombine.high %v3499, %v3499
          %v3502 = vld [vmem:[%s456 + $0x10] sm:$0xf]
          %v3503 = vsel %vm1725, %v3500, %v3502
          %3504 = vst [vmem:[%s456 + $0x10] sm:$0xf] %v3503
          %v3505 = vpack.c.bf16 %v3464, %v3464
          %v3506 = vpack.c.bf16 %v3465, %v3465
          %v3507 = vpack.c.bf16 %v3466, %v3466
          %v3508 = vpack.c.bf16 %v3467, %v3467
          %v3513 = vcombine.low %v3505, %v3506
          %v3514 = vcombine.low %v3507, %v3508
          %v3516 = vunpack.c.l.s4 1966171168
          %v3517 = vunpack.c.0.s8 %v3516
          %v3518 = vlaneseq
          %v3519 = vshrl.u32 %v3518, 7
          %v3520 = vsub.s32 %v3517, %v3519
          %v3521 = vrot.slane %v3513, %v3520
          %v3523 = vunpack.c.l.s4 1966171168
          %v3524 = vunpack.c.0.s8 %v3523
          %v3525 = vlaneseq
          %v3526 = vshrl.u32 %v3525, 7
          %v3527 = vsub.s32 %v3524, %v3526
          %v3528 = vrot.slane %v3514, %v3527
          %v3529 = vcombine.low %v3521, %v3528
          %v3531 = vunpack.c.l.s4 1966171168
          %v3532 = vunpack.c.0.s8 %v3531
          %v3533 = vlaneseq
          %v3534 = vshrl.u32 %v3533, 7
          %v3535 = vsub.s32 %v3532, %v3534
          %v3536 = vrot.slane %v3529, %v3535
          %v3537 = vcombine.high %v3536, %v3536
          %v3539 = vld [vmem:[%s463 + $0x10] sm:$0xf]
          %v3540 = vsel %vm1725, %v3537, %v3539
          %3541 = vst [vmem:[%s463 + $0x10] sm:$0xf] %v3540
          %v3542 = vpack.c.bf16 %v3352, %v3352
          %v3543 = vpack.c.bf16 %v3353, %v3353
          %v3544 = vpack.c.bf16 %v3354, %v3354
          %v3545 = vpack.c.bf16 %v3355, %v3355
          %v3550 = vunpack.c.l.b16 %v3542
          %v3551 = vunpack.c.l.b16 %v3543
          %v3552 = vunpack.c.l.b16 %v3544
          %v3553 = vunpack.c.l.b16 %v3545
          %v3554 = vpack.c.b16 %v3551, %v3550
          %v3555 = vpack.c.b16 %v3553, %v3552
          %3558 = vst [vmem:[%s471 + $0x40] sm:$0xff] %v3554
          %3559 = vst [vmem:[%s471 + $0x48] sm:$0xff] %v3555
          %s3560 = scalar_lea.vmem [#allocation2], 320
          %v3561 = vld [vmem:[%s3560] sm:$0xff]
          %v3562 = vld [vmem:[%s3560 + $0x8] sm:$0xff]
          %v3563 = vld [vmem:[%s3560 + $0x10] sm:$0xff]
          %v3564 = vld [vmem:[%s3560 + $0x18] sm:$0xff]
          %v3565 = vld [vmem:[%s3560 + $0x20] sm:$0xff]
          %v3566 = vld [vmem:[%s3560 + $0x28] sm:$0xff]
          %v3567 = vld [vmem:[%s3560 + $0x30] sm:$0xff]
          %v3568 = vld [vmem:[%s3560 + $0x38] sm:$0xff]
          %v3569 = vld [vmem:[%s434 + $0x14] sm:$0xf]
          %v3570 = vunpack.c.l.bf16 %v3569
          %v3571 = vld [vmem:[%s441 + $0x14] sm:$0xf]
          %v3572 = vunpack.c.l.bf16 %v3571
          %v3573 = vld [vmem:[%s449 + $0x50] sm:$0xff]
          %v3574 = vld [vmem:[%s449 + $0x58] sm:$0xff]
          %v3575 = vunpack.c.l.bf16 %v3573
          %v3576 = vunpack.c.h.bf16 %v3573
          %v3577 = vunpack.c.l.bf16 %v3574
          %v3578 = vunpack.c.h.bf16 %v3574
          %vm3579 = vcmp.gt.f32.partialorder %v3561, 0.0
          %vm3580 = vcmp.gt.f32.partialorder %v3562, 0.0
          %vm3581 = vcmp.gt.f32.partialorder %v3563, 0.0
          %vm3582 = vcmp.gt.f32.partialorder %v3564, 0.0
          %v3587 = vcombine.low %v3561, %v3562
          %v3588 = vcombine.low %v3563, %v3564
          %v3590 = vunpack.c.l.s4 1983009808
          %v3591 = vunpack.c.0.s8 %v3590
          %v3592 = vlaneseq
          %v3593 = vshrl.u32 %v3592, 7
          %v3594 = vsub.s32 %v3591, %v3593
          %v3595 = vrot.slane %v3587, %v3594
          %v3597 = vunpack.c.l.s4 1983009808
          %v3598 = vunpack.c.0.s8 %v3597
          %v3599 = vlaneseq
          %v3600 = vshrl.u32 %v3599, 7
          %v3601 = vsub.s32 %v3598, %v3600
          %v3602 = vrot.slane %v3588, %v3601
          %v3603 = vcombine.low %v3595, %v3602
          %v3604 = vrot.slane %v3603, 7
          %v3605 = vrot.slane %v3604, 2
          %v3607 = vadd.f32 %v3572, %v3605
          %v3608 = vrcp.pop %v3607
          %v3609 = vmul.f32 %v3572, %v3570
          %v3611 = vadd.f32 %v3609, %v3603
          %v3612 = vmul.f32 %v3611, %v3608
          %v3614 = vlaneseq
          %v3615 = vshrl.u32 %v3614, 7
          %v3616 = vsub.s32 0, %v3615
          %v3617 = vrot.slane %v3612, %v3616
          %v3618 = vlaneseq
          %v3619 = vshrl.u32 %v3618, 7
          %v3620 = vsub.s32 2, %v3619
          %v3621 = vrot.slane %v3612, %v3620
          %v3622 = vlaneseq
          %v3623 = vshrl.u32 %v3622, 7
          %v3624 = vsub.s32 4, %v3623
          %v3625 = vrot.slane %v3612, %v3624
          %v3626 = vlaneseq
          %v3627 = vshrl.u32 %v3626, 7
          %v3628 = vsub.s32 6, %v3627
          %v3629 = vrot.slane %v3612, %v3628
          %v3635 = vlaneseq
          %v3636 = vshrl.u32 %v3635, 7
          %v3637 = vsub.s32 0, %v3636
          %v3638 = vrot.slane %v3570, %v3637
          %v3639 = vlaneseq
          %v3640 = vshrl.u32 %v3639, 7
          %v3641 = vsub.s32 2, %v3640
          %v3642 = vrot.slane %v3570, %v3641
          %v3643 = vlaneseq
          %v3644 = vshrl.u32 %v3643, 7
          %v3645 = vsub.s32 4, %v3644
          %v3646 = vrot.slane %v3570, %v3645
          %v3647 = vlaneseq
          %v3648 = vshrl.u32 %v3647, 7
          %v3649 = vsub.s32 6, %v3648
          %v3650 = vrot.slane %v3570, %v3649
          %v3655 = vsel %vm3579, %v3617, %v3638
          %v3656 = vsel %vm3580, %v3621, %v3642
          %v3657 = vsel %vm3581, %v3625, %v3646
          %v3658 = vsel %vm3582, %v3629, %v3650
          %v3659 = vmax.f32 %v3607, 0.0
          %v3660 = vmin.f32 %v3659, 255.0
          %v3662 = vlaneseq
          %v3663 = vshrl.u32 %v3662, 7
          %v3664 = vsub.s32 0, %v3663
          %v3665 = vrot.slane %v3660, %v3664
          %v3666 = vlaneseq
          %v3667 = vshrl.u32 %v3666, 7
          %v3668 = vsub.s32 2, %v3667
          %v3669 = vrot.slane %v3660, %v3668
          %v3670 = vlaneseq
          %v3671 = vshrl.u32 %v3670, 7
          %v3672 = vsub.s32 4, %v3671
          %v3673 = vrot.slane %v3660, %v3672
          %v3674 = vlaneseq
          %v3675 = vshrl.u32 %v3674, 7
          %v3676 = vsub.s32 6, %v3675
          %v3677 = vrot.slane %v3660, %v3676
          %v3683 = vlaneseq
          %v3684 = vshrl.u32 %v3683, 7
          %v3685 = vsub.s32 0, %v3684
          %v3686 = vrot.slane %v3572, %v3685
          %v3687 = vlaneseq
          %v3688 = vshrl.u32 %v3687, 7
          %v3689 = vsub.s32 2, %v3688
          %v3690 = vrot.slane %v3572, %v3689
          %v3691 = vlaneseq
          %v3692 = vshrl.u32 %v3691, 7
          %v3693 = vsub.s32 4, %v3692
          %v3694 = vrot.slane %v3572, %v3693
          %v3695 = vlaneseq
          %v3696 = vshrl.u32 %v3695, 7
          %v3697 = vsub.s32 6, %v3696
          %v3698 = vrot.slane %v3572, %v3697
          %v3703 = vsel %vm3579, %v3665, %v3686
          %v3704 = vsel %vm3580, %v3669, %v3690
          %v3705 = vsel %vm3581, %v3673, %v3694
          %v3706 = vsel %vm3582, %v3677, %v3698
          %v3707 = vlaneseq
          %v3708 = vshrl.u32 %v3707, 7
          %v3709 = vsub.s32 0, %v3708
          %v3710 = vrot.slane %v3686, %v3709
          %v3711 = vlaneseq
          %v3712 = vshrl.u32 %v3711, 7
          %v3713 = vsub.s32 0, %v3712
          %v3714 = vrot.slane %v3690, %v3713
          %v3715 = vlaneseq
          %v3716 = vshrl.u32 %v3715, 7
          %v3717 = vsub.s32 0, %v3716
          %v3718 = vrot.slane %v3694, %v3717
          %v3719 = vlaneseq
          %v3720 = vshrl.u32 %v3719, 7
          %v3721 = vsub.s32 0, %v3720
          %v3722 = vrot.slane %v3698, %v3721
          %v3723 = vmul.f32 %v3710, %v3575
          %v3724 = vmul.f32 %v3714, %v3576
          %v3725 = vmul.f32 %v3718, %v3577
          %v3726 = vmul.f32 %v3722, %v3578
          %v3727 = vadd.f32 %v3723, %v3565
          %v3728 = vadd.f32 %v3724, %v3566
          %v3729 = vadd.f32 %v3725, %v3567
          %v3730 = vadd.f32 %v3726, %v3568
          %v3732 = vlaneseq
          %v3733 = vshrl.u32 %v3732, 7
          %v3734 = vsub.s32 0, %v3733
          %v3735 = vrot.slane %v3608, %v3734
          %v3736 = vlaneseq
          %v3737 = vshrl.u32 %v3736, 7
          %v3738 = vsub.s32 2, %v3737
          %v3739 = vrot.slane %v3608, %v3738
          %v3740 = vlaneseq
          %v3741 = vshrl.u32 %v3740, 7
          %v3742 = vsub.s32 4, %v3741
          %v3743 = vrot.slane %v3608, %v3742
          %v3744 = vlaneseq
          %v3745 = vshrl.u32 %v3744, 7
          %v3746 = vsub.s32 6, %v3745
          %v3747 = vrot.slane %v3608, %v3746
          %v3752 = vlaneseq
          %v3753 = vshrl.u32 %v3752, 7
          %v3754 = vsub.s32 0, %v3753
          %v3755 = vrot.slane %v3735, %v3754
          %v3756 = vlaneseq
          %v3757 = vshrl.u32 %v3756, 7
          %v3758 = vsub.s32 0, %v3757
          %v3759 = vrot.slane %v3739, %v3758
          %v3760 = vlaneseq
          %v3761 = vshrl.u32 %v3760, 7
          %v3762 = vsub.s32 0, %v3761
          %v3763 = vrot.slane %v3743, %v3762
          %v3764 = vlaneseq
          %v3765 = vshrl.u32 %v3764, 7
          %v3766 = vsub.s32 0, %v3765
          %v3767 = vrot.slane %v3747, %v3766
          %v3768 = vmul.f32 %v3727, %v3755
          %v3769 = vmul.f32 %v3728, %v3759
          %v3770 = vmul.f32 %v3729, %v3763
          %v3771 = vmul.f32 %v3730, %v3767
          %v3772 = vsel %vm3579, 1, 0
          %v3773 = vsel %vm3580, 1, 0
          %v3774 = vsel %vm3581, 1, 0
          %v3775 = vsel %vm3582, 1, 0
          %v3776 = vlaneseq
          %v3777 = vshrl.u32 %v3776, 7
          %v3778 = vsub.s32 2, %v3777
          %v3779 = vrot.slane %v3772, %v3778
          %v3780 = vlaneseq
          %v3781 = vshrl.u32 %v3780, 7
          %v3782 = vsub.s32 2, %v3781
          %v3783 = vrot.slane %v3773, %v3782
          %v3784 = vlaneseq
          %v3785 = vshrl.u32 %v3784, 7
          %v3786 = vsub.s32 2, %v3785
          %v3787 = vrot.slane %v3774, %v3786
          %v3788 = vlaneseq
          %v3789 = vshrl.u32 %v3788, 7
          %v3790 = vsub.s32 2, %v3789
          %v3791 = vrot.slane %v3775, %v3790
          %vm3792 = vcmp.eq.s32.totalorder %v3779, 1
          %vm3793 = vcmp.eq.s32.totalorder %v3783, 1
          %vm3794 = vcmp.eq.s32.totalorder %v3787, 1
          %vm3795 = vcmp.eq.s32.totalorder %v3791, 1
          %v3796 = vsel %vm3792, %v3768, %v3575
          %v3797 = vsel %vm3793, %v3769, %v3576
          %v3798 = vsel %vm3794, %v3770, %v3577
          %v3799 = vsel %vm3795, %v3771, %v3578
          %v3800 = vcombine.high %v3595, %v3602
          %v3801 = vrot.slane %v3800, 7
          %v3802 = vrot.slane %v3801, 2
          %v3804 = vadd.f32 %v3572, %v3802
          %v3805 = vrcp.pop %v3804
          %v3806 = vmul.f32 %v3561, 0.1
          %v3807 = vmul.f32 %v3562, 0.1
          %v3808 = vmul.f32 %v3563, 0.1
          %v3809 = vmul.f32 %v3564, 0.1
          %v3814 = vcombine.low %v3806, %v3807
          %v3815 = vcombine.low %v3808, %v3809
          %v3817 = vunpack.c.l.s4 1983009808
          %v3818 = vunpack.c.0.s8 %v3817
          %v3819 = vlaneseq
          %v3820 = vshrl.u32 %v3819, 7
          %v3821 = vsub.s32 %v3818, %v3820
          %v3822 = vrot.slane %v3814, %v3821
          %v3824 = vunpack.c.l.s4 1983009808
          %v3825 = vunpack.c.0.s8 %v3824
          %v3826 = vlaneseq
          %v3827 = vshrl.u32 %v3826, 7
          %v3828 = vsub.s32 %v3825, %v3827
          %v3829 = vrot.slane %v3815, %v3828
          %v3830 = vcombine.high %v3822, %v3829
          %v3831 = vrot.slane %v3830, 7
          %v3832 = vrot.slane %v3831, 2
          %v3834 = vadd.f32 %v3609, %v3832
          %v3835 = vmul.f32 %v3834, %v3805
          %v3837 = vlaneseq
          %v3838 = vshrl.u32 %v3837, 7
          %v3839 = vsub.s32 0, %v3838
          %v3840 = vrot.slane %v3835, %v3839
          %v3841 = vlaneseq
          %v3842 = vshrl.u32 %v3841, 7
          %v3843 = vsub.s32 2, %v3842
          %v3844 = vrot.slane %v3835, %v3843
          %v3845 = vlaneseq
          %v3846 = vshrl.u32 %v3845, 7
          %v3847 = vsub.s32 4, %v3846
          %v3848 = vrot.slane %v3835, %v3847
          %v3849 = vlaneseq
          %v3850 = vshrl.u32 %v3849, 7
          %v3851 = vsub.s32 6, %v3850
          %v3852 = vrot.slane %v3835, %v3851
          %v3861 = vrot.slane %v3655, 6
          %v3862 = vrot.slane %v3656, 6
          %v3863 = vrot.slane %v3657, 6
          %v3864 = vrot.slane %v3658, 6
          %v3869 = vsel %vm3579, %v3840, %v3861
          %v3870 = vsel %vm3580, %v3844, %v3862
          %v3871 = vsel %vm3581, %v3848, %v3863
          %v3872 = vsel %vm3582, %v3852, %v3864
          %v3873 = vmax.f32 %v3804, 0.0
          %v3874 = vmin.f32 %v3873, 255.0
          %v3876 = vlaneseq
          %v3877 = vshrl.u32 %v3876, 7
          %v3878 = vsub.s32 0, %v3877
          %v3879 = vrot.slane %v3874, %v3878
          %v3880 = vlaneseq
          %v3881 = vshrl.u32 %v3880, 7
          %v3882 = vsub.s32 2, %v3881
          %v3883 = vrot.slane %v3874, %v3882
          %v3884 = vlaneseq
          %v3885 = vshrl.u32 %v3884, 7
          %v3886 = vsub.s32 4, %v3885
          %v3887 = vrot.slane %v3874, %v3886
          %v3888 = vlaneseq
          %v3889 = vshrl.u32 %v3888, 7
          %v3890 = vsub.s32 6, %v3889
          %v3891 = vrot.slane %v3874, %v3890
          %v3900 = vrot.slane %v3703, 6
          %v3901 = vrot.slane %v3704, 6
          %v3902 = vrot.slane %v3705, 6
          %v3903 = vrot.slane %v3706, 6
          %v3908 = vsel %vm3579, %v3879, %v3900
          %v3909 = vsel %vm3580, %v3883, %v3901
          %v3910 = vsel %vm3581, %v3887, %v3902
          %v3911 = vsel %vm3582, %v3891, %v3903
          %v3912 = vpack.c.bf16 %v3869, %v3869
          %v3913 = vpack.c.bf16 %v3870, %v3870
          %v3914 = vpack.c.bf16 %v3871, %v3871
          %v3915 = vpack.c.bf16 %v3872, %v3872
          %v3920 = vcombine.low %v3912, %v3913
          %v3921 = vcombine.low %v3914, %v3915
          %v3923 = vunpack.c.l.s4 1966171168
          %v3924 = vunpack.c.0.s8 %v3923
          %v3925 = vlaneseq
          %v3926 = vshrl.u32 %v3925, 7
          %v3927 = vsub.s32 %v3924, %v3926
          %v3928 = vrot.slane %v3920, %v3927
          %v3930 = vunpack.c.l.s4 1966171168
          %v3931 = vunpack.c.0.s8 %v3930
          %v3932 = vlaneseq
          %v3933 = vshrl.u32 %v3932, 7
          %v3934 = vsub.s32 %v3931, %v3933
          %v3935 = vrot.slane %v3921, %v3934
          %v3936 = vcombine.low %v3928, %v3935
          %v3938 = vunpack.c.l.s4 1966171168
          %v3939 = vunpack.c.0.s8 %v3938
          %v3940 = vlaneseq
          %v3941 = vshrl.u32 %v3940, 7
          %v3942 = vsub.s32 %v3939, %v3941
          %v3943 = vrot.slane %v3936, %v3942
          %v3944 = vcombine.high %v3943, %v3943
          %v3946 = vld [vmem:[%s456 + $0x14] sm:$0xf]
          %v3947 = vsel %vm1725, %v3944, %v3946
          %3948 = vst [vmem:[%s456 + $0x14] sm:$0xf] %v3947
          %v3949 = vpack.c.bf16 %v3908, %v3908
          %v3950 = vpack.c.bf16 %v3909, %v3909
          %v3951 = vpack.c.bf16 %v3910, %v3910
          %v3952 = vpack.c.bf16 %v3911, %v3911
          %v3957 = vcombine.low %v3949, %v3950
          %v3958 = vcombine.low %v3951, %v3952
          %v3960 = vunpack.c.l.s4 1966171168
          %v3961 = vunpack.c.0.s8 %v3960
          %v3962 = vlaneseq
          %v3963 = vshrl.u32 %v3962, 7
          %v3964 = vsub.s32 %v3961, %v3963
          %v3965 = vrot.slane %v3957, %v3964
          %v3967 = vunpack.c.l.s4 1966171168
          %v3968 = vunpack.c.0.s8 %v3967
          %v3969 = vlaneseq
          %v3970 = vshrl.u32 %v3969, 7
          %v3971 = vsub.s32 %v3968, %v3970
          %v3972 = vrot.slane %v3958, %v3971
          %v3973 = vcombine.low %v3965, %v3972
          %v3975 = vunpack.c.l.s4 1966171168
          %v3976 = vunpack.c.0.s8 %v3975
          %v3977 = vlaneseq
          %v3978 = vshrl.u32 %v3977, 7
          %v3979 = vsub.s32 %v3976, %v3978
          %v3980 = vrot.slane %v3973, %v3979
          %v3981 = vcombine.high %v3980, %v3980
          %v3983 = vld [vmem:[%s463 + $0x14] sm:$0xf]
          %v3984 = vsel %vm1725, %v3981, %v3983
          %3985 = vst [vmem:[%s463 + $0x14] sm:$0xf] %v3984
          %v3986 = vpack.c.bf16 %v3796, %v3796
          %v3987 = vpack.c.bf16 %v3797, %v3797
          %v3988 = vpack.c.bf16 %v3798, %v3798
          %v3989 = vpack.c.bf16 %v3799, %v3799
          %v3994 = vunpack.c.l.b16 %v3986
          %v3995 = vunpack.c.l.b16 %v3987
          %v3996 = vunpack.c.l.b16 %v3988
          %v3997 = vunpack.c.l.b16 %v3989
          %v3998 = vpack.c.b16 %v3995, %v3994
          %v3999 = vpack.c.b16 %v3997, %v3996
          %4002 = vst [vmem:[%s471 + $0x50] sm:$0xff] %v3998
          %4003 = vst [vmem:[%s471 + $0x58] sm:$0xff] %v3999
          %s4004 = scalar_lea.vmem [#allocation2], 384
          %v4005 = vld [vmem:[%s4004] sm:$0xff]
          %v4006 = vld [vmem:[%s4004 + $0x8] sm:$0xff]
          %v4007 = vld [vmem:[%s4004 + $0x10] sm:$0xff]
          %v4008 = vld [vmem:[%s4004 + $0x18] sm:$0xff]
          %v4009 = vld [vmem:[%s4004 + $0x20] sm:$0xff]
          %v4010 = vld [vmem:[%s4004 + $0x28] sm:$0xff]
          %v4011 = vld [vmem:[%s4004 + $0x30] sm:$0xff]
          %v4012 = vld [vmem:[%s4004 + $0x38] sm:$0xff]
          %v4013 = vld [vmem:[%s434 + $0x18] sm:$0xf]
          %v4014 = vunpack.c.l.bf16 %v4013
          %v4015 = vld [vmem:[%s441 + $0x18] sm:$0xf]
          %v4016 = vunpack.c.l.bf16 %v4015
          %v4017 = vld [vmem:[%s449 + $0x60] sm:$0xff]
          %v4018 = vld [vmem:[%s449 + $0x68] sm:$0xff]
          %v4019 = vunpack.c.l.bf16 %v4017
          %v4020 = vunpack.c.h.bf16 %v4017
          %v4021 = vunpack.c.l.bf16 %v4018
          %v4022 = vunpack.c.h.bf16 %v4018
          %vm4023 = vcmp.gt.f32.partialorder %v4005, 0.0
          %vm4024 = vcmp.gt.f32.partialorder %v4006, 0.0
          %vm4025 = vcmp.gt.f32.partialorder %v4007, 0.0
          %vm4026 = vcmp.gt.f32.partialorder %v4008, 0.0
          %v4031 = vcombine.low %v4005, %v4006
          %v4032 = vcombine.low %v4007, %v4008
          %v4034 = vunpack.c.l.s4 1983009808
          %v4035 = vunpack.c.0.s8 %v4034
          %v4036 = vlaneseq
          %v4037 = vshrl.u32 %v4036, 7
          %v4038 = vsub.s32 %v4035, %v4037
          %v4039 = vrot.slane %v4031, %v4038
          %v4041 = vunpack.c.l.s4 1983009808
          %v4042 = vunpack.c.0.s8 %v4041
          %v4043 = vlaneseq
          %v4044 = vshrl.u32 %v4043, 7
          %v4045 = vsub.s32 %v4042, %v4044
          %v4046 = vrot.slane %v4032, %v4045
          %v4047 = vcombine.low %v4039, %v4046
          %v4048 = vrot.slane %v4047, 7
          %v4049 = vrot.slane %v4048, 2
          %v4051 = vadd.f32 %v4016, %v4049
          %v4052 = vrcp.pop %v4051
          %v4053 = vmul.f32 %v4016, %v4014
          %v4055 = vadd.f32 %v4053, %v4047
          %v4056 = vmul.f32 %v4055, %v4052
          %v4058 = vlaneseq
          %v4059 = vshrl.u32 %v4058, 7
          %v4060 = vsub.s32 0, %v4059
          %v4061 = vrot.slane %v4056, %v4060
          %v4062 = vlaneseq
          %v4063 = vshrl.u32 %v4062, 7
          %v4064 = vsub.s32 2, %v4063
          %v4065 = vrot.slane %v4056, %v4064
          %v4066 = vlaneseq
          %v4067 = vshrl.u32 %v4066, 7
          %v4068 = vsub.s32 4, %v4067
          %v4069 = vrot.slane %v4056, %v4068
          %v4070 = vlaneseq
          %v4071 = vshrl.u32 %v4070, 7
          %v4072 = vsub.s32 6, %v4071
          %v4073 = vrot.slane %v4056, %v4072
          %v4079 = vlaneseq
          %v4080 = vshrl.u32 %v4079, 7
          %v4081 = vsub.s32 0, %v4080
          %v4082 = vrot.slane %v4014, %v4081
          %v4083 = vlaneseq
          %v4084 = vshrl.u32 %v4083, 7
          %v4085 = vsub.s32 2, %v4084
          %v4086 = vrot.slane %v4014, %v4085
          %v4087 = vlaneseq
          %v4088 = vshrl.u32 %v4087, 7
          %v4089 = vsub.s32 4, %v4088
          %v4090 = vrot.slane %v4014, %v4089
          %v4091 = vlaneseq
          %v4092 = vshrl.u32 %v4091, 7
          %v4093 = vsub.s32 6, %v4092
          %v4094 = vrot.slane %v4014, %v4093
          %v4099 = vsel %vm4023, %v4061, %v4082
          %v4100 = vsel %vm4024, %v4065, %v4086
          %v4101 = vsel %vm4025, %v4069, %v4090
          %v4102 = vsel %vm4026, %v4073, %v4094
          %v4103 = vmax.f32 %v4051, 0.0
          %v4104 = vmin.f32 %v4103, 255.0
          %v4106 = vlaneseq
          %v4107 = vshrl.u32 %v4106, 7
          %v4108 = vsub.s32 0, %v4107
          %v4109 = vrot.slane %v4104, %v4108
          %v4110 = vlaneseq
          %v4111 = vshrl.u32 %v4110, 7
          %v4112 = vsub.s32 2, %v4111
          %v4113 = vrot.slane %v4104, %v4112
          %v4114 = vlaneseq
          %v4115 = vshrl.u32 %v4114, 7
          %v4116 = vsub.s32 4, %v4115
          %v4117 = vrot.slane %v4104, %v4116
          %v4118 = vlaneseq
          %v4119 = vshrl.u32 %v4118, 7
          %v4120 = vsub.s32 6, %v4119
          %v4121 = vrot.slane %v4104, %v4120
          %v4127 = vlaneseq
          %v4128 = vshrl.u32 %v4127, 7
          %v4129 = vsub.s32 0, %v4128
          %v4130 = vrot.slane %v4016, %v4129
          %v4131 = vlaneseq
          %v4132 = vshrl.u32 %v4131, 7
          %v4133 = vsub.s32 2, %v4132
          %v4134 = vrot.slane %v4016, %v4133
          %v4135 = vlaneseq
          %v4136 = vshrl.u32 %v4135, 7
          %v4137 = vsub.s32 4, %v4136
          %v4138 = vrot.slane %v4016, %v4137
          %v4139 = vlaneseq
          %v4140 = vshrl.u32 %v4139, 7
          %v4141 = vsub.s32 6, %v4140
          %v4142 = vrot.slane %v4016, %v4141
          %v4147 = vsel %vm4023, %v4109, %v4130
          %v4148 = vsel %vm4024, %v4113, %v4134
          %v4149 = vsel %vm4025, %v4117, %v4138
          %v4150 = vsel %vm4026, %v4121, %v4142
          %v4151 = vlaneseq
          %v4152 = vshrl.u32 %v4151, 7
          %v4153 = vsub.s32 0, %v4152
          %v4154 = vrot.slane %v4130, %v4153
          %v4155 = vlaneseq
          %v4156 = vshrl.u32 %v4155, 7
          %v4157 = vsub.s32 0, %v4156
          %v4158 = vrot.slane %v4134, %v4157
          %v4159 = vlaneseq
          %v4160 = vshrl.u32 %v4159, 7
          %v4161 = vsub.s32 0, %v4160
          %v4162 = vrot.slane %v4138, %v4161
          %v4163 = vlaneseq
          %v4164 = vshrl.u32 %v4163, 7
          %v4165 = vsub.s32 0, %v4164
          %v4166 = vrot.slane %v4142, %v4165
          %v4167 = vmul.f32 %v4154, %v4019
          %v4168 = vmul.f32 %v4158, %v4020
          %v4169 = vmul.f32 %v4162, %v4021
          %v4170 = vmul.f32 %v4166, %v4022
          %v4171 = vadd.f32 %v4167, %v4009
          %v4172 = vadd.f32 %v4168, %v4010
          %v4173 = vadd.f32 %v4169, %v4011
          %v4174 = vadd.f32 %v4170, %v4012
          %v4176 = vlaneseq
          %v4177 = vshrl.u32 %v4176, 7
          %v4178 = vsub.s32 0, %v4177
          %v4179 = vrot.slane %v4052, %v4178
          %v4180 = vlaneseq
          %v4181 = vshrl.u32 %v4180, 7
          %v4182 = vsub.s32 2, %v4181
          %v4183 = vrot.slane %v4052, %v4182
          %v4184 = vlaneseq
          %v4185 = vshrl.u32 %v4184, 7
          %v4186 = vsub.s32 4, %v4185
          %v4187 = vrot.slane %v4052, %v4186
          %v4188 = vlaneseq
          %v4189 = vshrl.u32 %v4188, 7
          %v4190 = vsub.s32 6, %v4189
          %v4191 = vrot.slane %v4052, %v4190
          %v4196 = vlaneseq
          %v4197 = vshrl.u32 %v4196, 7
          %v4198 = vsub.s32 0, %v4197
          %v4199 = vrot.slane %v4179, %v4198
          %v4200 = vlaneseq
          %v4201 = vshrl.u32 %v4200, 7
          %v4202 = vsub.s32 0, %v4201
          %v4203 = vrot.slane %v4183, %v4202
          %v4204 = vlaneseq
          %v4205 = vshrl.u32 %v4204, 7
          %v4206 = vsub.s32 0, %v4205
          %v4207 = vrot.slane %v4187, %v4206
          %v4208 = vlaneseq
          %v4209 = vshrl.u32 %v4208, 7
          %v4210 = vsub.s32 0, %v4209
          %v4211 = vrot.slane %v4191, %v4210
          %v4212 = vmul.f32 %v4171, %v4199
          %v4213 = vmul.f32 %v4172, %v4203
          %v4214 = vmul.f32 %v4173, %v4207
          %v4215 = vmul.f32 %v4174, %v4211
          %v4216 = vsel %vm4023, 1, 0
          %v4217 = vsel %vm4024, 1, 0
          %v4218 = vsel %vm4025, 1, 0
          %v4219 = vsel %vm4026, 1, 0
          %v4220 = vlaneseq
          %v4221 = vshrl.u32 %v4220, 7
          %v4222 = vsub.s32 2, %v4221
          %v4223 = vrot.slane %v4216, %v4222
          %v4224 = vlaneseq
          %v4225 = vshrl.u32 %v4224, 7
          %v4226 = vsub.s32 2, %v4225
          %v4227 = vrot.slane %v4217, %v4226
          %v4228 = vlaneseq
          %v4229 = vshrl.u32 %v4228, 7
          %v4230 = vsub.s32 2, %v4229
          %v4231 = vrot.slane %v4218, %v4230
          %v4232 = vlaneseq
          %v4233 = vshrl.u32 %v4232, 7
          %v4234 = vsub.s32 2, %v4233
          %v4235 = vrot.slane %v4219, %v4234
          %vm4236 = vcmp.eq.s32.totalorder %v4223, 1
          %vm4237 = vcmp.eq.s32.totalorder %v4227, 1
          %vm4238 = vcmp.eq.s32.totalorder %v4231, 1
          %vm4239 = vcmp.eq.s32.totalorder %v4235, 1
          %v4240 = vsel %vm4236, %v4212, %v4019
          %v4241 = vsel %vm4237, %v4213, %v4020
          %v4242 = vsel %vm4238, %v4214, %v4021
          %v4243 = vsel %vm4239, %v4215, %v4022
          %v4244 = vcombine.high %v4039, %v4046
          %v4245 = vrot.slane %v4244, 7
          %v4246 = vrot.slane %v4245, 2
          %v4248 = vadd.f32 %v4016, %v4246
          %v4249 = vrcp.pop %v4248
          %v4250 = vmul.f32 %v4005, 0.1
          %v4251 = vmul.f32 %v4006, 0.1
          %v4252 = vmul.f32 %v4007, 0.1
          %v4253 = vmul.f32 %v4008, 0.1
          %v4258 = vcombine.low %v4250, %v4251
          %v4259 = vcombine.low %v4252, %v4253
          %v4261 = vunpack.c.l.s4 1983009808
          %v4262 = vunpack.c.0.s8 %v4261
          %v4263 = vlaneseq
          %v4264 = vshrl.u32 %v4263, 7
          %v4265 = vsub.s32 %v4262, %v4264
          %v4266 = vrot.slane %v4258, %v4265
          %v4268 = vunpack.c.l.s4 1983009808
          %v4269 = vunpack.c.0.s8 %v4268
          %v4270 = vlaneseq
          %v4271 = vshrl.u32 %v4270, 7
          %v4272 = vsub.s32 %v4269, %v4271
          %v4273 = vrot.slane %v4259, %v4272
          %v4274 = vcombine.high %v4266, %v4273
          %v4275 = vrot.slane %v4274, 7
          %v4276 = vrot.slane %v4275, 2
          %v4278 = vadd.f32 %v4053, %v4276
          %v4279 = vmul.f32 %v4278, %v4249
          %v4281 = vlaneseq
          %v4282 = vshrl.u32 %v4281, 7
          %v4283 = vsub.s32 0, %v4282
          %v4284 = vrot.slane %v4279, %v4283
          %v4285 = vlaneseq
          %v4286 = vshrl.u32 %v4285, 7
          %v4287 = vsub.s32 2, %v4286
          %v4288 = vrot.slane %v4279, %v4287
          %v4289 = vlaneseq
          %v4290 = vshrl.u32 %v4289, 7
          %v4291 = vsub.s32 4, %v4290
          %v4292 = vrot.slane %v4279, %v4291
          %v4293 = vlaneseq
          %v4294 = vshrl.u32 %v4293, 7
          %v4295 = vsub.s32 6, %v4294
          %v4296 = vrot.slane %v4279, %v4295
          %v4305 = vrot.slane %v4099, 6
          %v4306 = vrot.slane %v4100, 6
          %v4307 = vrot.slane %v4101, 6
          %v4308 = vrot.slane %v4102, 6
          %v4313 = vsel %vm4023, %v4284, %v4305
          %v4314 = vsel %vm4024, %v4288, %v4306
          %v4315 = vsel %vm4025, %v4292, %v4307
          %v4316 = vsel %vm4026, %v4296, %v4308
          %v4317 = vmax.f32 %v4248, 0.0
          %v4318 = vmin.f32 %v4317, 255.0
          %v4320 = vlaneseq
          %v4321 = vshrl.u32 %v4320, 7
          %v4322 = vsub.s32 0, %v4321
          %v4323 = vrot.slane %v4318, %v4322
          %v4324 = vlaneseq
          %v4325 = vshrl.u32 %v4324, 7
          %v4326 = vsub.s32 2, %v4325
          %v4327 = vrot.slane %v4318, %v4326
          %v4328 = vlaneseq
          %v4329 = vshrl.u32 %v4328, 7
          %v4330 = vsub.s32 4, %v4329
          %v4331 = vrot.slane %v4318, %v4330
          %v4332 = vlaneseq
          %v4333 = vshrl.u32 %v4332, 7
          %v4334 = vsub.s32 6, %v4333
          %v4335 = vrot.slane %v4318, %v4334
          %v4344 = vrot.slane %v4147, 6
          %v4345 = vrot.slane %v4148, 6
          %v4346 = vrot.slane %v4149, 6
          %v4347 = vrot.slane %v4150, 6
          %v4352 = vsel %vm4023, %v4323, %v4344
          %v4353 = vsel %vm4024, %v4327, %v4345
          %v4354 = vsel %vm4025, %v4331, %v4346
          %v4355 = vsel %vm4026, %v4335, %v4347
          %v4356 = vpack.c.bf16 %v4313, %v4313
          %v4357 = vpack.c.bf16 %v4314, %v4314
          %v4358 = vpack.c.bf16 %v4315, %v4315
          %v4359 = vpack.c.bf16 %v4316, %v4316
          %v4364 = vcombine.low %v4356, %v4357
          %v4365 = vcombine.low %v4358, %v4359
          %v4367 = vunpack.c.l.s4 1966171168
          %v4368 = vunpack.c.0.s8 %v4367
          %v4369 = vlaneseq
          %v4370 = vshrl.u32 %v4369, 7
          %v4371 = vsub.s32 %v4368, %v4370
          %v4372 = vrot.slane %v4364, %v4371
          %v4374 = vunpack.c.l.s4 1966171168
          %v4375 = vunpack.c.0.s8 %v4374
          %v4376 = vlaneseq
          %v4377 = vshrl.u32 %v4376, 7
          %v4378 = vsub.s32 %v4375, %v4377
          %v4379 = vrot.slane %v4365, %v4378
          %v4380 = vcombine.low %v4372, %v4379
          %v4382 = vunpack.c.l.s4 1966171168
          %v4383 = vunpack.c.0.s8 %v4382
          %v4384 = vlaneseq
          %v4385 = vshrl.u32 %v4384, 7
          %v4386 = vsub.s32 %v4383, %v4385
          %v4387 = vrot.slane %v4380, %v4386
          %v4388 = vcombine.high %v4387, %v4387
          %v4390 = vld [vmem:[%s456 + $0x18] sm:$0xf]
          %v4391 = vsel %vm1725, %v4388, %v4390
          %4392 = vst [vmem:[%s456 + $0x18] sm:$0xf] %v4391
          %v4393 = vpack.c.bf16 %v4352, %v4352
          %v4394 = vpack.c.bf16 %v4353, %v4353
          %v4395 = vpack.c.bf16 %v4354, %v4354
          %v4396 = vpack.c.bf16 %v4355, %v4355
          %v4401 = vcombine.low %v4393, %v4394
          %v4402 = vcombine.low %v4395, %v4396
          %v4404 = vunpack.c.l.s4 1966171168
          %v4405 = vunpack.c.0.s8 %v4404
          %v4406 = vlaneseq
          %v4407 = vshrl.u32 %v4406, 7
          %v4408 = vsub.s32 %v4405, %v4407
          %v4409 = vrot.slane %v4401, %v4408
          %v4411 = vunpack.c.l.s4 1966171168
          %v4412 = vunpack.c.0.s8 %v4411
          %v4413 = vlaneseq
          %v4414 = vshrl.u32 %v4413, 7
          %v4415 = vsub.s32 %v4412, %v4414
          %v4416 = vrot.slane %v4402, %v4415
          %v4417 = vcombine.low %v4409, %v4416
          %v4419 = vunpack.c.l.s4 1966171168
          %v4420 = vunpack.c.0.s8 %v4419
          %v4421 = vlaneseq
          %v4422 = vshrl.u32 %v4421, 7
          %v4423 = vsub.s32 %v4420, %v4422
          %v4424 = vrot.slane %v4417, %v4423
          %v4425 = vcombine.high %v4424, %v4424
          %v4427 = vld [vmem:[%s463 + $0x18] sm:$0xf]
          %v4428 = vsel %vm1725, %v4425, %v4427
          %4429 = vst [vmem:[%s463 + $0x18] sm:$0xf] %v4428
          %v4430 = vpack.c.bf16 %v4240, %v4240
          %v4431 = vpack.c.bf16 %v4241, %v4241
          %v4432 = vpack.c.bf16 %v4242, %v4242
          %v4433 = vpack.c.bf16 %v4243, %v4243
          %v4438 = vunpack.c.l.b16 %v4430
          %v4439 = vunpack.c.l.b16 %v4431
          %v4440 = vunpack.c.l.b16 %v4432
          %v4441 = vunpack.c.l.b16 %v4433
          %v4442 = vpack.c.b16 %v4439, %v4438
          %v4443 = vpack.c.b16 %v4441, %v4440
          %4446 = vst [vmem:[%s471 + $0x60] sm:$0xff] %v4442
          %4447 = vst [vmem:[%s471 + $0x68] sm:$0xff] %v4443
          %s4448 = scalar_lea.vmem [#allocation2], 448
          %v4449 = vld [vmem:[%s4448] sm:$0xff]
          %v4450 = vld [vmem:[%s4448 + $0x8] sm:$0xff]
          %v4451 = vld [vmem:[%s4448 + $0x10] sm:$0xff]
          %v4452 = vld [vmem:[%s4448 + $0x18] sm:$0xff]
          %v4453 = vld [vmem:[%s4448 + $0x20] sm:$0xff]
          %v4454 = vld [vmem:[%s4448 + $0x28] sm:$0xff]
          %v4455 = vld [vmem:[%s4448 + $0x30] sm:$0xff]
          %v4456 = vld [vmem:[%s4448 + $0x38] sm:$0xff]
          %v4457 = vld [vmem:[%s434 + $0x1c] sm:$0xf]
          %v4458 = vunpack.c.l.bf16 %v4457
          %v4459 = vld [vmem:[%s441 + $0x1c] sm:$0xf]
          %v4460 = vunpack.c.l.bf16 %v4459
          %v4461 = vld [vmem:[%s449 + $0x70] sm:$0xff]
          %v4462 = vld [vmem:[%s449 + $0x78] sm:$0xff]
          %v4463 = vunpack.c.l.bf16 %v4461
          %v4464 = vunpack.c.h.bf16 %v4461
          %v4465 = vunpack.c.l.bf16 %v4462
          %v4466 = vunpack.c.h.bf16 %v4462
          %vm4467 = vcmp.gt.f32.partialorder %v4449, 0.0
          %vm4468 = vcmp.gt.f32.partialorder %v4450, 0.0
          %vm4469 = vcmp.gt.f32.partialorder %v4451, 0.0
          %vm4470 = vcmp.gt.f32.partialorder %v4452, 0.0
          %v4475 = vcombine.low %v4449, %v4450
          %v4476 = vcombine.low %v4451, %v4452
          %v4478 = vunpack.c.l.s4 1983009808
          %v4479 = vunpack.c.0.s8 %v4478
          %v4480 = vlaneseq
          %v4481 = vshrl.u32 %v4480, 7
          %v4482 = vsub.s32 %v4479, %v4481
          %v4483 = vrot.slane %v4475, %v4482
          %v4485 = vunpack.c.l.s4 1983009808
          %v4486 = vunpack.c.0.s8 %v4485
          %v4487 = vlaneseq
          %v4488 = vshrl.u32 %v4487, 7
          %v4489 = vsub.s32 %v4486, %v4488
          %v4490 = vrot.slane %v4476, %v4489
          %v4491 = vcombine.low %v4483, %v4490
          %v4492 = vrot.slane %v4491, 7
          %v4493 = vrot.slane %v4492, 2
          %v4495 = vadd.f32 %v4460, %v4493
          %v4496 = vrcp.pop %v4495
          %v4497 = vmul.f32 %v4460, %v4458
          %v4499 = vadd.f32 %v4497, %v4491
          %v4500 = vmul.f32 %v4499, %v4496
          %v4502 = vlaneseq
          %v4503 = vshrl.u32 %v4502, 7
          %v4504 = vsub.s32 0, %v4503
          %v4505 = vrot.slane %v4500, %v4504
          %v4506 = vlaneseq
          %v4507 = vshrl.u32 %v4506, 7
          %v4508 = vsub.s32 2, %v4507
          %v4509 = vrot.slane %v4500, %v4508
          %v4510 = vlaneseq
          %v4511 = vshrl.u32 %v4510, 7
          %v4512 = vsub.s32 4, %v4511
          %v4513 = vrot.slane %v4500, %v4512
          %v4514 = vlaneseq
          %v4515 = vshrl.u32 %v4514, 7
          %v4516 = vsub.s32 6, %v4515
          %v4517 = vrot.slane %v4500, %v4516
          %v4523 = vlaneseq
          %v4524 = vshrl.u32 %v4523, 7
          %v4525 = vsub.s32 0, %v4524
          %v4526 = vrot.slane %v4458, %v4525
          %v4527 = vlaneseq
          %v4528 = vshrl.u32 %v4527, 7
          %v4529 = vsub.s32 2, %v4528
          %v4530 = vrot.slane %v4458, %v4529
          %v4531 = vlaneseq
          %v4532 = vshrl.u32 %v4531, 7
          %v4533 = vsub.s32 4, %v4532
          %v4534 = vrot.slane %v4458, %v4533
          %v4535 = vlaneseq
          %v4536 = vshrl.u32 %v4535, 7
          %v4537 = vsub.s32 6, %v4536
          %v4538 = vrot.slane %v4458, %v4537
          %v4543 = vsel %vm4467, %v4505, %v4526
          %v4544 = vsel %vm4468, %v4509, %v4530
          %v4545 = vsel %vm4469, %v4513, %v4534
          %v4546 = vsel %vm4470, %v4517, %v4538
          %v4547 = vmax.f32 %v4495, 0.0
          %v4548 = vmin.f32 %v4547, 255.0
          %v4550 = vlaneseq
          %v4551 = vshrl.u32 %v4550, 7
          %v4552 = vsub.s32 0, %v4551
          %v4553 = vrot.slane %v4548, %v4552
          %v4554 = vlaneseq
          %v4555 = vshrl.u32 %v4554, 7
          %v4556 = vsub.s32 2, %v4555
          %v4557 = vrot.slane %v4548, %v4556
          %v4558 = vlaneseq
          %v4559 = vshrl.u32 %v4558, 7
          %v4560 = vsub.s32 4, %v4559
          %v4561 = vrot.slane %v4548, %v4560
          %v4562 = vlaneseq
          %v4563 = vshrl.u32 %v4562, 7
          %v4564 = vsub.s32 6, %v4563
          %v4565 = vrot.slane %v4548, %v4564
          %v4571 = vlaneseq
          %v4572 = vshrl.u32 %v4571, 7
          %v4573 = vsub.s32 0, %v4572
          %v4574 = vrot.slane %v4460, %v4573
          %v4575 = vlaneseq
          %v4576 = vshrl.u32 %v4575, 7
          %v4577 = vsub.s32 2, %v4576
          %v4578 = vrot.slane %v4460, %v4577
          %v4579 = vlaneseq
          %v4580 = vshrl.u32 %v4579, 7
          %v4581 = vsub.s32 4, %v4580
          %v4582 = vrot.slane %v4460, %v4581
          %v4583 = vlaneseq
          %v4584 = vshrl.u32 %v4583, 7
          %v4585 = vsub.s32 6, %v4584
          %v4586 = vrot.slane %v4460, %v4585
          %v4591 = vsel %vm4467, %v4553, %v4574
          %v4592 = vsel %vm4468, %v4557, %v4578
          %v4593 = vsel %vm4469, %v4561, %v4582
          %v4594 = vsel %vm4470, %v4565, %v4586
          %v4595 = vlaneseq
          %v4596 = vshrl.u32 %v4595, 7
          %v4597 = vsub.s32 0, %v4596
          %v4598 = vrot.slane %v4574, %v4597
          %v4599 = vlaneseq
          %v4600 = vshrl.u32 %v4599, 7
          %v4601 = vsub.s32 0, %v4600
          %v4602 = vrot.slane %v4578, %v4601
          %v4603 = vlaneseq
          %v4604 = vshrl.u32 %v4603, 7
          %v4605 = vsub.s32 0, %v4604
          %v4606 = vrot.slane %v4582, %v4605
          %v4607 = vlaneseq
          %v4608 = vshrl.u32 %v4607, 7
          %v4609 = vsub.s32 0, %v4608
          %v4610 = vrot.slane %v4586, %v4609
          %v4611 = vmul.f32 %v4598, %v4463
          %v4612 = vmul.f32 %v4602, %v4464
          %v4613 = vmul.f32 %v4606, %v4465
          %v4614 = vmul.f32 %v4610, %v4466
          %v4615 = vadd.f32 %v4611, %v4453
          %v4616 = vadd.f32 %v4612, %v4454
          %v4617 = vadd.f32 %v4613, %v4455
          %v4618 = vadd.f32 %v4614, %v4456
          %v4620 = vlaneseq
          %v4621 = vshrl.u32 %v4620, 7
          %v4622 = vsub.s32 0, %v4621
          %v4623 = vrot.slane %v4496, %v4622
          %v4624 = vlaneseq
          %v4625 = vshrl.u32 %v4624, 7
          %v4626 = vsub.s32 2, %v4625
          %v4627 = vrot.slane %v4496, %v4626
          %v4628 = vlaneseq
          %v4629 = vshrl.u32 %v4628, 7
          %v4630 = vsub.s32 4, %v4629
          %v4631 = vrot.slane %v4496, %v4630
          %v4632 = vlaneseq
          %v4633 = vshrl.u32 %v4632, 7
          %v4634 = vsub.s32 6, %v4633
          %v4635 = vrot.slane %v4496, %v4634
          %v4640 = vlaneseq
          %v4641 = vshrl.u32 %v4640, 7
          %v4642 = vsub.s32 0, %v4641
          %v4643 = vrot.slane %v4623, %v4642
          %v4644 = vlaneseq
          %v4645 = vshrl.u32 %v4644, 7
          %v4646 = vsub.s32 0, %v4645
          %v4647 = vrot.slane %v4627, %v4646
          %v4648 = vlaneseq
          %v4649 = vshrl.u32 %v4648, 7
          %v4650 = vsub.s32 0, %v4649
          %v4651 = vrot.slane %v4631, %v4650
          %v4652 = vlaneseq
          %v4653 = vshrl.u32 %v4652, 7
          %v4654 = vsub.s32 0, %v4653
          %v4655 = vrot.slane %v4635, %v4654
          %v4656 = vmul.f32 %v4615, %v4643
          %v4657 = vmul.f32 %v4616, %v4647
          %v4658 = vmul.f32 %v4617, %v4651
          %v4659 = vmul.f32 %v4618, %v4655
          %v4660 = vsel %vm4467, 1, 0
          %v4661 = vsel %vm4468, 1, 0
          %v4662 = vsel %vm4469, 1, 0
          %v4663 = vsel %vm4470, 1, 0
          %v4664 = vlaneseq
          %v4665 = vshrl.u32 %v4664, 7
          %v4666 = vsub.s32 2, %v4665
          %v4667 = vrot.slane %v4660, %v4666
          %v4668 = vlaneseq
          %v4669 = vshrl.u32 %v4668, 7
          %v4670 = vsub.s32 2, %v4669
          %v4671 = vrot.slane %v4661, %v4670
          %v4672 = vlaneseq
          %v4673 = vshrl.u32 %v4672, 7
          %v4674 = vsub.s32 2, %v4673
          %v4675 = vrot.slane %v4662, %v4674
          %v4676 = vlaneseq
          %v4677 = vshrl.u32 %v4676, 7
          %v4678 = vsub.s32 2, %v4677
          %v4679 = vrot.slane %v4663, %v4678
          %vm4680 = vcmp.eq.s32.totalorder %v4667, 1
          %vm4681 = vcmp.eq.s32.totalorder %v4671, 1
          %vm4682 = vcmp.eq.s32.totalorder %v4675, 1
          %vm4683 = vcmp.eq.s32.totalorder %v4679, 1
          %v4684 = vsel %vm4680, %v4656, %v4463
          %v4685 = vsel %vm4681, %v4657, %v4464
          %v4686 = vsel %vm4682, %v4658, %v4465
          %v4687 = vsel %vm4683, %v4659, %v4466
          %v4688 = vcombine.high %v4483, %v4490
          %v4689 = vrot.slane %v4688, 7
          %v4690 = vrot.slane %v4689, 2
          %v4692 = vadd.f32 %v4460, %v4690
          %v4693 = vrcp.pop %v4692
          %v4694 = vmul.f32 %v4449, 0.1
          %v4695 = vmul.f32 %v4450, 0.1
          %v4696 = vmul.f32 %v4451, 0.1
          %v4697 = vmul.f32 %v4452, 0.1
          %v4702 = vcombine.low %v4694, %v4695
          %v4703 = vcombine.low %v4696, %v4697
          %v4705 = vunpack.c.l.s4 1983009808
          %v4706 = vunpack.c.0.s8 %v4705
          %v4707 = vlaneseq
          %v4708 = vshrl.u32 %v4707, 7
          %v4709 = vsub.s32 %v4706, %v4708
          %v4710 = vrot.slane %v4702, %v4709
          %v4712 = vunpack.c.l.s4 1983009808
          %v4713 = vunpack.c.0.s8 %v4712
          %v4714 = vlaneseq
          %v4715 = vshrl.u32 %v4714, 7
          %v4716 = vsub.s32 %v4713, %v4715
          %v4717 = vrot.slane %v4703, %v4716
          %v4718 = vcombine.high %v4710, %v4717
          %v4719 = vrot.slane %v4718, 7
          %v4720 = vrot.slane %v4719, 2
          %v4722 = vadd.f32 %v4497, %v4720
          %v4723 = vmul.f32 %v4722, %v4693
          %v4725 = vlaneseq
          %v4726 = vshrl.u32 %v4725, 7
          %v4727 = vsub.s32 0, %v4726
          %v4728 = vrot.slane %v4723, %v4727
          %v4729 = vlaneseq
          %v4730 = vshrl.u32 %v4729, 7
          %v4731 = vsub.s32 2, %v4730
          %v4732 = vrot.slane %v4723, %v4731
          %v4733 = vlaneseq
          %v4734 = vshrl.u32 %v4733, 7
          %v4735 = vsub.s32 4, %v4734
          %v4736 = vrot.slane %v4723, %v4735
          %v4737 = vlaneseq
          %v4738 = vshrl.u32 %v4737, 7
          %v4739 = vsub.s32 6, %v4738
          %v4740 = vrot.slane %v4723, %v4739
          %v4749 = vrot.slane %v4543, 6
          %v4750 = vrot.slane %v4544, 6
          %v4751 = vrot.slane %v4545, 6
          %v4752 = vrot.slane %v4546, 6
          %v4757 = vsel %vm4467, %v4728, %v4749
          %v4758 = vsel %vm4468, %v4732, %v4750
          %v4759 = vsel %vm4469, %v4736, %v4751
          %v4760 = vsel %vm4470, %v4740, %v4752
          %v4761 = vmax.f32 %v4692, 0.0
          %v4762 = vmin.f32 %v4761, 255.0
          %v4764 = vlaneseq
          %v4765 = vshrl.u32 %v4764, 7
          %v4766 = vsub.s32 0, %v4765
          %v4767 = vrot.slane %v4762, %v4766
          %v4768 = vlaneseq
          %v4769 = vshrl.u32 %v4768, 7
          %v4770 = vsub.s32 2, %v4769
          %v4771 = vrot.slane %v4762, %v4770
          %v4772 = vlaneseq
          %v4773 = vshrl.u32 %v4772, 7
          %v4774 = vsub.s32 4, %v4773
          %v4775 = vrot.slane %v4762, %v4774
          %v4776 = vlaneseq
          %v4777 = vshrl.u32 %v4776, 7
          %v4778 = vsub.s32 6, %v4777
          %v4779 = vrot.slane %v4762, %v4778
          %v4788 = vrot.slane %v4591, 6
          %v4789 = vrot.slane %v4592, 6
          %v4790 = vrot.slane %v4593, 6
          %v4791 = vrot.slane %v4594, 6
          %v4796 = vsel %vm4467, %v4767, %v4788
          %v4797 = vsel %vm4468, %v4771, %v4789
          %v4798 = vsel %vm4469, %v4775, %v4790
          %v4799 = vsel %vm4470, %v4779, %v4791
          %v4800 = vpack.c.bf16 %v4757, %v4757
          %v4801 = vpack.c.bf16 %v4758, %v4758
          %v4802 = vpack.c.bf16 %v4759, %v4759
          %v4803 = vpack.c.bf16 %v4760, %v4760
          %v4808 = vcombine.low %v4800, %v4801
          %v4809 = vcombine.low %v4802, %v4803
          %v4811 = vunpack.c.l.s4 1966171168
          %v4812 = vunpack.c.0.s8 %v4811
          %v4813 = vlaneseq
          %v4814 = vshrl.u32 %v4813, 7
          %v4815 = vsub.s32 %v4812, %v4814
          %v4816 = vrot.slane %v4808, %v4815
          %v4818 = vunpack.c.l.s4 1966171168
          %v4819 = vunpack.c.0.s8 %v4818
          %v4820 = vlaneseq
          %v4821 = vshrl.u32 %v4820, 7
          %v4822 = vsub.s32 %v4819, %v4821
          %v4823 = vrot.slane %v4809, %v4822
          %v4824 = vcombine.low %v4816, %v4823
          %v4826 = vunpack.c.l.s4 1966171168
          %v4827 = vunpack.c.0.s8 %v4826
          %v4828 = vlaneseq
          %v4829 = vshrl.u32 %v4828, 7
          %v4830 = vsub.s32 %v4827, %v4829
          %v4831 = vrot.slane %v4824, %v4830
          %v4832 = vcombine.high %v4831, %v4831
          %v4834 = vld [vmem:[%s456 + $0x1c] sm:$0xf]
          %v4835 = vsel %vm1725, %v4832, %v4834
          %4836 = vst [vmem:[%s456 + $0x1c] sm:$0xf] %v4835
          %v4837 = vpack.c.bf16 %v4796, %v4796
          %v4838 = vpack.c.bf16 %v4797, %v4797
          %v4839 = vpack.c.bf16 %v4798, %v4798
          %v4840 = vpack.c.bf16 %v4799, %v4799
          %v4845 = vcombine.low %v4837, %v4838
          %v4846 = vcombine.low %v4839, %v4840
          %v4848 = vunpack.c.l.s4 1966171168
          %v4849 = vunpack.c.0.s8 %v4848
          %v4850 = vlaneseq
          %v4851 = vshrl.u32 %v4850, 7
          %v4852 = vsub.s32 %v4849, %v4851
          %v4853 = vrot.slane %v4845, %v4852
          %v4855 = vunpack.c.l.s4 1966171168
          %v4856 = vunpack.c.0.s8 %v4855
          %v4857 = vlaneseq
          %v4858 = vshrl.u32 %v4857, 7
          %v4859 = vsub.s32 %v4856, %v4858
          %v4860 = vrot.slane %v4846, %v4859
          %v4861 = vcombine.low %v4853, %v4860
          %v4863 = vunpack.c.l.s4 1966171168
          %v4864 = vunpack.c.0.s8 %v4863
          %v4865 = vlaneseq
          %v4866 = vshrl.u32 %v4865, 7
          %v4867 = vsub.s32 %v4864, %v4866
          %v4868 = vrot.slane %v4861, %v4867
          %v4869 = vcombine.high %v4868, %v4868
          %v4871 = vld [vmem:[%s463 + $0x1c] sm:$0xf]
          %v4872 = vsel %vm1725, %v4869, %v4871
          %4873 = vst [vmem:[%s463 + $0x1c] sm:$0xf] %v4872
          %v4874 = vpack.c.bf16 %v4684, %v4684
          %v4875 = vpack.c.bf16 %v4685, %v4685
          %v4876 = vpack.c.bf16 %v4686, %v4686
          %v4877 = vpack.c.bf16 %v4687, %v4687
          %v4882 = vunpack.c.l.b16 %v4874
          %v4883 = vunpack.c.l.b16 %v4875
          %v4884 = vunpack.c.l.b16 %v4876
          %v4885 = vunpack.c.l.b16 %v4877
          %v4886 = vpack.c.b16 %v4883, %v4882
          %v4887 = vpack.c.b16 %v4885, %v4884
          %4890 = vst [vmem:[%s471 + $0x70] sm:$0xff] %v4886
          %4891 = vst [vmem:[%s471 + $0x78] sm:$0xff] %v4887
          %s4892 = scalar_lea.vmem [#allocation2], 512
          %v4893 = vld [vmem:[%s4892] sm:$0xff]
          %v4894 = vld [vmem:[%s4892 + $0x8] sm:$0xff]
          %v4895 = vld [vmem:[%s4892 + $0x10] sm:$0xff]
          %v4896 = vld [vmem:[%s4892 + $0x18] sm:$0xff]
          %v4897 = vld [vmem:[%s4892 + $0x20] sm:$0xff]
          %v4898 = vld [vmem:[%s4892 + $0x28] sm:$0xff]
          %v4899 = vld [vmem:[%s4892 + $0x30] sm:$0xff]
          %v4900 = vld [vmem:[%s4892 + $0x38] sm:$0xff]
          %v4901 = vld [vmem:[%s434 + $0x20] sm:$0xf]
          %v4902 = vunpack.c.l.bf16 %v4901
          %v4903 = vld [vmem:[%s441 + $0x20] sm:$0xf]
          %v4904 = vunpack.c.l.bf16 %v4903
          %v4905 = vld [vmem:[%s449 + $0x80] sm:$0xff]
          %v4906 = vld [vmem:[%s449 + $0x88] sm:$0xff]
          %v4907 = vunpack.c.l.bf16 %v4905
          %v4908 = vunpack.c.h.bf16 %v4905
          %v4909 = vunpack.c.l.bf16 %v4906
          %v4910 = vunpack.c.h.bf16 %v4906
          %vm4911 = vcmp.gt.f32.partialorder %v4893, 0.0
          %vm4912 = vcmp.gt.f32.partialorder %v4894, 0.0
          %vm4913 = vcmp.gt.f32.partialorder %v4895, 0.0
          %vm4914 = vcmp.gt.f32.partialorder %v4896, 0.0
          %v4919 = vcombine.low %v4893, %v4894
          %v4920 = vcombine.low %v4895, %v4896
          %v4922 = vunpack.c.l.s4 1983009808
          %v4923 = vunpack.c.0.s8 %v4922
          %v4924 = vlaneseq
          %v4925 = vshrl.u32 %v4924, 7
          %v4926 = vsub.s32 %v4923, %v4925
          %v4927 = vrot.slane %v4919, %v4926
          %v4929 = vunpack.c.l.s4 1983009808
          %v4930 = vunpack.c.0.s8 %v4929
          %v4931 = vlaneseq
          %v4932 = vshrl.u32 %v4931, 7
          %v4933 = vsub.s32 %v4930, %v4932
          %v4934 = vrot.slane %v4920, %v4933
          %v4935 = vcombine.low %v4927, %v4934
          %v4936 = vrot.slane %v4935, 7
          %v4937 = vrot.slane %v4936, 2
          %v4939 = vadd.f32 %v4904, %v4937
          %v4940 = vrcp.pop %v4939
          %v4941 = vmul.f32 %v4904, %v4902
          %v4943 = vadd.f32 %v4941, %v4935
          %v4944 = vmul.f32 %v4943, %v4940
          %v4946 = vlaneseq
          %v4947 = vshrl.u32 %v4946, 7
          %v4948 = vsub.s32 0, %v4947
          %v4949 = vrot.slane %v4944, %v4948
          %v4950 = vlaneseq
          %v4951 = vshrl.u32 %v4950, 7
          %v4952 = vsub.s32 2, %v4951
          %v4953 = vrot.slane %v4944, %v4952
          %v4954 = vlaneseq
          %v4955 = vshrl.u32 %v4954, 7
          %v4956 = vsub.s32 4, %v4955
          %v4957 = vrot.slane %v4944, %v4956
          %v4958 = vlaneseq
          %v4959 = vshrl.u32 %v4958, 7
          %v4960 = vsub.s32 6, %v4959
          %v4961 = vrot.slane %v4944, %v4960
          %v4967 = vlaneseq
          %v4968 = vshrl.u32 %v4967, 7
          %v4969 = vsub.s32 0, %v4968
          %v4970 = vrot.slane %v4902, %v4969
          %v4971 = vlaneseq
          %v4972 = vshrl.u32 %v4971, 7
          %v4973 = vsub.s32 2, %v4972
          %v4974 = vrot.slane %v4902, %v4973
          %v4975 = vlaneseq
          %v4976 = vshrl.u32 %v4975, 7
          %v4977 = vsub.s32 4, %v4976
          %v4978 = vrot.slane %v4902, %v4977
          %v4979 = vlaneseq
          %v4980 = vshrl.u32 %v4979, 7
          %v4981 = vsub.s32 6, %v4980
          %v4982 = vrot.slane %v4902, %v4981
          %v4987 = vsel %vm4911, %v4949, %v4970
          %v4988 = vsel %vm4912, %v4953, %v4974
          %v4989 = vsel %vm4913, %v4957, %v4978
          %v4990 = vsel %vm4914, %v4961, %v4982
          %v4991 = vmax.f32 %v4939, 0.0
          %v4992 = vmin.f32 %v4991, 255.0
          %v4994 = vlaneseq
          %v4995 = vshrl.u32 %v4994, 7
          %v4996 = vsub.s32 0, %v4995
          %v4997 = vrot.slane %v4992, %v4996
          %v4998 = vlaneseq
          %v4999 = vshrl.u32 %v4998, 7
          %v5000 = vsub.s32 2, %v4999
          %v5001 = vrot.slane %v4992, %v5000
          %v5002 = vlaneseq
          %v5003 = vshrl.u32 %v5002, 7
          %v5004 = vsub.s32 4, %v5003
          %v5005 = vrot.slane %v4992, %v5004
          %v5006 = vlaneseq
          %v5007 = vshrl.u32 %v5006, 7
          %v5008 = vsub.s32 6, %v5007
          %v5009 = vrot.slane %v4992, %v5008
          %v5015 = vlaneseq
          %v5016 = vshrl.u32 %v5015, 7
          %v5017 = vsub.s32 0, %v5016
          %v5018 = vrot.slane %v4904, %v5017
          %v5019 = vlaneseq
          %v5020 = vshrl.u32 %v5019, 7
          %v5021 = vsub.s32 2, %v5020
          %v5022 = vrot.slane %v4904, %v5021
          %v5023 = vlaneseq
          %v5024 = vshrl.u32 %v5023, 7
          %v5025 = vsub.s32 4, %v5024
          %v5026 = vrot.slane %v4904, %v5025
          %v5027 = vlaneseq
          %v5028 = vshrl.u32 %v5027, 7
          %v5029 = vsub.s32 6, %v5028
          %v5030 = vrot.slane %v4904, %v5029
          %v5035 = vsel %vm4911, %v4997, %v5018
          %v5036 = vsel %vm4912, %v5001, %v5022
          %v5037 = vsel %vm4913, %v5005, %v5026
          %v5038 = vsel %vm4914, %v5009, %v5030
          %v5039 = vlaneseq
          %v5040 = vshrl.u32 %v5039, 7
          %v5041 = vsub.s32 0, %v5040
          %v5042 = vrot.slane %v5018, %v5041
          %v5043 = vlaneseq
          %v5044 = vshrl.u32 %v5043, 7
          %v5045 = vsub.s32 0, %v5044
          %v5046 = vrot.slane %v5022, %v5045
          %v5047 = vlaneseq
          %v5048 = vshrl.u32 %v5047, 7
          %v5049 = vsub.s32 0, %v5048
          %v5050 = vrot.slane %v5026, %v5049
          %v5051 = vlaneseq
          %v5052 = vshrl.u32 %v5051, 7
          %v5053 = vsub.s32 0, %v5052
          %v5054 = vrot.slane %v5030, %v5053
          %v5055 = vmul.f32 %v5042, %v4907
          %v5056 = vmul.f32 %v5046, %v4908
          %v5057 = vmul.f32 %v5050, %v4909
          %v5058 = vmul.f32 %v5054, %v4910
          %v5059 = vadd.f32 %v5055, %v4897
          %v5060 = vadd.f32 %v5056, %v4898
          %v5061 = vadd.f32 %v5057, %v4899
          %v5062 = vadd.f32 %v5058, %v4900
          %v5064 = vlaneseq
          %v5065 = vshrl.u32 %v5064, 7
          %v5066 = vsub.s32 0, %v5065
          %v5067 = vrot.slane %v4940, %v5066
          %v5068 = vlaneseq
          %v5069 = vshrl.u32 %v5068, 7
          %v5070 = vsub.s32 2, %v5069
          %v5071 = vrot.slane %v4940, %v5070
          %v5072 = vlaneseq
          %v5073 = vshrl.u32 %v5072, 7
          %v5074 = vsub.s32 4, %v5073
          %v5075 = vrot.slane %v4940, %v5074
          %v5076 = vlaneseq
          %v5077 = vshrl.u32 %v5076, 7
          %v5078 = vsub.s32 6, %v5077
          %v5079 = vrot.slane %v4940, %v5078
          %v5084 = vlaneseq
          %v5085 = vshrl.u32 %v5084, 7
          %v5086 = vsub.s32 0, %v5085
          %v5087 = vrot.slane %v5067, %v5086
          %v5088 = vlaneseq
          %v5089 = vshrl.u32 %v5088, 7
          %v5090 = vsub.s32 0, %v5089
          %v5091 = vrot.slane %v5071, %v5090
          %v5092 = vlaneseq
          %v5093 = vshrl.u32 %v5092, 7
          %v5094 = vsub.s32 0, %v5093
          %v5095 = vrot.slane %v5075, %v5094
          %v5096 = vlaneseq
          %v5097 = vshrl.u32 %v5096, 7
          %v5098 = vsub.s32 0, %v5097
          %v5099 = vrot.slane %v5079, %v5098
          %v5100 = vmul.f32 %v5059, %v5087
          %v5101 = vmul.f32 %v5060, %v5091
          %v5102 = vmul.f32 %v5061, %v5095
          %v5103 = vmul.f32 %v5062, %v5099
          %v5104 = vsel %vm4911, 1, 0
          %v5105 = vsel %vm4912, 1, 0
          %v5106 = vsel %vm4913, 1, 0
          %v5107 = vsel %vm4914, 1, 0
          %v5108 = vlaneseq
          %v5109 = vshrl.u32 %v5108, 7
          %v5110 = vsub.s32 2, %v5109
          %v5111 = vrot.slane %v5104, %v5110
          %v5112 = vlaneseq
          %v5113 = vshrl.u32 %v5112, 7
          %v5114 = vsub.s32 2, %v5113
          %v5115 = vrot.slane %v5105, %v5114
          %v5116 = vlaneseq
          %v5117 = vshrl.u32 %v5116, 7
          %v5118 = vsub.s32 2, %v5117
          %v5119 = vrot.slane %v5106, %v5118
          %v5120 = vlaneseq
          %v5121 = vshrl.u32 %v5120, 7
          %v5122 = vsub.s32 2, %v5121
          %v5123 = vrot.slane %v5107, %v5122
          %vm5124 = vcmp.eq.s32.totalorder %v5111, 1
          %vm5125 = vcmp.eq.s32.totalorder %v5115, 1
          %vm5126 = vcmp.eq.s32.totalorder %v5119, 1
          %vm5127 = vcmp.eq.s32.totalorder %v5123, 1
          %v5128 = vsel %vm5124, %v5100, %v4907
          %v5129 = vsel %vm5125, %v5101, %v4908
          %v5130 = vsel %vm5126, %v5102, %v4909
          %v5131 = vsel %vm5127, %v5103, %v4910
          %v5132 = vcombine.high %v4927, %v4934
          %v5133 = vrot.slane %v5132, 7
          %v5134 = vrot.slane %v5133, 2
          %v5136 = vadd.f32 %v4904, %v5134
          %v5137 = vrcp.pop %v5136
          %v5138 = vmul.f32 %v4893, 0.1
          %v5139 = vmul.f32 %v4894, 0.1
          %v5140 = vmul.f32 %v4895, 0.1
          %v5141 = vmul.f32 %v4896, 0.1
          %v5146 = vcombine.low %v5138, %v5139
          %v5147 = vcombine.low %v5140, %v5141
          %v5149 = vunpack.c.l.s4 1983009808
          %v5150 = vunpack.c.0.s8 %v5149
          %v5151 = vlaneseq
          %v5152 = vshrl.u32 %v5151, 7
          %v5153 = vsub.s32 %v5150, %v5152
          %v5154 = vrot.slane %v5146, %v5153
          %v5156 = vunpack.c.l.s4 1983009808
          %v5157 = vunpack.c.0.s8 %v5156
          %v5158 = vlaneseq
          %v5159 = vshrl.u32 %v5158, 7
          %v5160 = vsub.s32 %v5157, %v5159
          %v5161 = vrot.slane %v5147, %v5160
          %v5162 = vcombine.high %v5154, %v5161
          %v5163 = vrot.slane %v5162, 7
          %v5164 = vrot.slane %v5163, 2
          %v5166 = vadd.f32 %v4941, %v5164
          %v5167 = vmul.f32 %v5166, %v5137
          %v5169 = vlaneseq
          %v5170 = vshrl.u32 %v5169, 7
          %v5171 = vsub.s32 0, %v5170
          %v5172 = vrot.slane %v5167, %v5171
          %v5173 = vlaneseq
          %v5174 = vshrl.u32 %v5173, 7
          %v5175 = vsub.s32 2, %v5174
          %v5176 = vrot.slane %v5167, %v5175
          %v5177 = vlaneseq
          %v5178 = vshrl.u32 %v5177, 7
          %v5179 = vsub.s32 4, %v5178
          %v5180 = vrot.slane %v5167, %v5179
          %v5181 = vlaneseq
          %v5182 = vshrl.u32 %v5181, 7
          %v5183 = vsub.s32 6, %v5182
          %v5184 = vrot.slane %v5167, %v5183
          %v5193 = vrot.slane %v4987, 6
          %v5194 = vrot.slane %v4988, 6
          %v5195 = vrot.slane %v4989, 6
          %v5196 = vrot.slane %v4990, 6
          %v5201 = vsel %vm4911, %v5172, %v5193
          %v5202 = vsel %vm4912, %v5176, %v5194
          %v5203 = vsel %vm4913, %v5180, %v5195
          %v5204 = vsel %vm4914, %v5184, %v5196
          %v5205 = vmax.f32 %v5136, 0.0
          %v5206 = vmin.f32 %v5205, 255.0
          %v5208 = vlaneseq
          %v5209 = vshrl.u32 %v5208, 7
          %v5210 = vsub.s32 0, %v5209
          %v5211 = vrot.slane %v5206, %v5210
          %v5212 = vlaneseq
          %v5213 = vshrl.u32 %v5212, 7
          %v5214 = vsub.s32 2, %v5213
          %v5215 = vrot.slane %v5206, %v5214
          %v5216 = vlaneseq
          %v5217 = vshrl.u32 %v5216, 7
          %v5218 = vsub.s32 4, %v5217
          %v5219 = vrot.slane %v5206, %v5218
          %v5220 = vlaneseq
          %v5221 = vshrl.u32 %v5220, 7
          %v5222 = vsub.s32 6, %v5221
          %v5223 = vrot.slane %v5206, %v5222
          %v5232 = vrot.slane %v5035, 6
          %v5233 = vrot.slane %v5036, 6
          %v5234 = vrot.slane %v5037, 6
          %v5235 = vrot.slane %v5038, 6
          %v5240 = vsel %vm4911, %v5211, %v5232
          %v5241 = vsel %vm4912, %v5215, %v5233
          %v5242 = vsel %vm4913, %v5219, %v5234
          %v5243 = vsel %vm4914, %v5223, %v5235
          %v5244 = vpack.c.bf16 %v5201, %v5201
          %v5245 = vpack.c.bf16 %v5202, %v5202
          %v5246 = vpack.c.bf16 %v5203, %v5203
          %v5247 = vpack.c.bf16 %v5204, %v5204
          %v5252 = vcombine.low %v5244, %v5245
          %v5253 = vcombine.low %v5246, %v5247
          %v5255 = vunpack.c.l.s4 1966171168
          %v5256 = vunpack.c.0.s8 %v5255
          %v5257 = vlaneseq
          %v5258 = vshrl.u32 %v5257, 7
          %v5259 = vsub.s32 %v5256, %v5258
          %v5260 = vrot.slane %v5252, %v5259
          %v5262 = vunpack.c.l.s4 1966171168
          %v5263 = vunpack.c.0.s8 %v5262
          %v5264 = vlaneseq
          %v5265 = vshrl.u32 %v5264, 7
          %v5266 = vsub.s32 %v5263, %v5265
          %v5267 = vrot.slane %v5253, %v5266
          %v5268 = vcombine.low %v5260, %v5267
          %v5270 = vunpack.c.l.s4 1966171168
          %v5271 = vunpack.c.0.s8 %v5270
          %v5272 = vlaneseq
          %v5273 = vshrl.u32 %v5272, 7
          %v5274 = vsub.s32 %v5271, %v5273
          %v5275 = vrot.slane %v5268, %v5274
          %v5276 = vcombine.high %v5275, %v5275
          %v5278 = vld [vmem:[%s456 + $0x20] sm:$0xf]
          %v5279 = vsel %vm1725, %v5276, %v5278
          %5280 = vst [vmem:[%s456 + $0x20] sm:$0xf] %v5279
          %v5281 = vpack.c.bf16 %v5240, %v5240
          %v5282 = vpack.c.bf16 %v5241, %v5241
          %v5283 = vpack.c.bf16 %v5242, %v5242
          %v5284 = vpack.c.bf16 %v5243, %v5243
          %v5289 = vcombine.low %v5281, %v5282
          %v5290 = vcombine.low %v5283, %v5284
          %v5292 = vunpack.c.l.s4 1966171168
          %v5293 = vunpack.c.0.s8 %v5292
          %v5294 = vlaneseq
          %v5295 = vshrl.u32 %v5294, 7
          %v5296 = vsub.s32 %v5293, %v5295
          %v5297 = vrot.slane %v5289, %v5296
          %v5299 = vunpack.c.l.s4 1966171168
          %v5300 = vunpack.c.0.s8 %v5299
          %v5301 = vlaneseq
          %v5302 = vshrl.u32 %v5301, 7
          %v5303 = vsub.s32 %v5300, %v5302
          %v5304 = vrot.slane %v5290, %v5303
          %v5305 = vcombine.low %v5297, %v5304
          %v5307 = vunpack.c.l.s4 1966171168
          %v5308 = vunpack.c.0.s8 %v5307
          %v5309 = vlaneseq
          %v5310 = vshrl.u32 %v5309, 7
          %v5311 = vsub.s32 %v5308, %v5310
          %v5312 = vrot.slane %v5305, %v5311
          %v5313 = vcombine.high %v5312, %v5312
          %v5315 = vld [vmem:[%s463 + $0x20] sm:$0xf]
          %v5316 = vsel %vm1725, %v5313, %v5315
          %5317 = vst [vmem:[%s463 + $0x20] sm:$0xf] %v5316
          %v5318 = vpack.c.bf16 %v5128, %v5128
          %v5319 = vpack.c.bf16 %v5129, %v5129
          %v5320 = vpack.c.bf16 %v5130, %v5130
          %v5321 = vpack.c.bf16 %v5131, %v5131
          %v5326 = vunpack.c.l.b16 %v5318
          %v5327 = vunpack.c.l.b16 %v5319
          %v5328 = vunpack.c.l.b16 %v5320
          %v5329 = vunpack.c.l.b16 %v5321
          %v5330 = vpack.c.b16 %v5327, %v5326
          %v5331 = vpack.c.b16 %v5329, %v5328
          %5334 = vst [vmem:[%s471 + $0x80] sm:$0xff] %v5330
          %5335 = vst [vmem:[%s471 + $0x88] sm:$0xff] %v5331
          %s5336 = scalar_lea.vmem [#allocation2], 576
          %v5337 = vld [vmem:[%s5336] sm:$0xff]
          %v5338 = vld [vmem:[%s5336 + $0x8] sm:$0xff]
          %v5339 = vld [vmem:[%s5336 + $0x10] sm:$0xff]
          %v5340 = vld [vmem:[%s5336 + $0x18] sm:$0xff]
          %v5341 = vld [vmem:[%s5336 + $0x20] sm:$0xff]
          %v5342 = vld [vmem:[%s5336 + $0x28] sm:$0xff]
          %v5343 = vld [vmem:[%s5336 + $0x30] sm:$0xff]
          %v5344 = vld [vmem:[%s5336 + $0x38] sm:$0xff]
          %v5345 = vld [vmem:[%s434 + $0x24] sm:$0xf]
          %v5346 = vunpack.c.l.bf16 %v5345
          %v5347 = vld [vmem:[%s441 + $0x24] sm:$0xf]
          %v5348 = vunpack.c.l.bf16 %v5347
          %v5349 = vld [vmem:[%s449 + $0x90] sm:$0xff]
          %v5350 = vld [vmem:[%s449 + $0x98] sm:$0xff]
          %v5351 = vunpack.c.l.bf16 %v5349
          %v5352 = vunpack.c.h.bf16 %v5349
          %v5353 = vunpack.c.l.bf16 %v5350
          %v5354 = vunpack.c.h.bf16 %v5350
          %vm5355 = vcmp.gt.f32.partialorder %v5337, 0.0
          %vm5356 = vcmp.gt.f32.partialorder %v5338, 0.0
          %vm5357 = vcmp.gt.f32.partialorder %v5339, 0.0
          %vm5358 = vcmp.gt.f32.partialorder %v5340, 0.0
          %v5363 = vcombine.low %v5337, %v5338
          %v5364 = vcombine.low %v5339, %v5340
          %v5366 = vunpack.c.l.s4 1983009808
          %v5367 = vunpack.c.0.s8 %v5366
          %v5368 = vlaneseq
          %v5369 = vshrl.u32 %v5368, 7
          %v5370 = vsub.s32 %v5367, %v5369
          %v5371 = vrot.slane %v5363, %v5370
          %v5373 = vunpack.c.l.s4 1983009808
          %v5374 = vunpack.c.0.s8 %v5373
          %v5375 = vlaneseq
          %v5376 = vshrl.u32 %v5375, 7
          %v5377 = vsub.s32 %v5374, %v5376
          %v5378 = vrot.slane %v5364, %v5377
          %v5379 = vcombine.low %v5371, %v5378
          %v5380 = vrot.slane %v5379, 7
          %v5381 = vrot.slane %v5380, 2
          %v5383 = vadd.f32 %v5348, %v5381
          %v5384 = vrcp.pop %v5383
          %v5385 = vmul.f32 %v5348, %v5346
          %v5387 = vadd.f32 %v5385, %v5379
          %v5388 = vmul.f32 %v5387, %v5384
          %v5390 = vlaneseq
          %v5391 = vshrl.u32 %v5390, 7
          %v5392 = vsub.s32 0, %v5391
          %v5393 = vrot.slane %v5388, %v5392
          %v5394 = vlaneseq
          %v5395 = vshrl.u32 %v5394, 7
          %v5396 = vsub.s32 2, %v5395
          %v5397 = vrot.slane %v5388, %v5396
          %v5398 = vlaneseq
          %v5399 = vshrl.u32 %v5398, 7
          %v5400 = vsub.s32 4, %v5399
          %v5401 = vrot.slane %v5388, %v5400
          %v5402 = vlaneseq
          %v5403 = vshrl.u32 %v5402, 7
          %v5404 = vsub.s32 6, %v5403
          %v5405 = vrot.slane %v5388, %v5404
          %v5411 = vlaneseq
          %v5412 = vshrl.u32 %v5411, 7
          %v5413 = vsub.s32 0, %v5412
          %v5414 = vrot.slane %v5346, %v5413
          %v5415 = vlaneseq
          %v5416 = vshrl.u32 %v5415, 7
          %v5417 = vsub.s32 2, %v5416
          %v5418 = vrot.slane %v5346, %v5417
          %v5419 = vlaneseq
          %v5420 = vshrl.u32 %v5419, 7
          %v5421 = vsub.s32 4, %v5420
          %v5422 = vrot.slane %v5346, %v5421
          %v5423 = vlaneseq
          %v5424 = vshrl.u32 %v5423, 7
          %v5425 = vsub.s32 6, %v5424
          %v5426 = vrot.slane %v5346, %v5425
          %v5431 = vsel %vm5355, %v5393, %v5414
          %v5432 = vsel %vm5356, %v5397, %v5418
          %v5433 = vsel %vm5357, %v5401, %v5422
          %v5434 = vsel %vm5358, %v5405, %v5426
          %v5435 = vmax.f32 %v5383, 0.0
          %v5436 = vmin.f32 %v5435, 255.0
          %v5438 = vlaneseq
          %v5439 = vshrl.u32 %v5438, 7
          %v5440 = vsub.s32 0, %v5439
          %v5441 = vrot.slane %v5436, %v5440
          %v5442 = vlaneseq
          %v5443 = vshrl.u32 %v5442, 7
          %v5444 = vsub.s32 2, %v5443
          %v5445 = vrot.slane %v5436, %v5444
          %v5446 = vlaneseq
          %v5447 = vshrl.u32 %v5446, 7
          %v5448 = vsub.s32 4, %v5447
          %v5449 = vrot.slane %v5436, %v5448
          %v5450 = vlaneseq
          %v5451 = vshrl.u32 %v5450, 7
          %v5452 = vsub.s32 6, %v5451
          %v5453 = vrot.slane %v5436, %v5452
          %v5459 = vlaneseq
          %v5460 = vshrl.u32 %v5459, 7
          %v5461 = vsub.s32 0, %v5460
          %v5462 = vrot.slane %v5348, %v5461
          %v5463 = vlaneseq
          %v5464 = vshrl.u32 %v5463, 7
          %v5465 = vsub.s32 2, %v5464
          %v5466 = vrot.slane %v5348, %v5465
          %v5467 = vlaneseq
          %v5468 = vshrl.u32 %v5467, 7
          %v5469 = vsub.s32 4, %v5468
          %v5470 = vrot.slane %v5348, %v5469
          %v5471 = vlaneseq
          %v5472 = vshrl.u32 %v5471, 7
          %v5473 = vsub.s32 6, %v5472
          %v5474 = vrot.slane %v5348, %v5473
          %v5479 = vsel %vm5355, %v5441, %v5462
          %v5480 = vsel %vm5356, %v5445, %v5466
          %v5481 = vsel %vm5357, %v5449, %v5470
          %v5482 = vsel %vm5358, %v5453, %v5474
          %v5483 = vlaneseq
          %v5484 = vshrl.u32 %v5483, 7
          %v5485 = vsub.s32 0, %v5484
          %v5486 = vrot.slane %v5462, %v5485
          %v5487 = vlaneseq
          %v5488 = vshrl.u32 %v5487, 7
          %v5489 = vsub.s32 0, %v5488
          %v5490 = vrot.slane %v5466, %v5489
          %v5491 = vlaneseq
          %v5492 = vshrl.u32 %v5491, 7
          %v5493 = vsub.s32 0, %v5492
          %v5494 = vrot.slane %v5470, %v5493
          %v5495 = vlaneseq
          %v5496 = vshrl.u32 %v5495, 7
          %v5497 = vsub.s32 0, %v5496
          %v5498 = vrot.slane %v5474, %v5497
          %v5499 = vmul.f32 %v5486, %v5351
          %v5500 = vmul.f32 %v5490, %v5352
          %v5501 = vmul.f32 %v5494, %v5353
          %v5502 = vmul.f32 %v5498, %v5354
          %v5503 = vadd.f32 %v5499, %v5341
          %v5504 = vadd.f32 %v5500, %v5342
          %v5505 = vadd.f32 %v5501, %v5343
          %v5506 = vadd.f32 %v5502, %v5344
          %v5508 = vlaneseq
          %v5509 = vshrl.u32 %v5508, 7
          %v5510 = vsub.s32 0, %v5509
          %v5511 = vrot.slane %v5384, %v5510
          %v5512 = vlaneseq
          %v5513 = vshrl.u32 %v5512, 7
          %v5514 = vsub.s32 2, %v5513
          %v5515 = vrot.slane %v5384, %v5514
          %v5516 = vlaneseq
          %v5517 = vshrl.u32 %v5516, 7
          %v5518 = vsub.s32 4, %v5517
          %v5519 = vrot.slane %v5384, %v5518
          %v5520 = vlaneseq
          %v5521 = vshrl.u32 %v5520, 7
          %v5522 = vsub.s32 6, %v5521
          %v5523 = vrot.slane %v5384, %v5522
          %v5528 = vlaneseq
          %v5529 = vshrl.u32 %v5528, 7
          %v5530 = vsub.s32 0, %v5529
          %v5531 = vrot.slane %v5511, %v5530
          %v5532 = vlaneseq
          %v5533 = vshrl.u32 %v5532, 7
          %v5534 = vsub.s32 0, %v5533
          %v5535 = vrot.slane %v5515, %v5534
          %v5536 = vlaneseq
          %v5537 = vshrl.u32 %v5536, 7
          %v5538 = vsub.s32 0, %v5537
          %v5539 = vrot.slane %v5519, %v5538
          %v5540 = vlaneseq
          %v5541 = vshrl.u32 %v5540, 7
          %v5542 = vsub.s32 0, %v5541
          %v5543 = vrot.slane %v5523, %v5542
          %v5544 = vmul.f32 %v5503, %v5531
          %v5545 = vmul.f32 %v5504, %v5535
          %v5546 = vmul.f32 %v5505, %v5539
          %v5547 = vmul.f32 %v5506, %v5543
          %v5548 = vsel %vm5355, 1, 0
          %v5549 = vsel %vm5356, 1, 0
          %v5550 = vsel %vm5357, 1, 0
          %v5551 = vsel %vm5358, 1, 0
          %v5552 = vlaneseq
          %v5553 = vshrl.u32 %v5552, 7
          %v5554 = vsub.s32 2, %v5553
          %v5555 = vrot.slane %v5548, %v5554
          %v5556 = vlaneseq
          %v5557 = vshrl.u32 %v5556, 7
          %v5558 = vsub.s32 2, %v5557
          %v5559 = vrot.slane %v5549, %v5558
          %v5560 = vlaneseq
          %v5561 = vshrl.u32 %v5560, 7
          %v5562 = vsub.s32 2, %v5561
          %v5563 = vrot.slane %v5550, %v5562
          %v5564 = vlaneseq
          %v5565 = vshrl.u32 %v5564, 7
          %v5566 = vsub.s32 2, %v5565
          %v5567 = vrot.slane %v5551, %v5566
          %vm5568 = vcmp.eq.s32.totalorder %v5555, 1
          %vm5569 = vcmp.eq.s32.totalorder %v5559, 1
          %vm5570 = vcmp.eq.s32.totalorder %v5563, 1
          %vm5571 = vcmp.eq.s32.totalorder %v5567, 1
          %v5572 = vsel %vm5568, %v5544, %v5351
          %v5573 = vsel %vm5569, %v5545, %v5352
          %v5574 = vsel %vm5570, %v5546, %v5353
          %v5575 = vsel %vm5571, %v5547, %v5354
          %v5576 = vcombine.high %v5371, %v5378
          %v5577 = vrot.slane %v5576, 7
          %v5578 = vrot.slane %v5577, 2
          %v5580 = vadd.f32 %v5348, %v5578
          %v5581 = vrcp.pop %v5580
          %v5582 = vmul.f32 %v5337, 0.1
          %v5583 = vmul.f32 %v5338, 0.1
          %v5584 = vmul.f32 %v5339, 0.1
          %v5585 = vmul.f32 %v5340, 0.1
          %v5590 = vcombine.low %v5582, %v5583
          %v5591 = vcombine.low %v5584, %v5585
          %v5593 = vunpack.c.l.s4 1983009808
          %v5594 = vunpack.c.0.s8 %v5593
          %v5595 = vlaneseq
          %v5596 = vshrl.u32 %v5595, 7
          %v5597 = vsub.s32 %v5594, %v5596
          %v5598 = vrot.slane %v5590, %v5597
          %v5600 = vunpack.c.l.s4 1983009808
          %v5601 = vunpack.c.0.s8 %v5600
          %v5602 = vlaneseq
          %v5603 = vshrl.u32 %v5602, 7
          %v5604 = vsub.s32 %v5601, %v5603
          %v5605 = vrot.slane %v5591, %v5604
          %v5606 = vcombine.high %v5598, %v5605
          %v5607 = vrot.slane %v5606, 7
          %v5608 = vrot.slane %v5607, 2
          %v5610 = vadd.f32 %v5385, %v5608
          %v5611 = vmul.f32 %v5610, %v5581
          %v5613 = vlaneseq
          %v5614 = vshrl.u32 %v5613, 7
          %v5615 = vsub.s32 0, %v5614
          %v5616 = vrot.slane %v5611, %v5615
          %v5617 = vlaneseq
          %v5618 = vshrl.u32 %v5617, 7
          %v5619 = vsub.s32 2, %v5618
          %v5620 = vrot.slane %v5611, %v5619
          %v5621 = vlaneseq
          %v5622 = vshrl.u32 %v5621, 7
          %v5623 = vsub.s32 4, %v5622
          %v5624 = vrot.slane %v5611, %v5623
          %v5625 = vlaneseq
          %v5626 = vshrl.u32 %v5625, 7
          %v5627 = vsub.s32 6, %v5626
          %v5628 = vrot.slane %v5611, %v5627
          %v5637 = vrot.slane %v5431, 6
          %v5638 = vrot.slane %v5432, 6
          %v5639 = vrot.slane %v5433, 6
          %v5640 = vrot.slane %v5434, 6
          %v5645 = vsel %vm5355, %v5616, %v5637
          %v5646 = vsel %vm5356, %v5620, %v5638
          %v5647 = vsel %vm5357, %v5624, %v5639
          %v5648 = vsel %vm5358, %v5628, %v5640
          %v5649 = vmax.f32 %v5580, 0.0
          %v5650 = vmin.f32 %v5649, 255.0
          %v5652 = vlaneseq
          %v5653 = vshrl.u32 %v5652, 7
          %v5654 = vsub.s32 0, %v5653
          %v5655 = vrot.slane %v5650, %v5654
          %v5656 = vlaneseq
          %v5657 = vshrl.u32 %v5656, 7
          %v5658 = vsub.s32 2, %v5657
          %v5659 = vrot.slane %v5650, %v5658
          %v5660 = vlaneseq
          %v5661 = vshrl.u32 %v5660, 7
          %v5662 = vsub.s32 4, %v5661
          %v5663 = vrot.slane %v5650, %v5662
          %v5664 = vlaneseq
          %v5665 = vshrl.u32 %v5664, 7
          %v5666 = vsub.s32 6, %v5665
          %v5667 = vrot.slane %v5650, %v5666
          %v5676 = vrot.slane %v5479, 6
          %v5677 = vrot.slane %v5480, 6
          %v5678 = vrot.slane %v5481, 6
          %v5679 = vrot.slane %v5482, 6
          %v5684 = vsel %vm5355, %v5655, %v5676
          %v5685 = vsel %vm5356, %v5659, %v5677
          %v5686 = vsel %vm5357, %v5663, %v5678
          %v5687 = vsel %vm5358, %v5667, %v5679
          %v5688 = vpack.c.bf16 %v5645, %v5645
          %v5689 = vpack.c.bf16 %v5646, %v5646
          %v5690 = vpack.c.bf16 %v5647, %v5647
          %v5691 = vpack.c.bf16 %v5648, %v5648
          %v5696 = vcombine.low %v5688, %v5689
          %v5697 = vcombine.low %v5690, %v5691
          %v5699 = vunpack.c.l.s4 1966171168
          %v5700 = vunpack.c.0.s8 %v5699
          %v5701 = vlaneseq
          %v5702 = vshrl.u32 %v5701, 7
          %v5703 = vsub.s32 %v5700, %v5702
          %v5704 = vrot.slane %v5696, %v5703
          %v5706 = vunpack.c.l.s4 1966171168
          %v5707 = vunpack.c.0.s8 %v5706
          %v5708 = vlaneseq
          %v5709 = vshrl.u32 %v5708, 7
          %v5710 = vsub.s32 %v5707, %v5709
          %v5711 = vrot.slane %v5697, %v5710
          %v5712 = vcombine.low %v5704, %v5711
          %v5714 = vunpack.c.l.s4 1966171168
          %v5715 = vunpack.c.0.s8 %v5714
          %v5716 = vlaneseq
          %v5717 = vshrl.u32 %v5716, 7
          %v5718 = vsub.s32 %v5715, %v5717
          %v5719 = vrot.slane %v5712, %v5718
          %v5720 = vcombine.high %v5719, %v5719
          %v5722 = vld [vmem:[%s456 + $0x24] sm:$0xf]
          %v5723 = vsel %vm1725, %v5720, %v5722
          %5724 = vst [vmem:[%s456 + $0x24] sm:$0xf] %v5723
          %v5725 = vpack.c.bf16 %v5684, %v5684
          %v5726 = vpack.c.bf16 %v5685, %v5685
          %v5727 = vpack.c.bf16 %v5686, %v5686
          %v5728 = vpack.c.bf16 %v5687, %v5687
          %v5733 = vcombine.low %v5725, %v5726
          %v5734 = vcombine.low %v5727, %v5728
          %v5736 = vunpack.c.l.s4 1966171168
          %v5737 = vunpack.c.0.s8 %v5736
          %v5738 = vlaneseq
          %v5739 = vshrl.u32 %v5738, 7
          %v5740 = vsub.s32 %v5737, %v5739
          %v5741 = vrot.slane %v5733, %v5740
          %v5743 = vunpack.c.l.s4 1966171168
          %v5744 = vunpack.c.0.s8 %v5743
          %v5745 = vlaneseq
          %v5746 = vshrl.u32 %v5745, 7
          %v5747 = vsub.s32 %v5744, %v5746
          %v5748 = vrot.slane %v5734, %v5747
          %v5749 = vcombine.low %v5741, %v5748
          %v5751 = vunpack.c.l.s4 1966171168
          %v5752 = vunpack.c.0.s8 %v5751
          %v5753 = vlaneseq
          %v5754 = vshrl.u32 %v5753, 7
          %v5755 = vsub.s32 %v5752, %v5754
          %v5756 = vrot.slane %v5749, %v5755
          %v5757 = vcombine.high %v5756, %v5756
          %v5759 = vld [vmem:[%s463 + $0x24] sm:$0xf]
          %v5760 = vsel %vm1725, %v5757, %v5759
          %5761 = vst [vmem:[%s463 + $0x24] sm:$0xf] %v5760
          %v5762 = vpack.c.bf16 %v5572, %v5572
          %v5763 = vpack.c.bf16 %v5573, %v5573
          %v5764 = vpack.c.bf16 %v5574, %v5574
          %v5765 = vpack.c.bf16 %v5575, %v5575
          %v5770 = vunpack.c.l.b16 %v5762
          %v5771 = vunpack.c.l.b16 %v5763
          %v5772 = vunpack.c.l.b16 %v5764
          %v5773 = vunpack.c.l.b16 %v5765
          %v5774 = vpack.c.b16 %v5771, %v5770
          %v5775 = vpack.c.b16 %v5773, %v5772
          %5778 = vst [vmem:[%s471 + $0x90] sm:$0xff] %v5774
          %5779 = vst [vmem:[%s471 + $0x98] sm:$0xff] %v5775
          %s5780 = scalar_lea.vmem [#allocation2], 640
          %v5781 = vld [vmem:[%s5780] sm:$0xff]
          %v5782 = vld [vmem:[%s5780 + $0x8] sm:$0xff]
          %v5783 = vld [vmem:[%s5780 + $0x10] sm:$0xff]
          %v5784 = vld [vmem:[%s5780 + $0x18] sm:$0xff]
          %v5785 = vld [vmem:[%s5780 + $0x20] sm:$0xff]
          %v5786 = vld [vmem:[%s5780 + $0x28] sm:$0xff]
          %v5787 = vld [vmem:[%s5780 + $0x30] sm:$0xff]
          %v5788 = vld [vmem:[%s5780 + $0x38] sm:$0xff]
          %v5789 = vld [vmem:[%s434 + $0x28] sm:$0xf]
          %v5790 = vunpack.c.l.bf16 %v5789
          %v5791 = vld [vmem:[%s441 + $0x28] sm:$0xf]
          %v5792 = vunpack.c.l.bf16 %v5791
          %v5793 = vld [vmem:[%s449 + $0xa0] sm:$0xff]
          %v5794 = vld [vmem:[%s449 + $0xa8] sm:$0xff]
          %v5795 = vunpack.c.l.bf16 %v5793
          %v5796 = vunpack.c.h.bf16 %v5793
          %v5797 = vunpack.c.l.bf16 %v5794
          %v5798 = vunpack.c.h.bf16 %v5794
          %vm5799 = vcmp.gt.f32.partialorder %v5781, 0.0
          %vm5800 = vcmp.gt.f32.partialorder %v5782, 0.0
          %vm5801 = vcmp.gt.f32.partialorder %v5783, 0.0
          %vm5802 = vcmp.gt.f32.partialorder %v5784, 0.0
          %v5807 = vcombine.low %v5781, %v5782
          %v5808 = vcombine.low %v5783, %v5784
          %v5810 = vunpack.c.l.s4 1983009808
          %v5811 = vunpack.c.0.s8 %v5810
          %v5812 = vlaneseq
          %v5813 = vshrl.u32 %v5812, 7
          %v5814 = vsub.s32 %v5811, %v5813
          %v5815 = vrot.slane %v5807, %v5814
          %v5817 = vunpack.c.l.s4 1983009808
          %v5818 = vunpack.c.0.s8 %v5817
          %v5819 = vlaneseq
          %v5820 = vshrl.u32 %v5819, 7
          %v5821 = vsub.s32 %v5818, %v5820
          %v5822 = vrot.slane %v5808, %v5821
          %v5823 = vcombine.low %v5815, %v5822
          %v5824 = vrot.slane %v5823, 7
          %v5825 = vrot.slane %v5824, 2
          %v5827 = vadd.f32 %v5792, %v5825
          %v5828 = vrcp.pop %v5827
          %v5829 = vmul.f32 %v5792, %v5790
          %v5831 = vadd.f32 %v5829, %v5823
          %v5832 = vmul.f32 %v5831, %v5828
          %v5834 = vlaneseq
          %v5835 = vshrl.u32 %v5834, 7
          %v5836 = vsub.s32 0, %v5835
          %v5837 = vrot.slane %v5832, %v5836
          %v5838 = vlaneseq
          %v5839 = vshrl.u32 %v5838, 7
          %v5840 = vsub.s32 2, %v5839
          %v5841 = vrot.slane %v5832, %v5840
          %v5842 = vlaneseq
          %v5843 = vshrl.u32 %v5842, 7
          %v5844 = vsub.s32 4, %v5843
          %v5845 = vrot.slane %v5832, %v5844
          %v5846 = vlaneseq
          %v5847 = vshrl.u32 %v5846, 7
          %v5848 = vsub.s32 6, %v5847
          %v5849 = vrot.slane %v5832, %v5848
          %v5855 = vlaneseq
          %v5856 = vshrl.u32 %v5855, 7
          %v5857 = vsub.s32 0, %v5856
          %v5858 = vrot.slane %v5790, %v5857
          %v5859 = vlaneseq
          %v5860 = vshrl.u32 %v5859, 7
          %v5861 = vsub.s32 2, %v5860
          %v5862 = vrot.slane %v5790, %v5861
          %v5863 = vlaneseq
          %v5864 = vshrl.u32 %v5863, 7
          %v5865 = vsub.s32 4, %v5864
          %v5866 = vrot.slane %v5790, %v5865
          %v5867 = vlaneseq
          %v5868 = vshrl.u32 %v5867, 7
          %v5869 = vsub.s32 6, %v5868
          %v5870 = vrot.slane %v5790, %v5869
          %v5875 = vsel %vm5799, %v5837, %v5858
          %v5876 = vsel %vm5800, %v5841, %v5862
          %v5877 = vsel %vm5801, %v5845, %v5866
          %v5878 = vsel %vm5802, %v5849, %v5870
          %v5879 = vmax.f32 %v5827, 0.0
          %v5880 = vmin.f32 %v5879, 255.0
          %v5882 = vlaneseq
          %v5883 = vshrl.u32 %v5882, 7
          %v5884 = vsub.s32 0, %v5883
          %v5885 = vrot.slane %v5880, %v5884
          %v5886 = vlaneseq
          %v5887 = vshrl.u32 %v5886, 7
          %v5888 = vsub.s32 2, %v5887
          %v5889 = vrot.slane %v5880, %v5888
          %v5890 = vlaneseq
          %v5891 = vshrl.u32 %v5890, 7
          %v5892 = vsub.s32 4, %v5891
          %v5893 = vrot.slane %v5880, %v5892
          %v5894 = vlaneseq
          %v5895 = vshrl.u32 %v5894, 7
          %v5896 = vsub.s32 6, %v5895
          %v5897 = vrot.slane %v5880, %v5896
          %v5903 = vlaneseq
          %v5904 = vshrl.u32 %v5903, 7
          %v5905 = vsub.s32 0, %v5904
          %v5906 = vrot.slane %v5792, %v5905
          %v5907 = vlaneseq
          %v5908 = vshrl.u32 %v5907, 7
          %v5909 = vsub.s32 2, %v5908
          %v5910 = vrot.slane %v5792, %v5909
          %v5911 = vlaneseq
          %v5912 = vshrl.u32 %v5911, 7
          %v5913 = vsub.s32 4, %v5912
          %v5914 = vrot.slane %v5792, %v5913
          %v5915 = vlaneseq
          %v5916 = vshrl.u32 %v5915, 7
          %v5917 = vsub.s32 6, %v5916
          %v5918 = vrot.slane %v5792, %v5917
          %v5923 = vsel %vm5799, %v5885, %v5906
          %v5924 = vsel %vm5800, %v5889, %v5910
          %v5925 = vsel %vm5801, %v5893, %v5914
          %v5926 = vsel %vm5802, %v5897, %v5918
          %v5927 = vlaneseq
          %v5928 = vshrl.u32 %v5927, 7
          %v5929 = vsub.s32 0, %v5928
          %v5930 = vrot.slane %v5906, %v5929
          %v5931 = vlaneseq
          %v5932 = vshrl.u32 %v5931, 7
          %v5933 = vsub.s32 0, %v5932
          %v5934 = vrot.slane %v5910, %v5933
          %v5935 = vlaneseq
          %v5936 = vshrl.u32 %v5935, 7
          %v5937 = vsub.s32 0, %v5936
          %v5938 = vrot.slane %v5914, %v5937
          %v5939 = vlaneseq
          %v5940 = vshrl.u32 %v5939, 7
          %v5941 = vsub.s32 0, %v5940
          %v5942 = vrot.slane %v5918, %v5941
          %v5943 = vmul.f32 %v5930, %v5795
          %v5944 = vmul.f32 %v5934, %v5796
          %v5945 = vmul.f32 %v5938, %v5797
          %v5946 = vmul.f32 %v5942, %v5798
          %v5947 = vadd.f32 %v5943, %v5785
          %v5948 = vadd.f32 %v5944, %v5786
          %v5949 = vadd.f32 %v5945, %v5787
          %v5950 = vadd.f32 %v5946, %v5788
          %v5952 = vlaneseq
          %v5953 = vshrl.u32 %v5952, 7
          %v5954 = vsub.s32 0, %v5953
          %v5955 = vrot.slane %v5828, %v5954
          %v5956 = vlaneseq
          %v5957 = vshrl.u32 %v5956, 7
          %v5958 = vsub.s32 2, %v5957
          %v5959 = vrot.slane %v5828, %v5958
          %v5960 = vlaneseq
          %v5961 = vshrl.u32 %v5960, 7
          %v5962 = vsub.s32 4, %v5961
          %v5963 = vrot.slane %v5828, %v5962
          %v5964 = vlaneseq
          %v5965 = vshrl.u32 %v5964, 7
          %v5966 = vsub.s32 6, %v5965
          %v5967 = vrot.slane %v5828, %v5966
          %v5972 = vlaneseq
          %v5973 = vshrl.u32 %v5972, 7
          %v5974 = vsub.s32 0, %v5973
          %v5975 = vrot.slane %v5955, %v5974
          %v5976 = vlaneseq
          %v5977 = vshrl.u32 %v5976, 7
          %v5978 = vsub.s32 0, %v5977
          %v5979 = vrot.slane %v5959, %v5978
          %v5980 = vlaneseq
          %v5981 = vshrl.u32 %v5980, 7
          %v5982 = vsub.s32 0, %v5981
          %v5983 = vrot.slane %v5963, %v5982
          %v5984 = vlaneseq
          %v5985 = vshrl.u32 %v5984, 7
          %v5986 = vsub.s32 0, %v5985
          %v5987 = vrot.slane %v5967, %v5986
          %v5988 = vmul.f32 %v5947, %v5975
          %v5989 = vmul.f32 %v5948, %v5979
          %v5990 = vmul.f32 %v5949, %v5983
          %v5991 = vmul.f32 %v5950, %v5987
          %v5992 = vsel %vm5799, 1, 0
          %v5993 = vsel %vm5800, 1, 0
          %v5994 = vsel %vm5801, 1, 0
          %v5995 = vsel %vm5802, 1, 0
          %v5996 = vlaneseq
          %v5997 = vshrl.u32 %v5996, 7
          %v5998 = vsub.s32 2, %v5997
          %v5999 = vrot.slane %v5992, %v5998
          %v6000 = vlaneseq
          %v6001 = vshrl.u32 %v6000, 7
          %v6002 = vsub.s32 2, %v6001
          %v6003 = vrot.slane %v5993, %v6002
          %v6004 = vlaneseq
          %v6005 = vshrl.u32 %v6004, 7
          %v6006 = vsub.s32 2, %v6005
          %v6007 = vrot.slane %v5994, %v6006
          %v6008 = vlaneseq
          %v6009 = vshrl.u32 %v6008, 7
          %v6010 = vsub.s32 2, %v6009
          %v6011 = vrot.slane %v5995, %v6010
          %vm6012 = vcmp.eq.s32.totalorder %v5999, 1
          %vm6013 = vcmp.eq.s32.totalorder %v6003, 1
          %vm6014 = vcmp.eq.s32.totalorder %v6007, 1
          %vm6015 = vcmp.eq.s32.totalorder %v6011, 1
          %v6016 = vsel %vm6012, %v5988, %v5795
          %v6017 = vsel %vm6013, %v5989, %v5796
          %v6018 = vsel %vm6014, %v5990, %v5797
          %v6019 = vsel %vm6015, %v5991, %v5798
          %v6020 = vcombine.high %v5815, %v5822
          %v6021 = vrot.slane %v6020, 7
          %v6022 = vrot.slane %v6021, 2
          %v6024 = vadd.f32 %v5792, %v6022
          %v6025 = vrcp.pop %v6024
          %v6026 = vmul.f32 %v5781, 0.1
          %v6027 = vmul.f32 %v5782, 0.1
          %v6028 = vmul.f32 %v5783, 0.1
          %v6029 = vmul.f32 %v5784, 0.1
          %v6034 = vcombine.low %v6026, %v6027
          %v6035 = vcombine.low %v6028, %v6029
          %v6037 = vunpack.c.l.s4 1983009808
          %v6038 = vunpack.c.0.s8 %v6037
          %v6039 = vlaneseq
          %v6040 = vshrl.u32 %v6039, 7
          %v6041 = vsub.s32 %v6038, %v6040
          %v6042 = vrot.slane %v6034, %v6041
          %v6044 = vunpack.c.l.s4 1983009808
          %v6045 = vunpack.c.0.s8 %v6044
          %v6046 = vlaneseq
          %v6047 = vshrl.u32 %v6046, 7
          %v6048 = vsub.s32 %v6045, %v6047
          %v6049 = vrot.slane %v6035, %v6048
          %v6050 = vcombine.high %v6042, %v6049
          %v6051 = vrot.slane %v6050, 7
          %v6052 = vrot.slane %v6051, 2
          %v6054 = vadd.f32 %v5829, %v6052
          %v6055 = vmul.f32 %v6054, %v6025
          %v6057 = vlaneseq
          %v6058 = vshrl.u32 %v6057, 7
          %v6059 = vsub.s32 0, %v6058
          %v6060 = vrot.slane %v6055, %v6059
          %v6061 = vlaneseq
          %v6062 = vshrl.u32 %v6061, 7
          %v6063 = vsub.s32 2, %v6062
          %v6064 = vrot.slane %v6055, %v6063
          %v6065 = vlaneseq
          %v6066 = vshrl.u32 %v6065, 7
          %v6067 = vsub.s32 4, %v6066
          %v6068 = vrot.slane %v6055, %v6067
          %v6069 = vlaneseq
          %v6070 = vshrl.u32 %v6069, 7
          %v6071 = vsub.s32 6, %v6070
          %v6072 = vrot.slane %v6055, %v6071
          %v6081 = vrot.slane %v5875, 6
          %v6082 = vrot.slane %v5876, 6
          %v6083 = vrot.slane %v5877, 6
          %v6084 = vrot.slane %v5878, 6
          %v6089 = vsel %vm5799, %v6060, %v6081
          %v6090 = vsel %vm5800, %v6064, %v6082
          %v6091 = vsel %vm5801, %v6068, %v6083
          %v6092 = vsel %vm5802, %v6072, %v6084
          %v6093 = vmax.f32 %v6024, 0.0
          %v6094 = vmin.f32 %v6093, 255.0
          %v6096 = vlaneseq
          %v6097 = vshrl.u32 %v6096, 7
          %v6098 = vsub.s32 0, %v6097
          %v6099 = vrot.slane %v6094, %v6098
          %v6100 = vlaneseq
          %v6101 = vshrl.u32 %v6100, 7
          %v6102 = vsub.s32 2, %v6101
          %v6103 = vrot.slane %v6094, %v6102
          %v6104 = vlaneseq
          %v6105 = vshrl.u32 %v6104, 7
          %v6106 = vsub.s32 4, %v6105
          %v6107 = vrot.slane %v6094, %v6106
          %v6108 = vlaneseq
          %v6109 = vshrl.u32 %v6108, 7
          %v6110 = vsub.s32 6, %v6109
          %v6111 = vrot.slane %v6094, %v6110
          %v6120 = vrot.slane %v5923, 6
          %v6121 = vrot.slane %v5924, 6
          %v6122 = vrot.slane %v5925, 6
          %v6123 = vrot.slane %v5926, 6
          %v6128 = vsel %vm5799, %v6099, %v6120
          %v6129 = vsel %vm5800, %v6103, %v6121
          %v6130 = vsel %vm5801, %v6107, %v6122
          %v6131 = vsel %vm5802, %v6111, %v6123
          %v6132 = vpack.c.bf16 %v6089, %v6089
          %v6133 = vpack.c.bf16 %v6090, %v6090
          %v6134 = vpack.c.bf16 %v6091, %v6091
          %v6135 = vpack.c.bf16 %v6092, %v6092
          %v6140 = vcombine.low %v6132, %v6133
          %v6141 = vcombine.low %v6134, %v6135
          %v6143 = vunpack.c.l.s4 1966171168
          %v6144 = vunpack.c.0.s8 %v6143
          %v6145 = vlaneseq
          %v6146 = vshrl.u32 %v6145, 7
          %v6147 = vsub.s32 %v6144, %v6146
          %v6148 = vrot.slane %v6140, %v6147
          %v6150 = vunpack.c.l.s4 1966171168
          %v6151 = vunpack.c.0.s8 %v6150
          %v6152 = vlaneseq
          %v6153 = vshrl.u32 %v6152, 7
          %v6154 = vsub.s32 %v6151, %v6153
          %v6155 = vrot.slane %v6141, %v6154
          %v6156 = vcombine.low %v6148, %v6155
          %v6158 = vunpack.c.l.s4 1966171168
          %v6159 = vunpack.c.0.s8 %v6158
          %v6160 = vlaneseq
          %v6161 = vshrl.u32 %v6160, 7
          %v6162 = vsub.s32 %v6159, %v6161
          %v6163 = vrot.slane %v6156, %v6162
          %v6164 = vcombine.high %v6163, %v6163
          %v6166 = vld [vmem:[%s456 + $0x28] sm:$0xf]
          %v6167 = vsel %vm1725, %v6164, %v6166
          %6168 = vst [vmem:[%s456 + $0x28] sm:$0xf] %v6167
          %v6169 = vpack.c.bf16 %v6128, %v6128
          %v6170 = vpack.c.bf16 %v6129, %v6129
          %v6171 = vpack.c.bf16 %v6130, %v6130
          %v6172 = vpack.c.bf16 %v6131, %v6131
          %v6177 = vcombine.low %v6169, %v6170
          %v6178 = vcombine.low %v6171, %v6172
          %v6180 = vunpack.c.l.s4 1966171168
          %v6181 = vunpack.c.0.s8 %v6180
          %v6182 = vlaneseq
          %v6183 = vshrl.u32 %v6182, 7
          %v6184 = vsub.s32 %v6181, %v6183
          %v6185 = vrot.slane %v6177, %v6184
          %v6187 = vunpack.c.l.s4 1966171168
          %v6188 = vunpack.c.0.s8 %v6187
          %v6189 = vlaneseq
          %v6190 = vshrl.u32 %v6189, 7
          %v6191 = vsub.s32 %v6188, %v6190
          %v6192 = vrot.slane %v6178, %v6191
          %v6193 = vcombine.low %v6185, %v6192
          %v6195 = vunpack.c.l.s4 1966171168
          %v6196 = vunpack.c.0.s8 %v6195
          %v6197 = vlaneseq
          %v6198 = vshrl.u32 %v6197, 7
          %v6199 = vsub.s32 %v6196, %v6198
          %v6200 = vrot.slane %v6193, %v6199
          %v6201 = vcombine.high %v6200, %v6200
          %v6203 = vld [vmem:[%s463 + $0x28] sm:$0xf]
          %v6204 = vsel %vm1725, %v6201, %v6203
          %6205 = vst [vmem:[%s463 + $0x28] sm:$0xf] %v6204
          %v6206 = vpack.c.bf16 %v6016, %v6016
          %v6207 = vpack.c.bf16 %v6017, %v6017
          %v6208 = vpack.c.bf16 %v6018, %v6018
          %v6209 = vpack.c.bf16 %v6019, %v6019
          %v6214 = vunpack.c.l.b16 %v6206
          %v6215 = vunpack.c.l.b16 %v6207
          %v6216 = vunpack.c.l.b16 %v6208
          %v6217 = vunpack.c.l.b16 %v6209
          %v6218 = vpack.c.b16 %v6215, %v6214
          %v6219 = vpack.c.b16 %v6217, %v6216
          %6222 = vst [vmem:[%s471 + $0xa0] sm:$0xff] %v6218
          %6223 = vst [vmem:[%s471 + $0xa8] sm:$0xff] %v6219
          %s6224 = scalar_lea.vmem [#allocation2], 704
          %v6225 = vld [vmem:[%s6224] sm:$0xff]
          %v6226 = vld [vmem:[%s6224 + $0x8] sm:$0xff]
          %v6227 = vld [vmem:[%s6224 + $0x10] sm:$0xff]
          %v6228 = vld [vmem:[%s6224 + $0x18] sm:$0xff]
          %v6229 = vld [vmem:[%s6224 + $0x20] sm:$0xff]
          %v6230 = vld [vmem:[%s6224 + $0x28] sm:$0xff]
          %v6231 = vld [vmem:[%s6224 + $0x30] sm:$0xff]
          %v6232 = vld [vmem:[%s6224 + $0x38] sm:$0xff]
          %v6233 = vld [vmem:[%s434 + $0x2c] sm:$0xf]
          %v6234 = vunpack.c.l.bf16 %v6233
          %v6235 = vld [vmem:[%s441 + $0x2c] sm:$0xf]
          %v6236 = vunpack.c.l.bf16 %v6235
          %v6237 = vld [vmem:[%s449 + $0xb0] sm:$0xff]
          %v6238 = vld [vmem:[%s449 + $0xb8] sm:$0xff]
          %v6239 = vunpack.c.l.bf16 %v6237
          %v6240 = vunpack.c.h.bf16 %v6237
          %v6241 = vunpack.c.l.bf16 %v6238
          %v6242 = vunpack.c.h.bf16 %v6238
          %vm6243 = vcmp.gt.f32.partialorder %v6225, 0.0
          %vm6244 = vcmp.gt.f32.partialorder %v6226, 0.0
          %vm6245 = vcmp.gt.f32.partialorder %v6227, 0.0
          %vm6246 = vcmp.gt.f32.partialorder %v6228, 0.0
          %v6251 = vcombine.low %v6225, %v6226
          %v6252 = vcombine.low %v6227, %v6228
          %v6254 = vunpack.c.l.s4 1983009808
          %v6255 = vunpack.c.0.s8 %v6254
          %v6256 = vlaneseq
          %v6257 = vshrl.u32 %v6256, 7
          %v6258 = vsub.s32 %v6255, %v6257
          %v6259 = vrot.slane %v6251, %v6258
          %v6261 = vunpack.c.l.s4 1983009808
          %v6262 = vunpack.c.0.s8 %v6261
          %v6263 = vlaneseq
          %v6264 = vshrl.u32 %v6263, 7
          %v6265 = vsub.s32 %v6262, %v6264
          %v6266 = vrot.slane %v6252, %v6265
          %v6267 = vcombine.low %v6259, %v6266
          %v6268 = vrot.slane %v6267, 7
          %v6269 = vrot.slane %v6268, 2
          %v6271 = vadd.f32 %v6236, %v6269
          %v6272 = vrcp.pop %v6271
          %v6273 = vmul.f32 %v6236, %v6234
          %v6275 = vadd.f32 %v6273, %v6267
          %v6276 = vmul.f32 %v6275, %v6272
          %v6278 = vlaneseq
          %v6279 = vshrl.u32 %v6278, 7
          %v6280 = vsub.s32 0, %v6279
          %v6281 = vrot.slane %v6276, %v6280
          %v6282 = vlaneseq
          %v6283 = vshrl.u32 %v6282, 7
          %v6284 = vsub.s32 2, %v6283
          %v6285 = vrot.slane %v6276, %v6284
          %v6286 = vlaneseq
          %v6287 = vshrl.u32 %v6286, 7
          %v6288 = vsub.s32 4, %v6287
          %v6289 = vrot.slane %v6276, %v6288
          %v6290 = vlaneseq
          %v6291 = vshrl.u32 %v6290, 7
          %v6292 = vsub.s32 6, %v6291
          %v6293 = vrot.slane %v6276, %v6292
          %v6299 = vlaneseq
          %v6300 = vshrl.u32 %v6299, 7
          %v6301 = vsub.s32 0, %v6300
          %v6302 = vrot.slane %v6234, %v6301
          %v6303 = vlaneseq
          %v6304 = vshrl.u32 %v6303, 7
          %v6305 = vsub.s32 2, %v6304
          %v6306 = vrot.slane %v6234, %v6305
          %v6307 = vlaneseq
          %v6308 = vshrl.u32 %v6307, 7
          %v6309 = vsub.s32 4, %v6308
          %v6310 = vrot.slane %v6234, %v6309
          %v6311 = vlaneseq
          %v6312 = vshrl.u32 %v6311, 7
          %v6313 = vsub.s32 6, %v6312
          %v6314 = vrot.slane %v6234, %v6313
          %v6319 = vsel %vm6243, %v6281, %v6302
          %v6320 = vsel %vm6244, %v6285, %v6306
          %v6321 = vsel %vm6245, %v6289, %v6310
          %v6322 = vsel %vm6246, %v6293, %v6314
          %v6323 = vmax.f32 %v6271, 0.0
          %v6324 = vmin.f32 %v6323, 255.0
          %v6326 = vlaneseq
          %v6327 = vshrl.u32 %v6326, 7
          %v6328 = vsub.s32 0, %v6327
          %v6329 = vrot.slane %v6324, %v6328
          %v6330 = vlaneseq
          %v6331 = vshrl.u32 %v6330, 7
          %v6332 = vsub.s32 2, %v6331
          %v6333 = vrot.slane %v6324, %v6332
          %v6334 = vlaneseq
          %v6335 = vshrl.u32 %v6334, 7
          %v6336 = vsub.s32 4, %v6335
          %v6337 = vrot.slane %v6324, %v6336
          %v6338 = vlaneseq
          %v6339 = vshrl.u32 %v6338, 7
          %v6340 = vsub.s32 6, %v6339
          %v6341 = vrot.slane %v6324, %v6340
          %v6347 = vlaneseq
          %v6348 = vshrl.u32 %v6347, 7
          %v6349 = vsub.s32 0, %v6348
          %v6350 = vrot.slane %v6236, %v6349
          %v6351 = vlaneseq
          %v6352 = vshrl.u32 %v6351, 7
          %v6353 = vsub.s32 2, %v6352
          %v6354 = vrot.slane %v6236, %v6353
          %v6355 = vlaneseq
          %v6356 = vshrl.u32 %v6355, 7
          %v6357 = vsub.s32 4, %v6356
          %v6358 = vrot.slane %v6236, %v6357
          %v6359 = vlaneseq
          %v6360 = vshrl.u32 %v6359, 7
          %v6361 = vsub.s32 6, %v6360
          %v6362 = vrot.slane %v6236, %v6361
          %v6367 = vsel %vm6243, %v6329, %v6350
          %v6368 = vsel %vm6244, %v6333, %v6354
          %v6369 = vsel %vm6245, %v6337, %v6358
          %v6370 = vsel %vm6246, %v6341, %v6362
          %v6371 = vlaneseq
          %v6372 = vshrl.u32 %v6371, 7
          %v6373 = vsub.s32 0, %v6372
          %v6374 = vrot.slane %v6350, %v6373
          %v6375 = vlaneseq
          %v6376 = vshrl.u32 %v6375, 7
          %v6377 = vsub.s32 0, %v6376
          %v6378 = vrot.slane %v6354, %v6377
          %v6379 = vlaneseq
          %v6380 = vshrl.u32 %v6379, 7
          %v6381 = vsub.s32 0, %v6380
          %v6382 = vrot.slane %v6358, %v6381
          %v6383 = vlaneseq
          %v6384 = vshrl.u32 %v6383, 7
          %v6385 = vsub.s32 0, %v6384
          %v6386 = vrot.slane %v6362, %v6385
          %v6387 = vmul.f32 %v6374, %v6239
          %v6388 = vmul.f32 %v6378, %v6240
          %v6389 = vmul.f32 %v6382, %v6241
          %v6390 = vmul.f32 %v6386, %v6242
          %v6391 = vadd.f32 %v6387, %v6229
          %v6392 = vadd.f32 %v6388, %v6230
          %v6393 = vadd.f32 %v6389, %v6231
          %v6394 = vadd.f32 %v6390, %v6232
          %v6396 = vlaneseq
          %v6397 = vshrl.u32 %v6396, 7
          %v6398 = vsub.s32 0, %v6397
          %v6399 = vrot.slane %v6272, %v6398
          %v6400 = vlaneseq
          %v6401 = vshrl.u32 %v6400, 7
          %v6402 = vsub.s32 2, %v6401
          %v6403 = vrot.slane %v6272, %v6402
          %v6404 = vlaneseq
          %v6405 = vshrl.u32 %v6404, 7
          %v6406 = vsub.s32 4, %v6405
          %v6407 = vrot.slane %v6272, %v6406
          %v6408 = vlaneseq
          %v6409 = vshrl.u32 %v6408, 7
          %v6410 = vsub.s32 6, %v6409
          %v6411 = vrot.slane %v6272, %v6410
          %v6416 = vlaneseq
          %v6417 = vshrl.u32 %v6416, 7
          %v6418 = vsub.s32 0, %v6417
          %v6419 = vrot.slane %v6399, %v6418
          %v6420 = vlaneseq
          %v6421 = vshrl.u32 %v6420, 7
          %v6422 = vsub.s32 0, %v6421
          %v6423 = vrot.slane %v6403, %v6422
          %v6424 = vlaneseq
          %v6425 = vshrl.u32 %v6424, 7
          %v6426 = vsub.s32 0, %v6425
          %v6427 = vrot.slane %v6407, %v6426
          %v6428 = vlaneseq
          %v6429 = vshrl.u32 %v6428, 7
          %v6430 = vsub.s32 0, %v6429
          %v6431 = vrot.slane %v6411, %v6430
          %v6432 = vmul.f32 %v6391, %v6419
          %v6433 = vmul.f32 %v6392, %v6423
          %v6434 = vmul.f32 %v6393, %v6427
          %v6435 = vmul.f32 %v6394, %v6431
          %v6436 = vsel %vm6243, 1, 0
          %v6437 = vsel %vm6244, 1, 0
          %v6438 = vsel %vm6245, 1, 0
          %v6439 = vsel %vm6246, 1, 0
          %v6440 = vlaneseq
          %v6441 = vshrl.u32 %v6440, 7
          %v6442 = vsub.s32 2, %v6441
          %v6443 = vrot.slane %v6436, %v6442
          %v6444 = vlaneseq
          %v6445 = vshrl.u32 %v6444, 7
          %v6446 = vsub.s32 2, %v6445
          %v6447 = vrot.slane %v6437, %v6446
          %v6448 = vlaneseq
          %v6449 = vshrl.u32 %v6448, 7
          %v6450 = vsub.s32 2, %v6449
          %v6451 = vrot.slane %v6438, %v6450
          %v6452 = vlaneseq
          %v6453 = vshrl.u32 %v6452, 7
          %v6454 = vsub.s32 2, %v6453
          %v6455 = vrot.slane %v6439, %v6454
          %vm6456 = vcmp.eq.s32.totalorder %v6443, 1
          %vm6457 = vcmp.eq.s32.totalorder %v6447, 1
          %vm6458 = vcmp.eq.s32.totalorder %v6451, 1
          %vm6459 = vcmp.eq.s32.totalorder %v6455, 1
          %v6460 = vsel %vm6456, %v6432, %v6239
          %v6461 = vsel %vm6457, %v6433, %v6240
          %v6462 = vsel %vm6458, %v6434, %v6241
          %v6463 = vsel %vm6459, %v6435, %v6242
          %v6464 = vcombine.high %v6259, %v6266
          %v6465 = vrot.slane %v6464, 7
          %v6466 = vrot.slane %v6465, 2
          %v6468 = vadd.f32 %v6236, %v6466
          %v6469 = vrcp.pop %v6468
          %v6470 = vmul.f32 %v6225, 0.1
          %v6471 = vmul.f32 %v6226, 0.1
          %v6472 = vmul.f32 %v6227, 0.1
          %v6473 = vmul.f32 %v6228, 0.1
          %v6478 = vcombine.low %v6470, %v6471
          %v6479 = vcombine.low %v6472, %v6473
          %v6481 = vunpack.c.l.s4 1983009808
          %v6482 = vunpack.c.0.s8 %v6481
          %v6483 = vlaneseq
          %v6484 = vshrl.u32 %v6483, 7
          %v6485 = vsub.s32 %v6482, %v6484
          %v6486 = vrot.slane %v6478, %v6485
          %v6488 = vunpack.c.l.s4 1983009808
          %v6489 = vunpack.c.0.s8 %v6488
          %v6490 = vlaneseq
          %v6491 = vshrl.u32 %v6490, 7
          %v6492 = vsub.s32 %v6489, %v6491
          %v6493 = vrot.slane %v6479, %v6492
          %v6494 = vcombine.high %v6486, %v6493
          %v6495 = vrot.slane %v6494, 7
          %v6496 = vrot.slane %v6495, 2
          %v6498 = vadd.f32 %v6273, %v6496
          %v6499 = vmul.f32 %v6498, %v6469
          %v6501 = vlaneseq
          %v6502 = vshrl.u32 %v6501, 7
          %v6503 = vsub.s32 0, %v6502
          %v6504 = vrot.slane %v6499, %v6503
          %v6505 = vlaneseq
          %v6506 = vshrl.u32 %v6505, 7
          %v6507 = vsub.s32 2, %v6506
          %v6508 = vrot.slane %v6499, %v6507
          %v6509 = vlaneseq
          %v6510 = vshrl.u32 %v6509, 7
          %v6511 = vsub.s32 4, %v6510
          %v6512 = vrot.slane %v6499, %v6511
          %v6513 = vlaneseq
          %v6514 = vshrl.u32 %v6513, 7
          %v6515 = vsub.s32 6, %v6514
          %v6516 = vrot.slane %v6499, %v6515
          %v6525 = vrot.slane %v6319, 6
          %v6526 = vrot.slane %v6320, 6
          %v6527 = vrot.slane %v6321, 6
          %v6528 = vrot.slane %v6322, 6
          %v6533 = vsel %vm6243, %v6504, %v6525
          %v6534 = vsel %vm6244, %v6508, %v6526
          %v6535 = vsel %vm6245, %v6512, %v6527
          %v6536 = vsel %vm6246, %v6516, %v6528
          %v6537 = vmax.f32 %v6468, 0.0
          %v6538 = vmin.f32 %v6537, 255.0
          %v6540 = vlaneseq
          %v6541 = vshrl.u32 %v6540, 7
          %v6542 = vsub.s32 0, %v6541
          %v6543 = vrot.slane %v6538, %v6542
          %v6544 = vlaneseq
          %v6545 = vshrl.u32 %v6544, 7
          %v6546 = vsub.s32 2, %v6545
          %v6547 = vrot.slane %v6538, %v6546
          %v6548 = vlaneseq
          %v6549 = vshrl.u32 %v6548, 7
          %v6550 = vsub.s32 4, %v6549
          %v6551 = vrot.slane %v6538, %v6550
          %v6552 = vlaneseq
          %v6553 = vshrl.u32 %v6552, 7
          %v6554 = vsub.s32 6, %v6553
          %v6555 = vrot.slane %v6538, %v6554
          %v6564 = vrot.slane %v6367, 6
          %v6565 = vrot.slane %v6368, 6
          %v6566 = vrot.slane %v6369, 6
          %v6567 = vrot.slane %v6370, 6
          %v6572 = vsel %vm6243, %v6543, %v6564
          %v6573 = vsel %vm6244, %v6547, %v6565
          %v6574 = vsel %vm6245, %v6551, %v6566
          %v6575 = vsel %vm6246, %v6555, %v6567
          %v6576 = vpack.c.bf16 %v6533, %v6533
          %v6577 = vpack.c.bf16 %v6534, %v6534
          %v6578 = vpack.c.bf16 %v6535, %v6535
          %v6579 = vpack.c.bf16 %v6536, %v6536
          %v6584 = vcombine.low %v6576, %v6577
          %v6585 = vcombine.low %v6578, %v6579
          %v6587 = vunpack.c.l.s4 1966171168
          %v6588 = vunpack.c.0.s8 %v6587
          %v6589 = vlaneseq
          %v6590 = vshrl.u32 %v6589, 7
          %v6591 = vsub.s32 %v6588, %v6590
          %v6592 = vrot.slane %v6584, %v6591
          %v6594 = vunpack.c.l.s4 1966171168
          %v6595 = vunpack.c.0.s8 %v6594
          %v6596 = vlaneseq
          %v6597 = vshrl.u32 %v6596, 7
          %v6598 = vsub.s32 %v6595, %v6597
          %v6599 = vrot.slane %v6585, %v6598
          %v6600 = vcombine.low %v6592, %v6599
          %v6602 = vunpack.c.l.s4 1966171168
          %v6603 = vunpack.c.0.s8 %v6602
          %v6604 = vlaneseq
          %v6605 = vshrl.u32 %v6604, 7
          %v6606 = vsub.s32 %v6603, %v6605
          %v6607 = vrot.slane %v6600, %v6606
          %v6608 = vcombine.high %v6607, %v6607
          %v6610 = vld [vmem:[%s456 + $0x2c] sm:$0xf]
          %v6611 = vsel %vm1725, %v6608, %v6610
          %6612 = vst [vmem:[%s456 + $0x2c] sm:$0xf] %v6611
          %v6613 = vpack.c.bf16 %v6572, %v6572
          %v6614 = vpack.c.bf16 %v6573, %v6573
          %v6615 = vpack.c.bf16 %v6574, %v6574
          %v6616 = vpack.c.bf16 %v6575, %v6575
          %v6621 = vcombine.low %v6613, %v6614
          %v6622 = vcombine.low %v6615, %v6616
          %v6624 = vunpack.c.l.s4 1966171168
          %v6625 = vunpack.c.0.s8 %v6624
          %v6626 = vlaneseq
          %v6627 = vshrl.u32 %v6626, 7
          %v6628 = vsub.s32 %v6625, %v6627
          %v6629 = vrot.slane %v6621, %v6628
          %v6631 = vunpack.c.l.s4 1966171168
          %v6632 = vunpack.c.0.s8 %v6631
          %v6633 = vlaneseq
          %v6634 = vshrl.u32 %v6633, 7
          %v6635 = vsub.s32 %v6632, %v6634
          %v6636 = vrot.slane %v6622, %v6635
          %v6637 = vcombine.low %v6629, %v6636
          %v6639 = vunpack.c.l.s4 1966171168
          %v6640 = vunpack.c.0.s8 %v6639
          %v6641 = vlaneseq
          %v6642 = vshrl.u32 %v6641, 7
          %v6643 = vsub.s32 %v6640, %v6642
          %v6644 = vrot.slane %v6637, %v6643
          %v6645 = vcombine.high %v6644, %v6644
          %v6647 = vld [vmem:[%s463 + $0x2c] sm:$0xf]
          %v6648 = vsel %vm1725, %v6645, %v6647
          %6649 = vst [vmem:[%s463 + $0x2c] sm:$0xf] %v6648
          %v6650 = vpack.c.bf16 %v6460, %v6460
          %v6651 = vpack.c.bf16 %v6461, %v6461
          %v6652 = vpack.c.bf16 %v6462, %v6462
          %v6653 = vpack.c.bf16 %v6463, %v6463
          %v6658 = vunpack.c.l.b16 %v6650
          %v6659 = vunpack.c.l.b16 %v6651
          %v6660 = vunpack.c.l.b16 %v6652
          %v6661 = vunpack.c.l.b16 %v6653
          %v6662 = vpack.c.b16 %v6659, %v6658
          %v6663 = vpack.c.b16 %v6661, %v6660
          %6666 = vst [vmem:[%s471 + $0xb0] sm:$0xff] %v6662
          %6667 = vst [vmem:[%s471 + $0xb8] sm:$0xff] %v6663
          %s6668 = scalar_lea.vmem [#allocation2], 768
          %v6669 = vld [vmem:[%s6668] sm:$0xff]
          %v6670 = vld [vmem:[%s6668 + $0x8] sm:$0xff]
          %v6671 = vld [vmem:[%s6668 + $0x10] sm:$0xff]
          %v6672 = vld [vmem:[%s6668 + $0x18] sm:$0xff]
          %v6673 = vld [vmem:[%s6668 + $0x20] sm:$0xff]
          %v6674 = vld [vmem:[%s6668 + $0x28] sm:$0xff]
          %v6675 = vld [vmem:[%s6668 + $0x30] sm:$0xff]
          %v6676 = vld [vmem:[%s6668 + $0x38] sm:$0xff]
          %v6677 = vld [vmem:[%s434 + $0x30] sm:$0xf]
          %v6678 = vunpack.c.l.bf16 %v6677
          %v6679 = vld [vmem:[%s441 + $0x30] sm:$0xf]
          %v6680 = vunpack.c.l.bf16 %v6679
          %v6681 = vld [vmem:[%s449 + $0xc0] sm:$0xff]
          %v6682 = vld [vmem:[%s449 + $0xc8] sm:$0xff]
          %v6683 = vunpack.c.l.bf16 %v6681
          %v6684 = vunpack.c.h.bf16 %v6681
          %v6685 = vunpack.c.l.bf16 %v6682
          %v6686 = vunpack.c.h.bf16 %v6682
          %vm6687 = vcmp.gt.f32.partialorder %v6669, 0.0
          %vm6688 = vcmp.gt.f32.partialorder %v6670, 0.0
          %vm6689 = vcmp.gt.f32.partialorder %v6671, 0.0
          %vm6690 = vcmp.gt.f32.partialorder %v6672, 0.0
          %v6695 = vcombine.low %v6669, %v6670
          %v6696 = vcombine.low %v6671, %v6672
          %v6698 = vunpack.c.l.s4 1983009808
          %v6699 = vunpack.c.0.s8 %v6698
          %v6700 = vlaneseq
          %v6701 = vshrl.u32 %v6700, 7
          %v6702 = vsub.s32 %v6699, %v6701
          %v6703 = vrot.slane %v6695, %v6702
          %v6705 = vunpack.c.l.s4 1983009808
          %v6706 = vunpack.c.0.s8 %v6705
          %v6707 = vlaneseq
          %v6708 = vshrl.u32 %v6707, 7
          %v6709 = vsub.s32 %v6706, %v6708
          %v6710 = vrot.slane %v6696, %v6709
          %v6711 = vcombine.low %v6703, %v6710
          %v6712 = vrot.slane %v6711, 7
          %v6713 = vrot.slane %v6712, 2
          %v6715 = vadd.f32 %v6680, %v6713
          %v6716 = vrcp.pop %v6715
          %v6717 = vmul.f32 %v6680, %v6678
          %v6719 = vadd.f32 %v6717, %v6711
          %v6720 = vmul.f32 %v6719, %v6716
          %v6722 = vlaneseq
          %v6723 = vshrl.u32 %v6722, 7
          %v6724 = vsub.s32 0, %v6723
          %v6725 = vrot.slane %v6720, %v6724
          %v6726 = vlaneseq
          %v6727 = vshrl.u32 %v6726, 7
          %v6728 = vsub.s32 2, %v6727
          %v6729 = vrot.slane %v6720, %v6728
          %v6730 = vlaneseq
          %v6731 = vshrl.u32 %v6730, 7
          %v6732 = vsub.s32 4, %v6731
          %v6733 = vrot.slane %v6720, %v6732
          %v6734 = vlaneseq
          %v6735 = vshrl.u32 %v6734, 7
          %v6736 = vsub.s32 6, %v6735
          %v6737 = vrot.slane %v6720, %v6736
          %v6743 = vlaneseq
          %v6744 = vshrl.u32 %v6743, 7
          %v6745 = vsub.s32 0, %v6744
          %v6746 = vrot.slane %v6678, %v6745
          %v6747 = vlaneseq
          %v6748 = vshrl.u32 %v6747, 7
          %v6749 = vsub.s32 2, %v6748
          %v6750 = vrot.slane %v6678, %v6749
          %v6751 = vlaneseq
          %v6752 = vshrl.u32 %v6751, 7
          %v6753 = vsub.s32 4, %v6752
          %v6754 = vrot.slane %v6678, %v6753
          %v6755 = vlaneseq
          %v6756 = vshrl.u32 %v6755, 7
          %v6757 = vsub.s32 6, %v6756
          %v6758 = vrot.slane %v6678, %v6757
          %v6763 = vsel %vm6687, %v6725, %v6746
          %v6764 = vsel %vm6688, %v6729, %v6750
          %v6765 = vsel %vm6689, %v6733, %v6754
          %v6766 = vsel %vm6690, %v6737, %v6758
          %v6767 = vmax.f32 %v6715, 0.0
          %v6768 = vmin.f32 %v6767, 255.0
          %v6770 = vlaneseq
          %v6771 = vshrl.u32 %v6770, 7
          %v6772 = vsub.s32 0, %v6771
          %v6773 = vrot.slane %v6768, %v6772
          %v6774 = vlaneseq
          %v6775 = vshrl.u32 %v6774, 7
          %v6776 = vsub.s32 2, %v6775
          %v6777 = vrot.slane %v6768, %v6776
          %v6778 = vlaneseq
          %v6779 = vshrl.u32 %v6778, 7
          %v6780 = vsub.s32 4, %v6779
          %v6781 = vrot.slane %v6768, %v6780
          %v6782 = vlaneseq
          %v6783 = vshrl.u32 %v6782, 7
          %v6784 = vsub.s32 6, %v6783
          %v6785 = vrot.slane %v6768, %v6784
          %v6791 = vlaneseq
          %v6792 = vshrl.u32 %v6791, 7
          %v6793 = vsub.s32 0, %v6792
          %v6794 = vrot.slane %v6680, %v6793
          %v6795 = vlaneseq
          %v6796 = vshrl.u32 %v6795, 7
          %v6797 = vsub.s32 2, %v6796
          %v6798 = vrot.slane %v6680, %v6797
          %v6799 = vlaneseq
          %v6800 = vshrl.u32 %v6799, 7
          %v6801 = vsub.s32 4, %v6800
          %v6802 = vrot.slane %v6680, %v6801
          %v6803 = vlaneseq
          %v6804 = vshrl.u32 %v6803, 7
          %v6805 = vsub.s32 6, %v6804
          %v6806 = vrot.slane %v6680, %v6805
          %v6811 = vsel %vm6687, %v6773, %v6794
          %v6812 = vsel %vm6688, %v6777, %v6798
          %v6813 = vsel %vm6689, %v6781, %v6802
          %v6814 = vsel %vm6690, %v6785, %v6806
          %v6815 = vlaneseq
          %v6816 = vshrl.u32 %v6815, 7
          %v6817 = vsub.s32 0, %v6816
          %v6818 = vrot.slane %v6794, %v6817
          %v6819 = vlaneseq
          %v6820 = vshrl.u32 %v6819, 7
          %v6821 = vsub.s32 0, %v6820
          %v6822 = vrot.slane %v6798, %v6821
          %v6823 = vlaneseq
          %v6824 = vshrl.u32 %v6823, 7
          %v6825 = vsub.s32 0, %v6824
          %v6826 = vrot.slane %v6802, %v6825
          %v6827 = vlaneseq
          %v6828 = vshrl.u32 %v6827, 7
          %v6829 = vsub.s32 0, %v6828
          %v6830 = vrot.slane %v6806, %v6829
          %v6831 = vmul.f32 %v6818, %v6683
          %v6832 = vmul.f32 %v6822, %v6684
          %v6833 = vmul.f32 %v6826, %v6685
          %v6834 = vmul.f32 %v6830, %v6686
          %v6835 = vadd.f32 %v6831, %v6673
          %v6836 = vadd.f32 %v6832, %v6674
          %v6837 = vadd.f32 %v6833, %v6675
          %v6838 = vadd.f32 %v6834, %v6676
          %v6840 = vlaneseq
          %v6841 = vshrl.u32 %v6840, 7
          %v6842 = vsub.s32 0, %v6841
          %v6843 = vrot.slane %v6716, %v6842
          %v6844 = vlaneseq
          %v6845 = vshrl.u32 %v6844, 7
          %v6846 = vsub.s32 2, %v6845
          %v6847 = vrot.slane %v6716, %v6846
          %v6848 = vlaneseq
          %v6849 = vshrl.u32 %v6848, 7
          %v6850 = vsub.s32 4, %v6849
          %v6851 = vrot.slane %v6716, %v6850
          %v6852 = vlaneseq
          %v6853 = vshrl.u32 %v6852, 7
          %v6854 = vsub.s32 6, %v6853
          %v6855 = vrot.slane %v6716, %v6854
          %v6860 = vlaneseq
          %v6861 = vshrl.u32 %v6860, 7
          %v6862 = vsub.s32 0, %v6861
          %v6863 = vrot.slane %v6843, %v6862
          %v6864 = vlaneseq
          %v6865 = vshrl.u32 %v6864, 7
          %v6866 = vsub.s32 0, %v6865
          %v6867 = vrot.slane %v6847, %v6866
          %v6868 = vlaneseq
          %v6869 = vshrl.u32 %v6868, 7
          %v6870 = vsub.s32 0, %v6869
          %v6871 = vrot.slane %v6851, %v6870
          %v6872 = vlaneseq
          %v6873 = vshrl.u32 %v6872, 7
          %v6874 = vsub.s32 0, %v6873
          %v6875 = vrot.slane %v6855, %v6874
          %v6876 = vmul.f32 %v6835, %v6863
          %v6877 = vmul.f32 %v6836, %v6867
          %v6878 = vmul.f32 %v6837, %v6871
          %v6879 = vmul.f32 %v6838, %v6875
          %v6880 = vsel %vm6687, 1, 0
          %v6881 = vsel %vm6688, 1, 0
          %v6882 = vsel %vm6689, 1, 0
          %v6883 = vsel %vm6690, 1, 0
          %v6884 = vlaneseq
          %v6885 = vshrl.u32 %v6884, 7
          %v6886 = vsub.s32 2, %v6885
          %v6887 = vrot.slane %v6880, %v6886
          %v6888 = vlaneseq
          %v6889 = vshrl.u32 %v6888, 7
          %v6890 = vsub.s32 2, %v6889
          %v6891 = vrot.slane %v6881, %v6890
          %v6892 = vlaneseq
          %v6893 = vshrl.u32 %v6892, 7
          %v6894 = vsub.s32 2, %v6893
          %v6895 = vrot.slane %v6882, %v6894
          %v6896 = vlaneseq
          %v6897 = vshrl.u32 %v6896, 7
          %v6898 = vsub.s32 2, %v6897
          %v6899 = vrot.slane %v6883, %v6898
          %vm6900 = vcmp.eq.s32.totalorder %v6887, 1
          %vm6901 = vcmp.eq.s32.totalorder %v6891, 1
          %vm6902 = vcmp.eq.s32.totalorder %v6895, 1
          %vm6903 = vcmp.eq.s32.totalorder %v6899, 1
          %v6904 = vsel %vm6900, %v6876, %v6683
          %v6905 = vsel %vm6901, %v6877, %v6684
          %v6906 = vsel %vm6902, %v6878, %v6685
          %v6907 = vsel %vm6903, %v6879, %v6686
          %v6908 = vcombine.high %v6703, %v6710
          %v6909 = vrot.slane %v6908, 7
          %v6910 = vrot.slane %v6909, 2
          %v6912 = vadd.f32 %v6680, %v6910
          %v6913 = vrcp.pop %v6912
          %v6914 = vmul.f32 %v6669, 0.1
          %v6915 = vmul.f32 %v6670, 0.1
          %v6916 = vmul.f32 %v6671, 0.1
          %v6917 = vmul.f32 %v6672, 0.1
          %v6922 = vcombine.low %v6914, %v6915
          %v6923 = vcombine.low %v6916, %v6917
          %v6925 = vunpack.c.l.s4 1983009808
          %v6926 = vunpack.c.0.s8 %v6925
          %v6927 = vlaneseq
          %v6928 = vshrl.u32 %v6927, 7
          %v6929 = vsub.s32 %v6926, %v6928
          %v6930 = vrot.slane %v6922, %v6929
          %v6932 = vunpack.c.l.s4 1983009808
          %v6933 = vunpack.c.0.s8 %v6932
          %v6934 = vlaneseq
          %v6935 = vshrl.u32 %v6934, 7
          %v6936 = vsub.s32 %v6933, %v6935
          %v6937 = vrot.slane %v6923, %v6936
          %v6938 = vcombine.high %v6930, %v6937
          %v6939 = vrot.slane %v6938, 7
          %v6940 = vrot.slane %v6939, 2
          %v6942 = vadd.f32 %v6717, %v6940
          %v6943 = vmul.f32 %v6942, %v6913
          %v6945 = vlaneseq
          %v6946 = vshrl.u32 %v6945, 7
          %v6947 = vsub.s32 0, %v6946
          %v6948 = vrot.slane %v6943, %v6947
          %v6949 = vlaneseq
          %v6950 = vshrl.u32 %v6949, 7
          %v6951 = vsub.s32 2, %v6950
          %v6952 = vrot.slane %v6943, %v6951
          %v6953 = vlaneseq
          %v6954 = vshrl.u32 %v6953, 7
          %v6955 = vsub.s32 4, %v6954
          %v6956 = vrot.slane %v6943, %v6955
          %v6957 = vlaneseq
          %v6958 = vshrl.u32 %v6957, 7
          %v6959 = vsub.s32 6, %v6958
          %v6960 = vrot.slane %v6943, %v6959
          %v6969 = vrot.slane %v6763, 6
          %v6970 = vrot.slane %v6764, 6
          %v6971 = vrot.slane %v6765, 6
          %v6972 = vrot.slane %v6766, 6
          %v6977 = vsel %vm6687, %v6948, %v6969
          %v6978 = vsel %vm6688, %v6952, %v6970
          %v6979 = vsel %vm6689, %v6956, %v6971
          %v6980 = vsel %vm6690, %v6960, %v6972
          %v6981 = vmax.f32 %v6912, 0.0
          %v6982 = vmin.f32 %v6981, 255.0
          %v6984 = vlaneseq
          %v6985 = vshrl.u32 %v6984, 7
          %v6986 = vsub.s32 0, %v6985
          %v6987 = vrot.slane %v6982, %v6986
          %v6988 = vlaneseq
          %v6989 = vshrl.u32 %v6988, 7
          %v6990 = vsub.s32 2, %v6989
          %v6991 = vrot.slane %v6982, %v6990
          %v6992 = vlaneseq
          %v6993 = vshrl.u32 %v6992, 7
          %v6994 = vsub.s32 4, %v6993
          %v6995 = vrot.slane %v6982, %v6994
          %v6996 = vlaneseq
          %v6997 = vshrl.u32 %v6996, 7
          %v6998 = vsub.s32 6, %v6997
          %v6999 = vrot.slane %v6982, %v6998
          %v7008 = vrot.slane %v6811, 6
          %v7009 = vrot.slane %v6812, 6
          %v7010 = vrot.slane %v6813, 6
          %v7011 = vrot.slane %v6814, 6
          %v7016 = vsel %vm6687, %v6987, %v7008
          %v7017 = vsel %vm6688, %v6991, %v7009
          %v7018 = vsel %vm6689, %v6995, %v7010
          %v7019 = vsel %vm6690, %v6999, %v7011
          %v7020 = vpack.c.bf16 %v6977, %v6977
          %v7021 = vpack.c.bf16 %v6978, %v6978
          %v7022 = vpack.c.bf16 %v6979, %v6979
          %v7023 = vpack.c.bf16 %v6980, %v6980
          %v7028 = vcombine.low %v7020, %v7021
          %v7029 = vcombine.low %v7022, %v7023
          %v7031 = vunpack.c.l.s4 1966171168
          %v7032 = vunpack.c.0.s8 %v7031
          %v7033 = vlaneseq
          %v7034 = vshrl.u32 %v7033, 7
          %v7035 = vsub.s32 %v7032, %v7034
          %v7036 = vrot.slane %v7028, %v7035
          %v7038 = vunpack.c.l.s4 1966171168
          %v7039 = vunpack.c.0.s8 %v7038
          %v7040 = vlaneseq
          %v7041 = vshrl.u32 %v7040, 7
          %v7042 = vsub.s32 %v7039, %v7041
          %v7043 = vrot.slane %v7029, %v7042
          %v7044 = vcombine.low %v7036, %v7043
          %v7046 = vunpack.c.l.s4 1966171168
          %v7047 = vunpack.c.0.s8 %v7046
          %v7048 = vlaneseq
          %v7049 = vshrl.u32 %v7048, 7
          %v7050 = vsub.s32 %v7047, %v7049
          %v7051 = vrot.slane %v7044, %v7050
          %v7052 = vcombine.high %v7051, %v7051
          %v7054 = vld [vmem:[%s456 + $0x30] sm:$0xf]
          %v7055 = vsel %vm1725, %v7052, %v7054
          %7056 = vst [vmem:[%s456 + $0x30] sm:$0xf] %v7055
          %v7057 = vpack.c.bf16 %v7016, %v7016
          %v7058 = vpack.c.bf16 %v7017, %v7017
          %v7059 = vpack.c.bf16 %v7018, %v7018
          %v7060 = vpack.c.bf16 %v7019, %v7019
          %v7065 = vcombine.low %v7057, %v7058
          %v7066 = vcombine.low %v7059, %v7060
          %v7068 = vunpack.c.l.s4 1966171168
          %v7069 = vunpack.c.0.s8 %v7068
          %v7070 = vlaneseq
          %v7071 = vshrl.u32 %v7070, 7
          %v7072 = vsub.s32 %v7069, %v7071
          %v7073 = vrot.slane %v7065, %v7072
          %v7075 = vunpack.c.l.s4 1966171168
          %v7076 = vunpack.c.0.s8 %v7075
          %v7077 = vlaneseq
          %v7078 = vshrl.u32 %v7077, 7
          %v7079 = vsub.s32 %v7076, %v7078
          %v7080 = vrot.slane %v7066, %v7079
          %v7081 = vcombine.low %v7073, %v7080
          %v7083 = vunpack.c.l.s4 1966171168
          %v7084 = vunpack.c.0.s8 %v7083
          %v7085 = vlaneseq
          %v7086 = vshrl.u32 %v7085, 7
          %v7087 = vsub.s32 %v7084, %v7086
          %v7088 = vrot.slane %v7081, %v7087
          %v7089 = vcombine.high %v7088, %v7088
          %v7091 = vld [vmem:[%s463 + $0x30] sm:$0xf]
          %v7092 = vsel %vm1725, %v7089, %v7091
          %7093 = vst [vmem:[%s463 + $0x30] sm:$0xf] %v7092
          %v7094 = vpack.c.bf16 %v6904, %v6904
          %v7095 = vpack.c.bf16 %v6905, %v6905
          %v7096 = vpack.c.bf16 %v6906, %v6906
          %v7097 = vpack.c.bf16 %v6907, %v6907
          %v7102 = vunpack.c.l.b16 %v7094
          %v7103 = vunpack.c.l.b16 %v7095
          %v7104 = vunpack.c.l.b16 %v7096
          %v7105 = vunpack.c.l.b16 %v7097
          %v7106 = vpack.c.b16 %v7103, %v7102
          %v7107 = vpack.c.b16 %v7105, %v7104
          %7110 = vst [vmem:[%s471 + $0xc0] sm:$0xff] %v7106
          %7111 = vst [vmem:[%s471 + $0xc8] sm:$0xff] %v7107
          %s7112 = scalar_lea.vmem [#allocation2], 832
          %v7113 = vld [vmem:[%s7112] sm:$0xff]
          %v7114 = vld [vmem:[%s7112 + $0x8] sm:$0xff]
          %v7115 = vld [vmem:[%s7112 + $0x10] sm:$0xff]
          %v7116 = vld [vmem:[%s7112 + $0x18] sm:$0xff]
          %v7117 = vld [vmem:[%s7112 + $0x20] sm:$0xff]
          %v7118 = vld [vmem:[%s7112 + $0x28] sm:$0xff]
          %v7119 = vld [vmem:[%s7112 + $0x30] sm:$0xff]
          %v7120 = vld [vmem:[%s7112 + $0x38] sm:$0xff]
          %v7121 = vld [vmem:[%s434 + $0x34] sm:$0xf]
          %v7122 = vunpack.c.l.bf16 %v7121
          %v7123 = vld [vmem:[%s441 + $0x34] sm:$0xf]
          %v7124 = vunpack.c.l.bf16 %v7123
          %v7125 = vld [vmem:[%s449 + $0xd0] sm:$0xff]
          %v7126 = vld [vmem:[%s449 + $0xd8] sm:$0xff]
          %v7127 = vunpack.c.l.bf16 %v7125
          %v7128 = vunpack.c.h.bf16 %v7125
          %v7129 = vunpack.c.l.bf16 %v7126
          %v7130 = vunpack.c.h.bf16 %v7126
          %vm7131 = vcmp.gt.f32.partialorder %v7113, 0.0
          %vm7132 = vcmp.gt.f32.partialorder %v7114, 0.0
          %vm7133 = vcmp.gt.f32.partialorder %v7115, 0.0
          %vm7134 = vcmp.gt.f32.partialorder %v7116, 0.0
          %v7139 = vcombine.low %v7113, %v7114
          %v7140 = vcombine.low %v7115, %v7116
          %v7142 = vunpack.c.l.s4 1983009808
          %v7143 = vunpack.c.0.s8 %v7142
          %v7144 = vlaneseq
          %v7145 = vshrl.u32 %v7144, 7
          %v7146 = vsub.s32 %v7143, %v7145
          %v7147 = vrot.slane %v7139, %v7146
          %v7149 = vunpack.c.l.s4 1983009808
          %v7150 = vunpack.c.0.s8 %v7149
          %v7151 = vlaneseq
          %v7152 = vshrl.u32 %v7151, 7
          %v7153 = vsub.s32 %v7150, %v7152
          %v7154 = vrot.slane %v7140, %v7153
          %v7155 = vcombine.low %v7147, %v7154
          %v7156 = vrot.slane %v7155, 7
          %v7157 = vrot.slane %v7156, 2
          %v7159 = vadd.f32 %v7124, %v7157
          %v7160 = vrcp.pop %v7159
          %v7161 = vmul.f32 %v7124, %v7122
          %v7163 = vadd.f32 %v7161, %v7155
          %v7164 = vmul.f32 %v7163, %v7160
          %v7166 = vlaneseq
          %v7167 = vshrl.u32 %v7166, 7
          %v7168 = vsub.s32 0, %v7167
          %v7169 = vrot.slane %v7164, %v7168
          %v7170 = vlaneseq
          %v7171 = vshrl.u32 %v7170, 7
          %v7172 = vsub.s32 2, %v7171
          %v7173 = vrot.slane %v7164, %v7172
          %v7174 = vlaneseq
          %v7175 = vshrl.u32 %v7174, 7
          %v7176 = vsub.s32 4, %v7175
          %v7177 = vrot.slane %v7164, %v7176
          %v7178 = vlaneseq
          %v7179 = vshrl.u32 %v7178, 7
          %v7180 = vsub.s32 6, %v7179
          %v7181 = vrot.slane %v7164, %v7180
          %v7187 = vlaneseq
          %v7188 = vshrl.u32 %v7187, 7
          %v7189 = vsub.s32 0, %v7188
          %v7190 = vrot.slane %v7122, %v7189
          %v7191 = vlaneseq
          %v7192 = vshrl.u32 %v7191, 7
          %v7193 = vsub.s32 2, %v7192
          %v7194 = vrot.slane %v7122, %v7193
          %v7195 = vlaneseq
          %v7196 = vshrl.u32 %v7195, 7
          %v7197 = vsub.s32 4, %v7196
          %v7198 = vrot.slane %v7122, %v7197
          %v7199 = vlaneseq
          %v7200 = vshrl.u32 %v7199, 7
          %v7201 = vsub.s32 6, %v7200
          %v7202 = vrot.slane %v7122, %v7201
          %v7207 = vsel %vm7131, %v7169, %v7190
          %v7208 = vsel %vm7132, %v7173, %v7194
          %v7209 = vsel %vm7133, %v7177, %v7198
          %v7210 = vsel %vm7134, %v7181, %v7202
          %v7211 = vmax.f32 %v7159, 0.0
          %v7212 = vmin.f32 %v7211, 255.0
          %v7214 = vlaneseq
          %v7215 = vshrl.u32 %v7214, 7
          %v7216 = vsub.s32 0, %v7215
          %v7217 = vrot.slane %v7212, %v7216
          %v7218 = vlaneseq
          %v7219 = vshrl.u32 %v7218, 7
          %v7220 = vsub.s32 2, %v7219
          %v7221 = vrot.slane %v7212, %v7220
          %v7222 = vlaneseq
          %v7223 = vshrl.u32 %v7222, 7
          %v7224 = vsub.s32 4, %v7223
          %v7225 = vrot.slane %v7212, %v7224
          %v7226 = vlaneseq
          %v7227 = vshrl.u32 %v7226, 7
          %v7228 = vsub.s32 6, %v7227
          %v7229 = vrot.slane %v7212, %v7228
          %v7235 = vlaneseq
          %v7236 = vshrl.u32 %v7235, 7
          %v7237 = vsub.s32 0, %v7236
          %v7238 = vrot.slane %v7124, %v7237
          %v7239 = vlaneseq
          %v7240 = vshrl.u32 %v7239, 7
          %v7241 = vsub.s32 2, %v7240
          %v7242 = vrot.slane %v7124, %v7241
          %v7243 = vlaneseq
          %v7244 = vshrl.u32 %v7243, 7
          %v7245 = vsub.s32 4, %v7244
          %v7246 = vrot.slane %v7124, %v7245
          %v7247 = vlaneseq
          %v7248 = vshrl.u32 %v7247, 7
          %v7249 = vsub.s32 6, %v7248
          %v7250 = vrot.slane %v7124, %v7249
          %v7255 = vsel %vm7131, %v7217, %v7238
          %v7256 = vsel %vm7132, %v7221, %v7242
          %v7257 = vsel %vm7133, %v7225, %v7246
          %v7258 = vsel %vm7134, %v7229, %v7250
          %v7259 = vlaneseq
          %v7260 = vshrl.u32 %v7259, 7
          %v7261 = vsub.s32 0, %v7260
          %v7262 = vrot.slane %v7238, %v7261
          %v7263 = vlaneseq
          %v7264 = vshrl.u32 %v7263, 7
          %v7265 = vsub.s32 0, %v7264
          %v7266 = vrot.slane %v7242, %v7265
          %v7267 = vlaneseq
          %v7268 = vshrl.u32 %v7267, 7
          %v7269 = vsub.s32 0, %v7268
          %v7270 = vrot.slane %v7246, %v7269
          %v7271 = vlaneseq
          %v7272 = vshrl.u32 %v7271, 7
          %v7273 = vsub.s32 0, %v7272
          %v7274 = vrot.slane %v7250, %v7273
          %v7275 = vmul.f32 %v7262, %v7127
          %v7276 = vmul.f32 %v7266, %v7128
          %v7277 = vmul.f32 %v7270, %v7129
          %v7278 = vmul.f32 %v7274, %v7130
          %v7279 = vadd.f32 %v7275, %v7117
          %v7280 = vadd.f32 %v7276, %v7118
          %v7281 = vadd.f32 %v7277, %v7119
          %v7282 = vadd.f32 %v7278, %v7120
          %v7284 = vlaneseq
          %v7285 = vshrl.u32 %v7284, 7
          %v7286 = vsub.s32 0, %v7285
          %v7287 = vrot.slane %v7160, %v7286
          %v7288 = vlaneseq
          %v7289 = vshrl.u32 %v7288, 7
          %v7290 = vsub.s32 2, %v7289
          %v7291 = vrot.slane %v7160, %v7290
          %v7292 = vlaneseq
          %v7293 = vshrl.u32 %v7292, 7
          %v7294 = vsub.s32 4, %v7293
          %v7295 = vrot.slane %v7160, %v7294
          %v7296 = vlaneseq
          %v7297 = vshrl.u32 %v7296, 7
          %v7298 = vsub.s32 6, %v7297
          %v7299 = vrot.slane %v7160, %v7298
          %v7304 = vlaneseq
          %v7305 = vshrl.u32 %v7304, 7
          %v7306 = vsub.s32 0, %v7305
          %v7307 = vrot.slane %v7287, %v7306
          %v7308 = vlaneseq
          %v7309 = vshrl.u32 %v7308, 7
          %v7310 = vsub.s32 0, %v7309
          %v7311 = vrot.slane %v7291, %v7310
          %v7312 = vlaneseq
          %v7313 = vshrl.u32 %v7312, 7
          %v7314 = vsub.s32 0, %v7313
          %v7315 = vrot.slane %v7295, %v7314
          %v7316 = vlaneseq
          %v7317 = vshrl.u32 %v7316, 7
          %v7318 = vsub.s32 0, %v7317
          %v7319 = vrot.slane %v7299, %v7318
          %v7320 = vmul.f32 %v7279, %v7307
          %v7321 = vmul.f32 %v7280, %v7311
          %v7322 = vmul.f32 %v7281, %v7315
          %v7323 = vmul.f32 %v7282, %v7319
          %v7324 = vsel %vm7131, 1, 0
          %v7325 = vsel %vm7132, 1, 0
          %v7326 = vsel %vm7133, 1, 0
          %v7327 = vsel %vm7134, 1, 0
          %v7328 = vlaneseq
          %v7329 = vshrl.u32 %v7328, 7
          %v7330 = vsub.s32 2, %v7329
          %v7331 = vrot.slane %v7324, %v7330
          %v7332 = vlaneseq
          %v7333 = vshrl.u32 %v7332, 7
          %v7334 = vsub.s32 2, %v7333
          %v7335 = vrot.slane %v7325, %v7334
          %v7336 = vlaneseq
          %v7337 = vshrl.u32 %v7336, 7
          %v7338 = vsub.s32 2, %v7337
          %v7339 = vrot.slane %v7326, %v7338
          %v7340 = vlaneseq
          %v7341 = vshrl.u32 %v7340, 7
          %v7342 = vsub.s32 2, %v7341
          %v7343 = vrot.slane %v7327, %v7342
          %vm7344 = vcmp.eq.s32.totalorder %v7331, 1
          %vm7345 = vcmp.eq.s32.totalorder %v7335, 1
          %vm7346 = vcmp.eq.s32.totalorder %v7339, 1
          %vm7347 = vcmp.eq.s32.totalorder %v7343, 1
          %v7348 = vsel %vm7344, %v7320, %v7127
          %v7349 = vsel %vm7345, %v7321, %v7128
          %v7350 = vsel %vm7346, %v7322, %v7129
          %v7351 = vsel %vm7347, %v7323, %v7130
          %v7352 = vcombine.high %v7147, %v7154
          %v7353 = vrot.slane %v7352, 7
          %v7354 = vrot.slane %v7353, 2
          %v7356 = vadd.f32 %v7124, %v7354
          %v7357 = vrcp.pop %v7356
          %v7358 = vmul.f32 %v7113, 0.1
          %v7359 = vmul.f32 %v7114, 0.1
          %v7360 = vmul.f32 %v7115, 0.1
          %v7361 = vmul.f32 %v7116, 0.1
          %v7366 = vcombine.low %v7358, %v7359
          %v7367 = vcombine.low %v7360, %v7361
          %v7369 = vunpack.c.l.s4 1983009808
          %v7370 = vunpack.c.0.s8 %v7369
          %v7371 = vlaneseq
          %v7372 = vshrl.u32 %v7371, 7
          %v7373 = vsub.s32 %v7370, %v7372
          %v7374 = vrot.slane %v7366, %v7373
          %v7376 = vunpack.c.l.s4 1983009808
          %v7377 = vunpack.c.0.s8 %v7376
          %v7378 = vlaneseq
          %v7379 = vshrl.u32 %v7378, 7
          %v7380 = vsub.s32 %v7377, %v7379
          %v7381 = vrot.slane %v7367, %v7380
          %v7382 = vcombine.high %v7374, %v7381
          %v7383 = vrot.slane %v7382, 7
          %v7384 = vrot.slane %v7383, 2
          %v7386 = vadd.f32 %v7161, %v7384
          %v7387 = vmul.f32 %v7386, %v7357
          %v7389 = vlaneseq
          %v7390 = vshrl.u32 %v7389, 7
          %v7391 = vsub.s32 0, %v7390
          %v7392 = vrot.slane %v7387, %v7391
          %v7393 = vlaneseq
          %v7394 = vshrl.u32 %v7393, 7
          %v7395 = vsub.s32 2, %v7394
          %v7396 = vrot.slane %v7387, %v7395
          %v7397 = vlaneseq
          %v7398 = vshrl.u32 %v7397, 7
          %v7399 = vsub.s32 4, %v7398
          %v7400 = vrot.slane %v7387, %v7399
          %v7401 = vlaneseq
          %v7402 = vshrl.u32 %v7401, 7
          %v7403 = vsub.s32 6, %v7402
          %v7404 = vrot.slane %v7387, %v7403
          %v7413 = vrot.slane %v7207, 6
          %v7414 = vrot.slane %v7208, 6
          %v7415 = vrot.slane %v7209, 6
          %v7416 = vrot.slane %v7210, 6
          %v7421 = vsel %vm7131, %v7392, %v7413
          %v7422 = vsel %vm7132, %v7396, %v7414
          %v7423 = vsel %vm7133, %v7400, %v7415
          %v7424 = vsel %vm7134, %v7404, %v7416
          %v7425 = vmax.f32 %v7356, 0.0
          %v7426 = vmin.f32 %v7425, 255.0
          %v7428 = vlaneseq
          %v7429 = vshrl.u32 %v7428, 7
          %v7430 = vsub.s32 0, %v7429
          %v7431 = vrot.slane %v7426, %v7430
          %v7432 = vlaneseq
          %v7433 = vshrl.u32 %v7432, 7
          %v7434 = vsub.s32 2, %v7433
          %v7435 = vrot.slane %v7426, %v7434
          %v7436 = vlaneseq
          %v7437 = vshrl.u32 %v7436, 7
          %v7438 = vsub.s32 4, %v7437
          %v7439 = vrot.slane %v7426, %v7438
          %v7440 = vlaneseq
          %v7441 = vshrl.u32 %v7440, 7
          %v7442 = vsub.s32 6, %v7441
          %v7443 = vrot.slane %v7426, %v7442
          %v7452 = vrot.slane %v7255, 6
          %v7453 = vrot.slane %v7256, 6
          %v7454 = vrot.slane %v7257, 6
          %v7455 = vrot.slane %v7258, 6
          %v7460 = vsel %vm7131, %v7431, %v7452
          %v7461 = vsel %vm7132, %v7435, %v7453
          %v7462 = vsel %vm7133, %v7439, %v7454
          %v7463 = vsel %vm7134, %v7443, %v7455
          %v7464 = vpack.c.bf16 %v7421, %v7421
          %v7465 = vpack.c.bf16 %v7422, %v7422
          %v7466 = vpack.c.bf16 %v7423, %v7423
          %v7467 = vpack.c.bf16 %v7424, %v7424
          %v7472 = vcombine.low %v7464, %v7465
          %v7473 = vcombine.low %v7466, %v7467
          %v7475 = vunpack.c.l.s4 1966171168
          %v7476 = vunpack.c.0.s8 %v7475
          %v7477 = vlaneseq
          %v7478 = vshrl.u32 %v7477, 7
          %v7479 = vsub.s32 %v7476, %v7478
          %v7480 = vrot.slane %v7472, %v7479
          %v7482 = vunpack.c.l.s4 1966171168
          %v7483 = vunpack.c.0.s8 %v7482
          %v7484 = vlaneseq
          %v7485 = vshrl.u32 %v7484, 7
          %v7486 = vsub.s32 %v7483, %v7485
          %v7487 = vrot.slane %v7473, %v7486
          %v7488 = vcombine.low %v7480, %v7487
          %v7490 = vunpack.c.l.s4 1966171168
          %v7491 = vunpack.c.0.s8 %v7490
          %v7492 = vlaneseq
          %v7493 = vshrl.u32 %v7492, 7
          %v7494 = vsub.s32 %v7491, %v7493
          %v7495 = vrot.slane %v7488, %v7494
          %v7496 = vcombine.high %v7495, %v7495
          %v7498 = vld [vmem:[%s456 + $0x34] sm:$0xf]
          %v7499 = vsel %vm1725, %v7496, %v7498
          %7500 = vst [vmem:[%s456 + $0x34] sm:$0xf] %v7499
          %v7501 = vpack.c.bf16 %v7460, %v7460
          %v7502 = vpack.c.bf16 %v7461, %v7461
          %v7503 = vpack.c.bf16 %v7462, %v7462
          %v7504 = vpack.c.bf16 %v7463, %v7463
          %v7509 = vcombine.low %v7501, %v7502
          %v7510 = vcombine.low %v7503, %v7504
          %v7512 = vunpack.c.l.s4 1966171168
          %v7513 = vunpack.c.0.s8 %v7512
          %v7514 = vlaneseq
          %v7515 = vshrl.u32 %v7514, 7
          %v7516 = vsub.s32 %v7513, %v7515
          %v7517 = vrot.slane %v7509, %v7516
          %v7519 = vunpack.c.l.s4 1966171168
          %v7520 = vunpack.c.0.s8 %v7519
          %v7521 = vlaneseq
          %v7522 = vshrl.u32 %v7521, 7
          %v7523 = vsub.s32 %v7520, %v7522
          %v7524 = vrot.slane %v7510, %v7523
          %v7525 = vcombine.low %v7517, %v7524
          %v7527 = vunpack.c.l.s4 1966171168
          %v7528 = vunpack.c.0.s8 %v7527
          %v7529 = vlaneseq
          %v7530 = vshrl.u32 %v7529, 7
          %v7531 = vsub.s32 %v7528, %v7530
          %v7532 = vrot.slane %v7525, %v7531
          %v7533 = vcombine.high %v7532, %v7532
          %v7535 = vld [vmem:[%s463 + $0x34] sm:$0xf]
          %v7536 = vsel %vm1725, %v7533, %v7535
          %7537 = vst [vmem:[%s463 + $0x34] sm:$0xf] %v7536
          %v7538 = vpack.c.bf16 %v7348, %v7348
          %v7539 = vpack.c.bf16 %v7349, %v7349
          %v7540 = vpack.c.bf16 %v7350, %v7350
          %v7541 = vpack.c.bf16 %v7351, %v7351
          %v7546 = vunpack.c.l.b16 %v7538
          %v7547 = vunpack.c.l.b16 %v7539
          %v7548 = vunpack.c.l.b16 %v7540
          %v7549 = vunpack.c.l.b16 %v7541
          %v7550 = vpack.c.b16 %v7547, %v7546
          %v7551 = vpack.c.b16 %v7549, %v7548
          %7554 = vst [vmem:[%s471 + $0xd0] sm:$0xff] %v7550
          %7555 = vst [vmem:[%s471 + $0xd8] sm:$0xff] %v7551
          %s7556 = scalar_lea.vmem [#allocation2], 896
          %v7557 = vld [vmem:[%s7556] sm:$0xff]
          %v7558 = vld [vmem:[%s7556 + $0x8] sm:$0xff]
          %v7559 = vld [vmem:[%s7556 + $0x10] sm:$0xff]
          %v7560 = vld [vmem:[%s7556 + $0x18] sm:$0xff]
          %v7561 = vld [vmem:[%s7556 + $0x20] sm:$0xff]
          %v7562 = vld [vmem:[%s7556 + $0x28] sm:$0xff]
          %v7563 = vld [vmem:[%s7556 + $0x30] sm:$0xff]
          %v7564 = vld [vmem:[%s7556 + $0x38] sm:$0xff]
          %v7565 = vld [vmem:[%s434 + $0x38] sm:$0xf]
          %v7566 = vunpack.c.l.bf16 %v7565
          %v7567 = vld [vmem:[%s441 + $0x38] sm:$0xf]
          %v7568 = vunpack.c.l.bf16 %v7567
          %v7569 = vld [vmem:[%s449 + $0xe0] sm:$0xff]
          %v7570 = vld [vmem:[%s449 + $0xe8] sm:$0xff]
          %v7571 = vunpack.c.l.bf16 %v7569
          %v7572 = vunpack.c.h.bf16 %v7569
          %v7573 = vunpack.c.l.bf16 %v7570
          %v7574 = vunpack.c.h.bf16 %v7570
          %vm7575 = vcmp.gt.f32.partialorder %v7557, 0.0
          %vm7576 = vcmp.gt.f32.partialorder %v7558, 0.0
          %vm7577 = vcmp.gt.f32.partialorder %v7559, 0.0
          %vm7578 = vcmp.gt.f32.partialorder %v7560, 0.0
          %v7583 = vcombine.low %v7557, %v7558
          %v7584 = vcombine.low %v7559, %v7560
          %v7586 = vunpack.c.l.s4 1983009808
          %v7587 = vunpack.c.0.s8 %v7586
          %v7588 = vlaneseq
          %v7589 = vshrl.u32 %v7588, 7
          %v7590 = vsub.s32 %v7587, %v7589
          %v7591 = vrot.slane %v7583, %v7590
          %v7593 = vunpack.c.l.s4 1983009808
          %v7594 = vunpack.c.0.s8 %v7593
          %v7595 = vlaneseq
          %v7596 = vshrl.u32 %v7595, 7
          %v7597 = vsub.s32 %v7594, %v7596
          %v7598 = vrot.slane %v7584, %v7597
          %v7599 = vcombine.low %v7591, %v7598
          %v7600 = vrot.slane %v7599, 7
          %v7601 = vrot.slane %v7600, 2
          %v7603 = vadd.f32 %v7568, %v7601
          %v7604 = vrcp.pop %v7603
          %v7605 = vmul.f32 %v7568, %v7566
          %v7607 = vadd.f32 %v7605, %v7599
          %v7608 = vmul.f32 %v7607, %v7604
          %v7610 = vlaneseq
          %v7611 = vshrl.u32 %v7610, 7
          %v7612 = vsub.s32 0, %v7611
          %v7613 = vrot.slane %v7608, %v7612
          %v7614 = vlaneseq
          %v7615 = vshrl.u32 %v7614, 7
          %v7616 = vsub.s32 2, %v7615
          %v7617 = vrot.slane %v7608, %v7616
          %v7618 = vlaneseq
          %v7619 = vshrl.u32 %v7618, 7
          %v7620 = vsub.s32 4, %v7619
          %v7621 = vrot.slane %v7608, %v7620
          %v7622 = vlaneseq
          %v7623 = vshrl.u32 %v7622, 7
          %v7624 = vsub.s32 6, %v7623
          %v7625 = vrot.slane %v7608, %v7624
          %v7631 = vlaneseq
          %v7632 = vshrl.u32 %v7631, 7
          %v7633 = vsub.s32 0, %v7632
          %v7634 = vrot.slane %v7566, %v7633
          %v7635 = vlaneseq
          %v7636 = vshrl.u32 %v7635, 7
          %v7637 = vsub.s32 2, %v7636
          %v7638 = vrot.slane %v7566, %v7637
          %v7639 = vlaneseq
          %v7640 = vshrl.u32 %v7639, 7
          %v7641 = vsub.s32 4, %v7640
          %v7642 = vrot.slane %v7566, %v7641
          %v7643 = vlaneseq
          %v7644 = vshrl.u32 %v7643, 7
          %v7645 = vsub.s32 6, %v7644
          %v7646 = vrot.slane %v7566, %v7645
          %v7651 = vsel %vm7575, %v7613, %v7634
          %v7652 = vsel %vm7576, %v7617, %v7638
          %v7653 = vsel %vm7577, %v7621, %v7642
          %v7654 = vsel %vm7578, %v7625, %v7646
          %v7655 = vmax.f32 %v7603, 0.0
          %v7656 = vmin.f32 %v7655, 255.0
          %v7658 = vlaneseq
          %v7659 = vshrl.u32 %v7658, 7
          %v7660 = vsub.s32 0, %v7659
          %v7661 = vrot.slane %v7656, %v7660
          %v7662 = vlaneseq
          %v7663 = vshrl.u32 %v7662, 7
          %v7664 = vsub.s32 2, %v7663
          %v7665 = vrot.slane %v7656, %v7664
          %v7666 = vlaneseq
          %v7667 = vshrl.u32 %v7666, 7
          %v7668 = vsub.s32 4, %v7667
          %v7669 = vrot.slane %v7656, %v7668
          %v7670 = vlaneseq
          %v7671 = vshrl.u32 %v7670, 7
          %v7672 = vsub.s32 6, %v7671
          %v7673 = vrot.slane %v7656, %v7672
          %v7679 = vlaneseq
          %v7680 = vshrl.u32 %v7679, 7
          %v7681 = vsub.s32 0, %v7680
          %v7682 = vrot.slane %v7568, %v7681
          %v7683 = vlaneseq
          %v7684 = vshrl.u32 %v7683, 7
          %v7685 = vsub.s32 2, %v7684
          %v7686 = vrot.slane %v7568, %v7685
          %v7687 = vlaneseq
          %v7688 = vshrl.u32 %v7687, 7
          %v7689 = vsub.s32 4, %v7688
          %v7690 = vrot.slane %v7568, %v7689
          %v7691 = vlaneseq
          %v7692 = vshrl.u32 %v7691, 7
          %v7693 = vsub.s32 6, %v7692
          %v7694 = vrot.slane %v7568, %v7693
          %v7699 = vsel %vm7575, %v7661, %v7682
          %v7700 = vsel %vm7576, %v7665, %v7686
          %v7701 = vsel %vm7577, %v7669, %v7690
          %v7702 = vsel %vm7578, %v7673, %v7694
          %v7703 = vlaneseq
          %v7704 = vshrl.u32 %v7703, 7
          %v7705 = vsub.s32 0, %v7704
          %v7706 = vrot.slane %v7682, %v7705
          %v7707 = vlaneseq
          %v7708 = vshrl.u32 %v7707, 7
          %v7709 = vsub.s32 0, %v7708
          %v7710 = vrot.slane %v7686, %v7709
          %v7711 = vlaneseq
          %v7712 = vshrl.u32 %v7711, 7
          %v7713 = vsub.s32 0, %v7712
          %v7714 = vrot.slane %v7690, %v7713
          %v7715 = vlaneseq
          %v7716 = vshrl.u32 %v7715, 7
          %v7717 = vsub.s32 0, %v7716
          %v7718 = vrot.slane %v7694, %v7717
          %v7719 = vmul.f32 %v7706, %v7571
          %v7720 = vmul.f32 %v7710, %v7572
          %v7721 = vmul.f32 %v7714, %v7573
          %v7722 = vmul.f32 %v7718, %v7574
          %v7723 = vadd.f32 %v7719, %v7561
          %v7724 = vadd.f32 %v7720, %v7562
          %v7725 = vadd.f32 %v7721, %v7563
          %v7726 = vadd.f32 %v7722, %v7564
          %v7728 = vlaneseq
          %v7729 = vshrl.u32 %v7728, 7
          %v7730 = vsub.s32 0, %v7729
          %v7731 = vrot.slane %v7604, %v7730
          %v7732 = vlaneseq
          %v7733 = vshrl.u32 %v7732, 7
          %v7734 = vsub.s32 2, %v7733
          %v7735 = vrot.slane %v7604, %v7734
          %v7736 = vlaneseq
          %v7737 = vshrl.u32 %v7736, 7
          %v7738 = vsub.s32 4, %v7737
          %v7739 = vrot.slane %v7604, %v7738
          %v7740 = vlaneseq
          %v7741 = vshrl.u32 %v7740, 7
          %v7742 = vsub.s32 6, %v7741
          %v7743 = vrot.slane %v7604, %v7742
          %v7748 = vlaneseq
          %v7749 = vshrl.u32 %v7748, 7
          %v7750 = vsub.s32 0, %v7749
          %v7751 = vrot.slane %v7731, %v7750
          %v7752 = vlaneseq
          %v7753 = vshrl.u32 %v7752, 7
          %v7754 = vsub.s32 0, %v7753
          %v7755 = vrot.slane %v7735, %v7754
          %v7756 = vlaneseq
          %v7757 = vshrl.u32 %v7756, 7
          %v7758 = vsub.s32 0, %v7757
          %v7759 = vrot.slane %v7739, %v7758
          %v7760 = vlaneseq
          %v7761 = vshrl.u32 %v7760, 7
          %v7762 = vsub.s32 0, %v7761
          %v7763 = vrot.slane %v7743, %v7762
          %v7764 = vmul.f32 %v7723, %v7751
          %v7765 = vmul.f32 %v7724, %v7755
          %v7766 = vmul.f32 %v7725, %v7759
          %v7767 = vmul.f32 %v7726, %v7763
          %v7768 = vsel %vm7575, 1, 0
          %v7769 = vsel %vm7576, 1, 0
          %v7770 = vsel %vm7577, 1, 0
          %v7771 = vsel %vm7578, 1, 0
          %v7772 = vlaneseq
          %v7773 = vshrl.u32 %v7772, 7
          %v7774 = vsub.s32 2, %v7773
          %v7775 = vrot.slane %v7768, %v7774
          %v7776 = vlaneseq
          %v7777 = vshrl.u32 %v7776, 7
          %v7778 = vsub.s32 2, %v7777
          %v7779 = vrot.slane %v7769, %v7778
          %v7780 = vlaneseq
          %v7781 = vshrl.u32 %v7780, 7
          %v7782 = vsub.s32 2, %v7781
          %v7783 = vrot.slane %v7770, %v7782
          %v7784 = vlaneseq
          %v7785 = vshrl.u32 %v7784, 7
          %v7786 = vsub.s32 2, %v7785
          %v7787 = vrot.slane %v7771, %v7786
          %vm7788 = vcmp.eq.s32.totalorder %v7775, 1
          %vm7789 = vcmp.eq.s32.totalorder %v7779, 1
          %vm7790 = vcmp.eq.s32.totalorder %v7783, 1
          %vm7791 = vcmp.eq.s32.totalorder %v7787, 1
          %v7792 = vsel %vm7788, %v7764, %v7571
          %v7793 = vsel %vm7789, %v7765, %v7572
          %v7794 = vsel %vm7790, %v7766, %v7573
          %v7795 = vsel %vm7791, %v7767, %v7574
          %v7796 = vcombine.high %v7591, %v7598
          %v7797 = vrot.slane %v7796, 7
          %v7798 = vrot.slane %v7797, 2
          %v7800 = vadd.f32 %v7568, %v7798
          %v7801 = vrcp.pop %v7800
          %v7802 = vmul.f32 %v7557, 0.1
          %v7803 = vmul.f32 %v7558, 0.1
          %v7804 = vmul.f32 %v7559, 0.1
          %v7805 = vmul.f32 %v7560, 0.1
          %v7810 = vcombine.low %v7802, %v7803
          %v7811 = vcombine.low %v7804, %v7805
          %v7813 = vunpack.c.l.s4 1983009808
          %v7814 = vunpack.c.0.s8 %v7813
          %v7815 = vlaneseq
          %v7816 = vshrl.u32 %v7815, 7
          %v7817 = vsub.s32 %v7814, %v7816
          %v7818 = vrot.slane %v7810, %v7817
          %v7820 = vunpack.c.l.s4 1983009808
          %v7821 = vunpack.c.0.s8 %v7820
          %v7822 = vlaneseq
          %v7823 = vshrl.u32 %v7822, 7
          %v7824 = vsub.s32 %v7821, %v7823
          %v7825 = vrot.slane %v7811, %v7824
          %v7826 = vcombine.high %v7818, %v7825
          %v7827 = vrot.slane %v7826, 7
          %v7828 = vrot.slane %v7827, 2
          %v7830 = vadd.f32 %v7605, %v7828
          %v7831 = vmul.f32 %v7830, %v7801
          %v7833 = vlaneseq
          %v7834 = vshrl.u32 %v7833, 7
          %v7835 = vsub.s32 0, %v7834
          %v7836 = vrot.slane %v7831, %v7835
          %v7837 = vlaneseq
          %v7838 = vshrl.u32 %v7837, 7
          %v7839 = vsub.s32 2, %v7838
          %v7840 = vrot.slane %v7831, %v7839
          %v7841 = vlaneseq
          %v7842 = vshrl.u32 %v7841, 7
          %v7843 = vsub.s32 4, %v7842
          %v7844 = vrot.slane %v7831, %v7843
          %v7845 = vlaneseq
          %v7846 = vshrl.u32 %v7845, 7
          %v7847 = vsub.s32 6, %v7846
          %v7848 = vrot.slane %v7831, %v7847
          %v7857 = vrot.slane %v7651, 6
          %v7858 = vrot.slane %v7652, 6
          %v7859 = vrot.slane %v7653, 6
          %v7860 = vrot.slane %v7654, 6
          %v7865 = vsel %vm7575, %v7836, %v7857
          %v7866 = vsel %vm7576, %v7840, %v7858
          %v7867 = vsel %vm7577, %v7844, %v7859
          %v7868 = vsel %vm7578, %v7848, %v7860
          %v7869 = vmax.f32 %v7800, 0.0
          %v7870 = vmin.f32 %v7869, 255.0
          %v7872 = vlaneseq
          %v7873 = vshrl.u32 %v7872, 7
          %v7874 = vsub.s32 0, %v7873
          %v7875 = vrot.slane %v7870, %v7874
          %v7876 = vlaneseq
          %v7877 = vshrl.u32 %v7876, 7
          %v7878 = vsub.s32 2, %v7877
          %v7879 = vrot.slane %v7870, %v7878
          %v7880 = vlaneseq
          %v7881 = vshrl.u32 %v7880, 7
          %v7882 = vsub.s32 4, %v7881
          %v7883 = vrot.slane %v7870, %v7882
          %v7884 = vlaneseq
          %v7885 = vshrl.u32 %v7884, 7
          %v7886 = vsub.s32 6, %v7885
          %v7887 = vrot.slane %v7870, %v7886
          %v7896 = vrot.slane %v7699, 6
          %v7897 = vrot.slane %v7700, 6
          %v7898 = vrot.slane %v7701, 6
          %v7899 = vrot.slane %v7702, 6
          %v7904 = vsel %vm7575, %v7875, %v7896
          %v7905 = vsel %vm7576, %v7879, %v7897
          %v7906 = vsel %vm7577, %v7883, %v7898
          %v7907 = vsel %vm7578, %v7887, %v7899
          %v7908 = vpack.c.bf16 %v7865, %v7865
          %v7909 = vpack.c.bf16 %v7866, %v7866
          %v7910 = vpack.c.bf16 %v7867, %v7867
          %v7911 = vpack.c.bf16 %v7868, %v7868
          %v7916 = vcombine.low %v7908, %v7909
          %v7917 = vcombine.low %v7910, %v7911
          %v7919 = vunpack.c.l.s4 1966171168
          %v7920 = vunpack.c.0.s8 %v7919
          %v7921 = vlaneseq
          %v7922 = vshrl.u32 %v7921, 7
          %v7923 = vsub.s32 %v7920, %v7922
          %v7924 = vrot.slane %v7916, %v7923
          %v7926 = vunpack.c.l.s4 1966171168
          %v7927 = vunpack.c.0.s8 %v7926
          %v7928 = vlaneseq
          %v7929 = vshrl.u32 %v7928, 7
          %v7930 = vsub.s32 %v7927, %v7929
          %v7931 = vrot.slane %v7917, %v7930
          %v7932 = vcombine.low %v7924, %v7931
          %v7934 = vunpack.c.l.s4 1966171168
          %v7935 = vunpack.c.0.s8 %v7934
          %v7936 = vlaneseq
          %v7937 = vshrl.u32 %v7936, 7
          %v7938 = vsub.s32 %v7935, %v7937
          %v7939 = vrot.slane %v7932, %v7938
          %v7940 = vcombine.high %v7939, %v7939
          %v7942 = vld [vmem:[%s456 + $0x38] sm:$0xf]
          %v7943 = vsel %vm1725, %v7940, %v7942
          %7944 = vst [vmem:[%s456 + $0x38] sm:$0xf] %v7943
          %v7945 = vpack.c.bf16 %v7904, %v7904
          %v7946 = vpack.c.bf16 %v7905, %v7905
          %v7947 = vpack.c.bf16 %v7906, %v7906
          %v7948 = vpack.c.bf16 %v7907, %v7907
          %v7953 = vcombine.low %v7945, %v7946
          %v7954 = vcombine.low %v7947, %v7948
          %v7956 = vunpack.c.l.s4 1966171168
          %v7957 = vunpack.c.0.s8 %v7956
          %v7958 = vlaneseq
          %v7959 = vshrl.u32 %v7958, 7
          %v7960 = vsub.s32 %v7957, %v7959
          %v7961 = vrot.slane %v7953, %v7960
          %v7963 = vunpack.c.l.s4 1966171168
          %v7964 = vunpack.c.0.s8 %v7963
          %v7965 = vlaneseq
          %v7966 = vshrl.u32 %v7965, 7
          %v7967 = vsub.s32 %v7964, %v7966
          %v7968 = vrot.slane %v7954, %v7967
          %v7969 = vcombine.low %v7961, %v7968
          %v7971 = vunpack.c.l.s4 1966171168
          %v7972 = vunpack.c.0.s8 %v7971
          %v7973 = vlaneseq
          %v7974 = vshrl.u32 %v7973, 7
          %v7975 = vsub.s32 %v7972, %v7974
          %v7976 = vrot.slane %v7969, %v7975
          %v7977 = vcombine.high %v7976, %v7976
          %v7979 = vld [vmem:[%s463 + $0x38] sm:$0xf]
          %v7980 = vsel %vm1725, %v7977, %v7979
          %7981 = vst [vmem:[%s463 + $0x38] sm:$0xf] %v7980
          %v7982 = vpack.c.bf16 %v7792, %v7792
          %v7983 = vpack.c.bf16 %v7793, %v7793
          %v7984 = vpack.c.bf16 %v7794, %v7794
          %v7985 = vpack.c.bf16 %v7795, %v7795
          %v7990 = vunpack.c.l.b16 %v7982
          %v7991 = vunpack.c.l.b16 %v7983
          %v7992 = vunpack.c.l.b16 %v7984
          %v7993 = vunpack.c.l.b16 %v7985
          %v7994 = vpack.c.b16 %v7991, %v7990
          %v7995 = vpack.c.b16 %v7993, %v7992
          %7998 = vst [vmem:[%s471 + $0xe0] sm:$0xff] %v7994
          %7999 = vst [vmem:[%s471 + $0xe8] sm:$0xff] %v7995
          %s8000 = scalar_lea.vmem [#allocation2], 960
          %v8001 = vld [vmem:[%s8000] sm:$0xff]
          %v8002 = vld [vmem:[%s8000 + $0x8] sm:$0xff]
          %v8003 = vld [vmem:[%s8000 + $0x10] sm:$0xff]
          %v8004 = vld [vmem:[%s8000 + $0x18] sm:$0xff]
          %v8005 = vld [vmem:[%s8000 + $0x20] sm:$0xff]
          %v8006 = vld [vmem:[%s8000 + $0x28] sm:$0xff]
          %v8007 = vld [vmem:[%s8000 + $0x30] sm:$0xff]
          %v8008 = vld [vmem:[%s8000 + $0x38] sm:$0xff]
          %v8009 = vld [vmem:[%s434 + $0x3c] sm:$0xf]
          %v8010 = vunpack.c.l.bf16 %v8009
          %v8011 = vld [vmem:[%s441 + $0x3c] sm:$0xf]
          %v8012 = vunpack.c.l.bf16 %v8011
          %v8013 = vld [vmem:[%s449 + $0xf0] sm:$0xff]
          %v8014 = vld [vmem:[%s449 + $0xf8] sm:$0xff]
          %v8015 = vunpack.c.l.bf16 %v8013
          %v8016 = vunpack.c.h.bf16 %v8013
          %v8017 = vunpack.c.l.bf16 %v8014
          %v8018 = vunpack.c.h.bf16 %v8014
          %vm8019 = vcmp.gt.f32.partialorder %v8001, 0.0
          %vm8020 = vcmp.gt.f32.partialorder %v8002, 0.0
          %vm8021 = vcmp.gt.f32.partialorder %v8003, 0.0
          %vm8022 = vcmp.gt.f32.partialorder %v8004, 0.0
          %v8027 = vcombine.low %v8001, %v8002
          %v8028 = vcombine.low %v8003, %v8004
          %v8030 = vunpack.c.l.s4 1983009808
          %v8031 = vunpack.c.0.s8 %v8030
          %v8032 = vlaneseq
          %v8033 = vshrl.u32 %v8032, 7
          %v8034 = vsub.s32 %v8031, %v8033
          %v8035 = vrot.slane %v8027, %v8034
          %v8037 = vunpack.c.l.s4 1983009808
          %v8038 = vunpack.c.0.s8 %v8037
          %v8039 = vlaneseq
          %v8040 = vshrl.u32 %v8039, 7
          %v8041 = vsub.s32 %v8038, %v8040
          %v8042 = vrot.slane %v8028, %v8041
          %v8043 = vcombine.low %v8035, %v8042
          %v8044 = vrot.slane %v8043, 7
          %v8045 = vrot.slane %v8044, 2
          %v8047 = vadd.f32 %v8012, %v8045
          %v8048 = vrcp.pop %v8047
          %v8049 = vmul.f32 %v8012, %v8010
          %v8051 = vadd.f32 %v8049, %v8043
          %v8052 = vmul.f32 %v8051, %v8048
          %v8054 = vlaneseq
          %v8055 = vshrl.u32 %v8054, 7
          %v8056 = vsub.s32 0, %v8055
          %v8057 = vrot.slane %v8052, %v8056
          %v8058 = vlaneseq
          %v8059 = vshrl.u32 %v8058, 7
          %v8060 = vsub.s32 2, %v8059
          %v8061 = vrot.slane %v8052, %v8060
          %v8062 = vlaneseq
          %v8063 = vshrl.u32 %v8062, 7
          %v8064 = vsub.s32 4, %v8063
          %v8065 = vrot.slane %v8052, %v8064
          %v8066 = vlaneseq
          %v8067 = vshrl.u32 %v8066, 7
          %v8068 = vsub.s32 6, %v8067
          %v8069 = vrot.slane %v8052, %v8068
          %v8075 = vlaneseq
          %v8076 = vshrl.u32 %v8075, 7
          %v8077 = vsub.s32 0, %v8076
          %v8078 = vrot.slane %v8010, %v8077
          %v8079 = vlaneseq
          %v8080 = vshrl.u32 %v8079, 7
          %v8081 = vsub.s32 2, %v8080
          %v8082 = vrot.slane %v8010, %v8081
          %v8083 = vlaneseq
          %v8084 = vshrl.u32 %v8083, 7
          %v8085 = vsub.s32 4, %v8084
          %v8086 = vrot.slane %v8010, %v8085
          %v8087 = vlaneseq
          %v8088 = vshrl.u32 %v8087, 7
          %v8089 = vsub.s32 6, %v8088
          %v8090 = vrot.slane %v8010, %v8089
          %v8095 = vsel %vm8019, %v8057, %v8078
          %v8096 = vsel %vm8020, %v8061, %v8082
          %v8097 = vsel %vm8021, %v8065, %v8086
          %v8098 = vsel %vm8022, %v8069, %v8090
          %v8099 = vmax.f32 %v8047, 0.0
          %v8100 = vmin.f32 %v8099, 255.0
          %v8102 = vlaneseq
          %v8103 = vshrl.u32 %v8102, 7
          %v8104 = vsub.s32 0, %v8103
          %v8105 = vrot.slane %v8100, %v8104
          %v8106 = vlaneseq
          %v8107 = vshrl.u32 %v8106, 7
          %v8108 = vsub.s32 2, %v8107
          %v8109 = vrot.slane %v8100, %v8108
          %v8110 = vlaneseq
          %v8111 = vshrl.u32 %v8110, 7
          %v8112 = vsub.s32 4, %v8111
          %v8113 = vrot.slane %v8100, %v8112
          %v8114 = vlaneseq
          %v8115 = vshrl.u32 %v8114, 7
          %v8116 = vsub.s32 6, %v8115
          %v8117 = vrot.slane %v8100, %v8116
          %v8123 = vlaneseq
          %v8124 = vshrl.u32 %v8123, 7
          %v8125 = vsub.s32 0, %v8124
          %v8126 = vrot.slane %v8012, %v8125
          %v8127 = vlaneseq
          %v8128 = vshrl.u32 %v8127, 7
          %v8129 = vsub.s32 2, %v8128
          %v8130 = vrot.slane %v8012, %v8129
          %v8131 = vlaneseq
          %v8132 = vshrl.u32 %v8131, 7
          %v8133 = vsub.s32 4, %v8132
          %v8134 = vrot.slane %v8012, %v8133
          %v8135 = vlaneseq
          %v8136 = vshrl.u32 %v8135, 7
          %v8137 = vsub.s32 6, %v8136
          %v8138 = vrot.slane %v8012, %v8137
          %v8143 = vsel %vm8019, %v8105, %v8126
          %v8144 = vsel %vm8020, %v8109, %v8130
          %v8145 = vsel %vm8021, %v8113, %v8134
          %v8146 = vsel %vm8022, %v8117, %v8138
          %v8147 = vlaneseq
          %v8148 = vshrl.u32 %v8147, 7
          %v8149 = vsub.s32 0, %v8148
          %v8150 = vrot.slane %v8126, %v8149
          %v8151 = vlaneseq
          %v8152 = vshrl.u32 %v8151, 7
          %v8153 = vsub.s32 0, %v8152
          %v8154 = vrot.slane %v8130, %v8153
          %v8155 = vlaneseq
          %v8156 = vshrl.u32 %v8155, 7
          %v8157 = vsub.s32 0, %v8156
          %v8158 = vrot.slane %v8134, %v8157
          %v8159 = vlaneseq
          %v8160 = vshrl.u32 %v8159, 7
          %v8161 = vsub.s32 0, %v8160
          %v8162 = vrot.slane %v8138, %v8161
          %v8163 = vmul.f32 %v8150, %v8015
          %v8164 = vmul.f32 %v8154, %v8016
          %v8165 = vmul.f32 %v8158, %v8017
          %v8166 = vmul.f32 %v8162, %v8018
          %v8167 = vadd.f32 %v8163, %v8005
          %v8168 = vadd.f32 %v8164, %v8006
          %v8169 = vadd.f32 %v8165, %v8007
          %v8170 = vadd.f32 %v8166, %v8008
          %v8172 = vlaneseq
          %v8173 = vshrl.u32 %v8172, 7
          %v8174 = vsub.s32 0, %v8173
          %v8175 = vrot.slane %v8048, %v8174
          %v8176 = vlaneseq
          %v8177 = vshrl.u32 %v8176, 7
          %v8178 = vsub.s32 2, %v8177
          %v8179 = vrot.slane %v8048, %v8178
          %v8180 = vlaneseq
          %v8181 = vshrl.u32 %v8180, 7
          %v8182 = vsub.s32 4, %v8181
          %v8183 = vrot.slane %v8048, %v8182
          %v8184 = vlaneseq
          %v8185 = vshrl.u32 %v8184, 7
          %v8186 = vsub.s32 6, %v8185
          %v8187 = vrot.slane %v8048, %v8186
          %v8192 = vlaneseq
          %v8193 = vshrl.u32 %v8192, 7
          %v8194 = vsub.s32 0, %v8193
          %v8195 = vrot.slane %v8175, %v8194
          %v8196 = vlaneseq
          %v8197 = vshrl.u32 %v8196, 7
          %v8198 = vsub.s32 0, %v8197
          %v8199 = vrot.slane %v8179, %v8198
          %v8200 = vlaneseq
          %v8201 = vshrl.u32 %v8200, 7
          %v8202 = vsub.s32 0, %v8201
          %v8203 = vrot.slane %v8183, %v8202
          %v8204 = vlaneseq
          %v8205 = vshrl.u32 %v8204, 7
          %v8206 = vsub.s32 0, %v8205
          %v8207 = vrot.slane %v8187, %v8206
          %v8208 = vmul.f32 %v8167, %v8195
          %v8209 = vmul.f32 %v8168, %v8199
          %v8210 = vmul.f32 %v8169, %v8203
          %v8211 = vmul.f32 %v8170, %v8207
          %v8212 = vsel %vm8019, 1, 0
          %v8213 = vsel %vm8020, 1, 0
          %v8214 = vsel %vm8021, 1, 0
          %v8215 = vsel %vm8022, 1, 0
          %v8216 = vlaneseq
          %v8217 = vshrl.u32 %v8216, 7
          %v8218 = vsub.s32 2, %v8217
          %v8219 = vrot.slane %v8212, %v8218
          %v8220 = vlaneseq
          %v8221 = vshrl.u32 %v8220, 7
          %v8222 = vsub.s32 2, %v8221
          %v8223 = vrot.slane %v8213, %v8222
          %v8224 = vlaneseq
          %v8225 = vshrl.u32 %v8224, 7
          %v8226 = vsub.s32 2, %v8225
          %v8227 = vrot.slane %v8214, %v8226
          %v8228 = vlaneseq
          %v8229 = vshrl.u32 %v8228, 7
          %v8230 = vsub.s32 2, %v8229
          %v8231 = vrot.slane %v8215, %v8230
          %vm8232 = vcmp.eq.s32.totalorder %v8219, 1
          %vm8233 = vcmp.eq.s32.totalorder %v8223, 1
          %vm8234 = vcmp.eq.s32.totalorder %v8227, 1
          %vm8235 = vcmp.eq.s32.totalorder %v8231, 1
          %v8236 = vsel %vm8232, %v8208, %v8015
          %v8237 = vsel %vm8233, %v8209, %v8016
          %v8238 = vsel %vm8234, %v8210, %v8017
          %v8239 = vsel %vm8235, %v8211, %v8018
          %v8240 = vcombine.high %v8035, %v8042
          %v8241 = vrot.slane %v8240, 7
          %v8242 = vrot.slane %v8241, 2
          %v8244 = vadd.f32 %v8012, %v8242
          %v8245 = vrcp.pop %v8244
          %v8246 = vmul.f32 %v8001, 0.1
          %v8247 = vmul.f32 %v8002, 0.1
          %v8248 = vmul.f32 %v8003, 0.1
          %v8249 = vmul.f32 %v8004, 0.1
          %v8254 = vcombine.low %v8246, %v8247
          %v8255 = vcombine.low %v8248, %v8249
          %v8257 = vunpack.c.l.s4 1983009808
          %v8258 = vunpack.c.0.s8 %v8257
          %v8259 = vlaneseq
          %v8260 = vshrl.u32 %v8259, 7
          %v8261 = vsub.s32 %v8258, %v8260
          %v8262 = vrot.slane %v8254, %v8261
          %v8264 = vunpack.c.l.s4 1983009808
          %v8265 = vunpack.c.0.s8 %v8264
          %v8266 = vlaneseq
          %v8267 = vshrl.u32 %v8266, 7
          %v8268 = vsub.s32 %v8265, %v8267
          %v8269 = vrot.slane %v8255, %v8268
          %v8270 = vcombine.high %v8262, %v8269
          %v8271 = vrot.slane %v8270, 7
          %v8272 = vrot.slane %v8271, 2
          %v8274 = vadd.f32 %v8049, %v8272
          %v8275 = vmul.f32 %v8274, %v8245
          %v8277 = vlaneseq
          %v8278 = vshrl.u32 %v8277, 7
          %v8279 = vsub.s32 0, %v8278
          %v8280 = vrot.slane %v8275, %v8279
          %v8281 = vlaneseq
          %v8282 = vshrl.u32 %v8281, 7
          %v8283 = vsub.s32 2, %v8282
          %v8284 = vrot.slane %v8275, %v8283
          %v8285 = vlaneseq
          %v8286 = vshrl.u32 %v8285, 7
          %v8287 = vsub.s32 4, %v8286
          %v8288 = vrot.slane %v8275, %v8287
          %v8289 = vlaneseq
          %v8290 = vshrl.u32 %v8289, 7
          %v8291 = vsub.s32 6, %v8290
          %v8292 = vrot.slane %v8275, %v8291
          %v8301 = vrot.slane %v8095, 6
          %v8302 = vrot.slane %v8096, 6
          %v8303 = vrot.slane %v8097, 6
          %v8304 = vrot.slane %v8098, 6
          %v8309 = vsel %vm8019, %v8280, %v8301
          %v8310 = vsel %vm8020, %v8284, %v8302
          %v8311 = vsel %vm8021, %v8288, %v8303
          %v8312 = vsel %vm8022, %v8292, %v8304
          %v8313 = vmax.f32 %v8244, 0.0
          %v8314 = vmin.f32 %v8313, 255.0
          %v8316 = vlaneseq
          %v8317 = vshrl.u32 %v8316, 7
          %v8318 = vsub.s32 0, %v8317
          %v8319 = vrot.slane %v8314, %v8318
          %v8320 = vlaneseq
          %v8321 = vshrl.u32 %v8320, 7
          %v8322 = vsub.s32 2, %v8321
          %v8323 = vrot.slane %v8314, %v8322
          %v8324 = vlaneseq
          %v8325 = vshrl.u32 %v8324, 7
          %v8326 = vsub.s32 4, %v8325
          %v8327 = vrot.slane %v8314, %v8326
          %v8328 = vlaneseq
          %v8329 = vshrl.u32 %v8328, 7
          %v8330 = vsub.s32 6, %v8329
          %v8331 = vrot.slane %v8314, %v8330
          %v8340 = vrot.slane %v8143, 6
          %v8341 = vrot.slane %v8144, 6
          %v8342 = vrot.slane %v8145, 6
          %v8343 = vrot.slane %v8146, 6
          %v8348 = vsel %vm8019, %v8319, %v8340
          %v8349 = vsel %vm8020, %v8323, %v8341
          %v8350 = vsel %vm8021, %v8327, %v8342
          %v8351 = vsel %vm8022, %v8331, %v8343
          %v8352 = vpack.c.bf16 %v8309, %v8309
          %v8353 = vpack.c.bf16 %v8310, %v8310
          %v8354 = vpack.c.bf16 %v8311, %v8311
          %v8355 = vpack.c.bf16 %v8312, %v8312
          %v8360 = vcombine.low %v8352, %v8353
          %v8361 = vcombine.low %v8354, %v8355
          %v8363 = vunpack.c.l.s4 1966171168
          %v8364 = vunpack.c.0.s8 %v8363
          %v8365 = vlaneseq
          %v8366 = vshrl.u32 %v8365, 7
          %v8367 = vsub.s32 %v8364, %v8366
          %v8368 = vrot.slane %v8360, %v8367
          %v8370 = vunpack.c.l.s4 1966171168
          %v8371 = vunpack.c.0.s8 %v8370
          %v8372 = vlaneseq
          %v8373 = vshrl.u32 %v8372, 7
          %v8374 = vsub.s32 %v8371, %v8373
          %v8375 = vrot.slane %v8361, %v8374
          %v8376 = vcombine.low %v8368, %v8375
          %v8378 = vunpack.c.l.s4 1966171168
          %v8379 = vunpack.c.0.s8 %v8378
          %v8380 = vlaneseq
          %v8381 = vshrl.u32 %v8380, 7
          %v8382 = vsub.s32 %v8379, %v8381
          %v8383 = vrot.slane %v8376, %v8382
          %v8384 = vcombine.high %v8383, %v8383
          %v8386 = vld [vmem:[%s456 + $0x3c] sm:$0xf]
          %v8387 = vsel %vm1725, %v8384, %v8386
          %8388 = vst [vmem:[%s456 + $0x3c] sm:$0xf] %v8387
          %v8389 = vpack.c.bf16 %v8348, %v8348
          %v8390 = vpack.c.bf16 %v8349, %v8349
          %v8391 = vpack.c.bf16 %v8350, %v8350
          %v8392 = vpack.c.bf16 %v8351, %v8351
          %v8397 = vcombine.low %v8389, %v8390
          %v8398 = vcombine.low %v8391, %v8392
          %v8400 = vunpack.c.l.s4 1966171168
          %v8401 = vunpack.c.0.s8 %v8400
          %v8402 = vlaneseq
          %v8403 = vshrl.u32 %v8402, 7
          %v8404 = vsub.s32 %v8401, %v8403
          %v8405 = vrot.slane %v8397, %v8404
          %v8407 = vunpack.c.l.s4 1966171168
          %v8408 = vunpack.c.0.s8 %v8407
          %v8409 = vlaneseq
          %v8410 = vshrl.u32 %v8409, 7
          %v8411 = vsub.s32 %v8408, %v8410
          %v8412 = vrot.slane %v8398, %v8411
          %v8413 = vcombine.low %v8405, %v8412
          %v8415 = vunpack.c.l.s4 1966171168
          %v8416 = vunpack.c.0.s8 %v8415
          %v8417 = vlaneseq
          %v8418 = vshrl.u32 %v8417, 7
          %v8419 = vsub.s32 %v8416, %v8418
          %v8420 = vrot.slane %v8413, %v8419
          %v8421 = vcombine.high %v8420, %v8420
          %v8423 = vld [vmem:[%s463 + $0x3c] sm:$0xf]
          %v8424 = vsel %vm1725, %v8421, %v8423
          %8425 = vst [vmem:[%s463 + $0x3c] sm:$0xf] %v8424
          %v8426 = vpack.c.bf16 %v8236, %v8236
          %v8427 = vpack.c.bf16 %v8237, %v8237
          %v8428 = vpack.c.bf16 %v8238, %v8238
          %v8429 = vpack.c.bf16 %v8239, %v8239
          %v8434 = vunpack.c.l.b16 %v8426
          %v8435 = vunpack.c.l.b16 %v8427
          %v8436 = vunpack.c.l.b16 %v8428
          %v8437 = vunpack.c.l.b16 %v8429
          %v8438 = vpack.c.b16 %v8435, %v8434
          %v8439 = vpack.c.b16 %v8437, %v8436
          %8442 = vst [vmem:[%s471 + $0xf0] sm:$0xff] %v8438
          %8443 = vst [vmem:[%s471 + $0xf8] sm:$0xff] %v8439
        $region86: #{_lambda_.1} parent=73 // pred_fallthru
          _
        %s8444 = sld [smem:[#allocation4 + %s31]]
        %s8445 = smul.u32 64, %s8444
        %p8446 = scmp.lt.s32.totalorder %s8445, 255
        %s8447 = scalar_select %p8446, %s8445, 255
        %s8448 = scalar_lea.vmem %s7, %s8447
        %s8449 = sld [smem:[#allocation4 + %s31]]
        %s8450 = smul.u32 64, %s8449
        %p8451 = scmp.lt.s32.totalorder %s8450, 255
        %s8452 = scalar_select %p8451, %s8450, 255
        %s8453 = scalar_lea.vmem %s8, %s8452
        %s8454 = sld [smem:[#allocation4 + %s31]]
        %s8455 = smul.u32 64, %s8454
        %p8456 = scmp.lt.s32.totalorder %s8455, 255
        %s8457 = scalar_select %p8456, %s8455, 255
        %s8458 = smul.addr %s8457, 4
        %s8459 = scalar_lea.vmem %s9, %s8458
        // Predicated region
        $region87: #{_lambda_.1} parent=73 // pred_check
          %p8460 = pneg %p187
        $region88: #{_lambda_.1} parent=73 // pred_check_branch
          %8462 = sbr.rel (%p8460) target = $region90
        $region89: #{_lambda_.1} parent=73 // pred_region
          %s8463 = sld [smem:[#allocation4 + %s31]]
          %s8464 = smul.u32 64, %s8463
        $region90: #{_lambda_.1} parent=73 // pred_fallthru
          _
        // Predicated region
        $region91: #{_lambda_.1} parent=73 // pred_check
          %p8465 = pneg %p215
        $region92: #{_lambda_.1} parent=73 // pred_check_branch
          %8467 = sbr.rel (%p8465) target = $region94
        $region93: #{_lambda_.1} parent=73 // pred_region
          %s8468 = sld [smem:[#allocation4 + %s31]]
          %s8469 = smul.u32 64, %s8468
        $region94: #{_lambda_.1} parent=73 // pred_fallthru
          _
        // Predicated region
        $region95: #{_lambda_.1} parent=73 // pred_check
          %p8470 = pneg %p243
        $region96: #{_lambda_.1} parent=73 // pred_check_branch
          %8472 = sbr.rel (%p8470) target = $region98
        $region97: #{_lambda_.1} parent=73 // pred_region
          %s8473 = sld [smem:[#allocation4 + %s31]]
          %s8474 = smul.u32 64, %s8473
        $region98: #{_lambda_.1} parent=73 // pred_fallthru
          _
      $region74: #{_lambda_.1} parent=5 // pred_fallthru
        _
      %p8475 = scmp.le.s32.totalorder 2, %s26
      // Predicated region
      $region99: #{_lambda_.1} parent=5 // pred_check
        %p8476 = pneg %p8475
      $region100: #{_lambda_.1} parent=5 // pred_check_branch
        %8478 = sbr.rel (%p8476) target = $region102
      $region101: #{_lambda_.1} parent=5 // pred_region
        %s8479 = ssub.s32 %s26, 2
        // Predicated region
        $region103: #{_lambda_.1} parent=101 // pred_check
          %p8480 = pneg %p193
        $region104: #{_lambda_.1} parent=101 // pred_check_branch
          %8482 = sbr.rel (%p8480) target = $region106
        $region105: #{_lambda_.1} parent=101 // pred_region
          %s8483 = sld [smem:[#allocation4 + %s32]]
          %s8484 = smul.u32 64, %s8483
          %p8485 = scmp.lt.s32.totalorder %s8484, 255
          %s8486 = scalar_select %p8485, %s8484, 255
          %s8487 = scalar_lea.vmem %s7, %s8486
        $region106: #{_lambda_.1} parent=101 // pred_fallthru
          _
        // Predicated region
        $region107: #{_lambda_.1} parent=101 // pred_check
          %p8488 = pneg %p221
        $region108: #{_lambda_.1} parent=101 // pred_check_branch
          %8490 = sbr.rel (%p8488) target = $region110
        $region109: #{_lambda_.1} parent=101 // pred_region
          %s8491 = sld [smem:[#allocation4 + %s32]]
          %s8492 = smul.u32 64, %s8491
          %p8493 = scmp.lt.s32.totalorder %s8492, 255
          %s8494 = scalar_select %p8493, %s8492, 255
          %s8495 = scalar_lea.vmem %s8, %s8494
        $region110: #{_lambda_.1} parent=101 // pred_fallthru
          _
        // Predicated region
        $region111: #{_lambda_.1} parent=101 // pred_check
          %p8496 = pneg %p249
        $region112: #{_lambda_.1} parent=101 // pred_check_branch
          %8498 = sbr.rel (%p8496) target = $region114
        $region113: #{_lambda_.1} parent=101 // pred_region
          %s8499 = sld [smem:[#allocation4 + %s32]]
          %s8500 = smul.u32 64, %s8499
          %p8501 = scmp.lt.s32.totalorder %s8500, 255
          %s8502 = scalar_select %p8501, %s8500, 255
          %s8503 = smul.addr %s8502, 4
          %s8504 = scalar_lea.vmem %s9, %s8503
        $region114: #{_lambda_.1} parent=101 // pred_fallthru
          _
      $region102: #{_lambda_.1} parent=5 // pred_fallthru
        _
    $region6: #{_lambda_.1} parent=1 // loop_footer
      %s30 = sadd.s32 1, %s26
    $region7: #{_lambda_.1} parent=1 // loop_footer_branch
      %25 = sbr.rel target = $region3
    $region8: #{_lambda_.1} parent=1 // loop_exit
      _

</llo_original>
